<compile_context>
chip_gen: v7x
topology: tpu7x:2x2x1
jax: 0.10.0
libtpu: 0.0.40
codegen_flags: <defaults>
</compile_context>

<pallas_src>
import functools

import jax
import jax.numpy as jnp
from jax.experimental import pallas as pl
from jax.experimental.pallas import tpu as pltpu


def _round_up(x, m):
    return ((x + m - 1) // m) * m


# ----------------------------------------------------------------------------
# Fused kernel
# ----------------------------------------------------------------------------
def _bilstm_fused_kernel(
    x_ref,                                    # (T*Bp, Dep)
    w0f_ih, w0f_hh, b0f,                      # layer 0, forward
    w0b_ih, w0b_hh, b0b,                      # layer 0, backward
    w1f_ih, w1f_hh, b1f,                      # layer 1, forward
    w1b_ih, w1b_hh, b1b,                      # layer 1, backward
    cls_w, cls_b,                             # classifier
    out_ref,                                  # (Bp, Cp)
    gx0f, gx0b, gx1f, gx1b,                   # (T*Bp, 4*Hp) scratch
    h0f, h0b, h1f, h1b,                       # (T*Bp, Hp)   scratch
):
    Bp = out_ref.shape[0]
    Hp = h0f.shape[1]
    T = h0f.shape[0] // Bp

    def run_direction(gx_ref, whh_ref, hseq_ref, reverse):
        whh = whh_ref[...]                    # (Hp, 4Hp), loaded once

        def step(s, carry):
            h, c = carry
            tt = (T - 1 - s) if reverse else s
            row = tt * Bp
            gates = gx_ref[pl.ds(row, Bp), :] + jnp.dot(
                h, whh, preferred_element_type=jnp.float32)       # (Bp, 4Hp)
            # PyTorch gate order i, f, g, o; each slice is 128-lane aligned.
            i_g = jax.nn.sigmoid(gates[:, 0 * Hp:1 * Hp])
            f_g = jax.nn.sigmoid(gates[:, 1 * Hp:2 * Hp])
            g_g = jnp.tanh(gates[:, 2 * Hp:3 * Hp])
            o_g = jax.nn.sigmoid(gates[:, 3 * Hp:4 * Hp])
            c_new = f_g * c + i_g * g_g
            h_new = o_g * jnp.tanh(c_new)
            hseq_ref[pl.ds(row, Bp), :] = h_new
            return (h_new, c_new)

        init = (jnp.zeros((Bp, Hp), jnp.float32),
                jnp.zeros((Bp, Hp), jnp.float32))
        jax.lax.fori_loop(0, T, step, init, unroll=True)

    x = x_ref[...]                                                # (T*Bp, Dep)

    # ----- layer 0: input projection hoisted out of the recurrence -----
    gx0f[...] = jnp.dot(x, w0f_ih[...],
                        preferred_element_type=jnp.float32) + b0f[...]
    gx0b[...] = jnp.dot(x, w0b_ih[...],
                        preferred_element_type=jnp.float32) + b0b[...]
    run_direction(gx0f, w0f_hh, h0f, reverse=False)
    run_direction(gx0b, w0b_hh, h0b, reverse=True)

    # ----- layer 1 (input = concat(fwd, bwd) of layer-0 output) -----
    x1 = jnp.concatenate([h0f[...], h0b[...]], axis=-1)           # (T*Bp, 2Hp)
    gx1f[...] = jnp.dot(x1, w1f_ih[...],
                        preferred_element_type=jnp.float32) + b1f[...]
    gx1b[...] = jnp.dot(x1, w1b_ih[...],
                        preferred_element_type=jnp.float32) + b1b[...]
    run_direction(gx1f, w1f_hh, h1f, reverse=False)
    run_direction(gx1b, w1b_hh, h1b, reverse=True)

    # ----- classifier on the last timestep (dropout = identity in eval) -----
    r = (T - 1) * Bp
    last = jnp.concatenate([h1f[r:r + Bp, :], h1b[r:r + Bp, :]], axis=-1)
    out_ref[...] = jnp.dot(last, cls_w[...],
                           preferred_element_type=jnp.float32) + cls_b[...]


# ----------------------------------------------------------------------------
# Padding helpers (zero padding is exact for LSTM: padded hidden units stay 0)
# ----------------------------------------------------------------------------
def _pad_axis(a, axis, new_size):
    if a.shape[axis] == new_size:
        return a
    pads = [(0, 0)] * a.ndim
    pads[axis] = (0, new_size - a.shape[axis])
    return jnp.pad(a, pads)


def _pad_gate_dim(w, Hp, axis):
    """Pad the 4H gate axis per-gate: [i|f|g|o] blocks each padded H -> Hp."""
    blocks = jnp.split(w, 4, axis=axis)
    blocks = [_pad_axis(b, axis, Hp) for b in blocks]
    return jnp.concatenate(blocks, axis=axis)


def _pad_concat_rows(w, H, Hp):
    """Rows of w are [fwd(H); bwd(H)] features; expand each half to Hp rows."""
    top = _pad_axis(w[:H], 0, Hp)
    bot = _pad_axis(w[H:], 0, Hp)
    return jnp.concatenate([top, bot], axis=0)


# ----------------------------------------------------------------------------
# Wrapper: pad to native tiles, launch the single fused kernel
# ----------------------------------------------------------------------------
def bilstm_forward(params, tokens):
    """Matches BiLSTM_model.forward (eval mode). Requires 2 LSTM layers."""
    assert len(params["lstm"]) == 2, "fused kernel is written for nlayers=2"
    B, T = tokens.shape
    emb_tbl = params["embedding"]
    De = emb_tbl.shape[1]
    H = params["lstm"][0]["fwd"]["whh_t"].shape[0]
    C = params["cls_w_t"].shape[1]

    Bp = _round_up(max(B, 8), 8)          # sublane-align batch
    Hp = _round_up(max(H, 128), 128)      # lane-align hidden
    Dep = _round_up(max(De, 128), 128)    # lane-align embedding
    Cp = _round_up(max(C, 128), 128)      # lane-dense output store
    G = 4 * Hp

    # Embedding gather stays in XLA (data-dependent gather).
    x = jnp.take(emb_tbl, tokens, axis=0)             # (B, T, De)
    x = jnp.transpose(x, (1, 0, 2))                   # time-major (T, B, De)
    x = jnp.pad(x, ((0, 0), (0, Bp - B), (0, Dep - De)))
    x_flat = x.reshape(T * Bp, Dep)                   # (T*Bp, Dep)

    def pad_dir(p, first_layer):
        wih = _pad_gate_dim(p["wih_t"], Hp, axis=1)            # (in, 4Hp)
        if first_layer:
            wih = _pad_axis(wih, 0, Dep)                       # (Dep, 4Hp)
        else:
            wih = _pad_concat_rows(wih, H, Hp)                 # (2Hp, 4Hp)
        whh = _pad_axis(_pad_gate_dim(p["whh_t"], Hp, axis=1), 0, Hp)  # (Hp,4Hp)
        b = _pad_gate_dim(p["bias"], Hp, axis=1)               # (1, 4Hp)
        return wih, whh, b

    l0f = pad_dir(params["lstm"][0]["fwd"], True)
    l0b = pad_dir(params["lstm"][0]["bwd"], True)
    l1f = pad_dir(params["lstm"][1]["fwd"], False)
    l1b = pad_dir(params["lstm"][1]["bwd"], False)

    cls_w = _pad_axis(_pad_concat_rows(params["cls_w_t"], H, Hp), 1, Cp)
    cls_b = _pad_axis(params["cls_b"], 1, Cp)

    def full2d(shape):
        return pl.BlockSpec(shape, lambda: (0, 0))

    lstm_specs = []
    for first in (True, True, False, False):
        in_rows = Dep if first else 2 * Hp
        lstm_specs += [full2d((in_rows, G)), full2d((Hp, G)), full2d((1, G))]

    out = pl.pallas_call(
        _bilstm_fused_kernel,
        out_shape=jax.ShapeDtypeStruct((Bp, Cp), jnp.float32),
        in_specs=[full2d((T * Bp, Dep))] + lstm_specs
                 + [full2d((2 * Hp, Cp)), full2d((1, Cp))],
        out_specs=full2d((Bp, Cp)),
        scratch_shapes=(
            [pltpu.VMEM((T * Bp, G), jnp.float32) for _ in range(4)]
            + [pltpu.VMEM((T * Bp, Hp), jnp.float32) for _ in range(4)]),
    )(x_flat, *l0f, *l0b, *l1f, *l1b, cls_w, cls_b)

    return out[:B, :C]


# ----------------------------------------------------------------------------
# Parameter construction (mimics nn.LSTM / nn.Linear shapes, natural layout)
# ----------------------------------------------------------------------------
def init_params(key, vocab_size, d_emb, d_hid, nlayers, num_classes):
    params = {}
    k_emb, k_lstm, k_cls = jax.random.split(key, 3)
    params["embedding"] = jax.random.normal(
        k_emb, (vocab_size, d_emb), jnp.float32) * 0.1

    bound = 1.0 / jnp.sqrt(d_hid)
    lstm_layers = []
    keys = jax.random.split(k_lstm, nlayers * 2)
    for layer in range(nlayers):
        in_dim = d_emb if layer == 0 else 2 * d_hid
        dirs = {}
        for d, name in enumerate(("fwd", "bwd")):
            kk = jax.random.split(keys[layer * 2 + d], 4)
            w_ih = jax.random.uniform(kk[0], (4 * d_hid, in_dim), jnp.float32,
                                      -bound, bound)
            w_hh = jax.random.uniform(kk[1], (4 * d_hid, d_hid), jnp.float32,
                                      -bound, bound)
            b_ih = jax.random.uniform(kk[2], (4 * d_hid,), jnp.float32,
                                      -bound, bound)
            b_hh = jax.random.uniform(kk[3], (4 * d_hid,), jnp.float32,
                                      -bound, bound)
            dirs[name] = {
                "wih_t": w_ih.T,                       # (in_dim, 4H)
                "whh_t": w_hh.T,                       # (H, 4H)
                "bias": (b_ih + b_hh)[None, :],        # (1, 4H)
            }
        lstm_layers.append(dirs)
    params["lstm"] = lstm_layers

    kc1, kc2 = jax.random.split(k_cls)
    cb = 1.0 / jnp.sqrt(2 * d_hid)
    params["cls_w_t"] = jax.random.uniform(
        kc1, (2 * d_hid, num_classes), jnp.float32, -cb, cb)
    params["cls_b"] = jax.random.uniform(
        kc2, (1, num_classes), jnp.float32, -cb, cb)
    return params


# ----------------------------------------------------------------------------
# Pure-JAX reference (unpadded) for a numerical sanity check
# ----------------------------------------------------------------------------
def _lstm_direction_ref(x_seq, wih_t, whh_t, bias):
    T, B, _ = x_seq.shape
    H = whh_t.shape[0]

    def step(carry, x_t):
        h, c = carry
        gates = x_t @ wih_t + h @ whh_t + bias
        i = jax.nn.sigmoid(gates[:, 0 * H:1 * H])
        f = jax.nn.sigmoid(gates[:, 1 * H:2 * H])
        g = jnp.tanh(gates[:, 2 * H:3 * H])
        o = jax.nn.sigmoid(gates[:, 3 * H:4 * H])
        c = f * c + i * g
        h = o * jnp.tanh(c)
        return (h, c), h

    init = (jnp.zeros((B, H), jnp.float32), jnp.zeros((B, H), jnp.float32))
    _, hs = jax.lax.scan(step, init, x_seq)
    return hs


def bilstm_forward_ref(params, tokens, nlayers):
    emb = jnp.take(params["embedding"], tokens, axis=0)
    x = jnp.transpose(emb, (1, 0, 2))
    for layer in range(nlayers):
        p = params["lstm"][layer]
        h_fwd = _lstm_direction_ref(x, p["fwd"]["wih_t"], p["fwd"]["whh_t"],
                                    p["fwd"]["bias"])
        h_bwd = _lstm_direction_ref(x[::-1], p["bwd"]["wih_t"],
                                    p["bwd"]["whh_t"], p["bwd"]["bias"])[::-1]
        x = jnp.concatenate([h_fwd, h_bwd], axis=-1)
    return x[-1] @ params["cls_w_t"] + params["cls_b"]


# ----------------------------------------------------------------------------
if __name__ == "__main__":
    VOCAB = 100
    D_EMB = 64
    D_HID = 32
    NLAYERS = 2
    NUM_CLASSES = 8
    B, T = 2, 8

    key = jax.random.PRNGKey(0)
    k_param, k_tok = jax.random.split(key)
    params = init_params(k_param, VOCAB, D_EMB, D_HID, NLAYERS, NUM_CLASSES)
    tokens = jax.random.randint(k_tok, (B, T), 0, VOCAB, dtype=jnp.int32)

    fwd = jax.jit(bilstm_forward)
    out = fwd(params, tokens)
    out = jax.block_until_ready(out)

    ref = bilstm_forward_ref(params, tokens, NLAYERS)
    assert out.shape == (B, NUM_CLASSES), out.shape
    assert jnp.allclose(out, ref, atol=1e-2, rtol=1e-2), (out, ref)

    print("KERNEL_OK")
</pallas_src>

<mosaic_0001>
module attributes {stable_mosaic.version = 11 : i64} {
  func.func @_bilstm_fused_kernel(%arg0: memref<64x128xf32, #tpu.memory_space<vmem>>, %arg1: memref<128x512xf32, #tpu.memory_space<vmem>>, %arg2: memref<128x512xf32, #tpu.memory_space<vmem>>, %arg3: memref<1x512xf32, #tpu.memory_space<vmem>>, %arg4: memref<128x512xf32, #tpu.memory_space<vmem>>, %arg5: memref<128x512xf32, #tpu.memory_space<vmem>>, %arg6: memref<1x512xf32, #tpu.memory_space<vmem>>, %arg7: memref<256x512xf32, #tpu.memory_space<vmem>>, %arg8: memref<128x512xf32, #tpu.memory_space<vmem>>, %arg9: memref<1x512xf32, #tpu.memory_space<vmem>>, %arg10: memref<256x512xf32, #tpu.memory_space<vmem>>, %arg11: memref<128x512xf32, #tpu.memory_space<vmem>>, %arg12: memref<1x512xf32, #tpu.memory_space<vmem>>, %arg13: memref<256x128xf32, #tpu.memory_space<vmem>>, %arg14: memref<1x128xf32, #tpu.memory_space<vmem>>, %arg15: memref<8x128xf32, #tpu.memory_space<vmem>>, %arg16: memref<64x512xf32, #tpu.memory_space<vmem>>, %arg17: memref<64x512xf32, #tpu.memory_space<vmem>>, %arg18: memref<64x512xf32, #tpu.memory_space<vmem>>, %arg19: memref<64x512xf32, #tpu.memory_space<vmem>>, %arg20: memref<64x128xf32, #tpu.memory_space<vmem>>, %arg21: memref<64x128xf32, #tpu.memory_space<vmem>>, %arg22: memref<64x128xf32, #tpu.memory_space<vmem>>, %arg23: memref<64x128xf32, #tpu.memory_space<vmem>>) attributes {dimension_semantics = [], scalar_prefetch = 0 : i64, scratch_operands = 8 : i64, tpu.core_type = #tpu.core_type<tc>} {
    %c0 = arith.constant 0 : index
    %c0_0 = arith.constant 0 : index
    %0 = vector.load %arg0[%c0, %c0_0] : memref<64x128xf32, #tpu.memory_space<vmem>>, vector<64x128xf32>
    %c0_1 = arith.constant 0 : index
    %c0_2 = arith.constant 0 : index
    %1 = vector.load %arg1[%c0_1, %c0_2] : memref<128x512xf32, #tpu.memory_space<vmem>>, vector<128x512xf32>
    %cst = arith.constant dense<0.000000e+00> : vector<64x512xf32>
    %2 = tpu.matmul %0, %1, %cst {dimension_numbers = #tpu.dot_dimension_numbers<[1], [0], [0], [1], [0, 0, 1, 1], [], []>} : vector<64x128xf32>, vector<128x512xf32>, vector<64x512xf32> -> vector<64x512xf32>
    %c0_3 = arith.constant 0 : index
    %c0_4 = arith.constant 0 : index
    %3 = vector.load %arg3[%c0_3, %c0_4] : memref<1x512xf32, #tpu.memory_space<vmem>>, vector<1x512xf32>
    %4 = vector.broadcast %3 : vector<1x512xf32> to vector<64x512xf32>
    %5 = arith.addf %2, %4 : vector<64x512xf32>
    %c0_5 = arith.constant 0 : index
    %c0_6 = arith.constant 0 : index
    %6 = vector.load %arg16[%c0_5, %c0_6] : memref<64x512xf32, #tpu.memory_space<vmem>>, vector<64x512xf32>
    tpu.vector_store %arg16[%c0_5, %c0_6], %5 {strides = array<i32>} : memref<64x512xf32, #tpu.memory_space<vmem>>, vector<64x512xf32>,
    %c0_7 = arith.constant 0 : index
    %c0_8 = arith.constant 0 : index
    %7 = vector.load %arg4[%c0_7, %c0_8] : memref<128x512xf32, #tpu.memory_space<vmem>>, vector<128x512xf32>
    %cst_9 = arith.constant dense<0.000000e+00> : vector<64x512xf32>
    %8 = tpu.matmul %0, %7, %cst_9 {dimension_numbers = #tpu.dot_dimension_numbers<[1], [0], [0], [1], [0, 0, 1, 1], [], []>} : vector<64x128xf32>, vector<128x512xf32>, vector<64x512xf32> -> vector<64x512xf32>
    %c0_10 = arith.constant 0 : index
    %c0_11 = arith.constant 0 : index
    %9 = vector.load %arg6[%c0_10, %c0_11] : memref<1x512xf32, #tpu.memory_space<vmem>>, vector<1x512xf32>
    %10 = vector.broadcast %9 : vector<1x512xf32> to vector<64x512xf32>
    %11 = arith.addf %8, %10 : vector<64x512xf32>
    %c0_12 = arith.constant 0 : index
    %c0_13 = arith.constant 0 : index
    %12 = vector.load %arg17[%c0_12, %c0_13] : memref<64x512xf32, #tpu.memory_space<vmem>>, vector<64x512xf32>
    tpu.vector_store %arg17[%c0_12, %c0_13], %11 {strides = array<i32>} : memref<64x512xf32, #tpu.memory_space<vmem>>, vector<64x512xf32>,
    %c0_14 = arith.constant 0 : index
    %c0_15 = arith.constant 0 : index
    %13 = vector.load %arg2[%c0_14, %c0_15] : memref<128x512xf32, #tpu.memory_space<vmem>>, vector<128x512xf32>
    %cst_16 = arith.constant 0.000000e+00 : f32
    %14 = vector.broadcast %cst_16 : f32 to vector<8x128xf32>
    %cst_17 = arith.constant 0.000000e+00 : f32
    %15 = vector.broadcast %cst_17 : f32 to vector<8x128xf32>
    %c0_i32 = arith.constant 0 : i32
    %c8_i32 = arith.constant 8 : i32
    %16 = arith.muli %c0_i32, %c8_i32 : i32
    %17 = arith.index_cast %16 : i32 to index
    %c0_18 = arith.constant 0 : index
    %18 = vector.load %arg16[%17, %c0_18] : memref<64x512xf32, #tpu.memory_space<vmem>>, vector<8x512xf32>
    %cst_19 = arith.constant dense<0.000000e+00> : vector<8x512xf32>
    %19 = tpu.matmul %14, %13, %cst_19 {dimension_numbers = #tpu.dot_dimension_numbers<[1], [0], [0], [1], [0, 0, 1, 1], [], []>} : vector<8x128xf32>, vector<128x512xf32>, vector<8x512xf32> -> vector<8x512xf32>
    %20 = arith.addf %18, %19 : vector<8x512xf32>
    %21 = vector.extract_strided_slice %20 {offsets = [0, 0], sizes = [8, 128], strides = [1, 1]} : vector<8x512xf32> to vector<8x128xf32>
    %22 = arith.negf %21 : vector<8x128xf32>
    %23 = math.exp %22 : vector<8x128xf32>
    %cst_20 = arith.constant 1.000000e+00 : f32
    %24 = vector.broadcast %cst_20 : f32 to vector<8x128xf32>
    %25 = arith.addf %24, %23 : vector<8x128xf32>
    %26 = arith.divf %24, %25 : vector<8x128xf32>
    %27 = vector.extract_strided_slice %20 {offsets = [0, 128], sizes = [8, 128], strides = [1, 1]} : vector<8x512xf32> to vector<8x128xf32>
    %28 = arith.negf %27 : vector<8x128xf32>
    %29 = math.exp %28 : vector<8x128xf32>
    %cst_21 = arith.constant 1.000000e+00 : f32
    %30 = vector.broadcast %cst_21 : f32 to vector<8x128xf32>
    %31 = arith.addf %30, %29 : vector<8x128xf32>
    %32 = arith.divf %30, %31 : vector<8x128xf32>
    %33 = vector.extract_strided_slice %20 {offsets = [0, 256], sizes = [8, 128], strides = [1, 1]} : vector<8x512xf32> to vector<8x128xf32>
    %34 = math.tanh %33 : vector<8x128xf32>
    %35 = vector.extract_strided_slice %20 {offsets = [0, 384], sizes = [8, 128], strides = [1, 1]} : vector<8x512xf32> to vector<8x128xf32>
    %36 = arith.negf %35 : vector<8x128xf32>
    %37 = math.exp %36 : vector<8x128xf32>
    %cst_22 = arith.constant 1.000000e+00 : f32
    %38 = vector.broadcast %cst_22 : f32 to vector<8x128xf32>
    %39 = arith.addf %38, %37 : vector<8x128xf32>
    %40 = arith.divf %38, %39 : vector<8x128xf32>
    %41 = arith.mulf %32, %15 : vector<8x128xf32>
    %42 = arith.mulf %26, %34 : vector<8x128xf32>
    %43 = arith.addf %41, %42 : vector<8x128xf32>
    %44 = math.tanh %43 : vector<8x128xf32>
    %45 = arith.mulf %40, %44 : vector<8x128xf32>
    %46 = arith.index_cast %16 : i32 to index
    %c0_23 = arith.constant 0 : index
    %47 = vector.load %arg20[%46, %c0_23] : memref<64x128xf32, #tpu.memory_space<vmem>>, vector<8x128xf32>
    tpu.vector_store %arg20[%46, %c0_23], %45 {strides = array<i32>} : memref<64x128xf32, #tpu.memory_space<vmem>>, vector<8x128xf32>,
    %c1_i32 = arith.constant 1 : i32
    %c8_i32_24 = arith.constant 8 : i32
    %48 = arith.muli %c1_i32, %c8_i32_24 : i32
    %49 = arith.index_cast %48 : i32 to index
    %c0_25 = arith.constant 0 : index
    %50 = vector.load %arg16[%49, %c0_25] : memref<64x512xf32, #tpu.memory_space<vmem>>, vector<8x512xf32>
    %cst_26 = arith.constant dense<0.000000e+00> : vector<8x512xf32>
    %51 = tpu.matmul %45, %13, %cst_26 {dimension_numbers = #tpu.dot_dimension_numbers<[1], [0], [0], [1], [0, 0, 1, 1], [], []>} : vector<8x128xf32>, vector<128x512xf32>, vector<8x512xf32> -> vector<8x512xf32>
    %52 = arith.addf %50, %51 : vector<8x512xf32>
    %53 = vector.extract_strided_slice %52 {offsets = [0, 0], sizes = [8, 128], strides = [1, 1]} : vector<8x512xf32> to vector<8x128xf32>
    %54 = arith.negf %53 : vector<8x128xf32>
    %55 = math.exp %54 : vector<8x128xf32>
    %cst_27 = arith.constant 1.000000e+00 : f32
    %56 = vector.broadcast %cst_27 : f32 to vector<8x128xf32>
    %57 = arith.addf %56, %55 : vector<8x128xf32>
    %58 = arith.divf %56, %57 : vector<8x128xf32>
    %59 = vector.extract_strided_slice %52 {offsets = [0, 128], sizes = [8, 128], strides = [1, 1]} : vector<8x512xf32> to vector<8x128xf32>
    %60 = arith.negf %59 : vector<8x128xf32>
    %61 = math.exp %60 : vector<8x128xf32>
    %cst_28 = arith.constant 1.000000e+00 : f32
    %62 = vector.broadcast %cst_28 : f32 to vector<8x128xf32>
    %63 = arith.addf %62, %61 : vector<8x128xf32>
    %64 = arith.divf %62, %63 : vector<8x128xf32>
    %65 = vector.extract_strided_slice %52 {offsets = [0, 256], sizes = [8, 128], strides = [1, 1]} : vector<8x512xf32> to vector<8x128xf32>
    %66 = math.tanh %65 : vector<8x128xf32>
    %67 = vector.extract_strided_slice %52 {offsets = [0, 384], sizes = [8, 128], strides = [1, 1]} : vector<8x512xf32> to vector<8x128xf32>
    %68 = arith.negf %67 : vector<8x128xf32>
    %69 = math.exp %68 : vector<8x128xf32>
    %cst_29 = arith.constant 1.000000e+00 : f32
    %70 = vector.broadcast %cst_29 : f32 to vector<8x128xf32>
    %71 = arith.addf %70, %69 : vector<8x128xf32>
    %72 = arith.divf %70, %71 : vector<8x128xf32>
    %73 = arith.mulf %64, %43 : vector<8x128xf32>
    %74 = arith.mulf %58, %66 : vector<8x128xf32>
    %75 = arith.addf %73, %74 : vector<8x128xf32>
    %76 = math.tanh %75 : vector<8x128xf32>
    %77 = arith.mulf %72, %76 : vector<8x128xf32>
    %78 = arith.index_cast %48 : i32 to index
    %c0_30 = arith.constant 0 : index
    %79 = vector.load %arg20[%78, %c0_30] : memref<64x128xf32, #tpu.memory_space<vmem>>, vector<8x128xf32>
    tpu.vector_store %arg20[%78, %c0_30], %77 {strides = array<i32>} : memref<64x128xf32, #tpu.memory_space<vmem>>, vector<8x128xf32>,
    %c2_i32 = arith.constant 2 : i32
    %c8_i32_31 = arith.constant 8 : i32
    %80 = arith.muli %c2_i32, %c8_i32_31 : i32
    %81 = arith.index_cast %80 : i32 to index
    %c0_32 = arith.constant 0 : index
    %82 = vector.load %arg16[%81, %c0_32] : memref<64x512xf32, #tpu.memory_space<vmem>>, vector<8x512xf32>
    %cst_33 = arith.constant dense<0.000000e+00> : vector<8x512xf32>
    %83 = tpu.matmul %77, %13, %cst_33 {dimension_numbers = #tpu.dot_dimension_numbers<[1], [0], [0], [1], [0, 0, 1, 1], [], []>} : vector<8x128xf32>, vector<128x512xf32>, vector<8x512xf32> -> vector<8x512xf32>
    %84 = arith.addf %82, %83 : vector<8x512xf32>
    %85 = vector.extract_strided_slice %84 {offsets = [0, 0], sizes = [8, 128], strides = [1, 1]} : vector<8x512xf32> to vector<8x128xf32>
    %86 = arith.negf %85 : vector<8x128xf32>
    %87 = math.exp %86 : vector<8x128xf32>
    %cst_34 = arith.constant 1.000000e+00 : f32
    %88 = vector.broadcast %cst_34 : f32 to vector<8x128xf32>
    %89 = arith.addf %88, %87 : vector<8x128xf32>
    %90 = arith.divf %88, %89 : vector<8x128xf32>
    %91 = vector.extract_strided_slice %84 {offsets = [0, 128], sizes = [8, 128], strides = [1, 1]} : vector<8x512xf32> to vector<8x128xf32>
    %92 = arith.negf %91 : vector<8x128xf32>
    %93 = math.exp %92 : vector<8x128xf32>
    %cst_35 = arith.constant 1.000000e+00 : f32
    %94 = vector.broadcast %cst_35 : f32 to vector<8x128xf32>
    %95 = arith.addf %94, %93 : vector<8x128xf32>
    %96 = arith.divf %94, %95 : vector<8x128xf32>
    %97 = vector.extract_strided_slice %84 {offsets = [0, 256], sizes = [8, 128], strides = [1, 1]} : vector<8x512xf32> to vector<8x128xf32>
    %98 = math.tanh %97 : vector<8x128xf32>
    %99 = vector.extract_strided_slice %84 {offsets = [0, 384], sizes = [8, 128], strides = [1, 1]} : vector<8x512xf32> to vector<8x128xf32>
    %100 = arith.negf %99 : vector<8x128xf32>
    %101 = math.exp %100 : vector<8x128xf32>
    %cst_36 = arith.constant 1.000000e+00 : f32
    %102 = vector.broadcast %cst_36 : f32 to vector<8x128xf32>
    %103 = arith.addf %102, %101 : vector<8x128xf32>
    %104 = arith.divf %102, %103 : vector<8x128xf32>
    %105 = arith.mulf %96, %75 : vector<8x128xf32>
    %106 = arith.mulf %90, %98 : vector<8x128xf32>
    %107 = arith.addf %105, %106 : vector<8x128xf32>
    %108 = math.tanh %107 : vector<8x128xf32>
    %109 = arith.mulf %104, %108 : vector<8x128xf32>
    %110 = arith.index_cast %80 : i32 to index
    %c0_37 = arith.constant 0 : index
    %111 = vector.load %arg20[%110, %c0_37] : memref<64x128xf32, #tpu.memory_space<vmem>>, vector<8x128xf32>
    tpu.vector_store %arg20[%110, %c0_37], %109 {strides = array<i32>} : memref<64x128xf32, #tpu.memory_space<vmem>>, vector<8x128xf32>,
    %c3_i32 = arith.constant 3 : i32
    %c8_i32_38 = arith.constant 8 : i32
    %112 = arith.muli %c3_i32, %c8_i32_38 : i32
    %113 = arith.index_cast %112 : i32 to index
    %c0_39 = arith.constant 0 : index
    %114 = vector.load %arg16[%113, %c0_39] : memref<64x512xf32, #tpu.memory_space<vmem>>, vector<8x512xf32>
    %cst_40 = arith.constant dense<0.000000e+00> : vector<8x512xf32>
    %115 = tpu.matmul %109, %13, %cst_40 {dimension_numbers = #tpu.dot_dimension_numbers<[1], [0], [0], [1], [0, 0, 1, 1], [], []>} : vector<8x128xf32>, vector<128x512xf32>, vector<8x512xf32> -> vector<8x512xf32>
    %116 = arith.addf %114, %115 : vector<8x512xf32>
    %117 = vector.extract_strided_slice %116 {offsets = [0, 0], sizes = [8, 128], strides = [1, 1]} : vector<8x512xf32> to vector<8x128xf32>
    %118 = arith.negf %117 : vector<8x128xf32>
    %119 = math.exp %118 : vector<8x128xf32>
    %cst_41 = arith.constant 1.000000e+00 : f32
    %120 = vector.broadcast %cst_41 : f32 to vector<8x128xf32>
    %121 = arith.addf %120, %119 : vector<8x128xf32>
    %122 = arith.divf %120, %121 : vector<8x128xf32>
    %123 = vector.extract_strided_slice %116 {offsets = [0, 128], sizes = [8, 128], strides = [1, 1]} : vector<8x512xf32> to vector<8x128xf32>
    %124 = arith.negf %123 : vector<8x128xf32>
    %125 = math.exp %124 : vector<8x128xf32>
    %cst_42 = arith.constant 1.000000e+00 : f32
    %126 = vector.broadcast %cst_42 : f32 to vector<8x128xf32>
    %127 = arith.addf %126, %125 : vector<8x128xf32>
    %128 = arith.divf %126, %127 : vector<8x128xf32>
    %129 = vector.extract_strided_slice %116 {offsets = [0, 256], sizes = [8, 128], strides = [1, 1]} : vector<8x512xf32> to vector<8x128xf32>
    %130 = math.tanh %129 : vector<8x128xf32>
    %131 = vector.extract_strided_slice %116 {offsets = [0, 384], sizes = [8, 128], strides = [1, 1]} : vector<8x512xf32> to vector<8x128xf32>
    %132 = arith.negf %131 : vector<8x128xf32>
    %133 = math.exp %132 : vector<8x128xf32>
    %cst_43 = arith.constant 1.000000e+00 : f32
    %134 = vector.broadcast %cst_43 : f32 to vector<8x128xf32>
    %135 = arith.addf %134, %133 : vector<8x128xf32>
    %136 = arith.divf %134, %135 : vector<8x128xf32>
    %137 = arith.mulf %128, %107 : vector<8x128xf32>
    %138 = arith.mulf %122, %130 : vector<8x128xf32>
    %139 = arith.addf %137, %138 : vector<8x128xf32>
    %140 = math.tanh %139 : vector<8x128xf32>
    %141 = arith.mulf %136, %140 : vector<8x128xf32>
    %142 = arith.index_cast %112 : i32 to index
    %c0_44 = arith.constant 0 : index
    %143 = vector.load %arg20[%142, %c0_44] : memref<64x128xf32, #tpu.memory_space<vmem>>, vector<8x128xf32>
    tpu.vector_store %arg20[%142, %c0_44], %141 {strides = array<i32>} : memref<64x128xf32, #tpu.memory_space<vmem>>, vector<8x128xf32>,
    %c4_i32 = arith.constant 4 : i32
    %c8_i32_45 = arith.constant 8 : i32
    %144 = arith.muli %c4_i32, %c8_i32_45 : i32
    %145 = arith.index_cast %144 : i32 to index
    %c0_46 = arith.constant 0 : index
    %146 = vector.load %arg16[%145, %c0_46] : memref<64x512xf32, #tpu.memory_space<vmem>>, vector<8x512xf32>
    %cst_47 = arith.constant dense<0.000000e+00> : vector<8x512xf32>
    %147 = tpu.matmul %141, %13, %cst_47 {dimension_numbers = #tpu.dot_dimension_numbers<[1], [0], [0], [1], [0, 0, 1, 1], [], []>} : vector<8x128xf32>, vector<128x512xf32>, vector<8x512xf32> -> vector<8x512xf32>
    %148 = arith.addf %146, %147 : vector<8x512xf32>
    %149 = vector.extract_strided_slice %148 {offsets = [0, 0], sizes = [8, 128], strides = [1, 1]} : vector<8x512xf32> to vector<8x128xf32>
    %150 = arith.negf %149 : vector<8x128xf32>
    %151 = math.exp %150 : vector<8x128xf32>
    %cst_48 = arith.constant 1.000000e+00 : f32
    %152 = vector.broadcast %cst_48 : f32 to vector<8x128xf32>
    %153 = arith.addf %152, %151 : vector<8x128xf32>
    %154 = arith.divf %152, %153 : vector<8x128xf32>
    %155 = vector.extract_strided_slice %148 {offsets = [0, 128], sizes = [8, 128], strides = [1, 1]} : vector<8x512xf32> to vector<8x128xf32>
    %156 = arith.negf %155 : vector<8x128xf32>
    %157 = math.exp %156 : vector<8x128xf32>
    %cst_49 = arith.constant 1.000000e+00 : f32
    %158 = vector.broadcast %cst_49 : f32 to vector<8x128xf32>
    %159 = arith.addf %158, %157 : vector<8x128xf32>
    %160 = arith.divf %158, %159 : vector<8x128xf32>
    %161 = vector.extract_strided_slice %148 {offsets = [0, 256], sizes = [8, 128], strides = [1, 1]} : vector<8x512xf32> to vector<8x128xf32>
    %162 = math.tanh %161 : vector<8x128xf32>
    %163 = vector.extract_strided_slice %148 {offsets = [0, 384], sizes = [8, 128], strides = [1, 1]} : vector<8x512xf32> to vector<8x128xf32>
    %164 = arith.negf %163 : vector<8x128xf32>
    %165 = math.exp %164 : vector<8x128xf32>
    %cst_50 = arith.constant 1.000000e+00 : f32
    %166 = vector.broadcast %cst_50 : f32 to vector<8x128xf32>
    %167 = arith.addf %166, %165 : vector<8x128xf32>
    %168 = arith.divf %166, %167 : vector<8x128xf32>
    %169 = arith.mulf %160, %139 : vector<8x128xf32>
    %170 = arith.mulf %154, %162 : vector<8x128xf32>
    %171 = arith.addf %169, %170 : vector<8x128xf32>
    %172 = math.tanh %171 : vector<8x128xf32>
    %173 = arith.mulf %168, %172 : vector<8x128xf32>
    %174 = arith.index_cast %144 : i32 to index
    %c0_51 = arith.constant 0 : index
    %175 = vector.load %arg20[%174, %c0_51] : memref<64x128xf32, #tpu.memory_space<vmem>>, vector<8x128xf32>
    tpu.vector_store %arg20[%174, %c0_51], %173 {strides = array<i32>} : memref<64x128xf32, #tpu.memory_space<vmem>>, vector<8x128xf32>,
    %c5_i32 = arith.constant 5 : i32
    %c8_i32_52 = arith.constant 8 : i32
    %176 = arith.muli %c5_i32, %c8_i32_52 : i32
    %177 = arith.index_cast %176 : i32 to index
    %c0_53 = arith.constant 0 : index
    %178 = vector.load %arg16[%177, %c0_53] : memref<64x512xf32, #tpu.memory_space<vmem>>, vector<8x512xf32>
    %cst_54 = arith.constant dense<0.000000e+00> : vector<8x512xf32>
    %179 = tpu.matmul %173, %13, %cst_54 {dimension_numbers = #tpu.dot_dimension_numbers<[1], [0], [0], [1], [0, 0, 1, 1], [], []>} : vector<8x128xf32>, vector<128x512xf32>, vector<8x512xf32> -> vector<8x512xf32>
    %180 = arith.addf %178, %179 : vector<8x512xf32>
    %181 = vector.extract_strided_slice %180 {offsets = [0, 0], sizes = [8, 128], strides = [1, 1]} : vector<8x512xf32> to vector<8x128xf32>
    %182 = arith.negf %181 : vector<8x128xf32>
    %183 = math.exp %182 : vector<8x128xf32>
    %cst_55 = arith.constant 1.000000e+00 : f32
    %184 = vector.broadcast %cst_55 : f32 to vector<8x128xf32>
    %185 = arith.addf %184, %183 : vector<8x128xf32>
    %186 = arith.divf %184, %185 : vector<8x128xf32>
    %187 = vector.extract_strided_slice %180 {offsets = [0, 128], sizes = [8, 128], strides = [1, 1]} : vector<8x512xf32> to vector<8x128xf32>
    %188 = arith.negf %187 : vector<8x128xf32>
    %189 = math.exp %188 : vector<8x128xf32>
    %cst_56 = arith.constant 1.000000e+00 : f32
    %190 = vector.broadcast %cst_56 : f32 to vector<8x128xf32>
    %191 = arith.addf %190, %189 : vector<8x128xf32>
    %192 = arith.divf %190, %191 : vector<8x128xf32>
    %193 = vector.extract_strided_slice %180 {offsets = [0, 256], sizes = [8, 128], strides = [1, 1]} : vector<8x512xf32> to vector<8x128xf32>
    %194 = math.tanh %193 : vector<8x128xf32>
    %195 = vector.extract_strided_slice %180 {offsets = [0, 384], sizes = [8, 128], strides = [1, 1]} : vector<8x512xf32> to vector<8x128xf32>
    %196 = arith.negf %195 : vector<8x128xf32>
    %197 = math.exp %196 : vector<8x128xf32>
    %cst_57 = arith.constant 1.000000e+00 : f32
    %198 = vector.broadcast %cst_57 : f32 to vector<8x128xf32>
    %199 = arith.addf %198, %197 : vector<8x128xf32>
    %200 = arith.divf %198, %199 : vector<8x128xf32>
    %201 = arith.mulf %192, %171 : vector<8x128xf32>
    %202 = arith.mulf %186, %194 : vector<8x128xf32>
    %203 = arith.addf %201, %202 : vector<8x128xf32>
    %204 = math.tanh %203 : vector<8x128xf32>
    %205 = arith.mulf %200, %204 : vector<8x128xf32>
    %206 = arith.index_cast %176 : i32 to index
    %c0_58 = arith.constant 0 : index
    %207 = vector.load %arg20[%206, %c0_58] : memref<64x128xf32, #tpu.memory_space<vmem>>, vector<8x128xf32>
    tpu.vector_store %arg20[%206, %c0_58], %205 {strides = array<i32>} : memref<64x128xf32, #tpu.memory_space<vmem>>, vector<8x128xf32>,
    %c6_i32 = arith.constant 6 : i32
    %c8_i32_59 = arith.constant 8 : i32
    %208 = arith.muli %c6_i32, %c8_i32_59 : i32
    %209 = arith.index_cast %208 : i32 to index
    %c0_60 = arith.constant 0 : index
    %210 = vector.load %arg16[%209, %c0_60] : memref<64x512xf32, #tpu.memory_space<vmem>>, vector<8x512xf32>
    %cst_61 = arith.constant dense<0.000000e+00> : vector<8x512xf32>
    %211 = tpu.matmul %205, %13, %cst_61 {dimension_numbers = #tpu.dot_dimension_numbers<[1], [0], [0], [1], [0, 0, 1, 1], [], []>} : vector<8x128xf32>, vector<128x512xf32>, vector<8x512xf32> -> vector<8x512xf32>
    %212 = arith.addf %210, %211 : vector<8x512xf32>
    %213 = vector.extract_strided_slice %212 {offsets = [0, 0], sizes = [8, 128], strides = [1, 1]} : vector<8x512xf32> to vector<8x128xf32>
    %214 = arith.negf %213 : vector<8x128xf32>
    %215 = math.exp %214 : vector<8x128xf32>
    %cst_62 = arith.constant 1.000000e+00 : f32
    %216 = vector.broadcast %cst_62 : f32 to vector<8x128xf32>
    %217 = arith.addf %216, %215 : vector<8x128xf32>
    %218 = arith.divf %216, %217 : vector<8x128xf32>
    %219 = vector.extract_strided_slice %212 {offsets = [0, 128], sizes = [8, 128], strides = [1, 1]} : vector<8x512xf32> to vector<8x128xf32>
    %220 = arith.negf %219 : vector<8x128xf32>
    %221 = math.exp %220 : vector<8x128xf32>
    %cst_63 = arith.constant 1.000000e+00 : f32
    %222 = vector.broadcast %cst_63 : f32 to vector<8x128xf32>
    %223 = arith.addf %222, %221 : vector<8x128xf32>
    %224 = arith.divf %222, %223 : vector<8x128xf32>
    %225 = vector.extract_strided_slice %212 {offsets = [0, 256], sizes = [8, 128], strides = [1, 1]} : vector<8x512xf32> to vector<8x128xf32>
    %226 = math.tanh %225 : vector<8x128xf32>
    %227 = vector.extract_strided_slice %212 {offsets = [0, 384], sizes = [8, 128], strides = [1, 1]} : vector<8x512xf32> to vector<8x128xf32>
    %228 = arith.negf %227 : vector<8x128xf32>
    %229 = math.exp %228 : vector<8x128xf32>
    %cst_64 = arith.constant 1.000000e+00 : f32
    %230 = vector.broadcast %cst_64 : f32 to vector<8x128xf32>
    %231 = arith.addf %230, %229 : vector<8x128xf32>
    %232 = arith.divf %230, %231 : vector<8x128xf32>
    %233 = arith.mulf %224, %203 : vector<8x128xf32>
    %234 = arith.mulf %218, %226 : vector<8x128xf32>
    %235 = arith.addf %233, %234 : vector<8x128xf32>
    %236 = math.tanh %235 : vector<8x128xf32>
    %237 = arith.mulf %232, %236 : vector<8x128xf32>
    %238 = arith.index_cast %208 : i32 to index
    %c0_65 = arith.constant 0 : index
    %239 = vector.load %arg20[%238, %c0_65] : memref<64x128xf32, #tpu.memory_space<vmem>>, vector<8x128xf32>
    tpu.vector_store %arg20[%238, %c0_65], %237 {strides = array<i32>} : memref<64x128xf32, #tpu.memory_space<vmem>>, vector<8x128xf32>,
    %c7_i32 = arith.constant 7 : i32
    %c8_i32_66 = arith.constant 8 : i32
    %240 = arith.muli %c7_i32, %c8_i32_66 : i32
    %241 = arith.index_cast %240 : i32 to index
    %c0_67 = arith.constant 0 : index
    %242 = vector.load %arg16[%241, %c0_67] : memref<64x512xf32, #tpu.memory_space<vmem>>, vector<8x512xf32>
    %cst_68 = arith.constant dense<0.000000e+00> : vector<8x512xf32>
    %243 = tpu.matmul %237, %13, %cst_68 {dimension_numbers = #tpu.dot_dimension_numbers<[1], [0], [0], [1], [0, 0, 1, 1], [], []>} : vector<8x128xf32>, vector<128x512xf32>, vector<8x512xf32> -> vector<8x512xf32>
    %244 = arith.addf %242, %243 : vector<8x512xf32>
    %245 = vector.extract_strided_slice %244 {offsets = [0, 0], sizes = [8, 128], strides = [1, 1]} : vector<8x512xf32> to vector<8x128xf32>
    %246 = arith.negf %245 : vector<8x128xf32>
    %247 = math.exp %246 : vector<8x128xf32>
    %cst_69 = arith.constant 1.000000e+00 : f32
    %248 = vector.broadcast %cst_69 : f32 to vector<8x128xf32>
    %249 = arith.addf %248, %247 : vector<8x128xf32>
    %250 = arith.divf %248, %249 : vector<8x128xf32>
    %251 = vector.extract_strided_slice %244 {offsets = [0, 128], sizes = [8, 128], strides = [1, 1]} : vector<8x512xf32> to vector<8x128xf32>
    %252 = arith.negf %251 : vector<8x128xf32>
    %253 = math.exp %252 : vector<8x128xf32>
    %cst_70 = arith.constant 1.000000e+00 : f32
    %254 = vector.broadcast %cst_70 : f32 to vector<8x128xf32>
    %255 = arith.addf %254, %253 : vector<8x128xf32>
    %256 = arith.divf %254, %255 : vector<8x128xf32>
    %257 = vector.extract_strided_slice %244 {offsets = [0, 256], sizes = [8, 128], strides = [1, 1]} : vector<8x512xf32> to vector<8x128xf32>
    %258 = math.tanh %257 : vector<8x128xf32>
    %259 = vector.extract_strided_slice %244 {offsets = [0, 384], sizes = [8, 128], strides = [1, 1]} : vector<8x512xf32> to vector<8x128xf32>
    %260 = arith.negf %259 : vector<8x128xf32>
    %261 = math.exp %260 : vector<8x128xf32>
    %cst_71 = arith.constant 1.000000e+00 : f32
    %262 = vector.broadcast %cst_71 : f32 to vector<8x128xf32>
    %263 = arith.addf %262, %261 : vector<8x128xf32>
    %264 = arith.divf %262, %263 : vector<8x128xf32>
    %265 = arith.mulf %256, %235 : vector<8x128xf32>
    %266 = arith.mulf %250, %258 : vector<8x128xf32>
    %267 = arith.addf %265, %266 : vector<8x128xf32>
    %268 = math.tanh %267 : vector<8x128xf32>
    %269 = arith.mulf %264, %268 : vector<8x128xf32>
    %270 = arith.index_cast %240 : i32 to index
    %c0_72 = arith.constant 0 : index
    %271 = vector.load %arg20[%270, %c0_72] : memref<64x128xf32, #tpu.memory_space<vmem>>, vector<8x128xf32>
    tpu.vector_store %arg20[%270, %c0_72], %269 {strides = array<i32>} : memref<64x128xf32, #tpu.memory_space<vmem>>, vector<8x128xf32>,
    %c8_i32_73 = arith.constant 8 : i32
    %c0_74 = arith.constant 0 : index
    %c0_75 = arith.constant 0 : index
    %272 = vector.load %arg5[%c0_74, %c0_75] : memref<128x512xf32, #tpu.memory_space<vmem>>, vector<128x512xf32>
    %cst_76 = arith.constant 0.000000e+00 : f32
    %273 = vector.broadcast %cst_76 : f32 to vector<8x128xf32>
    %cst_77 = arith.constant 0.000000e+00 : f32
    %274 = vector.broadcast %cst_77 : f32 to vector<8x128xf32>
    %c0_i32_78 = arith.constant 0 : i32
    %c7_i32_79 = arith.constant 7 : i32
    %275 = arith.subi %c7_i32_79, %c0_i32_78 : i32
    %c8_i32_80 = arith.constant 8 : i32
    %276 = arith.muli %275, %c8_i32_80 : i32
    %277 = arith.index_cast %276 : i32 to index
    %c0_81 = arith.constant 0 : index
    %278 = vector.load %arg17[%277, %c0_81] : memref<64x512xf32, #tpu.memory_space<vmem>>, vector<8x512xf32>
    %cst_82 = arith.constant dense<0.000000e+00> : vector<8x512xf32>
    %279 = tpu.matmul %273, %272, %cst_82 {dimension_numbers = #tpu.dot_dimension_numbers<[1], [0], [0], [1], [0, 0, 1, 1], [], []>} : vector<8x128xf32>, vector<128x512xf32>, vector<8x512xf32> -> vector<8x512xf32>
    %280 = arith.addf %278, %279 : vector<8x512xf32>
    %281 = vector.extract_strided_slice %280 {offsets = [0, 0], sizes = [8, 128], strides = [1, 1]} : vector<8x512xf32> to vector<8x128xf32>
    %282 = arith.negf %281 : vector<8x128xf32>
    %283 = math.exp %282 : vector<8x128xf32>
    %cst_83 = arith.constant 1.000000e+00 : f32
    %284 = vector.broadcast %cst_83 : f32 to vector<8x128xf32>
    %285 = arith.addf %284, %283 : vector<8x128xf32>
    %286 = arith.divf %284, %285 : vector<8x128xf32>
    %287 = vector.extract_strided_slice %280 {offsets = [0, 128], sizes = [8, 128], strides = [1, 1]} : vector<8x512xf32> to vector<8x128xf32>
    %288 = arith.negf %287 : vector<8x128xf32>
    %289 = math.exp %288 : vector<8x128xf32>
    %cst_84 = arith.constant 1.000000e+00 : f32
    %290 = vector.broadcast %cst_84 : f32 to vector<8x128xf32>
    %291 = arith.addf %290, %289 : vector<8x128xf32>
    %292 = arith.divf %290, %291 : vector<8x128xf32>
    %293 = vector.extract_strided_slice %280 {offsets = [0, 256], sizes = [8, 128], strides = [1, 1]} : vector<8x512xf32> to vector<8x128xf32>
    %294 = math.tanh %293 : vector<8x128xf32>
    %295 = vector.extract_strided_slice %280 {offsets = [0, 384], sizes = [8, 128], strides = [1, 1]} : vector<8x512xf32> to vector<8x128xf32>
    %296 = arith.negf %295 : vector<8x128xf32>
    %297 = math.exp %296 : vector<8x128xf32>
    %cst_85 = arith.constant 1.000000e+00 : f32
    %298 = vector.broadcast %cst_85 : f32 to vector<8x128xf32>
    %299 = arith.addf %298, %297 : vector<8x128xf32>
    %300 = arith.divf %298, %299 : vector<8x128xf32>
    %301 = arith.mulf %292, %274 : vector<8x128xf32>
    %302 = arith.mulf %286, %294 : vector<8x128xf32>
    %303 = arith.addf %301, %302 : vector<8x128xf32>
    %304 = math.tanh %303 : vector<8x128xf32>
    %305 = arith.mulf %300, %304 : vector<8x128xf32>
    %306 = arith.index_cast %276 : i32 to index
    %c0_86 = arith.constant 0 : index
    %307 = vector.load %arg21[%306, %c0_86] : memref<64x128xf32, #tpu.memory_space<vmem>>, vector<8x128xf32>
    tpu.vector_store %arg21[%306, %c0_86], %305 {strides = array<i32>} : memref<64x128xf32, #tpu.memory_space<vmem>>, vector<8x128xf32>,
    %c1_i32_87 = arith.constant 1 : i32
    %c7_i32_88 = arith.constant 7 : i32
    %308 = arith.subi %c7_i32_88, %c1_i32_87 : i32
    %c8_i32_89 = arith.constant 8 : i32
    %309 = arith.muli %308, %c8_i32_89 : i32
    %310 = arith.index_cast %309 : i32 to index
    %c0_90 = arith.constant 0 : index
    %311 = vector.load %arg17[%310, %c0_90] : memref<64x512xf32, #tpu.memory_space<vmem>>, vector<8x512xf32>
    %cst_91 = arith.constant dense<0.000000e+00> : vector<8x512xf32>
    %312 = tpu.matmul %305, %272, %cst_91 {dimension_numbers = #tpu.dot_dimension_numbers<[1], [0], [0], [1], [0, 0, 1, 1], [], []>} : vector<8x128xf32>, vector<128x512xf32>, vector<8x512xf32> -> vector<8x512xf32>
    %313 = arith.addf %311, %312 : vector<8x512xf32>
    %314 = vector.extract_strided_slice %313 {offsets = [0, 0], sizes = [8, 128], strides = [1, 1]} : vector<8x512xf32> to vector<8x128xf32>
    %315 = arith.negf %314 : vector<8x128xf32>
    %316 = math.exp %315 : vector<8x128xf32>
    %cst_92 = arith.constant 1.000000e+00 : f32
    %317 = vector.broadcast %cst_92 : f32 to vector<8x128xf32>
    %318 = arith.addf %317, %316 : vector<8x128xf32>
    %319 = arith.divf %317, %318 : vector<8x128xf32>
    %320 = vector.extract_strided_slice %313 {offsets = [0, 128], sizes = [8, 128], strides = [1, 1]} : vector<8x512xf32> to vector<8x128xf32>
    %321 = arith.negf %320 : vector<8x128xf32>
    %322 = math.exp %321 : vector<8x128xf32>
    %cst_93 = arith.constant 1.000000e+00 : f32
    %323 = vector.broadcast %cst_93 : f32 to vector<8x128xf32>
    %324 = arith.addf %323, %322 : vector<8x128xf32>
    %325 = arith.divf %323, %324 : vector<8x128xf32>
    %326 = vector.extract_strided_slice %313 {offsets = [0, 256], sizes = [8, 128], strides = [1, 1]} : vector<8x512xf32> to vector<8x128xf32>
    %327 = math.tanh %326 : vector<8x128xf32>
    %328 = vector.extract_strided_slice %313 {offsets = [0, 384], sizes = [8, 128], strides = [1, 1]} : vector<8x512xf32> to vector<8x128xf32>
    %329 = arith.negf %328 : vector<8x128xf32>
    %330 = math.exp %329 : vector<8x128xf32>
    %cst_94 = arith.constant 1.000000e+00 : f32
    %331 = vector.broadcast %cst_94 : f32 to vector<8x128xf32>
    %332 = arith.addf %331, %330 : vector<8x128xf32>
    %333 = arith.divf %331, %332 : vector<8x128xf32>
    %334 = arith.mulf %325, %303 : vector<8x128xf32>
    %335 = arith.mulf %319, %327 : vector<8x128xf32>
    %336 = arith.addf %334, %335 : vector<8x128xf32>
    %337 = math.tanh %336 : vector<8x128xf32>
    %338 = arith.mulf %333, %337 : vector<8x128xf32>
    %339 = arith.index_cast %309 : i32 to index
    %c0_95 = arith.constant 0 : index
    %340 = vector.load %arg21[%339, %c0_95] : memref<64x128xf32, #tpu.memory_space<vmem>>, vector<8x128xf32>
    tpu.vector_store %arg21[%339, %c0_95], %338 {strides = array<i32>} : memref<64x128xf32, #tpu.memory_space<vmem>>, vector<8x128xf32>,
    %c2_i32_96 = arith.constant 2 : i32
    %c7_i32_97 = arith.constant 7 : i32
    %341 = arith.subi %c7_i32_97, %c2_i32_96 : i32
    %c8_i32_98 = arith.constant 8 : i32
    %342 = arith.muli %341, %c8_i32_98 : i32
    %343 = arith.index_cast %342 : i32 to index
    %c0_99 = arith.constant 0 : index
    %344 = vector.load %arg17[%343, %c0_99] : memref<64x512xf32, #tpu.memory_space<vmem>>, vector<8x512xf32>
    %cst_100 = arith.constant dense<0.000000e+00> : vector<8x512xf32>
    %345 = tpu.matmul %338, %272, %cst_100 {dimension_numbers = #tpu.dot_dimension_numbers<[1], [0], [0], [1], [0, 0, 1, 1], [], []>} : vector<8x128xf32>, vector<128x512xf32>, vector<8x512xf32> -> vector<8x512xf32>
    %346 = arith.addf %344, %345 : vector<8x512xf32>
    %347 = vector.extract_strided_slice %346 {offsets = [0, 0], sizes = [8, 128], strides = [1, 1]} : vector<8x512xf32> to vector<8x128xf32>
    %348 = arith.negf %347 : vector<8x128xf32>
    %349 = math.exp %348 : vector<8x128xf32>
    %cst_101 = arith.constant 1.000000e+00 : f32
    %350 = vector.broadcast %cst_101 : f32 to vector<8x128xf32>
    %351 = arith.addf %350, %349 : vector<8x128xf32>
    %352 = arith.divf %350, %351 : vector<8x128xf32>
    %353 = vector.extract_strided_slice %346 {offsets = [0, 128], sizes = [8, 128], strides = [1, 1]} : vector<8x512xf32> to vector<8x128xf32>
    %354 = arith.negf %353 : vector<8x128xf32>
    %355 = math.exp %354 : vector<8x128xf32>
    %cst_102 = arith.constant 1.000000e+00 : f32
    %356 = vector.broadcast %cst_102 : f32 to vector<8x128xf32>
    %357 = arith.addf %356, %355 : vector<8x128xf32>
    %358 = arith.divf %356, %357 : vector<8x128xf32>
    %359 = vector.extract_strided_slice %346 {offsets = [0, 256], sizes = [8, 128], strides = [1, 1]} : vector<8x512xf32> to vector<8x128xf32>
    %360 = math.tanh %359 : vector<8x128xf32>
    %361 = vector.extract_strided_slice %346 {offsets = [0, 384], sizes = [8, 128], strides = [1, 1]} : vector<8x512xf32> to vector<8x128xf32>
    %362 = arith.negf %361 : vector<8x128xf32>
    %363 = math.exp %362 : vector<8x128xf32>
    %cst_103 = arith.constant 1.000000e+00 : f32
    %364 = vector.broadcast %cst_103 : f32 to vector<8x128xf32>
    %365 = arith.addf %364, %363 : vector<8x128xf32>
    %366 = arith.divf %364, %365 : vector<8x128xf32>
    %367 = arith.mulf %358, %336 : vector<8x128xf32>
    %368 = arith.mulf %352, %360 : vector<8x128xf32>
    %369 = arith.addf %367, %368 : vector<8x128xf32>
    %370 = math.tanh %369 : vector<8x128xf32>
    %371 = arith.mulf %366, %370 : vector<8x128xf32>
    %372 = arith.index_cast %342 : i32 to index
    %c0_104 = arith.constant 0 : index
    %373 = vector.load %arg21[%372, %c0_104] : memref<64x128xf32, #tpu.memory_space<vmem>>, vector<8x128xf32>
    tpu.vector_store %arg21[%372, %c0_104], %371 {strides = array<i32>} : memref<64x128xf32, #tpu.memory_space<vmem>>, vector<8x128xf32>,
    %c3_i32_105 = arith.constant 3 : i32
    %c7_i32_106 = arith.constant 7 : i32
    %374 = arith.subi %c7_i32_106, %c3_i32_105 : i32
    %c8_i32_107 = arith.constant 8 : i32
    %375 = arith.muli %374, %c8_i32_107 : i32
    %376 = arith.index_cast %375 : i32 to index
    %c0_108 = arith.constant 0 : index
    %377 = vector.load %arg17[%376, %c0_108] : memref<64x512xf32, #tpu.memory_space<vmem>>, vector<8x512xf32>
    %cst_109 = arith.constant dense<0.000000e+00> : vector<8x512xf32>
    %378 = tpu.matmul %371, %272, %cst_109 {dimension_numbers = #tpu.dot_dimension_numbers<[1], [0], [0], [1], [0, 0, 1, 1], [], []>} : vector<8x128xf32>, vector<128x512xf32>, vector<8x512xf32> -> vector<8x512xf32>
    %379 = arith.addf %377, %378 : vector<8x512xf32>
    %380 = vector.extract_strided_slice %379 {offsets = [0, 0], sizes = [8, 128], strides = [1, 1]} : vector<8x512xf32> to vector<8x128xf32>
    %381 = arith.negf %380 : vector<8x128xf32>
    %382 = math.exp %381 : vector<8x128xf32>
    %cst_110 = arith.constant 1.000000e+00 : f32
    %383 = vector.broadcast %cst_110 : f32 to vector<8x128xf32>
    %384 = arith.addf %383, %382 : vector<8x128xf32>
    %385 = arith.divf %383, %384 : vector<8x128xf32>
    %386 = vector.extract_strided_slice %379 {offsets = [0, 128], sizes = [8, 128], strides = [1, 1]} : vector<8x512xf32> to vector<8x128xf32>
    %387 = arith.negf %386 : vector<8x128xf32>
    %388 = math.exp %387 : vector<8x128xf32>
    %cst_111 = arith.constant 1.000000e+00 : f32
    %389 = vector.broadcast %cst_111 : f32 to vector<8x128xf32>
    %390 = arith.addf %389, %388 : vector<8x128xf32>
    %391 = arith.divf %389, %390 : vector<8x128xf32>
    %392 = vector.extract_strided_slice %379 {offsets = [0, 256], sizes = [8, 128], strides = [1, 1]} : vector<8x512xf32> to vector<8x128xf32>
    %393 = math.tanh %392 : vector<8x128xf32>
    %394 = vector.extract_strided_slice %379 {offsets = [0, 384], sizes = [8, 128], strides = [1, 1]} : vector<8x512xf32> to vector<8x128xf32>
    %395 = arith.negf %394 : vector<8x128xf32>
    %396 = math.exp %395 : vector<8x128xf32>
    %cst_112 = arith.constant 1.000000e+00 : f32
    %397 = vector.broadcast %cst_112 : f32 to vector<8x128xf32>
    %398 = arith.addf %397, %396 : vector<8x128xf32>
    %399 = arith.divf %397, %398 : vector<8x128xf32>
    %400 = arith.mulf %391, %369 : vector<8x128xf32>
    %401 = arith.mulf %385, %393 : vector<8x128xf32>
    %402 = arith.addf %400, %401 : vector<8x128xf32>
    %403 = math.tanh %402 : vector<8x128xf32>
    %404 = arith.mulf %399, %403 : vector<8x128xf32>
    %405 = arith.index_cast %375 : i32 to index
    %c0_113 = arith.constant 0 : index
    %406 = vector.load %arg21[%405, %c0_113] : memref<64x128xf32, #tpu.memory_space<vmem>>, vector<8x128xf32>
    tpu.vector_store %arg21[%405, %c0_113], %404 {strides = array<i32>} : memref<64x128xf32, #tpu.memory_space<vmem>>, vector<8x128xf32>,
    %c4_i32_114 = arith.constant 4 : i32
    %c7_i32_115 = arith.constant 7 : i32
    %407 = arith.subi %c7_i32_115, %c4_i32_114 : i32
    %c8_i32_116 = arith.constant 8 : i32
    %408 = arith.muli %407, %c8_i32_116 : i32
    %409 = arith.index_cast %408 : i32 to index
    %c0_117 = arith.constant 0 : index
    %410 = vector.load %arg17[%409, %c0_117] : memref<64x512xf32, #tpu.memory_space<vmem>>, vector<8x512xf32>
    %cst_118 = arith.constant dense<0.000000e+00> : vector<8x512xf32>
    %411 = tpu.matmul %404, %272, %cst_118 {dimension_numbers = #tpu.dot_dimension_numbers<[1], [0], [0], [1], [0, 0, 1, 1], [], []>} : vector<8x128xf32>, vector<128x512xf32>, vector<8x512xf32> -> vector<8x512xf32>
    %412 = arith.addf %410, %411 : vector<8x512xf32>
    %413 = vector.extract_strided_slice %412 {offsets = [0, 0], sizes = [8, 128], strides = [1, 1]} : vector<8x512xf32> to vector<8x128xf32>
    %414 = arith.negf %413 : vector<8x128xf32>
    %415 = math.exp %414 : vector<8x128xf32>
    %cst_119 = arith.constant 1.000000e+00 : f32
    %416 = vector.broadcast %cst_119 : f32 to vector<8x128xf32>
    %417 = arith.addf %416, %415 : vector<8x128xf32>
    %418 = arith.divf %416, %417 : vector<8x128xf32>
    %419 = vector.extract_strided_slice %412 {offsets = [0, 128], sizes = [8, 128], strides = [1, 1]} : vector<8x512xf32> to vector<8x128xf32>
    %420 = arith.negf %419 : vector<8x128xf32>
    %421 = math.exp %420 : vector<8x128xf32>
    %cst_120 = arith.constant 1.000000e+00 : f32
    %422 = vector.broadcast %cst_120 : f32 to vector<8x128xf32>
    %423 = arith.addf %422, %421 : vector<8x128xf32>
    %424 = arith.divf %422, %423 : vector<8x128xf32>
    %425 = vector.extract_strided_slice %412 {offsets = [0, 256], sizes = [8, 128], strides = [1, 1]} : vector<8x512xf32> to vector<8x128xf32>
    %426 = math.tanh %425 : vector<8x128xf32>
    %427 = vector.extract_strided_slice %412 {offsets = [0, 384], sizes = [8, 128], strides = [1, 1]} : vector<8x512xf32> to vector<8x128xf32>
    %428 = arith.negf %427 : vector<8x128xf32>
    %429 = math.exp %428 : vector<8x128xf32>
    %cst_121 = arith.constant 1.000000e+00 : f32
    %430 = vector.broadcast %cst_121 : f32 to vector<8x128xf32>
    %431 = arith.addf %430, %429 : vector<8x128xf32>
    %432 = arith.divf %430, %431 : vector<8x128xf32>
    %433 = arith.mulf %424, %402 : vector<8x128xf32>
    %434 = arith.mulf %418, %426 : vector<8x128xf32>
    %435 = arith.addf %433, %434 : vector<8x128xf32>
    %436 = math.tanh %435 : vector<8x128xf32>
    %437 = arith.mulf %432, %436 : vector<8x128xf32>
    %438 = arith.index_cast %408 : i32 to index
    %c0_122 = arith.constant 0 : index
    %439 = vector.load %arg21[%438, %c0_122] : memref<64x128xf32, #tpu.memory_space<vmem>>, vector<8x128xf32>
    tpu.vector_store %arg21[%438, %c0_122], %437 {strides = array<i32>} : memref<64x128xf32, #tpu.memory_space<vmem>>, vector<8x128xf32>,
    %c5_i32_123 = arith.constant 5 : i32
    %c7_i32_124 = arith.constant 7 : i32
    %440 = arith.subi %c7_i32_124, %c5_i32_123 : i32
    %c8_i32_125 = arith.constant 8 : i32
    %441 = arith.muli %440, %c8_i32_125 : i32
    %442 = arith.index_cast %441 : i32 to index
    %c0_126 = arith.constant 0 : index
    %443 = vector.load %arg17[%442, %c0_126] : memref<64x512xf32, #tpu.memory_space<vmem>>, vector<8x512xf32>
    %cst_127 = arith.constant dense<0.000000e+00> : vector<8x512xf32>
    %444 = tpu.matmul %437, %272, %cst_127 {dimension_numbers = #tpu.dot_dimension_numbers<[1], [0], [0], [1], [0, 0, 1, 1], [], []>} : vector<8x128xf32>, vector<128x512xf32>, vector<8x512xf32> -> vector<8x512xf32>
    %445 = arith.addf %443, %444 : vector<8x512xf32>
    %446 = vector.extract_strided_slice %445 {offsets = [0, 0], sizes = [8, 128], strides = [1, 1]} : vector<8x512xf32> to vector<8x128xf32>
    %447 = arith.negf %446 : vector<8x128xf32>
    %448 = math.exp %447 : vector<8x128xf32>
    %cst_128 = arith.constant 1.000000e+00 : f32
    %449 = vector.broadcast %cst_128 : f32 to vector<8x128xf32>
    %450 = arith.addf %449, %448 : vector<8x128xf32>
    %451 = arith.divf %449, %450 : vector<8x128xf32>
    %452 = vector.extract_strided_slice %445 {offsets = [0, 128], sizes = [8, 128], strides = [1, 1]} : vector<8x512xf32> to vector<8x128xf32>
    %453 = arith.negf %452 : vector<8x128xf32>
    %454 = math.exp %453 : vector<8x128xf32>
    %cst_129 = arith.constant 1.000000e+00 : f32
    %455 = vector.broadcast %cst_129 : f32 to vector<8x128xf32>
    %456 = arith.addf %455, %454 : vector<8x128xf32>
    %457 = arith.divf %455, %456 : vector<8x128xf32>
    %458 = vector.extract_strided_slice %445 {offsets = [0, 256], sizes = [8, 128], strides = [1, 1]} : vector<8x512xf32> to vector<8x128xf32>
    %459 = math.tanh %458 : vector<8x128xf32>
    %460 = vector.extract_strided_slice %445 {offsets = [0, 384], sizes = [8, 128], strides = [1, 1]} : vector<8x512xf32> to vector<8x128xf32>
    %461 = arith.negf %460 : vector<8x128xf32>
    %462 = math.exp %461 : vector<8x128xf32>
    %cst_130 = arith.constant 1.000000e+00 : f32
    %463 = vector.broadcast %cst_130 : f32 to vector<8x128xf32>
    %464 = arith.addf %463, %462 : vector<8x128xf32>
    %465 = arith.divf %463, %464 : vector<8x128xf32>
    %466 = arith.mulf %457, %435 : vector<8x128xf32>
    %467 = arith.mulf %451, %459 : vector<8x128xf32>
    %468 = arith.addf %466, %467 : vector<8x128xf32>
    %469 = math.tanh %468 : vector<8x128xf32>
    %470 = arith.mulf %465, %469 : vector<8x128xf32>
    %471 = arith.index_cast %441 : i32 to index
    %c0_131 = arith.constant 0 : index
    %472 = vector.load %arg21[%471, %c0_131] : memref<64x128xf32, #tpu.memory_space<vmem>>, vector<8x128xf32>
    tpu.vector_store %arg21[%471, %c0_131], %470 {strides = array<i32>} : memref<64x128xf32, #tpu.memory_space<vmem>>, vector<8x128xf32>,
    %c6_i32_132 = arith.constant 6 : i32
    %c7_i32_133 = arith.constant 7 : i32
    %473 = arith.subi %c7_i32_133, %c6_i32_132 : i32
    %c8_i32_134 = arith.constant 8 : i32
    %474 = arith.muli %473, %c8_i32_134 : i32
    %475 = arith.index_cast %474 : i32 to index
    %c0_135 = arith.constant 0 : index
    %476 = vector.load %arg17[%475, %c0_135] : memref<64x512xf32, #tpu.memory_space<vmem>>, vector<8x512xf32>
    %cst_136 = arith.constant dense<0.000000e+00> : vector<8x512xf32>
    %477 = tpu.matmul %470, %272, %cst_136 {dimension_numbers = #tpu.dot_dimension_numbers<[1], [0], [0], [1], [0, 0, 1, 1], [], []>} : vector<8x128xf32>, vector<128x512xf32>, vector<8x512xf32> -> vector<8x512xf32>
    %478 = arith.addf %476, %477 : vector<8x512xf32>
    %479 = vector.extract_strided_slice %478 {offsets = [0, 0], sizes = [8, 128], strides = [1, 1]} : vector<8x512xf32> to vector<8x128xf32>
    %480 = arith.negf %479 : vector<8x128xf32>
    %481 = math.exp %480 : vector<8x128xf32>
    %cst_137 = arith.constant 1.000000e+00 : f32
    %482 = vector.broadcast %cst_137 : f32 to vector<8x128xf32>
    %483 = arith.addf %482, %481 : vector<8x128xf32>
    %484 = arith.divf %482, %483 : vector<8x128xf32>
    %485 = vector.extract_strided_slice %478 {offsets = [0, 128], sizes = [8, 128], strides = [1, 1]} : vector<8x512xf32> to vector<8x128xf32>
    %486 = arith.negf %485 : vector<8x128xf32>
    %487 = math.exp %486 : vector<8x128xf32>
    %cst_138 = arith.constant 1.000000e+00 : f32
    %488 = vector.broadcast %cst_138 : f32 to vector<8x128xf32>
    %489 = arith.addf %488, %487 : vector<8x128xf32>
    %490 = arith.divf %488, %489 : vector<8x128xf32>
    %491 = vector.extract_strided_slice %478 {offsets = [0, 256], sizes = [8, 128], strides = [1, 1]} : vector<8x512xf32> to vector<8x128xf32>
    %492 = math.tanh %491 : vector<8x128xf32>
    %493 = vector.extract_strided_slice %478 {offsets = [0, 384], sizes = [8, 128], strides = [1, 1]} : vector<8x512xf32> to vector<8x128xf32>
    %494 = arith.negf %493 : vector<8x128xf32>
    %495 = math.exp %494 : vector<8x128xf32>
    %cst_139 = arith.constant 1.000000e+00 : f32
    %496 = vector.broadcast %cst_139 : f32 to vector<8x128xf32>
    %497 = arith.addf %496, %495 : vector<8x128xf32>
    %498 = arith.divf %496, %497 : vector<8x128xf32>
    %499 = arith.mulf %490, %468 : vector<8x128xf32>
    %500 = arith.mulf %484, %492 : vector<8x128xf32>
    %501 = arith.addf %499, %500 : vector<8x128xf32>
    %502 = math.tanh %501 : vector<8x128xf32>
    %503 = arith.mulf %498, %502 : vector<8x128xf32>
    %504 = arith.index_cast %474 : i32 to index
    %c0_140 = arith.constant 0 : index
    %505 = vector.load %arg21[%504, %c0_140] : memref<64x128xf32, #tpu.memory_space<vmem>>, vector<8x128xf32>
    tpu.vector_store %arg21[%504, %c0_140], %503 {strides = array<i32>} : memref<64x128xf32, #tpu.memory_space<vmem>>, vector<8x128xf32>,
    %c7_i32_141 = arith.constant 7 : i32
    %c7_i32_142 = arith.constant 7 : i32
    %506 = arith.subi %c7_i32_142, %c7_i32_141 : i32
    %c8_i32_143 = arith.constant 8 : i32
    %507 = arith.muli %506, %c8_i32_143 : i32
    %508 = arith.index_cast %507 : i32 to index
    %c0_144 = arith.constant 0 : index
    %509 = vector.load %arg17[%508, %c0_144] : memref<64x512xf32, #tpu.memory_space<vmem>>, vector<8x512xf32>
    %cst_145 = arith.constant dense<0.000000e+00> : vector<8x512xf32>
    %510 = tpu.matmul %503, %272, %cst_145 {dimension_numbers = #tpu.dot_dimension_numbers<[1], [0], [0], [1], [0, 0, 1, 1], [], []>} : vector<8x128xf32>, vector<128x512xf32>, vector<8x512xf32> -> vector<8x512xf32>
    %511 = arith.addf %509, %510 : vector<8x512xf32>
    %512 = vector.extract_strided_slice %511 {offsets = [0, 0], sizes = [8, 128], strides = [1, 1]} : vector<8x512xf32> to vector<8x128xf32>
    %513 = arith.negf %512 : vector<8x128xf32>
    %514 = math.exp %513 : vector<8x128xf32>
    %cst_146 = arith.constant 1.000000e+00 : f32
    %515 = vector.broadcast %cst_146 : f32 to vector<8x128xf32>
    %516 = arith.addf %515, %514 : vector<8x128xf32>
    %517 = arith.divf %515, %516 : vector<8x128xf32>
    %518 = vector.extract_strided_slice %511 {offsets = [0, 128], sizes = [8, 128], strides = [1, 1]} : vector<8x512xf32> to vector<8x128xf32>
    %519 = arith.negf %518 : vector<8x128xf32>
    %520 = math.exp %519 : vector<8x128xf32>
    %cst_147 = arith.constant 1.000000e+00 : f32
    %521 = vector.broadcast %cst_147 : f32 to vector<8x128xf32>
    %522 = arith.addf %521, %520 : vector<8x128xf32>
    %523 = arith.divf %521, %522 : vector<8x128xf32>
    %524 = vector.extract_strided_slice %511 {offsets = [0, 256], sizes = [8, 128], strides = [1, 1]} : vector<8x512xf32> to vector<8x128xf32>
    %525 = math.tanh %524 : vector<8x128xf32>
    %526 = vector.extract_strided_slice %511 {offsets = [0, 384], sizes = [8, 128], strides = [1, 1]} : vector<8x512xf32> to vector<8x128xf32>
    %527 = arith.negf %526 : vector<8x128xf32>
    %528 = math.exp %527 : vector<8x128xf32>
    %cst_148 = arith.constant 1.000000e+00 : f32
    %529 = vector.broadcast %cst_148 : f32 to vector<8x128xf32>
    %530 = arith.addf %529, %528 : vector<8x128xf32>
    %531 = arith.divf %529, %530 : vector<8x128xf32>
    %532 = arith.mulf %523, %501 : vector<8x128xf32>
    %533 = arith.mulf %517, %525 : vector<8x128xf32>
    %534 = arith.addf %532, %533 : vector<8x128xf32>
    %535 = math.tanh %534 : vector<8x128xf32>
    %536 = arith.mulf %531, %535 : vector<8x128xf32>
    %537 = arith.index_cast %507 : i32 to index
    %c0_149 = arith.constant 0 : index
    %538 = vector.load %arg21[%537, %c0_149] : memref<64x128xf32, #tpu.memory_space<vmem>>, vector<8x128xf32>
    tpu.vector_store %arg21[%537, %c0_149], %536 {strides = array<i32>} : memref<64x128xf32, #tpu.memory_space<vmem>>, vector<8x128xf32>,
    %c8_i32_150 = arith.constant 8 : i32
    %c0_151 = arith.constant 0 : index
    %c0_152 = arith.constant 0 : index
    %539 = vector.load %arg20[%c0_151, %c0_152] : memref<64x128xf32, #tpu.memory_space<vmem>>, vector<64x128xf32>
    %c0_153 = arith.constant 0 : index
    %c0_154 = arith.constant 0 : index
    %540 = vector.load %arg21[%c0_153, %c0_154] : memref<64x128xf32, #tpu.memory_space<vmem>>, vector<64x128xf32>
    %541 = tpu.concatenate %539, %540 in 1 : vector<64x128xf32>, vector<64x128xf32> -> vector<64x256xf32>
    %c0_155 = arith.constant 0 : index
    %c0_156 = arith.constant 0 : index
    %542 = vector.load %arg7[%c0_155, %c0_156] : memref<256x512xf32, #tpu.memory_space<vmem>>, vector<256x512xf32>
    %cst_157 = arith.constant dense<0.000000e+00> : vector<64x512xf32>
    %543 = tpu.matmul %541, %542, %cst_157 {dimension_numbers = #tpu.dot_dimension_numbers<[1], [0], [0], [1], [0, 0, 1, 1], [], []>} : vector<64x256xf32>, vector<256x512xf32>, vector<64x512xf32> -> vector<64x512xf32>
    %c0_158 = arith.constant 0 : index
    %c0_159 = arith.constant 0 : index
    %544 = vector.load %arg9[%c0_158, %c0_159] : memref<1x512xf32, #tpu.memory_space<vmem>>, vector<1x512xf32>
    %545 = vector.broadcast %544 : vector<1x512xf32> to vector<64x512xf32>
    %546 = arith.addf %543, %545 : vector<64x512xf32>
    %c0_160 = arith.constant 0 : index
    %c0_161 = arith.constant 0 : index
    %547 = vector.load %arg18[%c0_160, %c0_161] : memref<64x512xf32, #tpu.memory_space<vmem>>, vector<64x512xf32>
    tpu.vector_store %arg18[%c0_160, %c0_161], %546 {strides = array<i32>} : memref<64x512xf32, #tpu.memory_space<vmem>>, vector<64x512xf32>,
    %c0_162 = arith.constant 0 : index
    %c0_163 = arith.constant 0 : index
    %548 = vector.load %arg10[%c0_162, %c0_163] : memref<256x512xf32, #tpu.memory_space<vmem>>, vector<256x512xf32>
    %cst_164 = arith.constant dense<0.000000e+00> : vector<64x512xf32>
    %549 = tpu.matmul %541, %548, %cst_164 {dimension_numbers = #tpu.dot_dimension_numbers<[1], [0], [0], [1], [0, 0, 1, 1], [], []>} : vector<64x256xf32>, vector<256x512xf32>, vector<64x512xf32> -> vector<64x512xf32>
    %c0_165 = arith.constant 0 : index
    %c0_166 = arith.constant 0 : index
    %550 = vector.load %arg12[%c0_165, %c0_166] : memref<1x512xf32, #tpu.memory_space<vmem>>, vector<1x512xf32>
    %551 = vector.broadcast %550 : vector<1x512xf32> to vector<64x512xf32>
    %552 = arith.addf %549, %551 : vector<64x512xf32>
    %c0_167 = arith.constant 0 : index
    %c0_168 = arith.constant 0 : index
    %553 = vector.load %arg19[%c0_167, %c0_168] : memref<64x512xf32, #tpu.memory_space<vmem>>, vector<64x512xf32>
    tpu.vector_store %arg19[%c0_167, %c0_168], %552 {strides = array<i32>} : memref<64x512xf32, #tpu.memory_space<vmem>>, vector<64x512xf32>,
    %c0_169 = arith.constant 0 : index
    %c0_170 = arith.constant 0 : index
    %554 = vector.load %arg8[%c0_169, %c0_170] : memref<128x512xf32, #tpu.memory_space<vmem>>, vector<128x512xf32>
    %cst_171 = arith.constant 0.000000e+00 : f32
    %555 = vector.broadcast %cst_171 : f32 to vector<8x128xf32>
    %cst_172 = arith.constant 0.000000e+00 : f32
    %556 = vector.broadcast %cst_172 : f32 to vector<8x128xf32>
    %c0_i32_173 = arith.constant 0 : i32
    %c8_i32_174 = arith.constant 8 : i32
    %557 = arith.muli %c0_i32_173, %c8_i32_174 : i32
    %558 = arith.index_cast %557 : i32 to index
    %c0_175 = arith.constant 0 : index
    %559 = vector.load %arg18[%558, %c0_175] : memref<64x512xf32, #tpu.memory_space<vmem>>, vector<8x512xf32>
    %cst_176 = arith.constant dense<0.000000e+00> : vector<8x512xf32>
    %560 = tpu.matmul %555, %554, %cst_176 {dimension_numbers = #tpu.dot_dimension_numbers<[1], [0], [0], [1], [0, 0, 1, 1], [], []>} : vector<8x128xf32>, vector<128x512xf32>, vector<8x512xf32> -> vector<8x512xf32>
    %561 = arith.addf %559, %560 : vector<8x512xf32>
    %562 = vector.extract_strided_slice %561 {offsets = [0, 0], sizes = [8, 128], strides = [1, 1]} : vector<8x512xf32> to vector<8x128xf32>
    %563 = arith.negf %562 : vector<8x128xf32>
    %564 = math.exp %563 : vector<8x128xf32>
    %cst_177 = arith.constant 1.000000e+00 : f32
    %565 = vector.broadcast %cst_177 : f32 to vector<8x128xf32>
    %566 = arith.addf %565, %564 : vector<8x128xf32>
    %567 = arith.divf %565, %566 : vector<8x128xf32>
    %568 = vector.extract_strided_slice %561 {offsets = [0, 128], sizes = [8, 128], strides = [1, 1]} : vector<8x512xf32> to vector<8x128xf32>
    %569 = arith.negf %568 : vector<8x128xf32>
    %570 = math.exp %569 : vector<8x128xf32>
    %cst_178 = arith.constant 1.000000e+00 : f32
    %571 = vector.broadcast %cst_178 : f32 to vector<8x128xf32>
    %572 = arith.addf %571, %570 : vector<8x128xf32>
    %573 = arith.divf %571, %572 : vector<8x128xf32>
    %574 = vector.extract_strided_slice %561 {offsets = [0, 256], sizes = [8, 128], strides = [1, 1]} : vector<8x512xf32> to vector<8x128xf32>
    %575 = math.tanh %574 : vector<8x128xf32>
    %576 = vector.extract_strided_slice %561 {offsets = [0, 384], sizes = [8, 128], strides = [1, 1]} : vector<8x512xf32> to vector<8x128xf32>
    %577 = arith.negf %576 : vector<8x128xf32>
    %578 = math.exp %577 : vector<8x128xf32>
    %cst_179 = arith.constant 1.000000e+00 : f32
    %579 = vector.broadcast %cst_179 : f32 to vector<8x128xf32>
    %580 = arith.addf %579, %578 : vector<8x128xf32>
    %581 = arith.divf %579, %580 : vector<8x128xf32>
    %582 = arith.mulf %573, %556 : vector<8x128xf32>
    %583 = arith.mulf %567, %575 : vector<8x128xf32>
    %584 = arith.addf %582, %583 : vector<8x128xf32>
    %585 = math.tanh %584 : vector<8x128xf32>
    %586 = arith.mulf %581, %585 : vector<8x128xf32>
    %587 = arith.index_cast %557 : i32 to index
    %c0_180 = arith.constant 0 : index
    %588 = vector.load %arg22[%587, %c0_180] : memref<64x128xf32, #tpu.memory_space<vmem>>, vector<8x128xf32>
    tpu.vector_store %arg22[%587, %c0_180], %586 {strides = array<i32>} : memref<64x128xf32, #tpu.memory_space<vmem>>, vector<8x128xf32>,
    %c1_i32_181 = arith.constant 1 : i32
    %c8_i32_182 = arith.constant 8 : i32
    %589 = arith.muli %c1_i32_181, %c8_i32_182 : i32
    %590 = arith.index_cast %589 : i32 to index
    %c0_183 = arith.constant 0 : index
    %591 = vector.load %arg18[%590, %c0_183] : memref<64x512xf32, #tpu.memory_space<vmem>>, vector<8x512xf32>
    %cst_184 = arith.constant dense<0.000000e+00> : vector<8x512xf32>
    %592 = tpu.matmul %586, %554, %cst_184 {dimension_numbers = #tpu.dot_dimension_numbers<[1], [0], [0], [1], [0, 0, 1, 1], [], []>} : vector<8x128xf32>, vector<128x512xf32>, vector<8x512xf32> -> vector<8x512xf32>
    %593 = arith.addf %591, %592 : vector<8x512xf32>
    %594 = vector.extract_strided_slice %593 {offsets = [0, 0], sizes = [8, 128], strides = [1, 1]} : vector<8x512xf32> to vector<8x128xf32>
    %595 = arith.negf %594 : vector<8x128xf32>
    %596 = math.exp %595 : vector<8x128xf32>
    %cst_185 = arith.constant 1.000000e+00 : f32
    %597 = vector.broadcast %cst_185 : f32 to vector<8x128xf32>
    %598 = arith.addf %597, %596 : vector<8x128xf32>
    %599 = arith.divf %597, %598 : vector<8x128xf32>
    %600 = vector.extract_strided_slice %593 {offsets = [0, 128], sizes = [8, 128], strides = [1, 1]} : vector<8x512xf32> to vector<8x128xf32>
    %601 = arith.negf %600 : vector<8x128xf32>
    %602 = math.exp %601 : vector<8x128xf32>
    %cst_186 = arith.constant 1.000000e+00 : f32
    %603 = vector.broadcast %cst_186 : f32 to vector<8x128xf32>
    %604 = arith.addf %603, %602 : vector<8x128xf32>
    %605 = arith.divf %603, %604 : vector<8x128xf32>
    %606 = vector.extract_strided_slice %593 {offsets = [0, 256], sizes = [8, 128], strides = [1, 1]} : vector<8x512xf32> to vector<8x128xf32>
    %607 = math.tanh %606 : vector<8x128xf32>
    %608 = vector.extract_strided_slice %593 {offsets = [0, 384], sizes = [8, 128], strides = [1, 1]} : vector<8x512xf32> to vector<8x128xf32>
    %609 = arith.negf %608 : vector<8x128xf32>
    %610 = math.exp %609 : vector<8x128xf32>
    %cst_187 = arith.constant 1.000000e+00 : f32
    %611 = vector.broadcast %cst_187 : f32 to vector<8x128xf32>
    %612 = arith.addf %611, %610 : vector<8x128xf32>
    %613 = arith.divf %611, %612 : vector<8x128xf32>
    %614 = arith.mulf %605, %584 : vector<8x128xf32>
    %615 = arith.mulf %599, %607 : vector<8x128xf32>
    %616 = arith.addf %614, %615 : vector<8x128xf32>
    %617 = math.tanh %616 : vector<8x128xf32>
    %618 = arith.mulf %613, %617 : vector<8x128xf32>
    %619 = arith.index_cast %589 : i32 to index
    %c0_188 = arith.constant 0 : index
    %620 = vector.load %arg22[%619, %c0_188] : memref<64x128xf32, #tpu.memory_space<vmem>>, vector<8x128xf32>
    tpu.vector_store %arg22[%619, %c0_188], %618 {strides = array<i32>} : memref<64x128xf32, #tpu.memory_space<vmem>>, vector<8x128xf32>,
    %c2_i32_189 = arith.constant 2 : i32
    %c8_i32_190 = arith.constant 8 : i32
    %621 = arith.muli %c2_i32_189, %c8_i32_190 : i32
    %622 = arith.index_cast %621 : i32 to index
    %c0_191 = arith.constant 0 : index
    %623 = vector.load %arg18[%622, %c0_191] : memref<64x512xf32, #tpu.memory_space<vmem>>, vector<8x512xf32>
    %cst_192 = arith.constant dense<0.000000e+00> : vector<8x512xf32>
    %624 = tpu.matmul %618, %554, %cst_192 {dimension_numbers = #tpu.dot_dimension_numbers<[1], [0], [0], [1], [0, 0, 1, 1], [], []>} : vector<8x128xf32>, vector<128x512xf32>, vector<8x512xf32> -> vector<8x512xf32>
    %625 = arith.addf %623, %624 : vector<8x512xf32>
    %626 = vector.extract_strided_slice %625 {offsets = [0, 0], sizes = [8, 128], strides = [1, 1]} : vector<8x512xf32> to vector<8x128xf32>
    %627 = arith.negf %626 : vector<8x128xf32>
    %628 = math.exp %627 : vector<8x128xf32>
    %cst_193 = arith.constant 1.000000e+00 : f32
    %629 = vector.broadcast %cst_193 : f32 to vector<8x128xf32>
    %630 = arith.addf %629, %628 : vector<8x128xf32>
    %631 = arith.divf %629, %630 : vector<8x128xf32>
    %632 = vector.extract_strided_slice %625 {offsets = [0, 128], sizes = [8, 128], strides = [1, 1]} : vector<8x512xf32> to vector<8x128xf32>
    %633 = arith.negf %632 : vector<8x128xf32>
    %634 = math.exp %633 : vector<8x128xf32>
    %cst_194 = arith.constant 1.000000e+00 : f32
    %635 = vector.broadcast %cst_194 : f32 to vector<8x128xf32>
    %636 = arith.addf %635, %634 : vector<8x128xf32>
    %637 = arith.divf %635, %636 : vector<8x128xf32>
    %638 = vector.extract_strided_slice %625 {offsets = [0, 256], sizes = [8, 128], strides = [1, 1]} : vector<8x512xf32> to vector<8x128xf32>
    %639 = math.tanh %638 : vector<8x128xf32>
    %640 = vector.extract_strided_slice %625 {offsets = [0, 384], sizes = [8, 128], strides = [1, 1]} : vector<8x512xf32> to vector<8x128xf32>
    %641 = arith.negf %640 : vector<8x128xf32>
    %642 = math.exp %641 : vector<8x128xf32>
    %cst_195 = arith.constant 1.000000e+00 : f32
    %643 = vector.broadcast %cst_195 : f32 to vector<8x128xf32>
    %644 = arith.addf %643, %642 : vector<8x128xf32>
    %645 = arith.divf %643, %644 : vector<8x128xf32>
    %646 = arith.mulf %637, %616 : vector<8x128xf32>
    %647 = arith.mulf %631, %639 : vector<8x128xf32>
    %648 = arith.addf %646, %647 : vector<8x128xf32>
    %649 = math.tanh %648 : vector<8x128xf32>
    %650 = arith.mulf %645, %649 : vector<8x128xf32>
    %651 = arith.index_cast %621 : i32 to index
    %c0_196 = arith.constant 0 : index
    %652 = vector.load %arg22[%651, %c0_196] : memref<64x128xf32, #tpu.memory_space<vmem>>, vector<8x128xf32>
    tpu.vector_store %arg22[%651, %c0_196], %650 {strides = array<i32>} : memref<64x128xf32, #tpu.memory_space<vmem>>, vector<8x128xf32>,
    %c3_i32_197 = arith.constant 3 : i32
    %c8_i32_198 = arith.constant 8 : i32
    %653 = arith.muli %c3_i32_197, %c8_i32_198 : i32
    %654 = arith.index_cast %653 : i32 to index
    %c0_199 = arith.constant 0 : index
    %655 = vector.load %arg18[%654, %c0_199] : memref<64x512xf32, #tpu.memory_space<vmem>>, vector<8x512xf32>
    %cst_200 = arith.constant dense<0.000000e+00> : vector<8x512xf32>
    %656 = tpu.matmul %650, %554, %cst_200 {dimension_numbers = #tpu.dot_dimension_numbers<[1], [0], [0], [1], [0, 0, 1, 1], [], []>} : vector<8x128xf32>, vector<128x512xf32>, vector<8x512xf32> -> vector<8x512xf32>
    %657 = arith.addf %655, %656 : vector<8x512xf32>
    %658 = vector.extract_strided_slice %657 {offsets = [0, 0], sizes = [8, 128], strides = [1, 1]} : vector<8x512xf32> to vector<8x128xf32>
    %659 = arith.negf %658 : vector<8x128xf32>
    %660 = math.exp %659 : vector<8x128xf32>
    %cst_201 = arith.constant 1.000000e+00 : f32
    %661 = vector.broadcast %cst_201 : f32 to vector<8x128xf32>
    %662 = arith.addf %661, %660 : vector<8x128xf32>
    %663 = arith.divf %661, %662 : vector<8x128xf32>
    %664 = vector.extract_strided_slice %657 {offsets = [0, 128], sizes = [8, 128], strides = [1, 1]} : vector<8x512xf32> to vector<8x128xf32>
    %665 = arith.negf %664 : vector<8x128xf32>
    %666 = math.exp %665 : vector<8x128xf32>
    %cst_202 = arith.constant 1.000000e+00 : f32
    %667 = vector.broadcast %cst_202 : f32 to vector<8x128xf32>
    %668 = arith.addf %667, %666 : vector<8x128xf32>
    %669 = arith.divf %667, %668 : vector<8x128xf32>
    %670 = vector.extract_strided_slice %657 {offsets = [0, 256], sizes = [8, 128], strides = [1, 1]} : vector<8x512xf32> to vector<8x128xf32>
    %671 = math.tanh %670 : vector<8x128xf32>
    %672 = vector.extract_strided_slice %657 {offsets = [0, 384], sizes = [8, 128], strides = [1, 1]} : vector<8x512xf32> to vector<8x128xf32>
    %673 = arith.negf %672 : vector<8x128xf32>
    %674 = math.exp %673 : vector<8x128xf32>
    %cst_203 = arith.constant 1.000000e+00 : f32
    %675 = vector.broadcast %cst_203 : f32 to vector<8x128xf32>
    %676 = arith.addf %675, %674 : vector<8x128xf32>
    %677 = arith.divf %675, %676 : vector<8x128xf32>
    %678 = arith.mulf %669, %648 : vector<8x128xf32>
    %679 = arith.mulf %663, %671 : vector<8x128xf32>
    %680 = arith.addf %678, %679 : vector<8x128xf32>
    %681 = math.tanh %680 : vector<8x128xf32>
    %682 = arith.mulf %677, %681 : vector<8x128xf32>
    %683 = arith.index_cast %653 : i32 to index
    %c0_204 = arith.constant 0 : index
    %684 = vector.load %arg22[%683, %c0_204] : memref<64x128xf32, #tpu.memory_space<vmem>>, vector<8x128xf32>
    tpu.vector_store %arg22[%683, %c0_204], %682 {strides = array<i32>} : memref<64x128xf32, #tpu.memory_space<vmem>>, vector<8x128xf32>,
    %c4_i32_205 = arith.constant 4 : i32
    %c8_i32_206 = arith.constant 8 : i32
    %685 = arith.muli %c4_i32_205, %c8_i32_206 : i32
    %686 = arith.index_cast %685 : i32 to index
    %c0_207 = arith.constant 0 : index
    %687 = vector.load %arg18[%686, %c0_207] : memref<64x512xf32, #tpu.memory_space<vmem>>, vector<8x512xf32>
    %cst_208 = arith.constant dense<0.000000e+00> : vector<8x512xf32>
    %688 = tpu.matmul %682, %554, %cst_208 {dimension_numbers = #tpu.dot_dimension_numbers<[1], [0], [0], [1], [0, 0, 1, 1], [], []>} : vector<8x128xf32>, vector<128x512xf32>, vector<8x512xf32> -> vector<8x512xf32>
    %689 = arith.addf %687, %688 : vector<8x512xf32>
    %690 = vector.extract_strided_slice %689 {offsets = [0, 0], sizes = [8, 128], strides = [1, 1]} : vector<8x512xf32> to vector<8x128xf32>
    %691 = arith.negf %690 : vector<8x128xf32>
    %692 = math.exp %691 : vector<8x128xf32>
    %cst_209 = arith.constant 1.000000e+00 : f32
    %693 = vector.broadcast %cst_209 : f32 to vector<8x128xf32>
    %694 = arith.addf %693, %692 : vector<8x128xf32>
    %695 = arith.divf %693, %694 : vector<8x128xf32>
    %696 = vector.extract_strided_slice %689 {offsets = [0, 128], sizes = [8, 128], strides = [1, 1]} : vector<8x512xf32> to vector<8x128xf32>
    %697 = arith.negf %696 : vector<8x128xf32>
    %698 = math.exp %697 : vector<8x128xf32>
    %cst_210 = arith.constant 1.000000e+00 : f32
    %699 = vector.broadcast %cst_210 : f32 to vector<8x128xf32>
    %700 = arith.addf %699, %698 : vector<8x128xf32>
    %701 = arith.divf %699, %700 : vector<8x128xf32>
    %702 = vector.extract_strided_slice %689 {offsets = [0, 256], sizes = [8, 128], strides = [1, 1]} : vector<8x512xf32> to vector<8x128xf32>
    %703 = math.tanh %702 : vector<8x128xf32>
    %704 = vector.extract_strided_slice %689 {offsets = [0, 384], sizes = [8, 128], strides = [1, 1]} : vector<8x512xf32> to vector<8x128xf32>
    %705 = arith.negf %704 : vector<8x128xf32>
    %706 = math.exp %705 : vector<8x128xf32>
    %cst_211 = arith.constant 1.000000e+00 : f32
    %707 = vector.broadcast %cst_211 : f32 to vector<8x128xf32>
    %708 = arith.addf %707, %706 : vector<8x128xf32>
    %709 = arith.divf %707, %708 : vector<8x128xf32>
    %710 = arith.mulf %701, %680 : vector<8x128xf32>
    %711 = arith.mulf %695, %703 : vector<8x128xf32>
    %712 = arith.addf %710, %711 : vector<8x128xf32>
    %713 = math.tanh %712 : vector<8x128xf32>
    %714 = arith.mulf %709, %713 : vector<8x128xf32>
    %715 = arith.index_cast %685 : i32 to index
    %c0_212 = arith.constant 0 : index
    %716 = vector.load %arg22[%715, %c0_212] : memref<64x128xf32, #tpu.memory_space<vmem>>, vector<8x128xf32>
    tpu.vector_store %arg22[%715, %c0_212], %714 {strides = array<i32>} : memref<64x128xf32, #tpu.memory_space<vmem>>, vector<8x128xf32>,
    %c5_i32_213 = arith.constant 5 : i32
    %c8_i32_214 = arith.constant 8 : i32
    %717 = arith.muli %c5_i32_213, %c8_i32_214 : i32
    %718 = arith.index_cast %717 : i32 to index
    %c0_215 = arith.constant 0 : index
    %719 = vector.load %arg18[%718, %c0_215] : memref<64x512xf32, #tpu.memory_space<vmem>>, vector<8x512xf32>
    %cst_216 = arith.constant dense<0.000000e+00> : vector<8x512xf32>
    %720 = tpu.matmul %714, %554, %cst_216 {dimension_numbers = #tpu.dot_dimension_numbers<[1], [0], [0], [1], [0, 0, 1, 1], [], []>} : vector<8x128xf32>, vector<128x512xf32>, vector<8x512xf32> -> vector<8x512xf32>
    %721 = arith.addf %719, %720 : vector<8x512xf32>
    %722 = vector.extract_strided_slice %721 {offsets = [0, 0], sizes = [8, 128], strides = [1, 1]} : vector<8x512xf32> to vector<8x128xf32>
    %723 = arith.negf %722 : vector<8x128xf32>
    %724 = math.exp %723 : vector<8x128xf32>
    %cst_217 = arith.constant 1.000000e+00 : f32
    %725 = vector.broadcast %cst_217 : f32 to vector<8x128xf32>
    %726 = arith.addf %725, %724 : vector<8x128xf32>
    %727 = arith.divf %725, %726 : vector<8x128xf32>
    %728 = vector.extract_strided_slice %721 {offsets = [0, 128], sizes = [8, 128], strides = [1, 1]} : vector<8x512xf32> to vector<8x128xf32>
    %729 = arith.negf %728 : vector<8x128xf32>
    %730 = math.exp %729 : vector<8x128xf32>
    %cst_218 = arith.constant 1.000000e+00 : f32
    %731 = vector.broadcast %cst_218 : f32 to vector<8x128xf32>
    %732 = arith.addf %731, %730 : vector<8x128xf32>
    %733 = arith.divf %731, %732 : vector<8x128xf32>
    %734 = vector.extract_strided_slice %721 {offsets = [0, 256], sizes = [8, 128], strides = [1, 1]} : vector<8x512xf32> to vector<8x128xf32>
    %735 = math.tanh %734 : vector<8x128xf32>
    %736 = vector.extract_strided_slice %721 {offsets = [0, 384], sizes = [8, 128], strides = [1, 1]} : vector<8x512xf32> to vector<8x128xf32>
    %737 = arith.negf %736 : vector<8x128xf32>
    %738 = math.exp %737 : vector<8x128xf32>
    %cst_219 = arith.constant 1.000000e+00 : f32
    %739 = vector.broadcast %cst_219 : f32 to vector<8x128xf32>
    %740 = arith.addf %739, %738 : vector<8x128xf32>
    %741 = arith.divf %739, %740 : vector<8x128xf32>
    %742 = arith.mulf %733, %712 : vector<8x128xf32>
    %743 = arith.mulf %727, %735 : vector<8x128xf32>
    %744 = arith.addf %742, %743 : vector<8x128xf32>
    %745 = math.tanh %744 : vector<8x128xf32>
    %746 = arith.mulf %741, %745 : vector<8x128xf32>
    %747 = arith.index_cast %717 : i32 to index
    %c0_220 = arith.constant 0 : index
    %748 = vector.load %arg22[%747, %c0_220] : memref<64x128xf32, #tpu.memory_space<vmem>>, vector<8x128xf32>
    tpu.vector_store %arg22[%747, %c0_220], %746 {strides = array<i32>} : memref<64x128xf32, #tpu.memory_space<vmem>>, vector<8x128xf32>,
    %c6_i32_221 = arith.constant 6 : i32
    %c8_i32_222 = arith.constant 8 : i32
    %749 = arith.muli %c6_i32_221, %c8_i32_222 : i32
    %750 = arith.index_cast %749 : i32 to index
    %c0_223 = arith.constant 0 : index
    %751 = vector.load %arg18[%750, %c0_223] : memref<64x512xf32, #tpu.memory_space<vmem>>, vector<8x512xf32>
    %cst_224 = arith.constant dense<0.000000e+00> : vector<8x512xf32>
    %752 = tpu.matmul %746, %554, %cst_224 {dimension_numbers = #tpu.dot_dimension_numbers<[1], [0], [0], [1], [0, 0, 1, 1], [], []>} : vector<8x128xf32>, vector<128x512xf32>, vector<8x512xf32> -> vector<8x512xf32>
    %753 = arith.addf %751, %752 : vector<8x512xf32>
    %754 = vector.extract_strided_slice %753 {offsets = [0, 0], sizes = [8, 128], strides = [1, 1]} : vector<8x512xf32> to vector<8x128xf32>
    %755 = arith.negf %754 : vector<8x128xf32>
    %756 = math.exp %755 : vector<8x128xf32>
    %cst_225 = arith.constant 1.000000e+00 : f32
    %757 = vector.broadcast %cst_225 : f32 to vector<8x128xf32>
    %758 = arith.addf %757, %756 : vector<8x128xf32>
    %759 = arith.divf %757, %758 : vector<8x128xf32>
    %760 = vector.extract_strided_slice %753 {offsets = [0, 128], sizes = [8, 128], strides = [1, 1]} : vector<8x512xf32> to vector<8x128xf32>
    %761 = arith.negf %760 : vector<8x128xf32>
    %762 = math.exp %761 : vector<8x128xf32>
    %cst_226 = arith.constant 1.000000e+00 : f32
    %763 = vector.broadcast %cst_226 : f32 to vector<8x128xf32>
    %764 = arith.addf %763, %762 : vector<8x128xf32>
    %765 = arith.divf %763, %764 : vector<8x128xf32>
    %766 = vector.extract_strided_slice %753 {offsets = [0, 256], sizes = [8, 128], strides = [1, 1]} : vector<8x512xf32> to vector<8x128xf32>
    %767 = math.tanh %766 : vector<8x128xf32>
    %768 = vector.extract_strided_slice %753 {offsets = [0, 384], sizes = [8, 128], strides = [1, 1]} : vector<8x512xf32> to vector<8x128xf32>
    %769 = arith.negf %768 : vector<8x128xf32>
    %770 = math.exp %769 : vector<8x128xf32>
    %cst_227 = arith.constant 1.000000e+00 : f32
    %771 = vector.broadcast %cst_227 : f32 to vector<8x128xf32>
    %772 = arith.addf %771, %770 : vector<8x128xf32>
    %773 = arith.divf %771, %772 : vector<8x128xf32>
    %774 = arith.mulf %765, %744 : vector<8x128xf32>
    %775 = arith.mulf %759, %767 : vector<8x128xf32>
    %776 = arith.addf %774, %775 : vector<8x128xf32>
    %777 = math.tanh %776 : vector<8x128xf32>
    %778 = arith.mulf %773, %777 : vector<8x128xf32>
    %779 = arith.index_cast %749 : i32 to index
    %c0_228 = arith.constant 0 : index
    %780 = vector.load %arg22[%779, %c0_228] : memref<64x128xf32, #tpu.memory_space<vmem>>, vector<8x128xf32>
    tpu.vector_store %arg22[%779, %c0_228], %778 {strides = array<i32>} : memref<64x128xf32, #tpu.memory_space<vmem>>, vector<8x128xf32>,
    %c7_i32_229 = arith.constant 7 : i32
    %c8_i32_230 = arith.constant 8 : i32
    %781 = arith.muli %c7_i32_229, %c8_i32_230 : i32
    %782 = arith.index_cast %781 : i32 to index
    %c0_231 = arith.constant 0 : index
    %783 = vector.load %arg18[%782, %c0_231] : memref<64x512xf32, #tpu.memory_space<vmem>>, vector<8x512xf32>
    %cst_232 = arith.constant dense<0.000000e+00> : vector<8x512xf32>
    %784 = tpu.matmul %778, %554, %cst_232 {dimension_numbers = #tpu.dot_dimension_numbers<[1], [0], [0], [1], [0, 0, 1, 1], [], []>} : vector<8x128xf32>, vector<128x512xf32>, vector<8x512xf32> -> vector<8x512xf32>
    %785 = arith.addf %783, %784 : vector<8x512xf32>
    %786 = vector.extract_strided_slice %785 {offsets = [0, 0], sizes = [8, 128], strides = [1, 1]} : vector<8x512xf32> to vector<8x128xf32>
    %787 = arith.negf %786 : vector<8x128xf32>
    %788 = math.exp %787 : vector<8x128xf32>
    %cst_233 = arith.constant 1.000000e+00 : f32
    %789 = vector.broadcast %cst_233 : f32 to vector<8x128xf32>
    %790 = arith.addf %789, %788 : vector<8x128xf32>
    %791 = arith.divf %789, %790 : vector<8x128xf32>
    %792 = vector.extract_strided_slice %785 {offsets = [0, 128], sizes = [8, 128], strides = [1, 1]} : vector<8x512xf32> to vector<8x128xf32>
    %793 = arith.negf %792 : vector<8x128xf32>
    %794 = math.exp %793 : vector<8x128xf32>
    %cst_234 = arith.constant 1.000000e+00 : f32
    %795 = vector.broadcast %cst_234 : f32 to vector<8x128xf32>
    %796 = arith.addf %795, %794 : vector<8x128xf32>
    %797 = arith.divf %795, %796 : vector<8x128xf32>
    %798 = vector.extract_strided_slice %785 {offsets = [0, 256], sizes = [8, 128], strides = [1, 1]} : vector<8x512xf32> to vector<8x128xf32>
    %799 = math.tanh %798 : vector<8x128xf32>
    %800 = vector.extract_strided_slice %785 {offsets = [0, 384], sizes = [8, 128], strides = [1, 1]} : vector<8x512xf32> to vector<8x128xf32>
    %801 = arith.negf %800 : vector<8x128xf32>
    %802 = math.exp %801 : vector<8x128xf32>
    %cst_235 = arith.constant 1.000000e+00 : f32
    %803 = vector.broadcast %cst_235 : f32 to vector<8x128xf32>
    %804 = arith.addf %803, %802 : vector<8x128xf32>
    %805 = arith.divf %803, %804 : vector<8x128xf32>
    %806 = arith.mulf %797, %776 : vector<8x128xf32>
    %807 = arith.mulf %791, %799 : vector<8x128xf32>
    %808 = arith.addf %806, %807 : vector<8x128xf32>
    %809 = math.tanh %808 : vector<8x128xf32>
    %810 = arith.mulf %805, %809 : vector<8x128xf32>
    %811 = arith.index_cast %781 : i32 to index
    %c0_236 = arith.constant 0 : index
    %812 = vector.load %arg22[%811, %c0_236] : memref<64x128xf32, #tpu.memory_space<vmem>>, vector<8x128xf32>
    tpu.vector_store %arg22[%811, %c0_236], %810 {strides = array<i32>} : memref<64x128xf32, #tpu.memory_space<vmem>>, vector<8x128xf32>,
    %c8_i32_237 = arith.constant 8 : i32
    %c0_238 = arith.constant 0 : index
    %c0_239 = arith.constant 0 : index
    %813 = vector.load %arg11[%c0_238, %c0_239] : memref<128x512xf32, #tpu.memory_space<vmem>>, vector<128x512xf32>
    %cst_240 = arith.constant 0.000000e+00 : f32
    %814 = vector.broadcast %cst_240 : f32 to vector<8x128xf32>
    %cst_241 = arith.constant 0.000000e+00 : f32
    %815 = vector.broadcast %cst_241 : f32 to vector<8x128xf32>
    %c0_i32_242 = arith.constant 0 : i32
    %c7_i32_243 = arith.constant 7 : i32
    %816 = arith.subi %c7_i32_243, %c0_i32_242 : i32
    %c8_i32_244 = arith.constant 8 : i32
    %817 = arith.muli %816, %c8_i32_244 : i32
    %818 = arith.index_cast %817 : i32 to index
    %c0_245 = arith.constant 0 : index
    %819 = vector.load %arg19[%818, %c0_245] : memref<64x512xf32, #tpu.memory_space<vmem>>, vector<8x512xf32>
    %cst_246 = arith.constant dense<0.000000e+00> : vector<8x512xf32>
    %820 = tpu.matmul %814, %813, %cst_246 {dimension_numbers = #tpu.dot_dimension_numbers<[1], [0], [0], [1], [0, 0, 1, 1], [], []>} : vector<8x128xf32>, vector<128x512xf32>, vector<8x512xf32> -> vector<8x512xf32>
    %821 = arith.addf %819, %820 : vector<8x512xf32>
    %822 = vector.extract_strided_slice %821 {offsets = [0, 0], sizes = [8, 128], strides = [1, 1]} : vector<8x512xf32> to vector<8x128xf32>
    %823 = arith.negf %822 : vector<8x128xf32>
    %824 = math.exp %823 : vector<8x128xf32>
    %cst_247 = arith.constant 1.000000e+00 : f32
    %825 = vector.broadcast %cst_247 : f32 to vector<8x128xf32>
    %826 = arith.addf %825, %824 : vector<8x128xf32>
    %827 = arith.divf %825, %826 : vector<8x128xf32>
    %828 = vector.extract_strided_slice %821 {offsets = [0, 128], sizes = [8, 128], strides = [1, 1]} : vector<8x512xf32> to vector<8x128xf32>
    %829 = arith.negf %828 : vector<8x128xf32>
    %830 = math.exp %829 : vector<8x128xf32>
    %cst_248 = arith.constant 1.000000e+00 : f32
    %831 = vector.broadcast %cst_248 : f32 to vector<8x128xf32>
    %832 = arith.addf %831, %830 : vector<8x128xf32>
    %833 = arith.divf %831, %832 : vector<8x128xf32>
    %834 = vector.extract_strided_slice %821 {offsets = [0, 256], sizes = [8, 128], strides = [1, 1]} : vector<8x512xf32> to vector<8x128xf32>
    %835 = math.tanh %834 : vector<8x128xf32>
    %836 = vector.extract_strided_slice %821 {offsets = [0, 384], sizes = [8, 128], strides = [1, 1]} : vector<8x512xf32> to vector<8x128xf32>
    %837 = arith.negf %836 : vector<8x128xf32>
    %838 = math.exp %837 : vector<8x128xf32>
    %cst_249 = arith.constant 1.000000e+00 : f32
    %839 = vector.broadcast %cst_249 : f32 to vector<8x128xf32>
    %840 = arith.addf %839, %838 : vector<8x128xf32>
    %841 = arith.divf %839, %840 : vector<8x128xf32>
    %842 = arith.mulf %833, %815 : vector<8x128xf32>
    %843 = arith.mulf %827, %835 : vector<8x128xf32>
    %844 = arith.addf %842, %843 : vector<8x128xf32>
    %845 = math.tanh %844 : vector<8x128xf32>
    %846 = arith.mulf %841, %845 : vector<8x128xf32>
    %847 = arith.index_cast %817 : i32 to index
    %c0_250 = arith.constant 0 : index
    %848 = vector.load %arg23[%847, %c0_250] : memref<64x128xf32, #tpu.memory_space<vmem>>, vector<8x128xf32>
    tpu.vector_store %arg23[%847, %c0_250], %846 {strides = array<i32>} : memref<64x128xf32, #tpu.memory_space<vmem>>, vector<8x128xf32>,
    %c1_i32_251 = arith.constant 1 : i32
    %c7_i32_252 = arith.constant 7 : i32
    %849 = arith.subi %c7_i32_252, %c1_i32_251 : i32
    %c8_i32_253 = arith.constant 8 : i32
    %850 = arith.muli %849, %c8_i32_253 : i32
    %851 = arith.index_cast %850 : i32 to index
    %c0_254 = arith.constant 0 : index
    %852 = vector.load %arg19[%851, %c0_254] : memref<64x512xf32, #tpu.memory_space<vmem>>, vector<8x512xf32>
    %cst_255 = arith.constant dense<0.000000e+00> : vector<8x512xf32>
    %853 = tpu.matmul %846, %813, %cst_255 {dimension_numbers = #tpu.dot_dimension_numbers<[1], [0], [0], [1], [0, 0, 1, 1], [], []>} : vector<8x128xf32>, vector<128x512xf32>, vector<8x512xf32> -> vector<8x512xf32>
    %854 = arith.addf %852, %853 : vector<8x512xf32>
    %855 = vector.extract_strided_slice %854 {offsets = [0, 0], sizes = [8, 128], strides = [1, 1]} : vector<8x512xf32> to vector<8x128xf32>
    %856 = arith.negf %855 : vector<8x128xf32>
    %857 = math.exp %856 : vector<8x128xf32>
    %cst_256 = arith.constant 1.000000e+00 : f32
    %858 = vector.broadcast %cst_256 : f32 to vector<8x128xf32>
    %859 = arith.addf %858, %857 : vector<8x128xf32>
    %860 = arith.divf %858, %859 : vector<8x128xf32>
    %861 = vector.extract_strided_slice %854 {offsets = [0, 128], sizes = [8, 128], strides = [1, 1]} : vector<8x512xf32> to vector<8x128xf32>
    %862 = arith.negf %861 : vector<8x128xf32>
    %863 = math.exp %862 : vector<8x128xf32>
    %cst_257 = arith.constant 1.000000e+00 : f32
    %864 = vector.broadcast %cst_257 : f32 to vector<8x128xf32>
    %865 = arith.addf %864, %863 : vector<8x128xf32>
    %866 = arith.divf %864, %865 : vector<8x128xf32>
    %867 = vector.extract_strided_slice %854 {offsets = [0, 256], sizes = [8, 128], strides = [1, 1]} : vector<8x512xf32> to vector<8x128xf32>
    %868 = math.tanh %867 : vector<8x128xf32>
    %869 = vector.extract_strided_slice %854 {offsets = [0, 384], sizes = [8, 128], strides = [1, 1]} : vector<8x512xf32> to vector<8x128xf32>
    %870 = arith.negf %869 : vector<8x128xf32>
    %871 = math.exp %870 : vector<8x128xf32>
    %cst_258 = arith.constant 1.000000e+00 : f32
    %872 = vector.broadcast %cst_258 : f32 to vector<8x128xf32>
    %873 = arith.addf %872, %871 : vector<8x128xf32>
    %874 = arith.divf %872, %873 : vector<8x128xf32>
    %875 = arith.mulf %866, %844 : vector<8x128xf32>
    %876 = arith.mulf %860, %868 : vector<8x128xf32>
    %877 = arith.addf %875, %876 : vector<8x128xf32>
    %878 = math.tanh %877 : vector<8x128xf32>
    %879 = arith.mulf %874, %878 : vector<8x128xf32>
    %880 = arith.index_cast %850 : i32 to index
    %c0_259 = arith.constant 0 : index
    %881 = vector.load %arg23[%880, %c0_259] : memref<64x128xf32, #tpu.memory_space<vmem>>, vector<8x128xf32>
    tpu.vector_store %arg23[%880, %c0_259], %879 {strides = array<i32>} : memref<64x128xf32, #tpu.memory_space<vmem>>, vector<8x128xf32>,
    %c2_i32_260 = arith.constant 2 : i32
    %c7_i32_261 = arith.constant 7 : i32
    %882 = arith.subi %c7_i32_261, %c2_i32_260 : i32
    %c8_i32_262 = arith.constant 8 : i32
    %883 = arith.muli %882, %c8_i32_262 : i32
    %884 = arith.index_cast %883 : i32 to index
    %c0_263 = arith.constant 0 : index
    %885 = vector.load %arg19[%884, %c0_263] : memref<64x512xf32, #tpu.memory_space<vmem>>, vector<8x512xf32>
    %cst_264 = arith.constant dense<0.000000e+00> : vector<8x512xf32>
    %886 = tpu.matmul %879, %813, %cst_264 {dimension_numbers = #tpu.dot_dimension_numbers<[1], [0], [0], [1], [0, 0, 1, 1], [], []>} : vector<8x128xf32>, vector<128x512xf32>, vector<8x512xf32> -> vector<8x512xf32>
    %887 = arith.addf %885, %886 : vector<8x512xf32>
    %888 = vector.extract_strided_slice %887 {offsets = [0, 0], sizes = [8, 128], strides = [1, 1]} : vector<8x512xf32> to vector<8x128xf32>
    %889 = arith.negf %888 : vector<8x128xf32>
    %890 = math.exp %889 : vector<8x128xf32>
    %cst_265 = arith.constant 1.000000e+00 : f32
    %891 = vector.broadcast %cst_265 : f32 to vector<8x128xf32>
    %892 = arith.addf %891, %890 : vector<8x128xf32>
    %893 = arith.divf %891, %892 : vector<8x128xf32>
    %894 = vector.extract_strided_slice %887 {offsets = [0, 128], sizes = [8, 128], strides = [1, 1]} : vector<8x512xf32> to vector<8x128xf32>
    %895 = arith.negf %894 : vector<8x128xf32>
    %896 = math.exp %895 : vector<8x128xf32>
    %cst_266 = arith.constant 1.000000e+00 : f32
    %897 = vector.broadcast %cst_266 : f32 to vector<8x128xf32>
    %898 = arith.addf %897, %896 : vector<8x128xf32>
    %899 = arith.divf %897, %898 : vector<8x128xf32>
    %900 = vector.extract_strided_slice %887 {offsets = [0, 256], sizes = [8, 128], strides = [1, 1]} : vector<8x512xf32> to vector<8x128xf32>
    %901 = math.tanh %900 : vector<8x128xf32>
    %902 = vector.extract_strided_slice %887 {offsets = [0, 384], sizes = [8, 128], strides = [1, 1]} : vector<8x512xf32> to vector<8x128xf32>
    %903 = arith.negf %902 : vector<8x128xf32>
    %904 = math.exp %903 : vector<8x128xf32>
    %cst_267 = arith.constant 1.000000e+00 : f32
    %905 = vector.broadcast %cst_267 : f32 to vector<8x128xf32>
    %906 = arith.addf %905, %904 : vector<8x128xf32>
    %907 = arith.divf %905, %906 : vector<8x128xf32>
    %908 = arith.mulf %899, %877 : vector<8x128xf32>
    %909 = arith.mulf %893, %901 : vector<8x128xf32>
    %910 = arith.addf %908, %909 : vector<8x128xf32>
    %911 = math.tanh %910 : vector<8x128xf32>
    %912 = arith.mulf %907, %911 : vector<8x128xf32>
    %913 = arith.index_cast %883 : i32 to index
    %c0_268 = arith.constant 0 : index
    %914 = vector.load %arg23[%913, %c0_268] : memref<64x128xf32, #tpu.memory_space<vmem>>, vector<8x128xf32>
    tpu.vector_store %arg23[%913, %c0_268], %912 {strides = array<i32>} : memref<64x128xf32, #tpu.memory_space<vmem>>, vector<8x128xf32>,
    %c3_i32_269 = arith.constant 3 : i32
    %c7_i32_270 = arith.constant 7 : i32
    %915 = arith.subi %c7_i32_270, %c3_i32_269 : i32
    %c8_i32_271 = arith.constant 8 : i32
    %916 = arith.muli %915, %c8_i32_271 : i32
    %917 = arith.index_cast %916 : i32 to index
    %c0_272 = arith.constant 0 : index
    %918 = vector.load %arg19[%917, %c0_272] : memref<64x512xf32, #tpu.memory_space<vmem>>, vector<8x512xf32>
    %cst_273 = arith.constant dense<0.000000e+00> : vector<8x512xf32>
    %919 = tpu.matmul %912, %813, %cst_273 {dimension_numbers = #tpu.dot_dimension_numbers<[1], [0], [0], [1], [0, 0, 1, 1], [], []>} : vector<8x128xf32>, vector<128x512xf32>, vector<8x512xf32> -> vector<8x512xf32>
    %920 = arith.addf %918, %919 : vector<8x512xf32>
    %921 = vector.extract_strided_slice %920 {offsets = [0, 0], sizes = [8, 128], strides = [1, 1]} : vector<8x512xf32> to vector<8x128xf32>
    %922 = arith.negf %921 : vector<8x128xf32>
    %923 = math.exp %922 : vector<8x128xf32>
    %cst_274 = arith.constant 1.000000e+00 : f32
    %924 = vector.broadcast %cst_274 : f32 to vector<8x128xf32>
    %925 = arith.addf %924, %923 : vector<8x128xf32>
    %926 = arith.divf %924, %925 : vector<8x128xf32>
    %927 = vector.extract_strided_slice %920 {offsets = [0, 128], sizes = [8, 128], strides = [1, 1]} : vector<8x512xf32> to vector<8x128xf32>
    %928 = arith.negf %927 : vector<8x128xf32>
    %929 = math.exp %928 : vector<8x128xf32>
    %cst_275 = arith.constant 1.000000e+00 : f32
    %930 = vector.broadcast %cst_275 : f32 to vector<8x128xf32>
    %931 = arith.addf %930, %929 : vector<8x128xf32>
    %932 = arith.divf %930, %931 : vector<8x128xf32>
    %933 = vector.extract_strided_slice %920 {offsets = [0, 256], sizes = [8, 128], strides = [1, 1]} : vector<8x512xf32> to vector<8x128xf32>
    %934 = math.tanh %933 : vector<8x128xf32>
    %935 = vector.extract_strided_slice %920 {offsets = [0, 384], sizes = [8, 128], strides = [1, 1]} : vector<8x512xf32> to vector<8x128xf32>
    %936 = arith.negf %935 : vector<8x128xf32>
    %937 = math.exp %936 : vector<8x128xf32>
    %cst_276 = arith.constant 1.000000e+00 : f32
    %938 = vector.broadcast %cst_276 : f32 to vector<8x128xf32>
    %939 = arith.addf %938, %937 : vector<8x128xf32>
    %940 = arith.divf %938, %939 : vector<8x128xf32>
    %941 = arith.mulf %932, %910 : vector<8x128xf32>
    %942 = arith.mulf %926, %934 : vector<8x128xf32>
    %943 = arith.addf %941, %942 : vector<8x128xf32>
    %944 = math.tanh %943 : vector<8x128xf32>
    %945 = arith.mulf %940, %944 : vector<8x128xf32>
    %946 = arith.index_cast %916 : i32 to index
    %c0_277 = arith.constant 0 : index
    %947 = vector.load %arg23[%946, %c0_277] : memref<64x128xf32, #tpu.memory_space<vmem>>, vector<8x128xf32>
    tpu.vector_store %arg23[%946, %c0_277], %945 {strides = array<i32>} : memref<64x128xf32, #tpu.memory_space<vmem>>, vector<8x128xf32>,
    %c4_i32_278 = arith.constant 4 : i32
    %c7_i32_279 = arith.constant 7 : i32
    %948 = arith.subi %c7_i32_279, %c4_i32_278 : i32
    %c8_i32_280 = arith.constant 8 : i32
    %949 = arith.muli %948, %c8_i32_280 : i32
    %950 = arith.index_cast %949 : i32 to index
    %c0_281 = arith.constant 0 : index
    %951 = vector.load %arg19[%950, %c0_281] : memref<64x512xf32, #tpu.memory_space<vmem>>, vector<8x512xf32>
    %cst_282 = arith.constant dense<0.000000e+00> : vector<8x512xf32>
    %952 = tpu.matmul %945, %813, %cst_282 {dimension_numbers = #tpu.dot_dimension_numbers<[1], [0], [0], [1], [0, 0, 1, 1], [], []>} : vector<8x128xf32>, vector<128x512xf32>, vector<8x512xf32> -> vector<8x512xf32>
    %953 = arith.addf %951, %952 : vector<8x512xf32>
    %954 = vector.extract_strided_slice %953 {offsets = [0, 0], sizes = [8, 128], strides = [1, 1]} : vector<8x512xf32> to vector<8x128xf32>
    %955 = arith.negf %954 : vector<8x128xf32>
    %956 = math.exp %955 : vector<8x128xf32>
    %cst_283 = arith.constant 1.000000e+00 : f32
    %957 = vector.broadcast %cst_283 : f32 to vector<8x128xf32>
    %958 = arith.addf %957, %956 : vector<8x128xf32>
    %959 = arith.divf %957, %958 : vector<8x128xf32>
    %960 = vector.extract_strided_slice %953 {offsets = [0, 128], sizes = [8, 128], strides = [1, 1]} : vector<8x512xf32> to vector<8x128xf32>
    %961 = arith.negf %960 : vector<8x128xf32>
    %962 = math.exp %961 : vector<8x128xf32>
    %cst_284 = arith.constant 1.000000e+00 : f32
    %963 = vector.broadcast %cst_284 : f32 to vector<8x128xf32>
    %964 = arith.addf %963, %962 : vector<8x128xf32>
    %965 = arith.divf %963, %964 : vector<8x128xf32>
    %966 = vector.extract_strided_slice %953 {offsets = [0, 256], sizes = [8, 128], strides = [1, 1]} : vector<8x512xf32> to vector<8x128xf32>
    %967 = math.tanh %966 : vector<8x128xf32>
    %968 = vector.extract_strided_slice %953 {offsets = [0, 384], sizes = [8, 128], strides = [1, 1]} : vector<8x512xf32> to vector<8x128xf32>
    %969 = arith.negf %968 : vector<8x128xf32>
    %970 = math.exp %969 : vector<8x128xf32>
    %cst_285 = arith.constant 1.000000e+00 : f32
    %971 = vector.broadcast %cst_285 : f32 to vector<8x128xf32>
    %972 = arith.addf %971, %970 : vector<8x128xf32>
    %973 = arith.divf %971, %972 : vector<8x128xf32>
    %974 = arith.mulf %965, %943 : vector<8x128xf32>
    %975 = arith.mulf %959, %967 : vector<8x128xf32>
    %976 = arith.addf %974, %975 : vector<8x128xf32>
    %977 = math.tanh %976 : vector<8x128xf32>
    %978 = arith.mulf %973, %977 : vector<8x128xf32>
    %979 = arith.index_cast %949 : i32 to index
    %c0_286 = arith.constant 0 : index
    %980 = vector.load %arg23[%979, %c0_286] : memref<64x128xf32, #tpu.memory_space<vmem>>, vector<8x128xf32>
    tpu.vector_store %arg23[%979, %c0_286], %978 {strides = array<i32>} : memref<64x128xf32, #tpu.memory_space<vmem>>, vector<8x128xf32>,
    %c5_i32_287 = arith.constant 5 : i32
    %c7_i32_288 = arith.constant 7 : i32
    %981 = arith.subi %c7_i32_288, %c5_i32_287 : i32
    %c8_i32_289 = arith.constant 8 : i32
    %982 = arith.muli %981, %c8_i32_289 : i32
    %983 = arith.index_cast %982 : i32 to index
    %c0_290 = arith.constant 0 : index
    %984 = vector.load %arg19[%983, %c0_290] : memref<64x512xf32, #tpu.memory_space<vmem>>, vector<8x512xf32>
    %cst_291 = arith.constant dense<0.000000e+00> : vector<8x512xf32>
    %985 = tpu.matmul %978, %813, %cst_291 {dimension_numbers = #tpu.dot_dimension_numbers<[1], [0], [0], [1], [0, 0, 1, 1], [], []>} : vector<8x128xf32>, vector<128x512xf32>, vector<8x512xf32> -> vector<8x512xf32>
    %986 = arith.addf %984, %985 : vector<8x512xf32>
    %987 = vector.extract_strided_slice %986 {offsets = [0, 0], sizes = [8, 128], strides = [1, 1]} : vector<8x512xf32> to vector<8x128xf32>
    %988 = arith.negf %987 : vector<8x128xf32>
    %989 = math.exp %988 : vector<8x128xf32>
    %cst_292 = arith.constant 1.000000e+00 : f32
    %990 = vector.broadcast %cst_292 : f32 to vector<8x128xf32>
    %991 = arith.addf %990, %989 : vector<8x128xf32>
    %992 = arith.divf %990, %991 : vector<8x128xf32>
    %993 = vector.extract_strided_slice %986 {offsets = [0, 128], sizes = [8, 128], strides = [1, 1]} : vector<8x512xf32> to vector<8x128xf32>
    %994 = arith.negf %993 : vector<8x128xf32>
    %995 = math.exp %994 : vector<8x128xf32>
    %cst_293 = arith.constant 1.000000e+00 : f32
    %996 = vector.broadcast %cst_293 : f32 to vector<8x128xf32>
    %997 = arith.addf %996, %995 : vector<8x128xf32>
    %998 = arith.divf %996, %997 : vector<8x128xf32>
    %999 = vector.extract_strided_slice %986 {offsets = [0, 256], sizes = [8, 128], strides = [1, 1]} : vector<8x512xf32> to vector<8x128xf32>
    %1000 = math.tanh %999 : vector<8x128xf32>
    %1001 = vector.extract_strided_slice %986 {offsets = [0, 384], sizes = [8, 128], strides = [1, 1]} : vector<8x512xf32> to vector<8x128xf32>
    %1002 = arith.negf %1001 : vector<8x128xf32>
    %1003 = math.exp %1002 : vector<8x128xf32>
    %cst_294 = arith.constant 1.000000e+00 : f32
    %1004 = vector.broadcast %cst_294 : f32 to vector<8x128xf32>
    %1005 = arith.addf %1004, %1003 : vector<8x128xf32>
    %1006 = arith.divf %1004, %1005 : vector<8x128xf32>
    %1007 = arith.mulf %998, %976 : vector<8x128xf32>
    %1008 = arith.mulf %992, %1000 : vector<8x128xf32>
    %1009 = arith.addf %1007, %1008 : vector<8x128xf32>
    %1010 = math.tanh %1009 : vector<8x128xf32>
    %1011 = arith.mulf %1006, %1010 : vector<8x128xf32>
    %1012 = arith.index_cast %982 : i32 to index
    %c0_295 = arith.constant 0 : index
    %1013 = vector.load %arg23[%1012, %c0_295] : memref<64x128xf32, #tpu.memory_space<vmem>>, vector<8x128xf32>
    tpu.vector_store %arg23[%1012, %c0_295], %1011 {strides = array<i32>} : memref<64x128xf32, #tpu.memory_space<vmem>>, vector<8x128xf32>,
    %c6_i32_296 = arith.constant 6 : i32
    %c7_i32_297 = arith.constant 7 : i32
    %1014 = arith.subi %c7_i32_297, %c6_i32_296 : i32
    %c8_i32_298 = arith.constant 8 : i32
    %1015 = arith.muli %1014, %c8_i32_298 : i32
    %1016 = arith.index_cast %1015 : i32 to index
    %c0_299 = arith.constant 0 : index
    %1017 = vector.load %arg19[%1016, %c0_299] : memref<64x512xf32, #tpu.memory_space<vmem>>, vector<8x512xf32>
    %cst_300 = arith.constant dense<0.000000e+00> : vector<8x512xf32>
    %1018 = tpu.matmul %1011, %813, %cst_300 {dimension_numbers = #tpu.dot_dimension_numbers<[1], [0], [0], [1], [0, 0, 1, 1], [], []>} : vector<8x128xf32>, vector<128x512xf32>, vector<8x512xf32> -> vector<8x512xf32>
    %1019 = arith.addf %1017, %1018 : vector<8x512xf32>
    %1020 = vector.extract_strided_slice %1019 {offsets = [0, 0], sizes = [8, 128], strides = [1, 1]} : vector<8x512xf32> to vector<8x128xf32>
    %1021 = arith.negf %1020 : vector<8x128xf32>
    %1022 = math.exp %1021 : vector<8x128xf32>
    %cst_301 = arith.constant 1.000000e+00 : f32
    %1023 = vector.broadcast %cst_301 : f32 to vector<8x128xf32>
    %1024 = arith.addf %1023, %1022 : vector<8x128xf32>
    %1025 = arith.divf %1023, %1024 : vector<8x128xf32>
    %1026 = vector.extract_strided_slice %1019 {offsets = [0, 128], sizes = [8, 128], strides = [1, 1]} : vector<8x512xf32> to vector<8x128xf32>
    %1027 = arith.negf %1026 : vector<8x128xf32>
    %1028 = math.exp %1027 : vector<8x128xf32>
    %cst_302 = arith.constant 1.000000e+00 : f32
    %1029 = vector.broadcast %cst_302 : f32 to vector<8x128xf32>
    %1030 = arith.addf %1029, %1028 : vector<8x128xf32>
    %1031 = arith.divf %1029, %1030 : vector<8x128xf32>
    %1032 = vector.extract_strided_slice %1019 {offsets = [0, 256], sizes = [8, 128], strides = [1, 1]} : vector<8x512xf32> to vector<8x128xf32>
    %1033 = math.tanh %1032 : vector<8x128xf32>
    %1034 = vector.extract_strided_slice %1019 {offsets = [0, 384], sizes = [8, 128], strides = [1, 1]} : vector<8x512xf32> to vector<8x128xf32>
    %1035 = arith.negf %1034 : vector<8x128xf32>
    %1036 = math.exp %1035 : vector<8x128xf32>
    %cst_303 = arith.constant 1.000000e+00 : f32
    %1037 = vector.broadcast %cst_303 : f32 to vector<8x128xf32>
    %1038 = arith.addf %1037, %1036 : vector<8x128xf32>
    %1039 = arith.divf %1037, %1038 : vector<8x128xf32>
    %1040 = arith.mulf %1031, %1009 : vector<8x128xf32>
    %1041 = arith.mulf %1025, %1033 : vector<8x128xf32>
    %1042 = arith.addf %1040, %1041 : vector<8x128xf32>
    %1043 = math.tanh %1042 : vector<8x128xf32>
    %1044 = arith.mulf %1039, %1043 : vector<8x128xf32>
    %1045 = arith.index_cast %1015 : i32 to index
    %c0_304 = arith.constant 0 : index
    %1046 = vector.load %arg23[%1045, %c0_304] : memref<64x128xf32, #tpu.memory_space<vmem>>, vector<8x128xf32>
    tpu.vector_store %arg23[%1045, %c0_304], %1044 {strides = array<i32>} : memref<64x128xf32, #tpu.memory_space<vmem>>, vector<8x128xf32>,
    %c7_i32_305 = arith.constant 7 : i32
    %c7_i32_306 = arith.constant 7 : i32
    %1047 = arith.subi %c7_i32_306, %c7_i32_305 : i32
    %c8_i32_307 = arith.constant 8 : i32
    %1048 = arith.muli %1047, %c8_i32_307 : i32
    %1049 = arith.index_cast %1048 : i32 to index
    %c0_308 = arith.constant 0 : index
    %1050 = vector.load %arg19[%1049, %c0_308] : memref<64x512xf32, #tpu.memory_space<vmem>>, vector<8x512xf32>
    %cst_309 = arith.constant dense<0.000000e+00> : vector<8x512xf32>
    %1051 = tpu.matmul %1044, %813, %cst_309 {dimension_numbers = #tpu.dot_dimension_numbers<[1], [0], [0], [1], [0, 0, 1, 1], [], []>} : vector<8x128xf32>, vector<128x512xf32>, vector<8x512xf32> -> vector<8x512xf32>
    %1052 = arith.addf %1050, %1051 : vector<8x512xf32>
    %1053 = vector.extract_strided_slice %1052 {offsets = [0, 0], sizes = [8, 128], strides = [1, 1]} : vector<8x512xf32> to vector<8x128xf32>
    %1054 = arith.negf %1053 : vector<8x128xf32>
    %1055 = math.exp %1054 : vector<8x128xf32>
    %cst_310 = arith.constant 1.000000e+00 : f32
    %1056 = vector.broadcast %cst_310 : f32 to vector<8x128xf32>
    %1057 = arith.addf %1056, %1055 : vector<8x128xf32>
    %1058 = arith.divf %1056, %1057 : vector<8x128xf32>
    %1059 = vector.extract_strided_slice %1052 {offsets = [0, 128], sizes = [8, 128], strides = [1, 1]} : vector<8x512xf32> to vector<8x128xf32>
    %1060 = arith.negf %1059 : vector<8x128xf32>
    %1061 = math.exp %1060 : vector<8x128xf32>
    %cst_311 = arith.constant 1.000000e+00 : f32
    %1062 = vector.broadcast %cst_311 : f32 to vector<8x128xf32>
    %1063 = arith.addf %1062, %1061 : vector<8x128xf32>
    %1064 = arith.divf %1062, %1063 : vector<8x128xf32>
    %1065 = vector.extract_strided_slice %1052 {offsets = [0, 256], sizes = [8, 128], strides = [1, 1]} : vector<8x512xf32> to vector<8x128xf32>
    %1066 = math.tanh %1065 : vector<8x128xf32>
    %1067 = vector.extract_strided_slice %1052 {offsets = [0, 384], sizes = [8, 128], strides = [1, 1]} : vector<8x512xf32> to vector<8x128xf32>
    %1068 = arith.negf %1067 : vector<8x128xf32>
    %1069 = math.exp %1068 : vector<8x128xf32>
    %cst_312 = arith.constant 1.000000e+00 : f32
    %1070 = vector.broadcast %cst_312 : f32 to vector<8x128xf32>
    %1071 = arith.addf %1070, %1069 : vector<8x128xf32>
    %1072 = arith.divf %1070, %1071 : vector<8x128xf32>
    %1073 = arith.mulf %1064, %1042 : vector<8x128xf32>
    %1074 = arith.mulf %1058, %1066 : vector<8x128xf32>
    %1075 = arith.addf %1073, %1074 : vector<8x128xf32>
    %1076 = math.tanh %1075 : vector<8x128xf32>
    %1077 = arith.mulf %1072, %1076 : vector<8x128xf32>
    %1078 = arith.index_cast %1048 : i32 to index
    %c0_313 = arith.constant 0 : index
    %1079 = vector.load %arg23[%1078, %c0_313] : memref<64x128xf32, #tpu.memory_space<vmem>>, vector<8x128xf32>
    tpu.vector_store %arg23[%1078, %c0_313], %1077 {strides = array<i32>} : memref<64x128xf32, #tpu.memory_space<vmem>>, vector<8x128xf32>,
    %c8_i32_314 = arith.constant 8 : i32
    %c56 = arith.constant 56 : index
    %c0_315 = arith.constant 0 : index
    %1080 = vector.load %arg22[%c56, %c0_315] : memref<64x128xf32, #tpu.memory_space<vmem>>, vector<8x128xf32>
    %c56_316 = arith.constant 56 : index
    %c0_317 = arith.constant 0 : index
    %1081 = vector.load %arg23[%c56_316, %c0_317] : memref<64x128xf32, #tpu.memory_space<vmem>>, vector<8x128xf32>
    %1082 = tpu.concatenate %1080, %1081 in 1 : vector<8x128xf32>, vector<8x128xf32> -> vector<8x256xf32>
    %c0_318 = arith.constant 0 : index
    %c0_319 = arith.constant 0 : index
    %1083 = vector.load %arg13[%c0_318, %c0_319] : memref<256x128xf32, #tpu.memory_space<vmem>>, vector<256x128xf32>
    %cst_320 = arith.constant dense<0.000000e+00> : vector<8x128xf32>
    %1084 = tpu.matmul %1082, %1083, %cst_320 {dimension_numbers = #tpu.dot_dimension_numbers<[1], [0], [0], [1], [0, 0, 1, 1], [], []>} : vector<8x256xf32>, vector<256x128xf32>, vector<8x128xf32> -> vector<8x128xf32>
    %c0_321 = arith.constant 0 : index
    %c0_322 = arith.constant 0 : index
    %1085 = vector.load %arg14[%c0_321, %c0_322] : memref<1x128xf32, #tpu.memory_space<vmem>>, vector<1x128xf32>
    %1086 = vector.broadcast %1085 : vector<1x128xf32> to vector<8x128xf32>
    %1087 = arith.addf %1084, %1086 : vector<8x128xf32>
    %c0_323 = arith.constant 0 : index
    %c0_324 = arith.constant 0 : index
    %1088 = vector.load %arg15[%c0_323, %c0_324] : memref<8x128xf32, #tpu.memory_space<vmem>>, vector<8x128xf32>
    tpu.vector_store %arg15[%c0_323, %c0_324], %1087 {strides = array<i32>} : memref<8x128xf32, #tpu.memory_space<vmem>>, vector<8x128xf32>,
    return
  }
}

</mosaic_0001>

<llo_original>
// kernel: bilstm_forward.1
$region0: #{bilstm_forward.1}
  #allocation0 [shape = 'u32[]', space=smem, size = 0x4, offset = 0x4, fixed_abs, tag = 'smem constant byte address 0x4 - core index']
  #allocation1 [shape = 'u32[144,128]{1,0:T(1,128)}', space=vmem, size = 0x12000, scoped, tag = 'internal scratch']
  #allocation2 [shape = 'f32[64,512]{1,0:T(8,128)}', space=vmem, size = 0x20000, scoped, tag = 'scratch operand']
  #allocation3 [shape = 'f32[64,512]{1,0:T(8,128)}', space=vmem, size = 0x20000, scoped, tag = 'scratch operand']
  #allocation4 [shape = 'f32[64,512]{1,0:T(8,128)}', space=vmem, size = 0x20000, scoped, tag = 'scratch operand']
  #allocation5 [shape = 'f32[64,512]{1,0:T(8,128)}', space=vmem, size = 0x20000, scoped, tag = 'scratch operand']
  #allocation6 [shape = 'f32[64,128]{1,0:T(8,128)}', space=vmem, size = 0x8000, scoped, tag = 'scratch operand']
  #allocation7 [shape = 'f32[64,128]{1,0:T(8,128)}', space=vmem, size = 0x8000, scoped, tag = 'scratch operand']
  #allocation8 [shape = 'f32[64,128]{1,0:T(8,128)}', space=vmem, size = 0x8000, scoped, tag = 'scratch operand']
  #allocation9 [shape = 'f32[64,128]{1,0:T(8,128)}', space=vmem, size = 0x8000, scoped, tag = 'scratch operand']
  %s0 = inlined_call_operand.vmem [shape: f32[64,128], index: 0, kind: input, shape index: {}]
  %s1 = inlined_call_operand.vmem [shape: f32[128,512], index: 1, kind: input, shape index: {}]
  %s2 = inlined_call_operand.vmem [shape: f32[128,512], index: 2, kind: input, shape index: {}]
  %s3 = inlined_call_operand.vmem [shape: f32[1,512], index: 3, kind: input, shape index: {}]
  %s4 = inlined_call_operand.vmem [shape: f32[128,512], index: 4, kind: input, shape index: {}]
  %s5 = inlined_call_operand.vmem [shape: f32[128,512], index: 5, kind: input, shape index: {}]
  %s6 = inlined_call_operand.vmem [shape: f32[1,512], index: 6, kind: input, shape index: {}]
  %s7 = inlined_call_operand.vmem [shape: f32[256,512], index: 7, kind: input, shape index: {}]
  %s8 = inlined_call_operand.vmem [shape: f32[128,512], index: 8, kind: input, shape index: {}]
  %s9 = inlined_call_operand.vmem [shape: f32[1,512], index: 9, kind: input, shape index: {}]
  %s10 = inlined_call_operand.vmem [shape: f32[256,512], index: 10, kind: input, shape index: {}]
  %s11 = inlined_call_operand.vmem [shape: f32[128,512], index: 11, kind: input, shape index: {}]
  %s12 = inlined_call_operand.vmem [shape: f32[1,512], index: 12, kind: input, shape index: {}]
  %s13 = inlined_call_operand.vmem [shape: f32[256,128], index: 13, kind: input, shape index: {}]
  %s14 = inlined_call_operand.vmem [shape: f32[1,128], index: 14, kind: input, shape index: {}]
  %s15 = inlined_call_operand.vmem [shape: f32[8,128], index: 15, kind: output, shape index: {}]
  %s16 = sld [smem:[#allocation0]]
  $region70: #{bilstm_forward.1} parent=0
    _
  %s18 = ssub.s32 1, %s16
  %s19 = scalar_select 0, %s18, %s16
  // Predicated region
  $region2: #{bilstm_forward.1} parent=0 // pred_check
    _
  $region3: #{bilstm_forward.1} parent=0 // pred_check_branch
    %21 = sbr.rel (0) target = $region5
  $region4: #{bilstm_forward.1} parent=0 // pred_region
    _
  $region5: #{bilstm_forward.1} parent=0 // pred_fallthru
    _
  // Predicated region
  $region6: #{bilstm_forward.1} parent=0 // pred_check
    _
  $region7: #{bilstm_forward.1} parent=0 // pred_check_branch
    %23 = sbr.rel (0) target = $region9
  $region8: #{bilstm_forward.1} parent=0 // pred_region
    _
  $region9: #{bilstm_forward.1} parent=0 // pred_fallthru
    _
  // Predicated region
  $region10: #{bilstm_forward.1} parent=0 // pred_check
    _
  $region11: #{bilstm_forward.1} parent=0 // pred_check_branch
    %25 = sbr.rel (0) target = $region13
  $region12: #{bilstm_forward.1} parent=0 // pred_region
    _
  $region13: #{bilstm_forward.1} parent=0 // pred_fallthru
    _
  // Predicated region
  $region14: #{bilstm_forward.1} parent=0 // pred_check
    _
  $region15: #{bilstm_forward.1} parent=0 // pred_check_branch
    %27 = sbr.rel (0) target = $region17
  $region16: #{bilstm_forward.1} parent=0 // pred_region
    _
  $region17: #{bilstm_forward.1} parent=0 // pred_fallthru
    _
  // Predicated region
  $region18: #{bilstm_forward.1} parent=0 // pred_check
    _
  $region19: #{bilstm_forward.1} parent=0 // pred_check_branch
    %29 = sbr.rel (0) target = $region21
  $region20: #{bilstm_forward.1} parent=0 // pred_region
    _
  $region21: #{bilstm_forward.1} parent=0 // pred_fallthru
    _
  // Predicated region
  $region22: #{bilstm_forward.1} parent=0 // pred_check
    _
  $region23: #{bilstm_forward.1} parent=0 // pred_check_branch
    %31 = sbr.rel (0) target = $region25
  $region24: #{bilstm_forward.1} parent=0 // pred_region
    _
  $region25: #{bilstm_forward.1} parent=0 // pred_fallthru
    _
  // Predicated region
  $region26: #{bilstm_forward.1} parent=0 // pred_check
    _
  $region27: #{bilstm_forward.1} parent=0 // pred_check_branch
    %33 = sbr.rel (0) target = $region29
  $region28: #{bilstm_forward.1} parent=0 // pred_region
    _
  $region29: #{bilstm_forward.1} parent=0 // pred_fallthru
    _
  // Predicated region
  $region30: #{bilstm_forward.1} parent=0 // pred_check
    _
  $region31: #{bilstm_forward.1} parent=0 // pred_check_branch
    %35 = sbr.rel (0) target = $region33
  $region32: #{bilstm_forward.1} parent=0 // pred_region
    _
  $region33: #{bilstm_forward.1} parent=0 // pred_fallthru
    _
  // Predicated region
  $region34: #{bilstm_forward.1} parent=0 // pred_check
    _
  $region35: #{bilstm_forward.1} parent=0 // pred_check_branch
    %37 = sbr.rel (0) target = $region37
  $region36: #{bilstm_forward.1} parent=0 // pred_region
    _
  $region37: #{bilstm_forward.1} parent=0 // pred_fallthru
    _
  // Predicated region
  $region38: #{bilstm_forward.1} parent=0 // pred_check
    _
  $region39: #{bilstm_forward.1} parent=0 // pred_check_branch
    %39 = sbr.rel (0) target = $region41
  $region40: #{bilstm_forward.1} parent=0 // pred_region
    _
  $region41: #{bilstm_forward.1} parent=0 // pred_fallthru
    _
  // Predicated region
  $region42: #{bilstm_forward.1} parent=0 // pred_check
    _
  $region43: #{bilstm_forward.1} parent=0 // pred_check_branch
    %41 = sbr.rel (0) target = $region45
  $region44: #{bilstm_forward.1} parent=0 // pred_region
    _
  $region45: #{bilstm_forward.1} parent=0 // pred_fallthru
    _
  // Predicated region
  $region46: #{bilstm_forward.1} parent=0 // pred_check
    _
  $region47: #{bilstm_forward.1} parent=0 // pred_check_branch
    %43 = sbr.rel (0) target = $region49
  $region48: #{bilstm_forward.1} parent=0 // pred_region
    _
  $region49: #{bilstm_forward.1} parent=0 // pred_fallthru
    _
  // Predicated region
  $region50: #{bilstm_forward.1} parent=0 // pred_check
    _
  $region51: #{bilstm_forward.1} parent=0 // pred_check_branch
    %45 = sbr.rel (0) target = $region53
  $region52: #{bilstm_forward.1} parent=0 // pred_region
    _
  $region53: #{bilstm_forward.1} parent=0 // pred_fallthru
    _
  // Predicated region
  $region54: #{bilstm_forward.1} parent=0 // pred_check
    _
  $region55: #{bilstm_forward.1} parent=0 // pred_check_branch
    %47 = sbr.rel (0) target = $region57
  $region56: #{bilstm_forward.1} parent=0 // pred_region
    _
  $region57: #{bilstm_forward.1} parent=0 // pred_fallthru
    _
  // Predicated region
  $region58: #{bilstm_forward.1} parent=0 // pred_check
    _
  $region59: #{bilstm_forward.1} parent=0 // pred_check_branch
    %49 = sbr.rel (0) target = $region61
  $region60: #{bilstm_forward.1} parent=0 // pred_region
    _
  $region61: #{bilstm_forward.1} parent=0 // pred_fallthru
    _
  %v50 = vld [vmem:[%s0] sm:$0xff]
  %v51 = vld [vmem:[%s0 + $0x8] sm:$0xff]
  %v52 = vld [vmem:[%s0 + $0x10] sm:$0xff]
  %v53 = vld [vmem:[%s0 + $0x18] sm:$0xff]
  %v54 = vld [vmem:[%s0 + $0x20] sm:$0xff]
  %v55 = vld [vmem:[%s0 + $0x28] sm:$0xff]
  %v56 = vld [vmem:[%s0 + $0x30] sm:$0xff]
  %v57 = vld [vmem:[%s0 + $0x38] sm:$0xff]
  %v58 = vld [vmem:[%s1] sm:$0xff]
  %v59 = vld [vmem:[%s1 + $0x8] sm:$0xff]
  %v60 = vld [vmem:[%s1 + $0x10] sm:$0xff]
  %v61 = vld [vmem:[%s1 + $0x18] sm:$0xff]
  %v62 = vld [vmem:[%s1 + $0x20] sm:$0xff]
  %v63 = vld [vmem:[%s1 + $0x28] sm:$0xff]
  %v64 = vld [vmem:[%s1 + $0x30] sm:$0xff]
  %v65 = vld [vmem:[%s1 + $0x38] sm:$0xff]
  %v66 = vld [vmem:[%s1 + $0x40] sm:$0xff]
  %v67 = vld [vmem:[%s1 + $0x48] sm:$0xff]
  %v68 = vld [vmem:[%s1 + $0x50] sm:$0xff]
  %v69 = vld [vmem:[%s1 + $0x58] sm:$0xff]
  %v70 = vld [vmem:[%s1 + $0x60] sm:$0xff]
  %v71 = vld [vmem:[%s1 + $0x68] sm:$0xff]
  %v72 = vld [vmem:[%s1 + $0x70] sm:$0xff]
  %v73 = vld [vmem:[%s1 + $0x78] sm:$0xff]
  %v74 = vld [vmem:[%s1 + $0x80] sm:$0xff]
  %v75 = vld [vmem:[%s1 + $0x88] sm:$0xff]
  %v76 = vld [vmem:[%s1 + $0x90] sm:$0xff]
  %v77 = vld [vmem:[%s1 + $0x98] sm:$0xff]
  %v78 = vld [vmem:[%s1 + $0xa0] sm:$0xff]
  %v79 = vld [vmem:[%s1 + $0xa8] sm:$0xff]
  %v80 = vld [vmem:[%s1 + $0xb0] sm:$0xff]
  %v81 = vld [vmem:[%s1 + $0xb8] sm:$0xff]
  %v82 = vld [vmem:[%s1 + $0xc0] sm:$0xff]
  %v83 = vld [vmem:[%s1 + $0xc8] sm:$0xff]
  %v84 = vld [vmem:[%s1 + $0xd0] sm:$0xff]
  %v85 = vld [vmem:[%s1 + $0xd8] sm:$0xff]
  %v86 = vld [vmem:[%s1 + $0xe0] sm:$0xff]
  %v87 = vld [vmem:[%s1 + $0xe8] sm:$0xff]
  %v88 = vld [vmem:[%s1 + $0xf0] sm:$0xff]
  %v89 = vld [vmem:[%s1 + $0xf8] sm:$0xff]
  %v90 = vld [vmem:[%s1 + $0x100] sm:$0xff]
  %v91 = vld [vmem:[%s1 + $0x108] sm:$0xff]
  %v92 = vld [vmem:[%s1 + $0x110] sm:$0xff]
  %v93 = vld [vmem:[%s1 + $0x118] sm:$0xff]
  %v94 = vld [vmem:[%s1 + $0x120] sm:$0xff]
  %v95 = vld [vmem:[%s1 + $0x128] sm:$0xff]
  %v96 = vld [vmem:[%s1 + $0x130] sm:$0xff]
  %v97 = vld [vmem:[%s1 + $0x138] sm:$0xff]
  %v98 = vld [vmem:[%s1 + $0x140] sm:$0xff]
  %v99 = vld [vmem:[%s1 + $0x148] sm:$0xff]
  %v100 = vld [vmem:[%s1 + $0x150] sm:$0xff]
  %v101 = vld [vmem:[%s1 + $0x158] sm:$0xff]
  %v102 = vld [vmem:[%s1 + $0x160] sm:$0xff]
  %v103 = vld [vmem:[%s1 + $0x168] sm:$0xff]
  %v104 = vld [vmem:[%s1 + $0x170] sm:$0xff]
  %v105 = vld [vmem:[%s1 + $0x178] sm:$0xff]
  %v106 = vld [vmem:[%s1 + $0x180] sm:$0xff]
  %v107 = vld [vmem:[%s1 + $0x188] sm:$0xff]
  %v108 = vld [vmem:[%s1 + $0x190] sm:$0xff]
  %v109 = vld [vmem:[%s1 + $0x198] sm:$0xff]
  %v110 = vld [vmem:[%s1 + $0x1a0] sm:$0xff]
  %v111 = vld [vmem:[%s1 + $0x1a8] sm:$0xff]
  %v112 = vld [vmem:[%s1 + $0x1b0] sm:$0xff]
  %v113 = vld [vmem:[%s1 + $0x1b8] sm:$0xff]
  %v114 = vld [vmem:[%s1 + $0x1c0] sm:$0xff]
  %v115 = vld [vmem:[%s1 + $0x1c8] sm:$0xff]
  %v116 = vld [vmem:[%s1 + $0x1d0] sm:$0xff]
  %v117 = vld [vmem:[%s1 + $0x1d8] sm:$0xff]
  %v118 = vld [vmem:[%s1 + $0x1e0] sm:$0xff]
  %v119 = vld [vmem:[%s1 + $0x1e8] sm:$0xff]
  %v120 = vld [vmem:[%s1 + $0x1f0] sm:$0xff]
  %v121 = vld [vmem:[%s1 + $0x1f8] sm:$0xff]
  %v122 = vld [vmem:[%s3] sm:$0xf]
  %v124 = vlaneseq
  %v125 = vshrl.u32 %v124, 7
  %v126 = vsub.s32 0, %v125
  %v127 = vrot.slane %v122, %v126
  %v128 = vlaneseq
  %v129 = vshrl.u32 %v128, 7
  %v130 = vsub.s32 1, %v129
  %v131 = vrot.slane %v122, %v130
  %v132 = vlaneseq
  %v133 = vshrl.u32 %v132, 7
  %v134 = vsub.s32 2, %v133
  %v135 = vrot.slane %v122, %v134
  %v136 = vlaneseq
  %v137 = vshrl.u32 %v136, 7
  %v138 = vsub.s32 3, %v137
  %v139 = vrot.slane %v122, %v138
  %144 = vmatprep.subr.mxu0 %v59
  %145 = vmatpush1.msra.mxu0 %v58
  %146 = vmatprep.subr.mxu0 %v63
  %147 = vmatpush1.msra.mxu0 %v62
  %148 = vmatprep.subr.mxu0 %v67
  %149 = vmatpush1.msra.mxu0 %v66
  %150 = vmatprep.subr.mxu0 %v71
  %151 = vmatpush1.msra.mxu0 %v70
  %152 = vmatprep.subr.mxu0 %v75
  %153 = vmatpush1.msra.mxu0 %v74
  %154 = vmatprep.subr.mxu0 %v79
  %155 = vmatpush1.msra.mxu0 %v78
  %156 = vmatprep.subr.mxu0 %v83
  %157 = vmatpush1.msra.mxu0 %v82
  %158 = vmatprep.subr.mxu0 %v87
  %159 = vmatpush1.msra.mxu0 %v86
  %160 = vmatprep.subr.mxu0 %v91
  %161 = vmatpush1.msra.mxu0 %v90
  %162 = vmatprep.subr.mxu0 %v95
  %163 = vmatpush1.msra.mxu0 %v94
  %164 = vmatprep.subr.mxu0 %v99
  %165 = vmatpush1.msra.mxu0 %v98
  %166 = vmatprep.subr.mxu0 %v103
  %167 = vmatpush1.msra.mxu0 %v102
  %168 = vmatprep.subr.mxu0 %v107
  %169 = vmatpush1.msra.mxu0 %v106
  %170 = vmatprep.subr.mxu0 %v111
  %171 = vmatpush1.msra.mxu0 %v110
  %172 = vmatprep.subr.mxu0 %v115
  %173 = vmatpush1.msra.mxu0 %v114
  %174 = vmatprep.subr.mxu0 %v119
  %175 = vmatpush1.msra.mxu0 %v118
  %176 = vmatprep.subr.mxu0 0.0
  %177 = vmatpush1.msra.mxu0 0.0
  %178 = vmatprep.subr.mxu0 0.0
  %179 = vmatpush1.msra.mxu0 0.0
  %180 = vmatprep.subr.mxu0 0.0
  %181 = vmatpush1.msra.mxu0 0.0
  %182 = vmatprep.subr.mxu0 0.0
  %183 = vmatpush1.msra.mxu0 0.0
  %184 = vmatprep.subr.mxu0 0.0
  %185 = vmatpush1.msra.mxu0 0.0
  %186 = vmatprep.subr.mxu0 0.0
  %187 = vmatpush1.msra.mxu0 0.0
  %188 = vmatprep.subr.mxu0 0.0
  %189 = vmatpush1.msra.mxu0 0.0
  %190 = vmatprep.subr.mxu0 0.0
  %191 = vmatpush1.msra.mxu0 0.0
  %192 = vmatprep.subr.mxu0 0.0
  %193 = vmatpush1.msra.mxu0 0.0
  %194 = vmatprep.subr.mxu0 0.0
  %195 = vmatpush1.msra.mxu0 0.0
  %196 = vmatprep.subr.mxu0 0.0
  %197 = vmatpush1.msra.mxu0 0.0
  %198 = vmatprep.subr.mxu0 0.0
  %199 = vmatpush1.msra.mxu0 0.0
  %200 = vmatprep.subr.mxu0 0.0
  %201 = vmatpush1.msra.mxu0 0.0
  %202 = vmatprep.subr.mxu0 0.0
  %203 = vmatpush1.msra.mxu0 0.0
  %204 = vmatprep.subr.mxu0 0.0
  %205 = vmatpush1.msra.mxu0 0.0
  %206 = vmatprep.subr.mxu0 0.0
  %207 = vmatpush1.msra.mxu0 0.0
  %208 = vmatprep.mubr.f32.mxu0 0.0
  %209 = vmatmul.mubr.f32.gmra.mrb[0].mxu0 %v50
  %v210 = vpop.f32.mrb[0].mxu0
  %v211 = vadd.f32 %v127, %v210
  %v212 = vpop.f32.mrb[0].mxu0
  %v213 = vadd.f32 %v131, %v212
  %214 = vmatprep.mubr.f32.mxu0 0.0
  %215 = vmatmul.mubr.f32.gmra.mrb[0].mxu0 %v51
  %v216 = vpop.f32.mrb[0].mxu0
  %v217 = vadd.f32 %v127, %v216
  %v218 = vpop.f32.mrb[0].mxu0
  %v219 = vadd.f32 %v131, %v218
  %220 = vmatprep.mubr.f32.mxu0 0.0
  %221 = vmatmul.mubr.f32.gmra.mrb[0].mxu0 %v52
  %v222 = vpop.f32.mrb[0].mxu0
  %v223 = vadd.f32 %v127, %v222
  %v224 = vpop.f32.mrb[0].mxu0
  %v225 = vadd.f32 %v131, %v224
  %226 = vmatprep.mubr.f32.mxu0 0.0
  %227 = vmatmul.mubr.f32.gmra.mrb[0].mxu0 %v53
  %v228 = vpop.f32.mrb[0].mxu0
  %v229 = vadd.f32 %v127, %v228
  %v230 = vpop.f32.mrb[0].mxu0
  %v231 = vadd.f32 %v131, %v230
  %232 = vmatprep.mubr.f32.mxu0 0.0
  %233 = vmatmul.mubr.f32.gmra.mrb[0].mxu0 %v54
  %v234 = vpop.f32.mrb[0].mxu0
  %v235 = vadd.f32 %v127, %v234
  %v236 = vpop.f32.mrb[0].mxu0
  %v237 = vadd.f32 %v131, %v236
  %238 = vmatprep.mubr.f32.mxu0 0.0
  %239 = vmatmul.mubr.f32.gmra.mrb[0].mxu0 %v55
  %v240 = vpop.f32.mrb[0].mxu0
  %v241 = vadd.f32 %v127, %v240
  %v242 = vpop.f32.mrb[0].mxu0
  %v243 = vadd.f32 %v131, %v242
  %244 = vmatprep.mubr.f32.mxu0 0.0
  %245 = vmatmul.mubr.f32.gmra.mrb[0].mxu0 %v56
  %v246 = vpop.f32.mrb[0].mxu0
  %v247 = vadd.f32 %v127, %v246
  %v248 = vpop.f32.mrb[0].mxu0
  %v249 = vadd.f32 %v131, %v248
  %250 = vmatprep.mubr.f32.mxu0 0.0
  %251 = vmatmul.mubr.f32.gmra.mrb[0].mxu0 %v57
  %v252 = vpop.f32.mrb[0].mxu0
  %v253 = vadd.f32 %v127, %v252
  %v254 = vpop.f32.mrb[0].mxu0
  %v255 = vadd.f32 %v131, %v254
  %256 = vdwg.mxu0
  %257 = vmatprep.subr.mxu0 %v61
  %258 = vmatpush1.msra.mxu0 %v60
  %259 = vmatprep.subr.mxu0 %v65
  %260 = vmatpush1.msra.mxu0 %v64
  %261 = vmatprep.subr.mxu0 %v69
  %262 = vmatpush1.msra.mxu0 %v68
  %263 = vmatprep.subr.mxu0 %v73
  %264 = vmatpush1.msra.mxu0 %v72
  %265 = vmatprep.subr.mxu0 %v77
  %266 = vmatpush1.msra.mxu0 %v76
  %267 = vmatprep.subr.mxu0 %v81
  %268 = vmatpush1.msra.mxu0 %v80
  %269 = vmatprep.subr.mxu0 %v85
  %270 = vmatpush1.msra.mxu0 %v84
  %271 = vmatprep.subr.mxu0 %v89
  %272 = vmatpush1.msra.mxu0 %v88
  %273 = vmatprep.subr.mxu0 %v93
  %274 = vmatpush1.msra.mxu0 %v92
  %275 = vmatprep.subr.mxu0 %v97
  %276 = vmatpush1.msra.mxu0 %v96
  %277 = vmatprep.subr.mxu0 %v101
  %278 = vmatpush1.msra.mxu0 %v100
  %279 = vmatprep.subr.mxu0 %v105
  %280 = vmatpush1.msra.mxu0 %v104
  %281 = vmatprep.subr.mxu0 %v109
  %282 = vmatpush1.msra.mxu0 %v108
  %283 = vmatprep.subr.mxu0 %v113
  %284 = vmatpush1.msra.mxu0 %v112
  %285 = vmatprep.subr.mxu0 %v117
  %286 = vmatpush1.msra.mxu0 %v116
  %287 = vmatprep.subr.mxu0 %v121
  %288 = vmatpush1.msra.mxu0 %v120
  %289 = vmatprep.subr.mxu0 0.0
  %290 = vmatpush1.msra.mxu0 0.0
  %291 = vmatprep.subr.mxu0 0.0
  %292 = vmatpush1.msra.mxu0 0.0
  %293 = vmatprep.subr.mxu0 0.0
  %294 = vmatpush1.msra.mxu0 0.0
  %295 = vmatprep.subr.mxu0 0.0
  %296 = vmatpush1.msra.mxu0 0.0
  %297 = vmatprep.subr.mxu0 0.0
  %298 = vmatpush1.msra.mxu0 0.0
  %299 = vmatprep.subr.mxu0 0.0
  %300 = vmatpush1.msra.mxu0 0.0
  %301 = vmatprep.subr.mxu0 0.0
  %302 = vmatpush1.msra.mxu0 0.0
  %303 = vmatprep.subr.mxu0 0.0
  %304 = vmatpush1.msra.mxu0 0.0
  %305 = vmatprep.subr.mxu0 0.0
  %306 = vmatpush1.msra.mxu0 0.0
  %307 = vmatprep.subr.mxu0 0.0
  %308 = vmatpush1.msra.mxu0 0.0
  %309 = vmatprep.subr.mxu0 0.0
  %310 = vmatpush1.msra.mxu0 0.0
  %311 = vmatprep.subr.mxu0 0.0
  %312 = vmatpush1.msra.mxu0 0.0
  %313 = vmatprep.subr.mxu0 0.0
  %314 = vmatpush1.msra.mxu0 0.0
  %315 = vmatprep.subr.mxu0 0.0
  %316 = vmatpush1.msra.mxu0 0.0
  %317 = vmatprep.subr.mxu0 0.0
  %318 = vmatpush1.msra.mxu0 0.0
  %319 = vmatprep.subr.mxu0 0.0
  %320 = vmatpush1.msra.mxu0 0.0
  %321 = vmatprep.mubr.f32.mxu0 0.0
  %322 = vmatmul.mubr.f32.gmra.mrb[0].mxu0 %v50
  %v323 = vpop.f32.mrb[0].mxu0
  %v324 = vadd.f32 %v135, %v323
  %v325 = vpop.f32.mrb[0].mxu0
  %v326 = vadd.f32 %v139, %v325
  %327 = vmatprep.mubr.f32.mxu0 0.0
  %328 = vmatmul.mubr.f32.gmra.mrb[0].mxu0 %v51
  %v329 = vpop.f32.mrb[0].mxu0
  %v330 = vadd.f32 %v135, %v329
  %v331 = vpop.f32.mrb[0].mxu0
  %v332 = vadd.f32 %v139, %v331
  %333 = vmatprep.mubr.f32.mxu0 0.0
  %334 = vmatmul.mubr.f32.gmra.mrb[0].mxu0 %v52
  %v335 = vpop.f32.mrb[0].mxu0
  %v336 = vadd.f32 %v135, %v335
  %v337 = vpop.f32.mrb[0].mxu0
  %v338 = vadd.f32 %v139, %v337
  %339 = vmatprep.mubr.f32.mxu0 0.0
  %340 = vmatmul.mubr.f32.gmra.mrb[0].mxu0 %v53
  %v341 = vpop.f32.mrb[0].mxu0
  %v342 = vadd.f32 %v135, %v341
  %v343 = vpop.f32.mrb[0].mxu0
  %v344 = vadd.f32 %v139, %v343
  %345 = vmatprep.mubr.f32.mxu0 0.0
  %346 = vmatmul.mubr.f32.gmra.mrb[0].mxu0 %v54
  %v347 = vpop.f32.mrb[0].mxu0
  %v348 = vadd.f32 %v135, %v347
  %v349 = vpop.f32.mrb[0].mxu0
  %v350 = vadd.f32 %v139, %v349
  %351 = vmatprep.mubr.f32.mxu0 0.0
  %352 = vmatmul.mubr.f32.gmra.mrb[0].mxu0 %v55
  %v353 = vpop.f32.mrb[0].mxu0
  %v354 = vadd.f32 %v135, %v353
  %v355 = vpop.f32.mrb[0].mxu0
  %v356 = vadd.f32 %v139, %v355
  %357 = vmatprep.mubr.f32.mxu0 0.0
  %358 = vmatmul.mubr.f32.gmra.mrb[0].mxu0 %v56
  %v359 = vpop.f32.mrb[0].mxu0
  %v360 = vadd.f32 %v135, %v359
  %v361 = vpop.f32.mrb[0].mxu0
  %v362 = vadd.f32 %v139, %v361
  %363 = vmatprep.mubr.f32.mxu0 0.0
  %364 = vmatmul.mubr.f32.gmra.mrb[0].mxu0 %v57
  %v365 = vpop.f32.mrb[0].mxu0
  %v366 = vadd.f32 %v135, %v365
  %v367 = vpop.f32.mrb[0].mxu0
  %v368 = vadd.f32 %v139, %v367
  %369 = vdwg.mxu0
  %370 = vst [vmem:[#allocation2] sm:$0xff] %v211
  %371 = vst [vmem:[#allocation2 + $0x8] sm:$0xff] %v213
  %372 = vst [vmem:[#allocation2 + $0x10] sm:$0xff] %v324
  %373 = vst [vmem:[#allocation2 + $0x18] sm:$0xff] %v326
  %374 = vst [vmem:[#allocation2 + $0x20] sm:$0xff] %v217
  %375 = vst [vmem:[#allocation2 + $0x28] sm:$0xff] %v219
  %376 = vst [vmem:[#allocation2 + $0x30] sm:$0xff] %v330
  %377 = vst [vmem:[#allocation2 + $0x38] sm:$0xff] %v332
  %378 = vst [vmem:[#allocation2 + $0x40] sm:$0xff] %v223
  %379 = vst [vmem:[#allocation2 + $0x48] sm:$0xff] %v225
  %380 = vst [vmem:[#allocation2 + $0x50] sm:$0xff] %v336
  %381 = vst [vmem:[#allocation2 + $0x58] sm:$0xff] %v338
  %382 = vst [vmem:[#allocation2 + $0x60] sm:$0xff] %v229
  %383 = vst [vmem:[#allocation2 + $0x68] sm:$0xff] %v231
  %384 = vst [vmem:[#allocation2 + $0x70] sm:$0xff] %v342
  %385 = vst [vmem:[#allocation2 + $0x78] sm:$0xff] %v344
  %386 = vst [vmem:[#allocation2 + $0x80] sm:$0xff] %v235
  %387 = vst [vmem:[#allocation2 + $0x88] sm:$0xff] %v237
  %388 = vst [vmem:[#allocation2 + $0x90] sm:$0xff] %v348
  %389 = vst [vmem:[#allocation2 + $0x98] sm:$0xff] %v350
  %390 = vst [vmem:[#allocation2 + $0xa0] sm:$0xff] %v241
  %391 = vst [vmem:[#allocation2 + $0xa8] sm:$0xff] %v243
  %392 = vst [vmem:[#allocation2 + $0xb0] sm:$0xff] %v354
  %393 = vst [vmem:[#allocation2 + $0xb8] sm:$0xff] %v356
  %394 = vst [vmem:[#allocation2 + $0xc0] sm:$0xff] %v247
  %395 = vst [vmem:[#allocation2 + $0xc8] sm:$0xff] %v249
  %396 = vst [vmem:[#allocation2 + $0xd0] sm:$0xff] %v360
  %397 = vst [vmem:[#allocation2 + $0xd8] sm:$0xff] %v362
  %398 = vst [vmem:[#allocation2 + $0xe0] sm:$0xff] %v253
  %399 = vst [vmem:[#allocation2 + $0xe8] sm:$0xff] %v255
  %400 = vst [vmem:[#allocation2 + $0xf0] sm:$0xff] %v366
  %401 = vst [vmem:[#allocation2 + $0xf8] sm:$0xff] %v368
  %v402 = vld [vmem:[%s4] sm:$0xff]
  %v403 = vld [vmem:[%s4 + $0x8] sm:$0xff]
  %v404 = vld [vmem:[%s4 + $0x10] sm:$0xff]
  %v405 = vld [vmem:[%s4 + $0x18] sm:$0xff]
  %v406 = vld [vmem:[%s4 + $0x20] sm:$0xff]
  %v407 = vld [vmem:[%s4 + $0x28] sm:$0xff]
  %v408 = vld [vmem:[%s4 + $0x30] sm:$0xff]
  %v409 = vld [vmem:[%s4 + $0x38] sm:$0xff]
  %v410 = vld [vmem:[%s4 + $0x40] sm:$0xff]
  %v411 = vld [vmem:[%s4 + $0x48] sm:$0xff]
  %v412 = vld [vmem:[%s4 + $0x50] sm:$0xff]
  %v413 = vld [vmem:[%s4 + $0x58] sm:$0xff]
  %v414 = vld [vmem:[%s4 + $0x60] sm:$0xff]
  %v415 = vld [vmem:[%s4 + $0x68] sm:$0xff]
  %v416 = vld [vmem:[%s4 + $0x70] sm:$0xff]
  %v417 = vld [vmem:[%s4 + $0x78] sm:$0xff]
  %v418 = vld [vmem:[%s4 + $0x80] sm:$0xff]
  %v419 = vld [vmem:[%s4 + $0x88] sm:$0xff]
  %v420 = vld [vmem:[%s4 + $0x90] sm:$0xff]
  %v421 = vld [vmem:[%s4 + $0x98] sm:$0xff]
  %v422 = vld [vmem:[%s4 + $0xa0] sm:$0xff]
  %v423 = vld [vmem:[%s4 + $0xa8] sm:$0xff]
  %v424 = vld [vmem:[%s4 + $0xb0] sm:$0xff]
  %v425 = vld [vmem:[%s4 + $0xb8] sm:$0xff]
  %v426 = vld [vmem:[%s4 + $0xc0] sm:$0xff]
  %v427 = vld [vmem:[%s4 + $0xc8] sm:$0xff]
  %v428 = vld [vmem:[%s4 + $0xd0] sm:$0xff]
  %v429 = vld [vmem:[%s4 + $0xd8] sm:$0xff]
  %v430 = vld [vmem:[%s4 + $0xe0] sm:$0xff]
  %v431 = vld [vmem:[%s4 + $0xe8] sm:$0xff]
  %v432 = vld [vmem:[%s4 + $0xf0] sm:$0xff]
  %v433 = vld [vmem:[%s4 + $0xf8] sm:$0xff]
  %v434 = vld [vmem:[%s4 + $0x100] sm:$0xff]
  %v435 = vld [vmem:[%s4 + $0x108] sm:$0xff]
  %v436 = vld [vmem:[%s4 + $0x110] sm:$0xff]
  %v437 = vld [vmem:[%s4 + $0x118] sm:$0xff]
  %v438 = vld [vmem:[%s4 + $0x120] sm:$0xff]
  %v439 = vld [vmem:[%s4 + $0x128] sm:$0xff]
  %v440 = vld [vmem:[%s4 + $0x130] sm:$0xff]
  %v441 = vld [vmem:[%s4 + $0x138] sm:$0xff]
  %v442 = vld [vmem:[%s4 + $0x140] sm:$0xff]
  %v443 = vld [vmem:[%s4 + $0x148] sm:$0xff]
  %v444 = vld [vmem:[%s4 + $0x150] sm:$0xff]
  %v445 = vld [vmem:[%s4 + $0x158] sm:$0xff]
  %v446 = vld [vmem:[%s4 + $0x160] sm:$0xff]
  %v447 = vld [vmem:[%s4 + $0x168] sm:$0xff]
  %v448 = vld [vmem:[%s4 + $0x170] sm:$0xff]
  %v449 = vld [vmem:[%s4 + $0x178] sm:$0xff]
  %v450 = vld [vmem:[%s4 + $0x180] sm:$0xff]
  %v451 = vld [vmem:[%s4 + $0x188] sm:$0xff]
  %v452 = vld [vmem:[%s4 + $0x190] sm:$0xff]
  %v453 = vld [vmem:[%s4 + $0x198] sm:$0xff]
  %v454 = vld [vmem:[%s4 + $0x1a0] sm:$0xff]
  %v455 = vld [vmem:[%s4 + $0x1a8] sm:$0xff]
  %v456 = vld [vmem:[%s4 + $0x1b0] sm:$0xff]
  %v457 = vld [vmem:[%s4 + $0x1b8] sm:$0xff]
  %v458 = vld [vmem:[%s4 + $0x1c0] sm:$0xff]
  %v459 = vld [vmem:[%s4 + $0x1c8] sm:$0xff]
  %v460 = vld [vmem:[%s4 + $0x1d0] sm:$0xff]
  %v461 = vld [vmem:[%s4 + $0x1d8] sm:$0xff]
  %v462 = vld [vmem:[%s4 + $0x1e0] sm:$0xff]
  %v463 = vld [vmem:[%s4 + $0x1e8] sm:$0xff]
  %v464 = vld [vmem:[%s4 + $0x1f0] sm:$0xff]
  %v465 = vld [vmem:[%s4 + $0x1f8] sm:$0xff]
  %v466 = vld [vmem:[%s6] sm:$0xf]
  %v468 = vlaneseq
  %v469 = vshrl.u32 %v468, 7
  %v470 = vsub.s32 0, %v469
  %v471 = vrot.slane %v466, %v470
  %v472 = vlaneseq
  %v473 = vshrl.u32 %v472, 7
  %v474 = vsub.s32 1, %v473
  %v475 = vrot.slane %v466, %v474
  %v476 = vlaneseq
  %v477 = vshrl.u32 %v476, 7
  %v478 = vsub.s32 2, %v477
  %v479 = vrot.slane %v466, %v478
  %v480 = vlaneseq
  %v481 = vshrl.u32 %v480, 7
  %v482 = vsub.s32 3, %v481
  %v483 = vrot.slane %v466, %v482
  %488 = vmatprep.subr.mxu0 %v403
  %489 = vmatpush1.msra.mxu0 %v402
  %490 = vmatprep.subr.mxu0 %v407
  %491 = vmatpush1.msra.mxu0 %v406
  %492 = vmatprep.subr.mxu0 %v411
  %493 = vmatpush1.msra.mxu0 %v410
  %494 = vmatprep.subr.mxu0 %v415
  %495 = vmatpush1.msra.mxu0 %v414
  %496 = vmatprep.subr.mxu0 %v419
  %497 = vmatpush1.msra.mxu0 %v418
  %498 = vmatprep.subr.mxu0 %v423
  %499 = vmatpush1.msra.mxu0 %v422
  %500 = vmatprep.subr.mxu0 %v427
  %501 = vmatpush1.msra.mxu0 %v426
  %502 = vmatprep.subr.mxu0 %v431
  %503 = vmatpush1.msra.mxu0 %v430
  %504 = vmatprep.subr.mxu0 %v435
  %505 = vmatpush1.msra.mxu0 %v434
  %506 = vmatprep.subr.mxu0 %v439
  %507 = vmatpush1.msra.mxu0 %v438
  %508 = vmatprep.subr.mxu0 %v443
  %509 = vmatpush1.msra.mxu0 %v442
  %510 = vmatprep.subr.mxu0 %v447
  %511 = vmatpush1.msra.mxu0 %v446
  %512 = vmatprep.subr.mxu0 %v451
  %513 = vmatpush1.msra.mxu0 %v450
  %514 = vmatprep.subr.mxu0 %v455
  %515 = vmatpush1.msra.mxu0 %v454
  %516 = vmatprep.subr.mxu0 %v459
  %517 = vmatpush1.msra.mxu0 %v458
  %518 = vmatprep.subr.mxu0 %v463
  %519 = vmatpush1.msra.mxu0 %v462
  %520 = vmatprep.subr.mxu0 0.0
  %521 = vmatpush1.msra.mxu0 0.0
  %522 = vmatprep.subr.mxu0 0.0
  %523 = vmatpush1.msra.mxu0 0.0
  %524 = vmatprep.subr.mxu0 0.0
  %525 = vmatpush1.msra.mxu0 0.0
  %526 = vmatprep.subr.mxu0 0.0
  %527 = vmatpush1.msra.mxu0 0.0
  %528 = vmatprep.subr.mxu0 0.0
  %529 = vmatpush1.msra.mxu0 0.0
  %530 = vmatprep.subr.mxu0 0.0
  %531 = vmatpush1.msra.mxu0 0.0
  %532 = vmatprep.subr.mxu0 0.0
  %533 = vmatpush1.msra.mxu0 0.0
  %534 = vmatprep.subr.mxu0 0.0
  %535 = vmatpush1.msra.mxu0 0.0
  %536 = vmatprep.subr.mxu0 0.0
  %537 = vmatpush1.msra.mxu0 0.0
  %538 = vmatprep.subr.mxu0 0.0
  %539 = vmatpush1.msra.mxu0 0.0
  %540 = vmatprep.subr.mxu0 0.0
  %541 = vmatpush1.msra.mxu0 0.0
  %542 = vmatprep.subr.mxu0 0.0
  %543 = vmatpush1.msra.mxu0 0.0
  %544 = vmatprep.subr.mxu0 0.0
  %545 = vmatpush1.msra.mxu0 0.0
  %546 = vmatprep.subr.mxu0 0.0
  %547 = vmatpush1.msra.mxu0 0.0
  %548 = vmatprep.subr.mxu0 0.0
  %549 = vmatpush1.msra.mxu0 0.0
  %550 = vmatprep.subr.mxu0 0.0
  %551 = vmatpush1.msra.mxu0 0.0
  %552 = vmatprep.mubr.f32.mxu0 0.0
  %553 = vmatmul.mubr.f32.gmra.mrb[0].mxu0 %v50
  %v554 = vpop.f32.mrb[0].mxu0
  %v555 = vadd.f32 %v471, %v554
  %v556 = vpop.f32.mrb[0].mxu0
  %v557 = vadd.f32 %v475, %v556
  %558 = vmatprep.mubr.f32.mxu0 0.0
  %559 = vmatmul.mubr.f32.gmra.mrb[0].mxu0 %v51
  %v560 = vpop.f32.mrb[0].mxu0
  %v561 = vadd.f32 %v471, %v560
  %v562 = vpop.f32.mrb[0].mxu0
  %v563 = vadd.f32 %v475, %v562
  %564 = vmatprep.mubr.f32.mxu0 0.0
  %565 = vmatmul.mubr.f32.gmra.mrb[0].mxu0 %v52
  %v566 = vpop.f32.mrb[0].mxu0
  %v567 = vadd.f32 %v471, %v566
  %v568 = vpop.f32.mrb[0].mxu0
  %v569 = vadd.f32 %v475, %v568
  %570 = vmatprep.mubr.f32.mxu0 0.0
  %571 = vmatmul.mubr.f32.gmra.mrb[0].mxu0 %v53
  %v572 = vpop.f32.mrb[0].mxu0
  %v573 = vadd.f32 %v471, %v572
  %v574 = vpop.f32.mrb[0].mxu0
  %v575 = vadd.f32 %v475, %v574
  %576 = vmatprep.mubr.f32.mxu0 0.0
  %577 = vmatmul.mubr.f32.gmra.mrb[0].mxu0 %v54
  %v578 = vpop.f32.mrb[0].mxu0
  %v579 = vadd.f32 %v471, %v578
  %v580 = vpop.f32.mrb[0].mxu0
  %v581 = vadd.f32 %v475, %v580
  %582 = vmatprep.mubr.f32.mxu0 0.0
  %583 = vmatmul.mubr.f32.gmra.mrb[0].mxu0 %v55
  %v584 = vpop.f32.mrb[0].mxu0
  %v585 = vadd.f32 %v471, %v584
  %v586 = vpop.f32.mrb[0].mxu0
  %v587 = vadd.f32 %v475, %v586
  %588 = vmatprep.mubr.f32.mxu0 0.0
  %589 = vmatmul.mubr.f32.gmra.mrb[0].mxu0 %v56
  %v590 = vpop.f32.mrb[0].mxu0
  %v591 = vadd.f32 %v471, %v590
  %v592 = vpop.f32.mrb[0].mxu0
  %v593 = vadd.f32 %v475, %v592
  %594 = vmatprep.mubr.f32.mxu0 0.0
  %595 = vmatmul.mubr.f32.gmra.mrb[0].mxu0 %v57
  %v596 = vpop.f32.mrb[0].mxu0
  %v597 = vadd.f32 %v471, %v596
  %v598 = vpop.f32.mrb[0].mxu0
  %v599 = vadd.f32 %v475, %v598
  %600 = vdwg.mxu0
  %601 = vmatprep.subr.mxu0 %v405
  %602 = vmatpush1.msra.mxu0 %v404
  %603 = vmatprep.subr.mxu0 %v409
  %604 = vmatpush1.msra.mxu0 %v408
  %605 = vmatprep.subr.mxu0 %v413
  %606 = vmatpush1.msra.mxu0 %v412
  %607 = vmatprep.subr.mxu0 %v417
  %608 = vmatpush1.msra.mxu0 %v416
  %609 = vmatprep.subr.mxu0 %v421
  %610 = vmatpush1.msra.mxu0 %v420
  %611 = vmatprep.subr.mxu0 %v425
  %612 = vmatpush1.msra.mxu0 %v424
  %613 = vmatprep.subr.mxu0 %v429
  %614 = vmatpush1.msra.mxu0 %v428
  %615 = vmatprep.subr.mxu0 %v433
  %616 = vmatpush1.msra.mxu0 %v432
  %617 = vmatprep.subr.mxu0 %v437
  %618 = vmatpush1.msra.mxu0 %v436
  %619 = vmatprep.subr.mxu0 %v441
  %620 = vmatpush1.msra.mxu0 %v440
  %621 = vmatprep.subr.mxu0 %v445
  %622 = vmatpush1.msra.mxu0 %v444
  %623 = vmatprep.subr.mxu0 %v449
  %624 = vmatpush1.msra.mxu0 %v448
  %625 = vmatprep.subr.mxu0 %v453
  %626 = vmatpush1.msra.mxu0 %v452
  %627 = vmatprep.subr.mxu0 %v457
  %628 = vmatpush1.msra.mxu0 %v456
  %629 = vmatprep.subr.mxu0 %v461
  %630 = vmatpush1.msra.mxu0 %v460
  %631 = vmatprep.subr.mxu0 %v465
  %632 = vmatpush1.msra.mxu0 %v464
  %633 = vmatprep.subr.mxu0 0.0
  %634 = vmatpush1.msra.mxu0 0.0
  %635 = vmatprep.subr.mxu0 0.0
  %636 = vmatpush1.msra.mxu0 0.0
  %637 = vmatprep.subr.mxu0 0.0
  %638 = vmatpush1.msra.mxu0 0.0
  %639 = vmatprep.subr.mxu0 0.0
  %640 = vmatpush1.msra.mxu0 0.0
  %641 = vmatprep.subr.mxu0 0.0
  %642 = vmatpush1.msra.mxu0 0.0
  %643 = vmatprep.subr.mxu0 0.0
  %644 = vmatpush1.msra.mxu0 0.0
  %645 = vmatprep.subr.mxu0 0.0
  %646 = vmatpush1.msra.mxu0 0.0
  %647 = vmatprep.subr.mxu0 0.0
  %648 = vmatpush1.msra.mxu0 0.0
  %649 = vmatprep.subr.mxu0 0.0
  %650 = vmatpush1.msra.mxu0 0.0
  %651 = vmatprep.subr.mxu0 0.0
  %652 = vmatpush1.msra.mxu0 0.0
  %653 = vmatprep.subr.mxu0 0.0
  %654 = vmatpush1.msra.mxu0 0.0
  %655 = vmatprep.subr.mxu0 0.0
  %656 = vmatpush1.msra.mxu0 0.0
  %657 = vmatprep.subr.mxu0 0.0
  %658 = vmatpush1.msra.mxu0 0.0
  %659 = vmatprep.subr.mxu0 0.0
  %660 = vmatpush1.msra.mxu0 0.0
  %661 = vmatprep.subr.mxu0 0.0
  %662 = vmatpush1.msra.mxu0 0.0
  %663 = vmatprep.subr.mxu0 0.0
  %664 = vmatpush1.msra.mxu0 0.0
  %665 = vmatprep.mubr.f32.mxu0 0.0
  %666 = vmatmul.mubr.f32.gmra.mrb[0].mxu0 %v50
  %v667 = vpop.f32.mrb[0].mxu0
  %v668 = vadd.f32 %v479, %v667
  %v669 = vpop.f32.mrb[0].mxu0
  %v670 = vadd.f32 %v483, %v669
  %671 = vmatprep.mubr.f32.mxu0 0.0
  %672 = vmatmul.mubr.f32.gmra.mrb[0].mxu0 %v51
  %v673 = vpop.f32.mrb[0].mxu0
  %v674 = vadd.f32 %v479, %v673
  %v675 = vpop.f32.mrb[0].mxu0
  %v676 = vadd.f32 %v483, %v675
  %677 = vmatprep.mubr.f32.mxu0 0.0
  %678 = vmatmul.mubr.f32.gmra.mrb[0].mxu0 %v52
  %v679 = vpop.f32.mrb[0].mxu0
  %v680 = vadd.f32 %v479, %v679
  %v681 = vpop.f32.mrb[0].mxu0
  %v682 = vadd.f32 %v483, %v681
  %683 = vmatprep.mubr.f32.mxu0 0.0
  %684 = vmatmul.mubr.f32.gmra.mrb[0].mxu0 %v53
  %v685 = vpop.f32.mrb[0].mxu0
  %v686 = vadd.f32 %v479, %v685
  %v687 = vpop.f32.mrb[0].mxu0
  %v688 = vadd.f32 %v483, %v687
  %689 = vmatprep.mubr.f32.mxu0 0.0
  %690 = vmatmul.mubr.f32.gmra.mrb[0].mxu0 %v54
  %v691 = vpop.f32.mrb[0].mxu0
  %v692 = vadd.f32 %v479, %v691
  %v693 = vpop.f32.mrb[0].mxu0
  %v694 = vadd.f32 %v483, %v693
  %695 = vmatprep.mubr.f32.mxu0 0.0
  %696 = vmatmul.mubr.f32.gmra.mrb[0].mxu0 %v55
  %v697 = vpop.f32.mrb[0].mxu0
  %v698 = vadd.f32 %v479, %v697
  %v699 = vpop.f32.mrb[0].mxu0
  %v700 = vadd.f32 %v483, %v699
  %701 = vmatprep.mubr.f32.mxu0 0.0
  %702 = vmatmul.mubr.f32.gmra.mrb[0].mxu0 %v56
  %v703 = vpop.f32.mrb[0].mxu0
  %v704 = vadd.f32 %v479, %v703
  %v705 = vpop.f32.mrb[0].mxu0
  %v706 = vadd.f32 %v483, %v705
  %707 = vmatprep.mubr.f32.mxu0 0.0
  %708 = vmatmul.mubr.f32.gmra.mrb[0].mxu0 %v57
  %v709 = vpop.f32.mrb[0].mxu0
  %v710 = vadd.f32 %v479, %v709
  %v711 = vpop.f32.mrb[0].mxu0
  %v712 = vadd.f32 %v483, %v711
  %713 = vdwg.mxu0
  %714 = vst [vmem:[#allocation3] sm:$0xff] %v555
  %715 = vst [vmem:[#allocation3 + $0x8] sm:$0xff] %v557
  %716 = vst [vmem:[#allocation3 + $0x10] sm:$0xff] %v668
  %717 = vst [vmem:[#allocation3 + $0x18] sm:$0xff] %v670
  %718 = vst [vmem:[#allocation3 + $0x20] sm:$0xff] %v561
  %719 = vst [vmem:[#allocation3 + $0x28] sm:$0xff] %v563
  %720 = vst [vmem:[#allocation3 + $0x30] sm:$0xff] %v674
  %721 = vst [vmem:[#allocation3 + $0x38] sm:$0xff] %v676
  %722 = vst [vmem:[#allocation3 + $0x40] sm:$0xff] %v567
  %723 = vst [vmem:[#allocation3 + $0x48] sm:$0xff] %v569
  %724 = vst [vmem:[#allocation3 + $0x50] sm:$0xff] %v680
  %725 = vst [vmem:[#allocation3 + $0x58] sm:$0xff] %v682
  %726 = vst [vmem:[#allocation3 + $0x60] sm:$0xff] %v573
  %727 = vst [vmem:[#allocation3 + $0x68] sm:$0xff] %v575
  %728 = vst [vmem:[#allocation3 + $0x70] sm:$0xff] %v686
  %729 = vst [vmem:[#allocation3 + $0x78] sm:$0xff] %v688
  %730 = vst [vmem:[#allocation3 + $0x80] sm:$0xff] %v579
  %731 = vst [vmem:[#allocation3 + $0x88] sm:$0xff] %v581
  %732 = vst [vmem:[#allocation3 + $0x90] sm:$0xff] %v692
  %733 = vst [vmem:[#allocation3 + $0x98] sm:$0xff] %v694
  %734 = vst [vmem:[#allocation3 + $0xa0] sm:$0xff] %v585
  %735 = vst [vmem:[#allocation3 + $0xa8] sm:$0xff] %v587
  %736 = vst [vmem:[#allocation3 + $0xb0] sm:$0xff] %v698
  %737 = vst [vmem:[#allocation3 + $0xb8] sm:$0xff] %v700
  %738 = vst [vmem:[#allocation3 + $0xc0] sm:$0xff] %v591
  %739 = vst [vmem:[#allocation3 + $0xc8] sm:$0xff] %v593
  %740 = vst [vmem:[#allocation3 + $0xd0] sm:$0xff] %v704
  %741 = vst [vmem:[#allocation3 + $0xd8] sm:$0xff] %v706
  %742 = vst [vmem:[#allocation3 + $0xe0] sm:$0xff] %v597
  %743 = vst [vmem:[#allocation3 + $0xe8] sm:$0xff] %v599
  %744 = vst [vmem:[#allocation3 + $0xf0] sm:$0xff] %v710
  %745 = vst [vmem:[#allocation3 + $0xf8] sm:$0xff] %v712
  %v746 = vld [vmem:[%s2] sm:$0xff]
  %v747 = vld [vmem:[%s2 + $0x8] sm:$0xff]
  %v748 = vld [vmem:[%s2 + $0x10] sm:$0xff]
  %v749 = vld [vmem:[%s2 + $0x18] sm:$0xff]
  %v750 = vld [vmem:[%s2 + $0x20] sm:$0xff]
  %v751 = vld [vmem:[%s2 + $0x28] sm:$0xff]
  %v752 = vld [vmem:[%s2 + $0x30] sm:$0xff]
  %v753 = vld [vmem:[%s2 + $0x38] sm:$0xff]
  %v754 = vld [vmem:[%s2 + $0x40] sm:$0xff]
  %v755 = vld [vmem:[%s2 + $0x48] sm:$0xff]
  %v756 = vld [vmem:[%s2 + $0x50] sm:$0xff]
  %v757 = vld [vmem:[%s2 + $0x58] sm:$0xff]
  %v758 = vld [vmem:[%s2 + $0x60] sm:$0xff]
  %v759 = vld [vmem:[%s2 + $0x68] sm:$0xff]
  %v760 = vld [vmem:[%s2 + $0x70] sm:$0xff]
  %v761 = vld [vmem:[%s2 + $0x78] sm:$0xff]
  %v762 = vld [vmem:[%s2 + $0x80] sm:$0xff]
  %v763 = vld [vmem:[%s2 + $0x88] sm:$0xff]
  %v764 = vld [vmem:[%s2 + $0x90] sm:$0xff]
  %v765 = vld [vmem:[%s2 + $0x98] sm:$0xff]
  %v766 = vld [vmem:[%s2 + $0xa0] sm:$0xff]
  %v767 = vld [vmem:[%s2 + $0xa8] sm:$0xff]
  %v768 = vld [vmem:[%s2 + $0xb0] sm:$0xff]
  %v769 = vld [vmem:[%s2 + $0xb8] sm:$0xff]
  %v770 = vld [vmem:[%s2 + $0xc0] sm:$0xff]
  %v771 = vld [vmem:[%s2 + $0xc8] sm:$0xff]
  %v772 = vld [vmem:[%s2 + $0xd0] sm:$0xff]
  %v773 = vld [vmem:[%s2 + $0xd8] sm:$0xff]
  %v774 = vld [vmem:[%s2 + $0xe0] sm:$0xff]
  %v775 = vld [vmem:[%s2 + $0xe8] sm:$0xff]
  %v776 = vld [vmem:[%s2 + $0xf0] sm:$0xff]
  %v777 = vld [vmem:[%s2 + $0xf8] sm:$0xff]
  %v778 = vld [vmem:[%s2 + $0x100] sm:$0xff]
  %v779 = vld [vmem:[%s2 + $0x108] sm:$0xff]
  %v780 = vld [vmem:[%s2 + $0x110] sm:$0xff]
  %v781 = vld [vmem:[%s2 + $0x118] sm:$0xff]
  %v782 = vld [vmem:[%s2 + $0x120] sm:$0xff]
  %v783 = vld [vmem:[%s2 + $0x128] sm:$0xff]
  %v784 = vld [vmem:[%s2 + $0x130] sm:$0xff]
  %v785 = vld [vmem:[%s2 + $0x138] sm:$0xff]
  %v786 = vld [vmem:[%s2 + $0x140] sm:$0xff]
  %v787 = vld [vmem:[%s2 + $0x148] sm:$0xff]
  %v788 = vld [vmem:[%s2 + $0x150] sm:$0xff]
  %v789 = vld [vmem:[%s2 + $0x158] sm:$0xff]
  %v790 = vld [vmem:[%s2 + $0x160] sm:$0xff]
  %v791 = vld [vmem:[%s2 + $0x168] sm:$0xff]
  %v792 = vld [vmem:[%s2 + $0x170] sm:$0xff]
  %v793 = vld [vmem:[%s2 + $0x178] sm:$0xff]
  %v794 = vld [vmem:[%s2 + $0x180] sm:$0xff]
  %v795 = vld [vmem:[%s2 + $0x188] sm:$0xff]
  %v796 = vld [vmem:[%s2 + $0x190] sm:$0xff]
  %v797 = vld [vmem:[%s2 + $0x198] sm:$0xff]
  %v798 = vld [vmem:[%s2 + $0x1a0] sm:$0xff]
  %v799 = vld [vmem:[%s2 + $0x1a8] sm:$0xff]
  %v800 = vld [vmem:[%s2 + $0x1b0] sm:$0xff]
  %v801 = vld [vmem:[%s2 + $0x1b8] sm:$0xff]
  %v802 = vld [vmem:[%s2 + $0x1c0] sm:$0xff]
  %v803 = vld [vmem:[%s2 + $0x1c8] sm:$0xff]
  %v804 = vld [vmem:[%s2 + $0x1d0] sm:$0xff]
  %v805 = vld [vmem:[%s2 + $0x1d8] sm:$0xff]
  %v806 = vld [vmem:[%s2 + $0x1e0] sm:$0xff]
  %v807 = vld [vmem:[%s2 + $0x1e8] sm:$0xff]
  %v808 = vld [vmem:[%s2 + $0x1f0] sm:$0xff]
  %v809 = vld [vmem:[%s2 + $0x1f8] sm:$0xff]
  %v810 = vld [vmem:[#allocation2] sm:$0xff]
  %v811 = vld [vmem:[#allocation2 + $0x8] sm:$0xff]
  %v812 = vld [vmem:[#allocation2 + $0x10] sm:$0xff]
  %v813 = vld [vmem:[#allocation2 + $0x18] sm:$0xff]
  %814 = vmatprep.subr.mxu0 %v747
  %815 = vmatpush1.msra.mxu0 %v746
  %816 = vmatprep.subr.mxu0 %v751
  %817 = vmatpush1.msra.mxu0 %v750
  %818 = vmatprep.subr.mxu0 %v755
  %819 = vmatpush1.msra.mxu0 %v754
  %820 = vmatprep.subr.mxu0 %v759
  %821 = vmatpush1.msra.mxu0 %v758
  %822 = vmatprep.subr.mxu0 %v763
  %823 = vmatpush1.msra.mxu0 %v762
  %824 = vmatprep.subr.mxu0 %v767
  %825 = vmatpush1.msra.mxu0 %v766
  %826 = vmatprep.subr.mxu0 %v771
  %827 = vmatpush1.msra.mxu0 %v770
  %828 = vmatprep.subr.mxu0 %v775
  %829 = vmatpush1.msra.mxu0 %v774
  %830 = vmatprep.subr.mxu0 %v779
  %831 = vmatpush1.msra.mxu0 %v778
  %832 = vmatprep.subr.mxu0 %v783
  %833 = vmatpush1.msra.mxu0 %v782
  %834 = vmatprep.subr.mxu0 %v787
  %835 = vmatpush1.msra.mxu0 %v786
  %836 = vmatprep.subr.mxu0 %v791
  %837 = vmatpush1.msra.mxu0 %v790
  %838 = vmatprep.subr.mxu0 %v795
  %839 = vmatpush1.msra.mxu0 %v794
  %840 = vmatprep.subr.mxu0 %v799
  %841 = vmatpush1.msra.mxu0 %v798
  %842 = vmatprep.subr.mxu0 %v803
  %843 = vmatpush1.msra.mxu0 %v802
  %844 = vmatprep.subr.mxu0 %v807
  %845 = vmatpush1.msra.mxu0 %v806
  %846 = vmatprep.subr.mxu0 0.0
  %847 = vmatpush1.msra.mxu0 0.0
  %848 = vmatprep.subr.mxu0 0.0
  %849 = vmatpush1.msra.mxu0 0.0
  %850 = vmatprep.subr.mxu0 0.0
  %851 = vmatpush1.msra.mxu0 0.0
  %852 = vmatprep.subr.mxu0 0.0
  %853 = vmatpush1.msra.mxu0 0.0
  %854 = vmatprep.subr.mxu0 0.0
  %855 = vmatpush1.msra.mxu0 0.0
  %856 = vmatprep.subr.mxu0 0.0
  %857 = vmatpush1.msra.mxu0 0.0
  %858 = vmatprep.subr.mxu0 0.0
  %859 = vmatpush1.msra.mxu0 0.0
  %860 = vmatprep.subr.mxu0 0.0
  %861 = vmatpush1.msra.mxu0 0.0
  %862 = vmatprep.subr.mxu0 0.0
  %863 = vmatpush1.msra.mxu0 0.0
  %864 = vmatprep.subr.mxu0 0.0
  %865 = vmatpush1.msra.mxu0 0.0
  %866 = vmatprep.subr.mxu0 0.0
  %867 = vmatpush1.msra.mxu0 0.0
  %868 = vmatprep.subr.mxu0 0.0
  %869 = vmatpush1.msra.mxu0 0.0
  %870 = vmatprep.subr.mxu0 0.0
  %871 = vmatpush1.msra.mxu0 0.0
  %872 = vmatprep.subr.mxu0 0.0
  %873 = vmatpush1.msra.mxu0 0.0
  %874 = vmatprep.subr.mxu0 0.0
  %875 = vmatpush1.msra.mxu0 0.0
  %876 = vmatprep.subr.mxu0 0.0
  %877 = vmatpush1.msra.mxu0 0.0
  %878 = vmatprep.mubr.f32.mxu0 0.0
  %879 = vmatmul.mubr.f32.gmra.mrb[0].mxu0 0.0
  %v880 = vpop.f32.mrb[0].mxu0
  %v881 = vadd.f32 0.0, %v880
  %v882 = vpop.f32.mrb[0].mxu0
  %v883 = vadd.f32 0.0, %v882
  %884 = vdwg.mxu0
  %885 = vmatprep.subr.mxu0 %v749
  %886 = vmatpush1.msra.mxu0 %v748
  %887 = vmatprep.subr.mxu0 %v753
  %888 = vmatpush1.msra.mxu0 %v752
  %889 = vmatprep.subr.mxu0 %v757
  %890 = vmatpush1.msra.mxu0 %v756
  %891 = vmatprep.subr.mxu0 %v761
  %892 = vmatpush1.msra.mxu0 %v760
  %893 = vmatprep.subr.mxu0 %v765
  %894 = vmatpush1.msra.mxu0 %v764
  %895 = vmatprep.subr.mxu0 %v769
  %896 = vmatpush1.msra.mxu0 %v768
  %897 = vmatprep.subr.mxu0 %v773
  %898 = vmatpush1.msra.mxu0 %v772
  %899 = vmatprep.subr.mxu0 %v777
  %900 = vmatpush1.msra.mxu0 %v776
  %901 = vmatprep.subr.mxu0 %v781
  %902 = vmatpush1.msra.mxu0 %v780
  %903 = vmatprep.subr.mxu0 %v785
  %904 = vmatpush1.msra.mxu0 %v784
  %905 = vmatprep.subr.mxu0 %v789
  %906 = vmatpush1.msra.mxu0 %v788
  %907 = vmatprep.subr.mxu0 %v793
  %908 = vmatpush1.msra.mxu0 %v792
  %909 = vmatprep.subr.mxu0 %v797
  %910 = vmatpush1.msra.mxu0 %v796
  %911 = vmatprep.subr.mxu0 %v801
  %912 = vmatpush1.msra.mxu0 %v800
  %913 = vmatprep.subr.mxu0 %v805
  %914 = vmatpush1.msra.mxu0 %v804
  %915 = vmatprep.subr.mxu0 %v809
  %916 = vmatpush1.msra.mxu0 %v808
  %917 = vmatprep.subr.mxu0 0.0
  %918 = vmatpush1.msra.mxu0 0.0
  %919 = vmatprep.subr.mxu0 0.0
  %920 = vmatpush1.msra.mxu0 0.0
  %921 = vmatprep.subr.mxu0 0.0
  %922 = vmatpush1.msra.mxu0 0.0
  %923 = vmatprep.subr.mxu0 0.0
  %924 = vmatpush1.msra.mxu0 0.0
  %925 = vmatprep.subr.mxu0 0.0
  %926 = vmatpush1.msra.mxu0 0.0
  %927 = vmatprep.subr.mxu0 0.0
  %928 = vmatpush1.msra.mxu0 0.0
  %929 = vmatprep.subr.mxu0 0.0
  %930 = vmatpush1.msra.mxu0 0.0
  %931 = vmatprep.subr.mxu0 0.0
  %932 = vmatpush1.msra.mxu0 0.0
  %933 = vmatprep.subr.mxu0 0.0
  %934 = vmatpush1.msra.mxu0 0.0
  %935 = vmatprep.subr.mxu0 0.0
  %936 = vmatpush1.msra.mxu0 0.0
  %937 = vmatprep.subr.mxu0 0.0
  %938 = vmatpush1.msra.mxu0 0.0
  %939 = vmatprep.subr.mxu0 0.0
  %940 = vmatpush1.msra.mxu0 0.0
  %941 = vmatprep.subr.mxu0 0.0
  %942 = vmatpush1.msra.mxu0 0.0
  %943 = vmatprep.subr.mxu0 0.0
  %944 = vmatpush1.msra.mxu0 0.0
  %945 = vmatprep.subr.mxu0 0.0
  %946 = vmatpush1.msra.mxu0 0.0
  %947 = vmatprep.subr.mxu0 0.0
  %948 = vmatpush1.msra.mxu0 0.0
  %949 = vmatprep.mubr.f32.mxu0 0.0
  %950 = vmatmul.mubr.f32.gmra.mrb[0].mxu0 0.0
  %v951 = vpop.f32.mrb[0].mxu0
  %v952 = vadd.f32 0.0, %v951
  %v953 = vpop.f32.mrb[0].mxu0
  %v954 = vadd.f32 0.0, %v953
  %955 = vdwg.mxu0
  %v956 = vadd.f32 %v810, %v881
  %v957 = vadd.f32 %v811, %v883
  %v958 = vadd.f32 %v812, %v952
  %v959 = vadd.f32 %v813, %v954
  %v960 = vxor.u32 %v956, 2147483648
  %v961 = vmul.f32 %v960, 1.442695
  %v962 = vpow.pop %v961
  %v963 = vadd.f32 %v962, 1.0
  %v964 = vrcp.pop %v963
  %v965 = vmul.f32 1.0, %v964
  %v966 = vxor.u32 %v957, 2147483648
  %v967 = vmul.f32 %v966, 1.442695
  %v968 = vpow.pop %v967
  %v969 = vadd.f32 %v968, 1.0
  %v970 = vrcp.pop %v969
  %v971 = vmul.f32 1.0, %v970
  %v972 = vtanh.pop %v958
  %v973 = vxor.u32 %v959, 2147483648
  %v974 = vmul.f32 %v973, 1.442695
  %v975 = vpow.pop %v974
  %v976 = vadd.f32 %v975, 1.0
  %v977 = vrcp.pop %v976
  %v978 = vmul.f32 1.0, %v977
  %v979 = vmul.f32 %v971, 0.0
  %v980 = vmul.f32 %v965, %v972
  %v981 = vadd.f32 %v979, %v980
  %v982 = vtanh.pop %v981
  %v983 = vmul.f32 %v978, %v982
  %984 = vst [vmem:[#allocation6] sm:$0xff] %v983
  %v985 = vld [vmem:[#allocation2 + $0x20] sm:$0xff]
  %v986 = vld [vmem:[#allocation2 + $0x28] sm:$0xff]
  %v987 = vld [vmem:[#allocation2 + $0x30] sm:$0xff]
  %v988 = vld [vmem:[#allocation2 + $0x38] sm:$0xff]
  %989 = vmatprep.subr.mxu0 %v747
  %990 = vmatpush1.msra.mxu0 %v746
  %991 = vmatprep.subr.mxu0 %v751
  %992 = vmatpush1.msra.mxu0 %v750
  %993 = vmatprep.subr.mxu0 %v755
  %994 = vmatpush1.msra.mxu0 %v754
  %995 = vmatprep.subr.mxu0 %v759
  %996 = vmatpush1.msra.mxu0 %v758
  %997 = vmatprep.subr.mxu0 %v763
  %998 = vmatpush1.msra.mxu0 %v762
  %999 = vmatprep.subr.mxu0 %v767
  %1000 = vmatpush1.msra.mxu0 %v766
  %1001 = vmatprep.subr.mxu0 %v771
  %1002 = vmatpush1.msra.mxu0 %v770
  %1003 = vmatprep.subr.mxu0 %v775
  %1004 = vmatpush1.msra.mxu0 %v774
  %1005 = vmatprep.subr.mxu0 %v779
  %1006 = vmatpush1.msra.mxu0 %v778
  %1007 = vmatprep.subr.mxu0 %v783
  %1008 = vmatpush1.msra.mxu0 %v782
  %1009 = vmatprep.subr.mxu0 %v787
  %1010 = vmatpush1.msra.mxu0 %v786
  %1011 = vmatprep.subr.mxu0 %v791
  %1012 = vmatpush1.msra.mxu0 %v790
  %1013 = vmatprep.subr.mxu0 %v795
  %1014 = vmatpush1.msra.mxu0 %v794
  %1015 = vmatprep.subr.mxu0 %v799
  %1016 = vmatpush1.msra.mxu0 %v798
  %1017 = vmatprep.subr.mxu0 %v803
  %1018 = vmatpush1.msra.mxu0 %v802
  %1019 = vmatprep.subr.mxu0 %v807
  %1020 = vmatpush1.msra.mxu0 %v806
  %1021 = vmatprep.subr.mxu0 0.0
  %1022 = vmatpush1.msra.mxu0 0.0
  %1023 = vmatprep.subr.mxu0 0.0
  %1024 = vmatpush1.msra.mxu0 0.0
  %1025 = vmatprep.subr.mxu0 0.0
  %1026 = vmatpush1.msra.mxu0 0.0
  %1027 = vmatprep.subr.mxu0 0.0
  %1028 = vmatpush1.msra.mxu0 0.0
  %1029 = vmatprep.subr.mxu0 0.0
  %1030 = vmatpush1.msra.mxu0 0.0
  %1031 = vmatprep.subr.mxu0 0.0
  %1032 = vmatpush1.msra.mxu0 0.0
  %1033 = vmatprep.subr.mxu0 0.0
  %1034 = vmatpush1.msra.mxu0 0.0
  %1035 = vmatprep.subr.mxu0 0.0
  %1036 = vmatpush1.msra.mxu0 0.0
  %1037 = vmatprep.subr.mxu0 0.0
  %1038 = vmatpush1.msra.mxu0 0.0
  %1039 = vmatprep.subr.mxu0 0.0
  %1040 = vmatpush1.msra.mxu0 0.0
  %1041 = vmatprep.subr.mxu0 0.0
  %1042 = vmatpush1.msra.mxu0 0.0
  %1043 = vmatprep.subr.mxu0 0.0
  %1044 = vmatpush1.msra.mxu0 0.0
  %1045 = vmatprep.subr.mxu0 0.0
  %1046 = vmatpush1.msra.mxu0 0.0
  %1047 = vmatprep.subr.mxu0 0.0
  %1048 = vmatpush1.msra.mxu0 0.0
  %1049 = vmatprep.subr.mxu0 0.0
  %1050 = vmatpush1.msra.mxu0 0.0
  %1051 = vmatprep.subr.mxu0 0.0
  %1052 = vmatpush1.msra.mxu0 0.0
  %1053 = vmatprep.mubr.f32.mxu0 0.0
  %1054 = vmatmul.mubr.f32.gmra.mrb[0].mxu0 %v983
  %v1055 = vpop.f32.mrb[0].mxu0
  %v1056 = vadd.f32 0.0, %v1055
  %v1057 = vpop.f32.mrb[0].mxu0
  %v1058 = vadd.f32 0.0, %v1057
  %1059 = vdwg.mxu0
  %1060 = vmatprep.subr.mxu0 %v749
  %1061 = vmatpush1.msra.mxu0 %v748
  %1062 = vmatprep.subr.mxu0 %v753
  %1063 = vmatpush1.msra.mxu0 %v752
  %1064 = vmatprep.subr.mxu0 %v757
  %1065 = vmatpush1.msra.mxu0 %v756
  %1066 = vmatprep.subr.mxu0 %v761
  %1067 = vmatpush1.msra.mxu0 %v760
  %1068 = vmatprep.subr.mxu0 %v765
  %1069 = vmatpush1.msra.mxu0 %v764
  %1070 = vmatprep.subr.mxu0 %v769
  %1071 = vmatpush1.msra.mxu0 %v768
  %1072 = vmatprep.subr.mxu0 %v773
  %1073 = vmatpush1.msra.mxu0 %v772
  %1074 = vmatprep.subr.mxu0 %v777
  %1075 = vmatpush1.msra.mxu0 %v776
  %1076 = vmatprep.subr.mxu0 %v781
  %1077 = vmatpush1.msra.mxu0 %v780
  %1078 = vmatprep.subr.mxu0 %v785
  %1079 = vmatpush1.msra.mxu0 %v784
  %1080 = vmatprep.subr.mxu0 %v789
  %1081 = vmatpush1.msra.mxu0 %v788
  %1082 = vmatprep.subr.mxu0 %v793
  %1083 = vmatpush1.msra.mxu0 %v792
  %1084 = vmatprep.subr.mxu0 %v797
  %1085 = vmatpush1.msra.mxu0 %v796
  %1086 = vmatprep.subr.mxu0 %v801
  %1087 = vmatpush1.msra.mxu0 %v800
  %1088 = vmatprep.subr.mxu0 %v805
  %1089 = vmatpush1.msra.mxu0 %v804
  %1090 = vmatprep.subr.mxu0 %v809
  %1091 = vmatpush1.msra.mxu0 %v808
  %1092 = vmatprep.subr.mxu0 0.0
  %1093 = vmatpush1.msra.mxu0 0.0
  %1094 = vmatprep.subr.mxu0 0.0
  %1095 = vmatpush1.msra.mxu0 0.0
  %1096 = vmatprep.subr.mxu0 0.0
  %1097 = vmatpush1.msra.mxu0 0.0
  %1098 = vmatprep.subr.mxu0 0.0
  %1099 = vmatpush1.msra.mxu0 0.0
  %1100 = vmatprep.subr.mxu0 0.0
  %1101 = vmatpush1.msra.mxu0 0.0
  %1102 = vmatprep.subr.mxu0 0.0
  %1103 = vmatpush1.msra.mxu0 0.0
  %1104 = vmatprep.subr.mxu0 0.0
  %1105 = vmatpush1.msra.mxu0 0.0
  %1106 = vmatprep.subr.mxu0 0.0
  %1107 = vmatpush1.msra.mxu0 0.0
  %1108 = vmatprep.subr.mxu0 0.0
  %1109 = vmatpush1.msra.mxu0 0.0
  %1110 = vmatprep.subr.mxu0 0.0
  %1111 = vmatpush1.msra.mxu0 0.0
  %1112 = vmatprep.subr.mxu0 0.0
  %1113 = vmatpush1.msra.mxu0 0.0
  %1114 = vmatprep.subr.mxu0 0.0
  %1115 = vmatpush1.msra.mxu0 0.0
  %1116 = vmatprep.subr.mxu0 0.0
  %1117 = vmatpush1.msra.mxu0 0.0
  %1118 = vmatprep.subr.mxu0 0.0
  %1119 = vmatpush1.msra.mxu0 0.0
  %1120 = vmatprep.subr.mxu0 0.0
  %1121 = vmatpush1.msra.mxu0 0.0
  %1122 = vmatprep.subr.mxu0 0.0
  %1123 = vmatpush1.msra.mxu0 0.0
  %1124 = vmatprep.mubr.f32.mxu0 0.0
  %1125 = vmatmul.mubr.f32.gmra.mrb[0].mxu0 %v983
  %v1126 = vpop.f32.mrb[0].mxu0
  %v1127 = vadd.f32 0.0, %v1126
  %v1128 = vpop.f32.mrb[0].mxu0
  %v1129 = vadd.f32 0.0, %v1128
  %1130 = vdwg.mxu0
  %v1131 = vadd.f32 %v985, %v1056
  %v1132 = vadd.f32 %v986, %v1058
  %v1133 = vadd.f32 %v987, %v1127
  %v1134 = vadd.f32 %v988, %v1129
  %v1135 = vxor.u32 %v1131, 2147483648
  %v1136 = vmul.f32 %v1135, 1.442695
  %v1137 = vpow.pop %v1136
  %v1138 = vadd.f32 %v1137, 1.0
  %v1139 = vrcp.pop %v1138
  %v1140 = vmul.f32 1.0, %v1139
  %v1141 = vxor.u32 %v1132, 2147483648
  %v1142 = vmul.f32 %v1141, 1.442695
  %v1143 = vpow.pop %v1142
  %v1144 = vadd.f32 %v1143, 1.0
  %v1145 = vrcp.pop %v1144
  %v1146 = vmul.f32 1.0, %v1145
  %v1147 = vtanh.pop %v1133
  %v1148 = vxor.u32 %v1134, 2147483648
  %v1149 = vmul.f32 %v1148, 1.442695
  %v1150 = vpow.pop %v1149
  %v1151 = vadd.f32 %v1150, 1.0
  %v1152 = vrcp.pop %v1151
  %v1153 = vmul.f32 1.0, %v1152
  %v1154 = vmul.f32 %v1146, %v981
  %v1155 = vmul.f32 %v1140, %v1147
  %v1156 = vadd.f32 %v1154, %v1155
  %v1157 = vtanh.pop %v1156
  %v1158 = vmul.f32 %v1153, %v1157
  %1159 = vst [vmem:[#allocation6 + $0x8] sm:$0xff] %v1158
  %v1160 = vld [vmem:[#allocation2 + $0x40] sm:$0xff]
  %v1161 = vld [vmem:[#allocation2 + $0x48] sm:$0xff]
  %v1162 = vld [vmem:[#allocation2 + $0x50] sm:$0xff]
  %v1163 = vld [vmem:[#allocation2 + $0x58] sm:$0xff]
  %1164 = vmatprep.subr.mxu0 %v747
  %1165 = vmatpush1.msra.mxu0 %v746
  %1166 = vmatprep.subr.mxu0 %v751
  %1167 = vmatpush1.msra.mxu0 %v750
  %1168 = vmatprep.subr.mxu0 %v755
  %1169 = vmatpush1.msra.mxu0 %v754
  %1170 = vmatprep.subr.mxu0 %v759
  %1171 = vmatpush1.msra.mxu0 %v758
  %1172 = vmatprep.subr.mxu0 %v763
  %1173 = vmatpush1.msra.mxu0 %v762
  %1174 = vmatprep.subr.mxu0 %v767
  %1175 = vmatpush1.msra.mxu0 %v766
  %1176 = vmatprep.subr.mxu0 %v771
  %1177 = vmatpush1.msra.mxu0 %v770
  %1178 = vmatprep.subr.mxu0 %v775
  %1179 = vmatpush1.msra.mxu0 %v774
  %1180 = vmatprep.subr.mxu0 %v779
  %1181 = vmatpush1.msra.mxu0 %v778
  %1182 = vmatprep.subr.mxu0 %v783
  %1183 = vmatpush1.msra.mxu0 %v782
  %1184 = vmatprep.subr.mxu0 %v787
  %1185 = vmatpush1.msra.mxu0 %v786
  %1186 = vmatprep.subr.mxu0 %v791
  %1187 = vmatpush1.msra.mxu0 %v790
  %1188 = vmatprep.subr.mxu0 %v795
  %1189 = vmatpush1.msra.mxu0 %v794
  %1190 = vmatprep.subr.mxu0 %v799
  %1191 = vmatpush1.msra.mxu0 %v798
  %1192 = vmatprep.subr.mxu0 %v803
  %1193 = vmatpush1.msra.mxu0 %v802
  %1194 = vmatprep.subr.mxu0 %v807
  %1195 = vmatpush1.msra.mxu0 %v806
  %1196 = vmatprep.subr.mxu0 0.0
  %1197 = vmatpush1.msra.mxu0 0.0
  %1198 = vmatprep.subr.mxu0 0.0
  %1199 = vmatpush1.msra.mxu0 0.0
  %1200 = vmatprep.subr.mxu0 0.0
  %1201 = vmatpush1.msra.mxu0 0.0
  %1202 = vmatprep.subr.mxu0 0.0
  %1203 = vmatpush1.msra.mxu0 0.0
  %1204 = vmatprep.subr.mxu0 0.0
  %1205 = vmatpush1.msra.mxu0 0.0
  %1206 = vmatprep.subr.mxu0 0.0
  %1207 = vmatpush1.msra.mxu0 0.0
  %1208 = vmatprep.subr.mxu0 0.0
  %1209 = vmatpush1.msra.mxu0 0.0
  %1210 = vmatprep.subr.mxu0 0.0
  %1211 = vmatpush1.msra.mxu0 0.0
  %1212 = vmatprep.subr.mxu0 0.0
  %1213 = vmatpush1.msra.mxu0 0.0
  %1214 = vmatprep.subr.mxu0 0.0
  %1215 = vmatpush1.msra.mxu0 0.0
  %1216 = vmatprep.subr.mxu0 0.0
  %1217 = vmatpush1.msra.mxu0 0.0
  %1218 = vmatprep.subr.mxu0 0.0
  %1219 = vmatpush1.msra.mxu0 0.0
  %1220 = vmatprep.subr.mxu0 0.0
  %1221 = vmatpush1.msra.mxu0 0.0
  %1222 = vmatprep.subr.mxu0 0.0
  %1223 = vmatpush1.msra.mxu0 0.0
  %1224 = vmatprep.subr.mxu0 0.0
  %1225 = vmatpush1.msra.mxu0 0.0
  %1226 = vmatprep.subr.mxu0 0.0
  %1227 = vmatpush1.msra.mxu0 0.0
  %1228 = vmatprep.mubr.f32.mxu0 0.0
  %1229 = vmatmul.mubr.f32.gmra.mrb[0].mxu0 %v1158
  %v1230 = vpop.f32.mrb[0].mxu0
  %v1231 = vadd.f32 0.0, %v1230
  %v1232 = vpop.f32.mrb[0].mxu0
  %v1233 = vadd.f32 0.0, %v1232
  %1234 = vdwg.mxu0
  %1235 = vmatprep.subr.mxu0 %v749
  %1236 = vmatpush1.msra.mxu0 %v748
  %1237 = vmatprep.subr.mxu0 %v753
  %1238 = vmatpush1.msra.mxu0 %v752
  %1239 = vmatprep.subr.mxu0 %v757
  %1240 = vmatpush1.msra.mxu0 %v756
  %1241 = vmatprep.subr.mxu0 %v761
  %1242 = vmatpush1.msra.mxu0 %v760
  %1243 = vmatprep.subr.mxu0 %v765
  %1244 = vmatpush1.msra.mxu0 %v764
  %1245 = vmatprep.subr.mxu0 %v769
  %1246 = vmatpush1.msra.mxu0 %v768
  %1247 = vmatprep.subr.mxu0 %v773
  %1248 = vmatpush1.msra.mxu0 %v772
  %1249 = vmatprep.subr.mxu0 %v777
  %1250 = vmatpush1.msra.mxu0 %v776
  %1251 = vmatprep.subr.mxu0 %v781
  %1252 = vmatpush1.msra.mxu0 %v780
  %1253 = vmatprep.subr.mxu0 %v785
  %1254 = vmatpush1.msra.mxu0 %v784
  %1255 = vmatprep.subr.mxu0 %v789
  %1256 = vmatpush1.msra.mxu0 %v788
  %1257 = vmatprep.subr.mxu0 %v793
  %1258 = vmatpush1.msra.mxu0 %v792
  %1259 = vmatprep.subr.mxu0 %v797
  %1260 = vmatpush1.msra.mxu0 %v796
  %1261 = vmatprep.subr.mxu0 %v801
  %1262 = vmatpush1.msra.mxu0 %v800
  %1263 = vmatprep.subr.mxu0 %v805
  %1264 = vmatpush1.msra.mxu0 %v804
  %1265 = vmatprep.subr.mxu0 %v809
  %1266 = vmatpush1.msra.mxu0 %v808
  %1267 = vmatprep.subr.mxu0 0.0
  %1268 = vmatpush1.msra.mxu0 0.0
  %1269 = vmatprep.subr.mxu0 0.0
  %1270 = vmatpush1.msra.mxu0 0.0
  %1271 = vmatprep.subr.mxu0 0.0
  %1272 = vmatpush1.msra.mxu0 0.0
  %1273 = vmatprep.subr.mxu0 0.0
  %1274 = vmatpush1.msra.mxu0 0.0
  %1275 = vmatprep.subr.mxu0 0.0
  %1276 = vmatpush1.msra.mxu0 0.0
  %1277 = vmatprep.subr.mxu0 0.0
  %1278 = vmatpush1.msra.mxu0 0.0
  %1279 = vmatprep.subr.mxu0 0.0
  %1280 = vmatpush1.msra.mxu0 0.0
  %1281 = vmatprep.subr.mxu0 0.0
  %1282 = vmatpush1.msra.mxu0 0.0
  %1283 = vmatprep.subr.mxu0 0.0
  %1284 = vmatpush1.msra.mxu0 0.0
  %1285 = vmatprep.subr.mxu0 0.0
  %1286 = vmatpush1.msra.mxu0 0.0
  %1287 = vmatprep.subr.mxu0 0.0
  %1288 = vmatpush1.msra.mxu0 0.0
  %1289 = vmatprep.subr.mxu0 0.0
  %1290 = vmatpush1.msra.mxu0 0.0
  %1291 = vmatprep.subr.mxu0 0.0
  %1292 = vmatpush1.msra.mxu0 0.0
  %1293 = vmatprep.subr.mxu0 0.0
  %1294 = vmatpush1.msra.mxu0 0.0
  %1295 = vmatprep.subr.mxu0 0.0
  %1296 = vmatpush1.msra.mxu0 0.0
  %1297 = vmatprep.subr.mxu0 0.0
  %1298 = vmatpush1.msra.mxu0 0.0
  %1299 = vmatprep.mubr.f32.mxu0 0.0
  %1300 = vmatmul.mubr.f32.gmra.mrb[0].mxu0 %v1158
  %v1301 = vpop.f32.mrb[0].mxu0
  %v1302 = vadd.f32 0.0, %v1301
  %v1303 = vpop.f32.mrb[0].mxu0
  %v1304 = vadd.f32 0.0, %v1303
  %1305 = vdwg.mxu0
  %v1306 = vadd.f32 %v1160, %v1231
  %v1307 = vadd.f32 %v1161, %v1233
  %v1308 = vadd.f32 %v1162, %v1302
  %v1309 = vadd.f32 %v1163, %v1304
  %v1310 = vxor.u32 %v1306, 2147483648
  %v1311 = vmul.f32 %v1310, 1.442695
  %v1312 = vpow.pop %v1311
  %v1313 = vadd.f32 %v1312, 1.0
  %v1314 = vrcp.pop %v1313
  %v1315 = vmul.f32 1.0, %v1314
  %v1316 = vxor.u32 %v1307, 2147483648
  %v1317 = vmul.f32 %v1316, 1.442695
  %v1318 = vpow.pop %v1317
  %v1319 = vadd.f32 %v1318, 1.0
  %v1320 = vrcp.pop %v1319
  %v1321 = vmul.f32 1.0, %v1320
  %v1322 = vtanh.pop %v1308
  %v1323 = vxor.u32 %v1309, 2147483648
  %v1324 = vmul.f32 %v1323, 1.442695
  %v1325 = vpow.pop %v1324
  %v1326 = vadd.f32 %v1325, 1.0
  %v1327 = vrcp.pop %v1326
  %v1328 = vmul.f32 1.0, %v1327
  %v1329 = vmul.f32 %v1321, %v1156
  %v1330 = vmul.f32 %v1315, %v1322
  %v1331 = vadd.f32 %v1329, %v1330
  %v1332 = vtanh.pop %v1331
  %v1333 = vmul.f32 %v1328, %v1332
  %1334 = vst [vmem:[#allocation6 + $0x10] sm:$0xff] %v1333
  %v1335 = vld [vmem:[#allocation2 + $0x60] sm:$0xff]
  %v1336 = vld [vmem:[#allocation2 + $0x68] sm:$0xff]
  %v1337 = vld [vmem:[#allocation2 + $0x70] sm:$0xff]
  %v1338 = vld [vmem:[#allocation2 + $0x78] sm:$0xff]
  %1339 = vmatprep.subr.mxu0 %v747
  %1340 = vmatpush1.msra.mxu0 %v746
  %1341 = vmatprep.subr.mxu0 %v751
  %1342 = vmatpush1.msra.mxu0 %v750
  %1343 = vmatprep.subr.mxu0 %v755
  %1344 = vmatpush1.msra.mxu0 %v754
  %1345 = vmatprep.subr.mxu0 %v759
  %1346 = vmatpush1.msra.mxu0 %v758
  %1347 = vmatprep.subr.mxu0 %v763
  %1348 = vmatpush1.msra.mxu0 %v762
  %1349 = vmatprep.subr.mxu0 %v767
  %1350 = vmatpush1.msra.mxu0 %v766
  %1351 = vmatprep.subr.mxu0 %v771
  %1352 = vmatpush1.msra.mxu0 %v770
  %1353 = vmatprep.subr.mxu0 %v775
  %1354 = vmatpush1.msra.mxu0 %v774
  %1355 = vmatprep.subr.mxu0 %v779
  %1356 = vmatpush1.msra.mxu0 %v778
  %1357 = vmatprep.subr.mxu0 %v783
  %1358 = vmatpush1.msra.mxu0 %v782
  %1359 = vmatprep.subr.mxu0 %v787
  %1360 = vmatpush1.msra.mxu0 %v786
  %1361 = vmatprep.subr.mxu0 %v791
  %1362 = vmatpush1.msra.mxu0 %v790
  %1363 = vmatprep.subr.mxu0 %v795
  %1364 = vmatpush1.msra.mxu0 %v794
  %1365 = vmatprep.subr.mxu0 %v799
  %1366 = vmatpush1.msra.mxu0 %v798
  %1367 = vmatprep.subr.mxu0 %v803
  %1368 = vmatpush1.msra.mxu0 %v802
  %1369 = vmatprep.subr.mxu0 %v807
  %1370 = vmatpush1.msra.mxu0 %v806
  %1371 = vmatprep.subr.mxu0 0.0
  %1372 = vmatpush1.msra.mxu0 0.0
  %1373 = vmatprep.subr.mxu0 0.0
  %1374 = vmatpush1.msra.mxu0 0.0
  %1375 = vmatprep.subr.mxu0 0.0
  %1376 = vmatpush1.msra.mxu0 0.0
  %1377 = vmatprep.subr.mxu0 0.0
  %1378 = vmatpush1.msra.mxu0 0.0
  %1379 = vmatprep.subr.mxu0 0.0
  %1380 = vmatpush1.msra.mxu0 0.0
  %1381 = vmatprep.subr.mxu0 0.0
  %1382 = vmatpush1.msra.mxu0 0.0
  %1383 = vmatprep.subr.mxu0 0.0
  %1384 = vmatpush1.msra.mxu0 0.0
  %1385 = vmatprep.subr.mxu0 0.0
  %1386 = vmatpush1.msra.mxu0 0.0
  %1387 = vmatprep.subr.mxu0 0.0
  %1388 = vmatpush1.msra.mxu0 0.0
  %1389 = vmatprep.subr.mxu0 0.0
  %1390 = vmatpush1.msra.mxu0 0.0
  %1391 = vmatprep.subr.mxu0 0.0
  %1392 = vmatpush1.msra.mxu0 0.0
  %1393 = vmatprep.subr.mxu0 0.0
  %1394 = vmatpush1.msra.mxu0 0.0
  %1395 = vmatprep.subr.mxu0 0.0
  %1396 = vmatpush1.msra.mxu0 0.0
  %1397 = vmatprep.subr.mxu0 0.0
  %1398 = vmatpush1.msra.mxu0 0.0
  %1399 = vmatprep.subr.mxu0 0.0
  %1400 = vmatpush1.msra.mxu0 0.0
  %1401 = vmatprep.subr.mxu0 0.0
  %1402 = vmatpush1.msra.mxu0 0.0
  %1403 = vmatprep.mubr.f32.mxu0 0.0
  %1404 = vmatmul.mubr.f32.gmra.mrb[0].mxu0 %v1333
  %v1405 = vpop.f32.mrb[0].mxu0
  %v1406 = vadd.f32 0.0, %v1405
  %v1407 = vpop.f32.mrb[0].mxu0
  %v1408 = vadd.f32 0.0, %v1407
  %1409 = vdwg.mxu0
  %1410 = vmatprep.subr.mxu0 %v749
  %1411 = vmatpush1.msra.mxu0 %v748
  %1412 = vmatprep.subr.mxu0 %v753
  %1413 = vmatpush1.msra.mxu0 %v752
  %1414 = vmatprep.subr.mxu0 %v757
  %1415 = vmatpush1.msra.mxu0 %v756
  %1416 = vmatprep.subr.mxu0 %v761
  %1417 = vmatpush1.msra.mxu0 %v760
  %1418 = vmatprep.subr.mxu0 %v765
  %1419 = vmatpush1.msra.mxu0 %v764
  %1420 = vmatprep.subr.mxu0 %v769
  %1421 = vmatpush1.msra.mxu0 %v768
  %1422 = vmatprep.subr.mxu0 %v773
  %1423 = vmatpush1.msra.mxu0 %v772
  %1424 = vmatprep.subr.mxu0 %v777
  %1425 = vmatpush1.msra.mxu0 %v776
  %1426 = vmatprep.subr.mxu0 %v781
  %1427 = vmatpush1.msra.mxu0 %v780
  %1428 = vmatprep.subr.mxu0 %v785
  %1429 = vmatpush1.msra.mxu0 %v784
  %1430 = vmatprep.subr.mxu0 %v789
  %1431 = vmatpush1.msra.mxu0 %v788
  %1432 = vmatprep.subr.mxu0 %v793
  %1433 = vmatpush1.msra.mxu0 %v792
  %1434 = vmatprep.subr.mxu0 %v797
  %1435 = vmatpush1.msra.mxu0 %v796
  %1436 = vmatprep.subr.mxu0 %v801
  %1437 = vmatpush1.msra.mxu0 %v800
  %1438 = vmatprep.subr.mxu0 %v805
  %1439 = vmatpush1.msra.mxu0 %v804
  %1440 = vmatprep.subr.mxu0 %v809
  %1441 = vmatpush1.msra.mxu0 %v808
  %1442 = vmatprep.subr.mxu0 0.0
  %1443 = vmatpush1.msra.mxu0 0.0
  %1444 = vmatprep.subr.mxu0 0.0
  %1445 = vmatpush1.msra.mxu0 0.0
  %1446 = vmatprep.subr.mxu0 0.0
  %1447 = vmatpush1.msra.mxu0 0.0
  %1448 = vmatprep.subr.mxu0 0.0
  %1449 = vmatpush1.msra.mxu0 0.0
  %1450 = vmatprep.subr.mxu0 0.0
  %1451 = vmatpush1.msra.mxu0 0.0
  %1452 = vmatprep.subr.mxu0 0.0
  %1453 = vmatpush1.msra.mxu0 0.0
  %1454 = vmatprep.subr.mxu0 0.0
  %1455 = vmatpush1.msra.mxu0 0.0
  %1456 = vmatprep.subr.mxu0 0.0
  %1457 = vmatpush1.msra.mxu0 0.0
  %1458 = vmatprep.subr.mxu0 0.0
  %1459 = vmatpush1.msra.mxu0 0.0
  %1460 = vmatprep.subr.mxu0 0.0
  %1461 = vmatpush1.msra.mxu0 0.0
  %1462 = vmatprep.subr.mxu0 0.0
  %1463 = vmatpush1.msra.mxu0 0.0
  %1464 = vmatprep.subr.mxu0 0.0
  %1465 = vmatpush1.msra.mxu0 0.0
  %1466 = vmatprep.subr.mxu0 0.0
  %1467 = vmatpush1.msra.mxu0 0.0
  %1468 = vmatprep.subr.mxu0 0.0
  %1469 = vmatpush1.msra.mxu0 0.0
  %1470 = vmatprep.subr.mxu0 0.0
  %1471 = vmatpush1.msra.mxu0 0.0
  %1472 = vmatprep.subr.mxu0 0.0
  %1473 = vmatpush1.msra.mxu0 0.0
  %1474 = vmatprep.mubr.f32.mxu0 0.0
  %1475 = vmatmul.mubr.f32.gmra.mrb[0].mxu0 %v1333
  %v1476 = vpop.f32.mrb[0].mxu0
  %v1477 = vadd.f32 0.0, %v1476
  %v1478 = vpop.f32.mrb[0].mxu0
  %v1479 = vadd.f32 0.0, %v1478
  %1480 = vdwg.mxu0
  %v1481 = vadd.f32 %v1335, %v1406
  %v1482 = vadd.f32 %v1336, %v1408
  %v1483 = vadd.f32 %v1337, %v1477
  %v1484 = vadd.f32 %v1338, %v1479
  %v1485 = vxor.u32 %v1481, 2147483648
  %v1486 = vmul.f32 %v1485, 1.442695
  %v1487 = vpow.pop %v1486
  %v1488 = vadd.f32 %v1487, 1.0
  %v1489 = vrcp.pop %v1488
  %v1490 = vmul.f32 1.0, %v1489
  %v1491 = vxor.u32 %v1482, 2147483648
  %v1492 = vmul.f32 %v1491, 1.442695
  %v1493 = vpow.pop %v1492
  %v1494 = vadd.f32 %v1493, 1.0
  %v1495 = vrcp.pop %v1494
  %v1496 = vmul.f32 1.0, %v1495
  %v1497 = vtanh.pop %v1483
  %v1498 = vxor.u32 %v1484, 2147483648
  %v1499 = vmul.f32 %v1498, 1.442695
  %v1500 = vpow.pop %v1499
  %v1501 = vadd.f32 %v1500, 1.0
  %v1502 = vrcp.pop %v1501
  %v1503 = vmul.f32 1.0, %v1502
  %v1504 = vmul.f32 %v1496, %v1331
  %v1505 = vmul.f32 %v1490, %v1497
  %v1506 = vadd.f32 %v1504, %v1505
  %v1507 = vtanh.pop %v1506
  %v1508 = vmul.f32 %v1503, %v1507
  %1509 = vst [vmem:[#allocation6 + $0x18] sm:$0xff] %v1508
  %v1510 = vld [vmem:[#allocation2 + $0x80] sm:$0xff]
  %v1511 = vld [vmem:[#allocation2 + $0x88] sm:$0xff]
  %v1512 = vld [vmem:[#allocation2 + $0x90] sm:$0xff]
  %v1513 = vld [vmem:[#allocation2 + $0x98] sm:$0xff]
  %1514 = vmatprep.subr.mxu0 %v747
  %1515 = vmatpush1.msra.mxu0 %v746
  %1516 = vmatprep.subr.mxu0 %v751
  %1517 = vmatpush1.msra.mxu0 %v750
  %1518 = vmatprep.subr.mxu0 %v755
  %1519 = vmatpush1.msra.mxu0 %v754
  %1520 = vmatprep.subr.mxu0 %v759
  %1521 = vmatpush1.msra.mxu0 %v758
  %1522 = vmatprep.subr.mxu0 %v763
  %1523 = vmatpush1.msra.mxu0 %v762
  %1524 = vmatprep.subr.mxu0 %v767
  %1525 = vmatpush1.msra.mxu0 %v766
  %1526 = vmatprep.subr.mxu0 %v771
  %1527 = vmatpush1.msra.mxu0 %v770
  %1528 = vmatprep.subr.mxu0 %v775
  %1529 = vmatpush1.msra.mxu0 %v774
  %1530 = vmatprep.subr.mxu0 %v779
  %1531 = vmatpush1.msra.mxu0 %v778
  %1532 = vmatprep.subr.mxu0 %v783
  %1533 = vmatpush1.msra.mxu0 %v782
  %1534 = vmatprep.subr.mxu0 %v787
  %1535 = vmatpush1.msra.mxu0 %v786
  %1536 = vmatprep.subr.mxu0 %v791
  %1537 = vmatpush1.msra.mxu0 %v790
  %1538 = vmatprep.subr.mxu0 %v795
  %1539 = vmatpush1.msra.mxu0 %v794
  %1540 = vmatprep.subr.mxu0 %v799
  %1541 = vmatpush1.msra.mxu0 %v798
  %1542 = vmatprep.subr.mxu0 %v803
  %1543 = vmatpush1.msra.mxu0 %v802
  %1544 = vmatprep.subr.mxu0 %v807
  %1545 = vmatpush1.msra.mxu0 %v806
  %1546 = vmatprep.subr.mxu0 0.0
  %1547 = vmatpush1.msra.mxu0 0.0
  %1548 = vmatprep.subr.mxu0 0.0
  %1549 = vmatpush1.msra.mxu0 0.0
  %1550 = vmatprep.subr.mxu0 0.0
  %1551 = vmatpush1.msra.mxu0 0.0
  %1552 = vmatprep.subr.mxu0 0.0
  %1553 = vmatpush1.msra.mxu0 0.0
  %1554 = vmatprep.subr.mxu0 0.0
  %1555 = vmatpush1.msra.mxu0 0.0
  %1556 = vmatprep.subr.mxu0 0.0
  %1557 = vmatpush1.msra.mxu0 0.0
  %1558 = vmatprep.subr.mxu0 0.0
  %1559 = vmatpush1.msra.mxu0 0.0
  %1560 = vmatprep.subr.mxu0 0.0
  %1561 = vmatpush1.msra.mxu0 0.0
  %1562 = vmatprep.subr.mxu0 0.0
  %1563 = vmatpush1.msra.mxu0 0.0
  %1564 = vmatprep.subr.mxu0 0.0
  %1565 = vmatpush1.msra.mxu0 0.0
  %1566 = vmatprep.subr.mxu0 0.0
  %1567 = vmatpush1.msra.mxu0 0.0
  %1568 = vmatprep.subr.mxu0 0.0
  %1569 = vmatpush1.msra.mxu0 0.0
  %1570 = vmatprep.subr.mxu0 0.0
  %1571 = vmatpush1.msra.mxu0 0.0
  %1572 = vmatprep.subr.mxu0 0.0
  %1573 = vmatpush1.msra.mxu0 0.0
  %1574 = vmatprep.subr.mxu0 0.0
  %1575 = vmatpush1.msra.mxu0 0.0
  %1576 = vmatprep.subr.mxu0 0.0
  %1577 = vmatpush1.msra.mxu0 0.0
  %1578 = vmatprep.mubr.f32.mxu0 0.0
  %1579 = vmatmul.mubr.f32.gmra.mrb[0].mxu0 %v1508
  %v1580 = vpop.f32.mrb[0].mxu0
  %v1581 = vadd.f32 0.0, %v1580
  %v1582 = vpop.f32.mrb[0].mxu0
  %v1583 = vadd.f32 0.0, %v1582
  %1584 = vdwg.mxu0
  %1585 = vmatprep.subr.mxu0 %v749
  %1586 = vmatpush1.msra.mxu0 %v748
  %1587 = vmatprep.subr.mxu0 %v753
  %1588 = vmatpush1.msra.mxu0 %v752
  %1589 = vmatprep.subr.mxu0 %v757
  %1590 = vmatpush1.msra.mxu0 %v756
  %1591 = vmatprep.subr.mxu0 %v761
  %1592 = vmatpush1.msra.mxu0 %v760
  %1593 = vmatprep.subr.mxu0 %v765
  %1594 = vmatpush1.msra.mxu0 %v764
  %1595 = vmatprep.subr.mxu0 %v769
  %1596 = vmatpush1.msra.mxu0 %v768
  %1597 = vmatprep.subr.mxu0 %v773
  %1598 = vmatpush1.msra.mxu0 %v772
  %1599 = vmatprep.subr.mxu0 %v777
  %1600 = vmatpush1.msra.mxu0 %v776
  %1601 = vmatprep.subr.mxu0 %v781
  %1602 = vmatpush1.msra.mxu0 %v780
  %1603 = vmatprep.subr.mxu0 %v785
  %1604 = vmatpush1.msra.mxu0 %v784
  %1605 = vmatprep.subr.mxu0 %v789
  %1606 = vmatpush1.msra.mxu0 %v788
  %1607 = vmatprep.subr.mxu0 %v793
  %1608 = vmatpush1.msra.mxu0 %v792
  %1609 = vmatprep.subr.mxu0 %v797
  %1610 = vmatpush1.msra.mxu0 %v796
  %1611 = vmatprep.subr.mxu0 %v801
  %1612 = vmatpush1.msra.mxu0 %v800
  %1613 = vmatprep.subr.mxu0 %v805
  %1614 = vmatpush1.msra.mxu0 %v804
  %1615 = vmatprep.subr.mxu0 %v809
  %1616 = vmatpush1.msra.mxu0 %v808
  %1617 = vmatprep.subr.mxu0 0.0
  %1618 = vmatpush1.msra.mxu0 0.0
  %1619 = vmatprep.subr.mxu0 0.0
  %1620 = vmatpush1.msra.mxu0 0.0
  %1621 = vmatprep.subr.mxu0 0.0
  %1622 = vmatpush1.msra.mxu0 0.0
  %1623 = vmatprep.subr.mxu0 0.0
  %1624 = vmatpush1.msra.mxu0 0.0
  %1625 = vmatprep.subr.mxu0 0.0
  %1626 = vmatpush1.msra.mxu0 0.0
  %1627 = vmatprep.subr.mxu0 0.0
  %1628 = vmatpush1.msra.mxu0 0.0
  %1629 = vmatprep.subr.mxu0 0.0
  %1630 = vmatpush1.msra.mxu0 0.0
  %1631 = vmatprep.subr.mxu0 0.0
  %1632 = vmatpush1.msra.mxu0 0.0
  %1633 = vmatprep.subr.mxu0 0.0
  %1634 = vmatpush1.msra.mxu0 0.0
  %1635 = vmatprep.subr.mxu0 0.0
  %1636 = vmatpush1.msra.mxu0 0.0
  %1637 = vmatprep.subr.mxu0 0.0
  %1638 = vmatpush1.msra.mxu0 0.0
  %1639 = vmatprep.subr.mxu0 0.0
  %1640 = vmatpush1.msra.mxu0 0.0
  %1641 = vmatprep.subr.mxu0 0.0
  %1642 = vmatpush1.msra.mxu0 0.0
  %1643 = vmatprep.subr.mxu0 0.0
  %1644 = vmatpush1.msra.mxu0 0.0
  %1645 = vmatprep.subr.mxu0 0.0
  %1646 = vmatpush1.msra.mxu0 0.0
  %1647 = vmatprep.subr.mxu0 0.0
  %1648 = vmatpush1.msra.mxu0 0.0
  %1649 = vmatprep.mubr.f32.mxu0 0.0
  %1650 = vmatmul.mubr.f32.gmra.mrb[0].mxu0 %v1508
  %v1651 = vpop.f32.mrb[0].mxu0
  %v1652 = vadd.f32 0.0, %v1651
  %v1653 = vpop.f32.mrb[0].mxu0
  %v1654 = vadd.f32 0.0, %v1653
  %1655 = vdwg.mxu0
  %v1656 = vadd.f32 %v1510, %v1581
  %v1657 = vadd.f32 %v1511, %v1583
  %v1658 = vadd.f32 %v1512, %v1652
  %v1659 = vadd.f32 %v1513, %v1654
  %v1660 = vxor.u32 %v1656, 2147483648
  %v1661 = vmul.f32 %v1660, 1.442695
  %v1662 = vpow.pop %v1661
  %v1663 = vadd.f32 %v1662, 1.0
  %v1664 = vrcp.pop %v1663
  %v1665 = vmul.f32 1.0, %v1664
  %v1666 = vxor.u32 %v1657, 2147483648
  %v1667 = vmul.f32 %v1666, 1.442695
  %v1668 = vpow.pop %v1667
  %v1669 = vadd.f32 %v1668, 1.0
  %v1670 = vrcp.pop %v1669
  %v1671 = vmul.f32 1.0, %v1670
  %v1672 = vtanh.pop %v1658
  %v1673 = vxor.u32 %v1659, 2147483648
  %v1674 = vmul.f32 %v1673, 1.442695
  %v1675 = vpow.pop %v1674
  %v1676 = vadd.f32 %v1675, 1.0
  %v1677 = vrcp.pop %v1676
  %v1678 = vmul.f32 1.0, %v1677
  %v1679 = vmul.f32 %v1671, %v1506
  %v1680 = vmul.f32 %v1665, %v1672
  %v1681 = vadd.f32 %v1679, %v1680
  %v1682 = vtanh.pop %v1681
  %v1683 = vmul.f32 %v1678, %v1682
  %1684 = vst [vmem:[#allocation6 + $0x20] sm:$0xff] %v1683
  %v1685 = vld [vmem:[#allocation2 + $0xa0] sm:$0xff]
  %v1686 = vld [vmem:[#allocation2 + $0xa8] sm:$0xff]
  %v1687 = vld [vmem:[#allocation2 + $0xb0] sm:$0xff]
  %v1688 = vld [vmem:[#allocation2 + $0xb8] sm:$0xff]
  %1689 = vmatprep.subr.mxu0 %v747
  %1690 = vmatpush1.msra.mxu0 %v746
  %1691 = vmatprep.subr.mxu0 %v751
  %1692 = vmatpush1.msra.mxu0 %v750
  %1693 = vmatprep.subr.mxu0 %v755
  %1694 = vmatpush1.msra.mxu0 %v754
  %1695 = vmatprep.subr.mxu0 %v759
  %1696 = vmatpush1.msra.mxu0 %v758
  %1697 = vmatprep.subr.mxu0 %v763
  %1698 = vmatpush1.msra.mxu0 %v762
  %1699 = vmatprep.subr.mxu0 %v767
  %1700 = vmatpush1.msra.mxu0 %v766
  %1701 = vmatprep.subr.mxu0 %v771
  %1702 = vmatpush1.msra.mxu0 %v770
  %1703 = vmatprep.subr.mxu0 %v775
  %1704 = vmatpush1.msra.mxu0 %v774
  %1705 = vmatprep.subr.mxu0 %v779
  %1706 = vmatpush1.msra.mxu0 %v778
  %1707 = vmatprep.subr.mxu0 %v783
  %1708 = vmatpush1.msra.mxu0 %v782
  %1709 = vmatprep.subr.mxu0 %v787
  %1710 = vmatpush1.msra.mxu0 %v786
  %1711 = vmatprep.subr.mxu0 %v791
  %1712 = vmatpush1.msra.mxu0 %v790
  %1713 = vmatprep.subr.mxu0 %v795
  %1714 = vmatpush1.msra.mxu0 %v794
  %1715 = vmatprep.subr.mxu0 %v799
  %1716 = vmatpush1.msra.mxu0 %v798
  %1717 = vmatprep.subr.mxu0 %v803
  %1718 = vmatpush1.msra.mxu0 %v802
  %1719 = vmatprep.subr.mxu0 %v807
  %1720 = vmatpush1.msra.mxu0 %v806
  %1721 = vmatprep.subr.mxu0 0.0
  %1722 = vmatpush1.msra.mxu0 0.0
  %1723 = vmatprep.subr.mxu0 0.0
  %1724 = vmatpush1.msra.mxu0 0.0
  %1725 = vmatprep.subr.mxu0 0.0
  %1726 = vmatpush1.msra.mxu0 0.0
  %1727 = vmatprep.subr.mxu0 0.0
  %1728 = vmatpush1.msra.mxu0 0.0
  %1729 = vmatprep.subr.mxu0 0.0
  %1730 = vmatpush1.msra.mxu0 0.0
  %1731 = vmatprep.subr.mxu0 0.0
  %1732 = vmatpush1.msra.mxu0 0.0
  %1733 = vmatprep.subr.mxu0 0.0
  %1734 = vmatpush1.msra.mxu0 0.0
  %1735 = vmatprep.subr.mxu0 0.0
  %1736 = vmatpush1.msra.mxu0 0.0
  %1737 = vmatprep.subr.mxu0 0.0
  %1738 = vmatpush1.msra.mxu0 0.0
  %1739 = vmatprep.subr.mxu0 0.0
  %1740 = vmatpush1.msra.mxu0 0.0
  %1741 = vmatprep.subr.mxu0 0.0
  %1742 = vmatpush1.msra.mxu0 0.0
  %1743 = vmatprep.subr.mxu0 0.0
  %1744 = vmatpush1.msra.mxu0 0.0
  %1745 = vmatprep.subr.mxu0 0.0
  %1746 = vmatpush1.msra.mxu0 0.0
  %1747 = vmatprep.subr.mxu0 0.0
  %1748 = vmatpush1.msra.mxu0 0.0
  %1749 = vmatprep.subr.mxu0 0.0
  %1750 = vmatpush1.msra.mxu0 0.0
  %1751 = vmatprep.subr.mxu0 0.0
  %1752 = vmatpush1.msra.mxu0 0.0
  %1753 = vmatprep.mubr.f32.mxu0 0.0
  %1754 = vmatmul.mubr.f32.gmra.mrb[0].mxu0 %v1683
  %v1755 = vpop.f32.mrb[0].mxu0
  %v1756 = vadd.f32 0.0, %v1755
  %v1757 = vpop.f32.mrb[0].mxu0
  %v1758 = vadd.f32 0.0, %v1757
  %1759 = vdwg.mxu0
  %1760 = vmatprep.subr.mxu0 %v749
  %1761 = vmatpush1.msra.mxu0 %v748
  %1762 = vmatprep.subr.mxu0 %v753
  %1763 = vmatpush1.msra.mxu0 %v752
  %1764 = vmatprep.subr.mxu0 %v757
  %1765 = vmatpush1.msra.mxu0 %v756
  %1766 = vmatprep.subr.mxu0 %v761
  %1767 = vmatpush1.msra.mxu0 %v760
  %1768 = vmatprep.subr.mxu0 %v765
  %1769 = vmatpush1.msra.mxu0 %v764
  %1770 = vmatprep.subr.mxu0 %v769
  %1771 = vmatpush1.msra.mxu0 %v768
  %1772 = vmatprep.subr.mxu0 %v773
  %1773 = vmatpush1.msra.mxu0 %v772
  %1774 = vmatprep.subr.mxu0 %v777
  %1775 = vmatpush1.msra.mxu0 %v776
  %1776 = vmatprep.subr.mxu0 %v781
  %1777 = vmatpush1.msra.mxu0 %v780
  %1778 = vmatprep.subr.mxu0 %v785
  %1779 = vmatpush1.msra.mxu0 %v784
  %1780 = vmatprep.subr.mxu0 %v789
  %1781 = vmatpush1.msra.mxu0 %v788
  %1782 = vmatprep.subr.mxu0 %v793
  %1783 = vmatpush1.msra.mxu0 %v792
  %1784 = vmatprep.subr.mxu0 %v797
  %1785 = vmatpush1.msra.mxu0 %v796
  %1786 = vmatprep.subr.mxu0 %v801
  %1787 = vmatpush1.msra.mxu0 %v800
  %1788 = vmatprep.subr.mxu0 %v805
  %1789 = vmatpush1.msra.mxu0 %v804
  %1790 = vmatprep.subr.mxu0 %v809
  %1791 = vmatpush1.msra.mxu0 %v808
  %1792 = vmatprep.subr.mxu0 0.0
  %1793 = vmatpush1.msra.mxu0 0.0
  %1794 = vmatprep.subr.mxu0 0.0
  %1795 = vmatpush1.msra.mxu0 0.0
  %1796 = vmatprep.subr.mxu0 0.0
  %1797 = vmatpush1.msra.mxu0 0.0
  %1798 = vmatprep.subr.mxu0 0.0
  %1799 = vmatpush1.msra.mxu0 0.0
  %1800 = vmatprep.subr.mxu0 0.0
  %1801 = vmatpush1.msra.mxu0 0.0
  %1802 = vmatprep.subr.mxu0 0.0
  %1803 = vmatpush1.msra.mxu0 0.0
  %1804 = vmatprep.subr.mxu0 0.0
  %1805 = vmatpush1.msra.mxu0 0.0
  %1806 = vmatprep.subr.mxu0 0.0
  %1807 = vmatpush1.msra.mxu0 0.0
  %1808 = vmatprep.subr.mxu0 0.0
  %1809 = vmatpush1.msra.mxu0 0.0
  %1810 = vmatprep.subr.mxu0 0.0
  %1811 = vmatpush1.msra.mxu0 0.0
  %1812 = vmatprep.subr.mxu0 0.0
  %1813 = vmatpush1.msra.mxu0 0.0
  %1814 = vmatprep.subr.mxu0 0.0
  %1815 = vmatpush1.msra.mxu0 0.0
  %1816 = vmatprep.subr.mxu0 0.0
  %1817 = vmatpush1.msra.mxu0 0.0
  %1818 = vmatprep.subr.mxu0 0.0
  %1819 = vmatpush1.msra.mxu0 0.0
  %1820 = vmatprep.subr.mxu0 0.0
  %1821 = vmatpush1.msra.mxu0 0.0
  %1822 = vmatprep.subr.mxu0 0.0
  %1823 = vmatpush1.msra.mxu0 0.0
  %1824 = vmatprep.mubr.f32.mxu0 0.0
  %1825 = vmatmul.mubr.f32.gmra.mrb[0].mxu0 %v1683
  %v1826 = vpop.f32.mrb[0].mxu0
  %v1827 = vadd.f32 0.0, %v1826
  %v1828 = vpop.f32.mrb[0].mxu0
  %v1829 = vadd.f32 0.0, %v1828
  %1830 = vdwg.mxu0
  %v1831 = vadd.f32 %v1685, %v1756
  %v1832 = vadd.f32 %v1686, %v1758
  %v1833 = vadd.f32 %v1687, %v1827
  %v1834 = vadd.f32 %v1688, %v1829
  %v1835 = vxor.u32 %v1831, 2147483648
  %v1836 = vmul.f32 %v1835, 1.442695
  %v1837 = vpow.pop %v1836
  %v1838 = vadd.f32 %v1837, 1.0
  %v1839 = vrcp.pop %v1838
  %v1840 = vmul.f32 1.0, %v1839
  %v1841 = vxor.u32 %v1832, 2147483648
  %v1842 = vmul.f32 %v1841, 1.442695
  %v1843 = vpow.pop %v1842
  %v1844 = vadd.f32 %v1843, 1.0
  %v1845 = vrcp.pop %v1844
  %v1846 = vmul.f32 1.0, %v1845
  %v1847 = vtanh.pop %v1833
  %v1848 = vxor.u32 %v1834, 2147483648
  %v1849 = vmul.f32 %v1848, 1.442695
  %v1850 = vpow.pop %v1849
  %v1851 = vadd.f32 %v1850, 1.0
  %v1852 = vrcp.pop %v1851
  %v1853 = vmul.f32 1.0, %v1852
  %v1854 = vmul.f32 %v1846, %v1681
  %v1855 = vmul.f32 %v1840, %v1847
  %v1856 = vadd.f32 %v1854, %v1855
  %v1857 = vtanh.pop %v1856
  %v1858 = vmul.f32 %v1853, %v1857
  %1859 = vst [vmem:[#allocation6 + $0x28] sm:$0xff] %v1858
  %v1860 = vld [vmem:[#allocation2 + $0xc0] sm:$0xff]
  %v1861 = vld [vmem:[#allocation2 + $0xc8] sm:$0xff]
  %v1862 = vld [vmem:[#allocation2 + $0xd0] sm:$0xff]
  %v1863 = vld [vmem:[#allocation2 + $0xd8] sm:$0xff]
  %1864 = vmatprep.subr.mxu0 %v747
  %1865 = vmatpush1.msra.mxu0 %v746
  %1866 = vmatprep.subr.mxu0 %v751
  %1867 = vmatpush1.msra.mxu0 %v750
  %1868 = vmatprep.subr.mxu0 %v755
  %1869 = vmatpush1.msra.mxu0 %v754
  %1870 = vmatprep.subr.mxu0 %v759
  %1871 = vmatpush1.msra.mxu0 %v758
  %1872 = vmatprep.subr.mxu0 %v763
  %1873 = vmatpush1.msra.mxu0 %v762
  %1874 = vmatprep.subr.mxu0 %v767
  %1875 = vmatpush1.msra.mxu0 %v766
  %1876 = vmatprep.subr.mxu0 %v771
  %1877 = vmatpush1.msra.mxu0 %v770
  %1878 = vmatprep.subr.mxu0 %v775
  %1879 = vmatpush1.msra.mxu0 %v774
  %1880 = vmatprep.subr.mxu0 %v779
  %1881 = vmatpush1.msra.mxu0 %v778
  %1882 = vmatprep.subr.mxu0 %v783
  %1883 = vmatpush1.msra.mxu0 %v782
  %1884 = vmatprep.subr.mxu0 %v787
  %1885 = vmatpush1.msra.mxu0 %v786
  %1886 = vmatprep.subr.mxu0 %v791
  %1887 = vmatpush1.msra.mxu0 %v790
  %1888 = vmatprep.subr.mxu0 %v795
  %1889 = vmatpush1.msra.mxu0 %v794
  %1890 = vmatprep.subr.mxu0 %v799
  %1891 = vmatpush1.msra.mxu0 %v798
  %1892 = vmatprep.subr.mxu0 %v803
  %1893 = vmatpush1.msra.mxu0 %v802
  %1894 = vmatprep.subr.mxu0 %v807
  %1895 = vmatpush1.msra.mxu0 %v806
  %1896 = vmatprep.subr.mxu0 0.0
  %1897 = vmatpush1.msra.mxu0 0.0
  %1898 = vmatprep.subr.mxu0 0.0
  %1899 = vmatpush1.msra.mxu0 0.0
  %1900 = vmatprep.subr.mxu0 0.0
  %1901 = vmatpush1.msra.mxu0 0.0
  %1902 = vmatprep.subr.mxu0 0.0
  %1903 = vmatpush1.msra.mxu0 0.0
  %1904 = vmatprep.subr.mxu0 0.0
  %1905 = vmatpush1.msra.mxu0 0.0
  %1906 = vmatprep.subr.mxu0 0.0
  %1907 = vmatpush1.msra.mxu0 0.0
  %1908 = vmatprep.subr.mxu0 0.0
  %1909 = vmatpush1.msra.mxu0 0.0
  %1910 = vmatprep.subr.mxu0 0.0
  %1911 = vmatpush1.msra.mxu0 0.0
  %1912 = vmatprep.subr.mxu0 0.0
  %1913 = vmatpush1.msra.mxu0 0.0
  %1914 = vmatprep.subr.mxu0 0.0
  %1915 = vmatpush1.msra.mxu0 0.0
  %1916 = vmatprep.subr.mxu0 0.0
  %1917 = vmatpush1.msra.mxu0 0.0
  %1918 = vmatprep.subr.mxu0 0.0
  %1919 = vmatpush1.msra.mxu0 0.0
  %1920 = vmatprep.subr.mxu0 0.0
  %1921 = vmatpush1.msra.mxu0 0.0
  %1922 = vmatprep.subr.mxu0 0.0
  %1923 = vmatpush1.msra.mxu0 0.0
  %1924 = vmatprep.subr.mxu0 0.0
  %1925 = vmatpush1.msra.mxu0 0.0
  %1926 = vmatprep.subr.mxu0 0.0
  %1927 = vmatpush1.msra.mxu0 0.0
  %1928 = vmatprep.mubr.f32.mxu0 0.0
  %1929 = vmatmul.mubr.f32.gmra.mrb[0].mxu0 %v1858
  %v1930 = vpop.f32.mrb[0].mxu0
  %v1931 = vadd.f32 0.0, %v1930
  %v1932 = vpop.f32.mrb[0].mxu0
  %v1933 = vadd.f32 0.0, %v1932
  %1934 = vdwg.mxu0
  %1935 = vmatprep.subr.mxu0 %v749
  %1936 = vmatpush1.msra.mxu0 %v748
  %1937 = vmatprep.subr.mxu0 %v753
  %1938 = vmatpush1.msra.mxu0 %v752
  %1939 = vmatprep.subr.mxu0 %v757
  %1940 = vmatpush1.msra.mxu0 %v756
  %1941 = vmatprep.subr.mxu0 %v761
  %1942 = vmatpush1.msra.mxu0 %v760
  %1943 = vmatprep.subr.mxu0 %v765
  %1944 = vmatpush1.msra.mxu0 %v764
  %1945 = vmatprep.subr.mxu0 %v769
  %1946 = vmatpush1.msra.mxu0 %v768
  %1947 = vmatprep.subr.mxu0 %v773
  %1948 = vmatpush1.msra.mxu0 %v772
  %1949 = vmatprep.subr.mxu0 %v777
  %1950 = vmatpush1.msra.mxu0 %v776
  %1951 = vmatprep.subr.mxu0 %v781
  %1952 = vmatpush1.msra.mxu0 %v780
  %1953 = vmatprep.subr.mxu0 %v785
  %1954 = vmatpush1.msra.mxu0 %v784
  %1955 = vmatprep.subr.mxu0 %v789
  %1956 = vmatpush1.msra.mxu0 %v788
  %1957 = vmatprep.subr.mxu0 %v793
  %1958 = vmatpush1.msra.mxu0 %v792
  %1959 = vmatprep.subr.mxu0 %v797
  %1960 = vmatpush1.msra.mxu0 %v796
  %1961 = vmatprep.subr.mxu0 %v801
  %1962 = vmatpush1.msra.mxu0 %v800
  %1963 = vmatprep.subr.mxu0 %v805
  %1964 = vmatpush1.msra.mxu0 %v804
  %1965 = vmatprep.subr.mxu0 %v809
  %1966 = vmatpush1.msra.mxu0 %v808
  %1967 = vmatprep.subr.mxu0 0.0
  %1968 = vmatpush1.msra.mxu0 0.0
  %1969 = vmatprep.subr.mxu0 0.0
  %1970 = vmatpush1.msra.mxu0 0.0
  %1971 = vmatprep.subr.mxu0 0.0
  %1972 = vmatpush1.msra.mxu0 0.0
  %1973 = vmatprep.subr.mxu0 0.0
  %1974 = vmatpush1.msra.mxu0 0.0
  %1975 = vmatprep.subr.mxu0 0.0
  %1976 = vmatpush1.msra.mxu0 0.0
  %1977 = vmatprep.subr.mxu0 0.0
  %1978 = vmatpush1.msra.mxu0 0.0
  %1979 = vmatprep.subr.mxu0 0.0
  %1980 = vmatpush1.msra.mxu0 0.0
  %1981 = vmatprep.subr.mxu0 0.0
  %1982 = vmatpush1.msra.mxu0 0.0
  %1983 = vmatprep.subr.mxu0 0.0
  %1984 = vmatpush1.msra.mxu0 0.0
  %1985 = vmatprep.subr.mxu0 0.0
  %1986 = vmatpush1.msra.mxu0 0.0
  %1987 = vmatprep.subr.mxu0 0.0
  %1988 = vmatpush1.msra.mxu0 0.0
  %1989 = vmatprep.subr.mxu0 0.0
  %1990 = vmatpush1.msra.mxu0 0.0
  %1991 = vmatprep.subr.mxu0 0.0
  %1992 = vmatpush1.msra.mxu0 0.0
  %1993 = vmatprep.subr.mxu0 0.0
  %1994 = vmatpush1.msra.mxu0 0.0
  %1995 = vmatprep.subr.mxu0 0.0
  %1996 = vmatpush1.msra.mxu0 0.0
  %1997 = vmatprep.subr.mxu0 0.0
  %1998 = vmatpush1.msra.mxu0 0.0
  %1999 = vmatprep.mubr.f32.mxu0 0.0
  %2000 = vmatmul.mubr.f32.gmra.mrb[0].mxu0 %v1858
  %v2001 = vpop.f32.mrb[0].mxu0
  %v2002 = vadd.f32 0.0, %v2001
  %v2003 = vpop.f32.mrb[0].mxu0
  %v2004 = vadd.f32 0.0, %v2003
  %2005 = vdwg.mxu0
  %v2006 = vadd.f32 %v1860, %v1931
  %v2007 = vadd.f32 %v1861, %v1933
  %v2008 = vadd.f32 %v1862, %v2002
  %v2009 = vadd.f32 %v1863, %v2004
  %v2010 = vxor.u32 %v2006, 2147483648
  %v2011 = vmul.f32 %v2010, 1.442695
  %v2012 = vpow.pop %v2011
  %v2013 = vadd.f32 %v2012, 1.0
  %v2014 = vrcp.pop %v2013
  %v2015 = vmul.f32 1.0, %v2014
  %v2016 = vxor.u32 %v2007, 2147483648
  %v2017 = vmul.f32 %v2016, 1.442695
  %v2018 = vpow.pop %v2017
  %v2019 = vadd.f32 %v2018, 1.0
  %v2020 = vrcp.pop %v2019
  %v2021 = vmul.f32 1.0, %v2020
  %v2022 = vtanh.pop %v2008
  %v2023 = vxor.u32 %v2009, 2147483648
  %v2024 = vmul.f32 %v2023, 1.442695
  %v2025 = vpow.pop %v2024
  %v2026 = vadd.f32 %v2025, 1.0
  %v2027 = vrcp.pop %v2026
  %v2028 = vmul.f32 1.0, %v2027
  %v2029 = vmul.f32 %v2021, %v1856
  %v2030 = vmul.f32 %v2015, %v2022
  %v2031 = vadd.f32 %v2029, %v2030
  %v2032 = vtanh.pop %v2031
  %v2033 = vmul.f32 %v2028, %v2032
  %2034 = vst [vmem:[#allocation6 + $0x30] sm:$0xff] %v2033
  %v2035 = vld [vmem:[#allocation2 + $0xe0] sm:$0xff]
  %v2036 = vld [vmem:[#allocation2 + $0xe8] sm:$0xff]
  %v2037 = vld [vmem:[#allocation2 + $0xf0] sm:$0xff]
  %v2038 = vld [vmem:[#allocation2 + $0xf8] sm:$0xff]
  %2039 = vmatprep.subr.mxu0 %v747
  %2040 = vmatpush1.msra.mxu0 %v746
  %2041 = vmatprep.subr.mxu0 %v751
  %2042 = vmatpush1.msra.mxu0 %v750
  %2043 = vmatprep.subr.mxu0 %v755
  %2044 = vmatpush1.msra.mxu0 %v754
  %2045 = vmatprep.subr.mxu0 %v759
  %2046 = vmatpush1.msra.mxu0 %v758
  %2047 = vmatprep.subr.mxu0 %v763
  %2048 = vmatpush1.msra.mxu0 %v762
  %2049 = vmatprep.subr.mxu0 %v767
  %2050 = vmatpush1.msra.mxu0 %v766
  %2051 = vmatprep.subr.mxu0 %v771
  %2052 = vmatpush1.msra.mxu0 %v770
  %2053 = vmatprep.subr.mxu0 %v775
  %2054 = vmatpush1.msra.mxu0 %v774
  %2055 = vmatprep.subr.mxu0 %v779
  %2056 = vmatpush1.msra.mxu0 %v778
  %2057 = vmatprep.subr.mxu0 %v783
  %2058 = vmatpush1.msra.mxu0 %v782
  %2059 = vmatprep.subr.mxu0 %v787
  %2060 = vmatpush1.msra.mxu0 %v786
  %2061 = vmatprep.subr.mxu0 %v791
  %2062 = vmatpush1.msra.mxu0 %v790
  %2063 = vmatprep.subr.mxu0 %v795
  %2064 = vmatpush1.msra.mxu0 %v794
  %2065 = vmatprep.subr.mxu0 %v799
  %2066 = vmatpush1.msra.mxu0 %v798
  %2067 = vmatprep.subr.mxu0 %v803
  %2068 = vmatpush1.msra.mxu0 %v802
  %2069 = vmatprep.subr.mxu0 %v807
  %2070 = vmatpush1.msra.mxu0 %v806
  %2071 = vmatprep.subr.mxu0 0.0
  %2072 = vmatpush1.msra.mxu0 0.0
  %2073 = vmatprep.subr.mxu0 0.0
  %2074 = vmatpush1.msra.mxu0 0.0
  %2075 = vmatprep.subr.mxu0 0.0
  %2076 = vmatpush1.msra.mxu0 0.0
  %2077 = vmatprep.subr.mxu0 0.0
  %2078 = vmatpush1.msra.mxu0 0.0
  %2079 = vmatprep.subr.mxu0 0.0
  %2080 = vmatpush1.msra.mxu0 0.0
  %2081 = vmatprep.subr.mxu0 0.0
  %2082 = vmatpush1.msra.mxu0 0.0
  %2083 = vmatprep.subr.mxu0 0.0
  %2084 = vmatpush1.msra.mxu0 0.0
  %2085 = vmatprep.subr.mxu0 0.0
  %2086 = vmatpush1.msra.mxu0 0.0
  %2087 = vmatprep.subr.mxu0 0.0
  %2088 = vmatpush1.msra.mxu0 0.0
  %2089 = vmatprep.subr.mxu0 0.0
  %2090 = vmatpush1.msra.mxu0 0.0
  %2091 = vmatprep.subr.mxu0 0.0
  %2092 = vmatpush1.msra.mxu0 0.0
  %2093 = vmatprep.subr.mxu0 0.0
  %2094 = vmatpush1.msra.mxu0 0.0
  %2095 = vmatprep.subr.mxu0 0.0
  %2096 = vmatpush1.msra.mxu0 0.0
  %2097 = vmatprep.subr.mxu0 0.0
  %2098 = vmatpush1.msra.mxu0 0.0
  %2099 = vmatprep.subr.mxu0 0.0
  %2100 = vmatpush1.msra.mxu0 0.0
  %2101 = vmatprep.subr.mxu0 0.0
  %2102 = vmatpush1.msra.mxu0 0.0
  %2103 = vmatprep.mubr.f32.mxu0 0.0
  %2104 = vmatmul.mubr.f32.gmra.mrb[0].mxu0 %v2033
  %v2105 = vpop.f32.mrb[0].mxu0
  %v2106 = vadd.f32 0.0, %v2105
  %v2107 = vpop.f32.mrb[0].mxu0
  %v2108 = vadd.f32 0.0, %v2107
  %2109 = vdwg.mxu0
  %2110 = vmatprep.subr.mxu0 %v749
  %2111 = vmatpush1.msra.mxu0 %v748
  %2112 = vmatprep.subr.mxu0 %v753
  %2113 = vmatpush1.msra.mxu0 %v752
  %2114 = vmatprep.subr.mxu0 %v757
  %2115 = vmatpush1.msra.mxu0 %v756
  %2116 = vmatprep.subr.mxu0 %v761
  %2117 = vmatpush1.msra.mxu0 %v760
  %2118 = vmatprep.subr.mxu0 %v765
  %2119 = vmatpush1.msra.mxu0 %v764
  %2120 = vmatprep.subr.mxu0 %v769
  %2121 = vmatpush1.msra.mxu0 %v768
  %2122 = vmatprep.subr.mxu0 %v773
  %2123 = vmatpush1.msra.mxu0 %v772
  %2124 = vmatprep.subr.mxu0 %v777
  %2125 = vmatpush1.msra.mxu0 %v776
  %2126 = vmatprep.subr.mxu0 %v781
  %2127 = vmatpush1.msra.mxu0 %v780
  %2128 = vmatprep.subr.mxu0 %v785
  %2129 = vmatpush1.msra.mxu0 %v784
  %2130 = vmatprep.subr.mxu0 %v789
  %2131 = vmatpush1.msra.mxu0 %v788
  %2132 = vmatprep.subr.mxu0 %v793
  %2133 = vmatpush1.msra.mxu0 %v792
  %2134 = vmatprep.subr.mxu0 %v797
  %2135 = vmatpush1.msra.mxu0 %v796
  %2136 = vmatprep.subr.mxu0 %v801
  %2137 = vmatpush1.msra.mxu0 %v800
  %2138 = vmatprep.subr.mxu0 %v805
  %2139 = vmatpush1.msra.mxu0 %v804
  %2140 = vmatprep.subr.mxu0 %v809
  %2141 = vmatpush1.msra.mxu0 %v808
  %2142 = vmatprep.subr.mxu0 0.0
  %2143 = vmatpush1.msra.mxu0 0.0
  %2144 = vmatprep.subr.mxu0 0.0
  %2145 = vmatpush1.msra.mxu0 0.0
  %2146 = vmatprep.subr.mxu0 0.0
  %2147 = vmatpush1.msra.mxu0 0.0
  %2148 = vmatprep.subr.mxu0 0.0
  %2149 = vmatpush1.msra.mxu0 0.0
  %2150 = vmatprep.subr.mxu0 0.0
  %2151 = vmatpush1.msra.mxu0 0.0
  %2152 = vmatprep.subr.mxu0 0.0
  %2153 = vmatpush1.msra.mxu0 0.0
  %2154 = vmatprep.subr.mxu0 0.0
  %2155 = vmatpush1.msra.mxu0 0.0
  %2156 = vmatprep.subr.mxu0 0.0
  %2157 = vmatpush1.msra.mxu0 0.0
  %2158 = vmatprep.subr.mxu0 0.0
  %2159 = vmatpush1.msra.mxu0 0.0
  %2160 = vmatprep.subr.mxu0 0.0
  %2161 = vmatpush1.msra.mxu0 0.0
  %2162 = vmatprep.subr.mxu0 0.0
  %2163 = vmatpush1.msra.mxu0 0.0
  %2164 = vmatprep.subr.mxu0 0.0
  %2165 = vmatpush1.msra.mxu0 0.0
  %2166 = vmatprep.subr.mxu0 0.0
  %2167 = vmatpush1.msra.mxu0 0.0
  %2168 = vmatprep.subr.mxu0 0.0
  %2169 = vmatpush1.msra.mxu0 0.0
  %2170 = vmatprep.subr.mxu0 0.0
  %2171 = vmatpush1.msra.mxu0 0.0
  %2172 = vmatprep.subr.mxu0 0.0
  %2173 = vmatpush1.msra.mxu0 0.0
  %2174 = vmatprep.mubr.f32.mxu0 0.0
  %2175 = vmatmul.mubr.f32.gmra.mrb[0].mxu0 %v2033
  %v2176 = vpop.f32.mrb[0].mxu0
  %v2177 = vadd.f32 0.0, %v2176
  %v2178 = vpop.f32.mrb[0].mxu0
  %v2179 = vadd.f32 0.0, %v2178
  %2180 = vdwg.mxu0
  %v2181 = vadd.f32 %v2035, %v2106
  %v2182 = vadd.f32 %v2036, %v2108
  %v2183 = vadd.f32 %v2037, %v2177
  %v2184 = vadd.f32 %v2038, %v2179
  %v2185 = vxor.u32 %v2181, 2147483648
  %v2186 = vmul.f32 %v2185, 1.442695
  %v2187 = vpow.pop %v2186
  %v2188 = vadd.f32 %v2187, 1.0
  %v2189 = vrcp.pop %v2188
  %v2190 = vmul.f32 1.0, %v2189
  %v2191 = vxor.u32 %v2182, 2147483648
  %v2192 = vmul.f32 %v2191, 1.442695
  %v2193 = vpow.pop %v2192
  %v2194 = vadd.f32 %v2193, 1.0
  %v2195 = vrcp.pop %v2194
  %v2196 = vmul.f32 1.0, %v2195
  %v2197 = vtanh.pop %v2183
  %v2198 = vxor.u32 %v2184, 2147483648
  %v2199 = vmul.f32 %v2198, 1.442695
  %v2200 = vpow.pop %v2199
  %v2201 = vadd.f32 %v2200, 1.0
  %v2202 = vrcp.pop %v2201
  %v2203 = vmul.f32 1.0, %v2202
  %v2204 = vmul.f32 %v2196, %v2031
  %v2205 = vmul.f32 %v2190, %v2197
  %v2206 = vadd.f32 %v2204, %v2205
  %v2207 = vtanh.pop %v2206
  %v2208 = vmul.f32 %v2203, %v2207
  %2209 = vst [vmem:[#allocation6 + $0x38] sm:$0xff] %v2208
  %v2210 = vld [vmem:[%s5] sm:$0xff]
  %v2211 = vld [vmem:[%s5 + $0x8] sm:$0xff]
  %v2212 = vld [vmem:[%s5 + $0x10] sm:$0xff]
  %v2213 = vld [vmem:[%s5 + $0x18] sm:$0xff]
  %v2214 = vld [vmem:[%s5 + $0x20] sm:$0xff]
  %v2215 = vld [vmem:[%s5 + $0x28] sm:$0xff]
  %v2216 = vld [vmem:[%s5 + $0x30] sm:$0xff]
  %v2217 = vld [vmem:[%s5 + $0x38] sm:$0xff]
  %v2218 = vld [vmem:[%s5 + $0x40] sm:$0xff]
  %v2219 = vld [vmem:[%s5 + $0x48] sm:$0xff]
  %v2220 = vld [vmem:[%s5 + $0x50] sm:$0xff]
  %v2221 = vld [vmem:[%s5 + $0x58] sm:$0xff]
  %v2222 = vld [vmem:[%s5 + $0x60] sm:$0xff]
  %v2223 = vld [vmem:[%s5 + $0x68] sm:$0xff]
  %v2224 = vld [vmem:[%s5 + $0x70] sm:$0xff]
  %v2225 = vld [vmem:[%s5 + $0x78] sm:$0xff]
  %v2226 = vld [vmem:[%s5 + $0x80] sm:$0xff]
  %v2227 = vld [vmem:[%s5 + $0x88] sm:$0xff]
  %v2228 = vld [vmem:[%s5 + $0x90] sm:$0xff]
  %v2229 = vld [vmem:[%s5 + $0x98] sm:$0xff]
  %v2230 = vld [vmem:[%s5 + $0xa0] sm:$0xff]
  %v2231 = vld [vmem:[%s5 + $0xa8] sm:$0xff]
  %v2232 = vld [vmem:[%s5 + $0xb0] sm:$0xff]
  %v2233 = vld [vmem:[%s5 + $0xb8] sm:$0xff]
  %v2234 = vld [vmem:[%s5 + $0xc0] sm:$0xff]
  %v2235 = vld [vmem:[%s5 + $0xc8] sm:$0xff]
  %v2236 = vld [vmem:[%s5 + $0xd0] sm:$0xff]
  %v2237 = vld [vmem:[%s5 + $0xd8] sm:$0xff]
  %v2238 = vld [vmem:[%s5 + $0xe0] sm:$0xff]
  %v2239 = vld [vmem:[%s5 + $0xe8] sm:$0xff]
  %v2240 = vld [vmem:[%s5 + $0xf0] sm:$0xff]
  %v2241 = vld [vmem:[%s5 + $0xf8] sm:$0xff]
  %v2242 = vld [vmem:[%s5 + $0x100] sm:$0xff]
  %v2243 = vld [vmem:[%s5 + $0x108] sm:$0xff]
  %v2244 = vld [vmem:[%s5 + $0x110] sm:$0xff]
  %v2245 = vld [vmem:[%s5 + $0x118] sm:$0xff]
  %v2246 = vld [vmem:[%s5 + $0x120] sm:$0xff]
  %v2247 = vld [vmem:[%s5 + $0x128] sm:$0xff]
  %v2248 = vld [vmem:[%s5 + $0x130] sm:$0xff]
  %v2249 = vld [vmem:[%s5 + $0x138] sm:$0xff]
  %v2250 = vld [vmem:[%s5 + $0x140] sm:$0xff]
  %v2251 = vld [vmem:[%s5 + $0x148] sm:$0xff]
  %v2252 = vld [vmem:[%s5 + $0x150] sm:$0xff]
  %v2253 = vld [vmem:[%s5 + $0x158] sm:$0xff]
  %v2254 = vld [vmem:[%s5 + $0x160] sm:$0xff]
  %v2255 = vld [vmem:[%s5 + $0x168] sm:$0xff]
  %v2256 = vld [vmem:[%s5 + $0x170] sm:$0xff]
  %v2257 = vld [vmem:[%s5 + $0x178] sm:$0xff]
  %v2258 = vld [vmem:[%s5 + $0x180] sm:$0xff]
  %v2259 = vld [vmem:[%s5 + $0x188] sm:$0xff]
  %v2260 = vld [vmem:[%s5 + $0x190] sm:$0xff]
  %v2261 = vld [vmem:[%s5 + $0x198] sm:$0xff]
  %v2262 = vld [vmem:[%s5 + $0x1a0] sm:$0xff]
  %v2263 = vld [vmem:[%s5 + $0x1a8] sm:$0xff]
  %v2264 = vld [vmem:[%s5 + $0x1b0] sm:$0xff]
  %v2265 = vld [vmem:[%s5 + $0x1b8] sm:$0xff]
  %v2266 = vld [vmem:[%s5 + $0x1c0] sm:$0xff]
  %v2267 = vld [vmem:[%s5 + $0x1c8] sm:$0xff]
  %v2268 = vld [vmem:[%s5 + $0x1d0] sm:$0xff]
  %v2269 = vld [vmem:[%s5 + $0x1d8] sm:$0xff]
  %v2270 = vld [vmem:[%s5 + $0x1e0] sm:$0xff]
  %v2271 = vld [vmem:[%s5 + $0x1e8] sm:$0xff]
  %v2272 = vld [vmem:[%s5 + $0x1f0] sm:$0xff]
  %v2273 = vld [vmem:[%s5 + $0x1f8] sm:$0xff]
  %v2274 = vld [vmem:[#allocation3 + $0xe0] sm:$0xff]
  %v2275 = vld [vmem:[#allocation3 + $0xe8] sm:$0xff]
  %v2276 = vld [vmem:[#allocation3 + $0xf0] sm:$0xff]
  %v2277 = vld [vmem:[#allocation3 + $0xf8] sm:$0xff]
  %2278 = vmatprep.subr.mxu0 %v2211
  %2279 = vmatpush1.msra.mxu0 %v2210
  %2280 = vmatprep.subr.mxu0 %v2215
  %2281 = vmatpush1.msra.mxu0 %v2214
  %2282 = vmatprep.subr.mxu0 %v2219
  %2283 = vmatpush1.msra.mxu0 %v2218
  %2284 = vmatprep.subr.mxu0 %v2223
  %2285 = vmatpush1.msra.mxu0 %v2222
  %2286 = vmatprep.subr.mxu0 %v2227
  %2287 = vmatpush1.msra.mxu0 %v2226
  %2288 = vmatprep.subr.mxu0 %v2231
  %2289 = vmatpush1.msra.mxu0 %v2230
  %2290 = vmatprep.subr.mxu0 %v2235
  %2291 = vmatpush1.msra.mxu0 %v2234
  %2292 = vmatprep.subr.mxu0 %v2239
  %2293 = vmatpush1.msra.mxu0 %v2238
  %2294 = vmatprep.subr.mxu0 %v2243
  %2295 = vmatpush1.msra.mxu0 %v2242
  %2296 = vmatprep.subr.mxu0 %v2247
  %2297 = vmatpush1.msra.mxu0 %v2246
  %2298 = vmatprep.subr.mxu0 %v2251
  %2299 = vmatpush1.msra.mxu0 %v2250
  %2300 = vmatprep.subr.mxu0 %v2255
  %2301 = vmatpush1.msra.mxu0 %v2254
  %2302 = vmatprep.subr.mxu0 %v2259
  %2303 = vmatpush1.msra.mxu0 %v2258
  %2304 = vmatprep.subr.mxu0 %v2263
  %2305 = vmatpush1.msra.mxu0 %v2262
  %2306 = vmatprep.subr.mxu0 %v2267
  %2307 = vmatpush1.msra.mxu0 %v2266
  %2308 = vmatprep.subr.mxu0 %v2271
  %2309 = vmatpush1.msra.mxu0 %v2270
  %2310 = vmatprep.subr.mxu0 0.0
  %2311 = vmatpush1.msra.mxu0 0.0
  %2312 = vmatprep.subr.mxu0 0.0
  %2313 = vmatpush1.msra.mxu0 0.0
  %2314 = vmatprep.subr.mxu0 0.0
  %2315 = vmatpush1.msra.mxu0 0.0
  %2316 = vmatprep.subr.mxu0 0.0
  %2317 = vmatpush1.msra.mxu0 0.0
  %2318 = vmatprep.subr.mxu0 0.0
  %2319 = vmatpush1.msra.mxu0 0.0
  %2320 = vmatprep.subr.mxu0 0.0
  %2321 = vmatpush1.msra.mxu0 0.0
  %2322 = vmatprep.subr.mxu0 0.0
  %2323 = vmatpush1.msra.mxu0 0.0
  %2324 = vmatprep.subr.mxu0 0.0
  %2325 = vmatpush1.msra.mxu0 0.0
  %2326 = vmatprep.subr.mxu0 0.0
  %2327 = vmatpush1.msra.mxu0 0.0
  %2328 = vmatprep.subr.mxu0 0.0
  %2329 = vmatpush1.msra.mxu0 0.0
  %2330 = vmatprep.subr.mxu0 0.0
  %2331 = vmatpush1.msra.mxu0 0.0
  %2332 = vmatprep.subr.mxu0 0.0
  %2333 = vmatpush1.msra.mxu0 0.0
  %2334 = vmatprep.subr.mxu0 0.0
  %2335 = vmatpush1.msra.mxu0 0.0
  %2336 = vmatprep.subr.mxu0 0.0
  %2337 = vmatpush1.msra.mxu0 0.0
  %2338 = vmatprep.subr.mxu0 0.0
  %2339 = vmatpush1.msra.mxu0 0.0
  %2340 = vmatprep.subr.mxu0 0.0
  %2341 = vmatpush1.msra.mxu0 0.0
  %2342 = vmatprep.mubr.f32.mxu0 0.0
  %2343 = vmatmul.mubr.f32.gmra.mrb[0].mxu0 0.0
  %v2344 = vpop.f32.mrb[0].mxu0
  %v2345 = vadd.f32 0.0, %v2344
  %v2346 = vpop.f32.mrb[0].mxu0
  %v2347 = vadd.f32 0.0, %v2346
  %2348 = vdwg.mxu0
  %2349 = vmatprep.subr.mxu0 %v2213
  %2350 = vmatpush1.msra.mxu0 %v2212
  %2351 = vmatprep.subr.mxu0 %v2217
  %2352 = vmatpush1.msra.mxu0 %v2216
  %2353 = vmatprep.subr.mxu0 %v2221
  %2354 = vmatpush1.msra.mxu0 %v2220
  %2355 = vmatprep.subr.mxu0 %v2225
  %2356 = vmatpush1.msra.mxu0 %v2224
  %2357 = vmatprep.subr.mxu0 %v2229
  %2358 = vmatpush1.msra.mxu0 %v2228
  %2359 = vmatprep.subr.mxu0 %v2233
  %2360 = vmatpush1.msra.mxu0 %v2232
  %2361 = vmatprep.subr.mxu0 %v2237
  %2362 = vmatpush1.msra.mxu0 %v2236
  %2363 = vmatprep.subr.mxu0 %v2241
  %2364 = vmatpush1.msra.mxu0 %v2240
  %2365 = vmatprep.subr.mxu0 %v2245
  %2366 = vmatpush1.msra.mxu0 %v2244
  %2367 = vmatprep.subr.mxu0 %v2249
  %2368 = vmatpush1.msra.mxu0 %v2248
  %2369 = vmatprep.subr.mxu0 %v2253
  %2370 = vmatpush1.msra.mxu0 %v2252
  %2371 = vmatprep.subr.mxu0 %v2257
  %2372 = vmatpush1.msra.mxu0 %v2256
  %2373 = vmatprep.subr.mxu0 %v2261
  %2374 = vmatpush1.msra.mxu0 %v2260
  %2375 = vmatprep.subr.mxu0 %v2265
  %2376 = vmatpush1.msra.mxu0 %v2264
  %2377 = vmatprep.subr.mxu0 %v2269
  %2378 = vmatpush1.msra.mxu0 %v2268
  %2379 = vmatprep.subr.mxu0 %v2273
  %2380 = vmatpush1.msra.mxu0 %v2272
  %2381 = vmatprep.subr.mxu0 0.0
  %2382 = vmatpush1.msra.mxu0 0.0
  %2383 = vmatprep.subr.mxu0 0.0
  %2384 = vmatpush1.msra.mxu0 0.0
  %2385 = vmatprep.subr.mxu0 0.0
  %2386 = vmatpush1.msra.mxu0 0.0
  %2387 = vmatprep.subr.mxu0 0.0
  %2388 = vmatpush1.msra.mxu0 0.0
  %2389 = vmatprep.subr.mxu0 0.0
  %2390 = vmatpush1.msra.mxu0 0.0
  %2391 = vmatprep.subr.mxu0 0.0
  %2392 = vmatpush1.msra.mxu0 0.0
  %2393 = vmatprep.subr.mxu0 0.0
  %2394 = vmatpush1.msra.mxu0 0.0
  %2395 = vmatprep.subr.mxu0 0.0
  %2396 = vmatpush1.msra.mxu0 0.0
  %2397 = vmatprep.subr.mxu0 0.0
  %2398 = vmatpush1.msra.mxu0 0.0
  %2399 = vmatprep.subr.mxu0 0.0
  %2400 = vmatpush1.msra.mxu0 0.0
  %2401 = vmatprep.subr.mxu0 0.0
  %2402 = vmatpush1.msra.mxu0 0.0
  %2403 = vmatprep.subr.mxu0 0.0
  %2404 = vmatpush1.msra.mxu0 0.0
  %2405 = vmatprep.subr.mxu0 0.0
  %2406 = vmatpush1.msra.mxu0 0.0
  %2407 = vmatprep.subr.mxu0 0.0
  %2408 = vmatpush1.msra.mxu0 0.0
  %2409 = vmatprep.subr.mxu0 0.0
  %2410 = vmatpush1.msra.mxu0 0.0
  %2411 = vmatprep.subr.mxu0 0.0
  %2412 = vmatpush1.msra.mxu0 0.0
  %2413 = vmatprep.mubr.f32.mxu0 0.0
  %2414 = vmatmul.mubr.f32.gmra.mrb[0].mxu0 0.0
  %v2415 = vpop.f32.mrb[0].mxu0
  %v2416 = vadd.f32 0.0, %v2415
  %v2417 = vpop.f32.mrb[0].mxu0
  %v2418 = vadd.f32 0.0, %v2417
  %2419 = vdwg.mxu0
  %v2420 = vadd.f32 %v2274, %v2345
  %v2421 = vadd.f32 %v2275, %v2347
  %v2422 = vadd.f32 %v2276, %v2416
  %v2423 = vadd.f32 %v2277, %v2418
  %v2424 = vxor.u32 %v2420, 2147483648
  %v2425 = vmul.f32 %v2424, 1.442695
  %v2426 = vpow.pop %v2425
  %v2427 = vadd.f32 %v2426, 1.0
  %v2428 = vrcp.pop %v2427
  %v2429 = vmul.f32 1.0, %v2428
  %v2430 = vxor.u32 %v2421, 2147483648
  %v2431 = vmul.f32 %v2430, 1.442695
  %v2432 = vpow.pop %v2431
  %v2433 = vadd.f32 %v2432, 1.0
  %v2434 = vrcp.pop %v2433
  %v2435 = vmul.f32 1.0, %v2434
  %v2436 = vtanh.pop %v2422
  %v2437 = vxor.u32 %v2423, 2147483648
  %v2438 = vmul.f32 %v2437, 1.442695
  %v2439 = vpow.pop %v2438
  %v2440 = vadd.f32 %v2439, 1.0
  %v2441 = vrcp.pop %v2440
  %v2442 = vmul.f32 1.0, %v2441
  %v2443 = vmul.f32 %v2435, 0.0
  %v2444 = vmul.f32 %v2429, %v2436
  %v2445 = vadd.f32 %v2443, %v2444
  %v2446 = vtanh.pop %v2445
  %v2447 = vmul.f32 %v2442, %v2446
  %2448 = vst [vmem:[#allocation7 + $0x38] sm:$0xff] %v2447
  %v2449 = vld [vmem:[#allocation3 + $0xc0] sm:$0xff]
  %v2450 = vld [vmem:[#allocation3 + $0xc8] sm:$0xff]
  %v2451 = vld [vmem:[#allocation3 + $0xd0] sm:$0xff]
  %v2452 = vld [vmem:[#allocation3 + $0xd8] sm:$0xff]
  %2453 = vmatprep.subr.mxu0 %v2211
  %2454 = vmatpush1.msra.mxu0 %v2210
  %2455 = vmatprep.subr.mxu0 %v2215
  %2456 = vmatpush1.msra.mxu0 %v2214
  %2457 = vmatprep.subr.mxu0 %v2219
  %2458 = vmatpush1.msra.mxu0 %v2218
  %2459 = vmatprep.subr.mxu0 %v2223
  %2460 = vmatpush1.msra.mxu0 %v2222
  %2461 = vmatprep.subr.mxu0 %v2227
  %2462 = vmatpush1.msra.mxu0 %v2226
  %2463 = vmatprep.subr.mxu0 %v2231
  %2464 = vmatpush1.msra.mxu0 %v2230
  %2465 = vmatprep.subr.mxu0 %v2235
  %2466 = vmatpush1.msra.mxu0 %v2234
  %2467 = vmatprep.subr.mxu0 %v2239
  %2468 = vmatpush1.msra.mxu0 %v2238
  %2469 = vmatprep.subr.mxu0 %v2243
  %2470 = vmatpush1.msra.mxu0 %v2242
  %2471 = vmatprep.subr.mxu0 %v2247
  %2472 = vmatpush1.msra.mxu0 %v2246
  %2473 = vmatprep.subr.mxu0 %v2251
  %2474 = vmatpush1.msra.mxu0 %v2250
  %2475 = vmatprep.subr.mxu0 %v2255
  %2476 = vmatpush1.msra.mxu0 %v2254
  %2477 = vmatprep.subr.mxu0 %v2259
  %2478 = vmatpush1.msra.mxu0 %v2258
  %2479 = vmatprep.subr.mxu0 %v2263
  %2480 = vmatpush1.msra.mxu0 %v2262
  %2481 = vmatprep.subr.mxu0 %v2267
  %2482 = vmatpush1.msra.mxu0 %v2266
  %2483 = vmatprep.subr.mxu0 %v2271
  %2484 = vmatpush1.msra.mxu0 %v2270
  %2485 = vmatprep.subr.mxu0 0.0
  %2486 = vmatpush1.msra.mxu0 0.0
  %2487 = vmatprep.subr.mxu0 0.0
  %2488 = vmatpush1.msra.mxu0 0.0
  %2489 = vmatprep.subr.mxu0 0.0
  %2490 = vmatpush1.msra.mxu0 0.0
  %2491 = vmatprep.subr.mxu0 0.0
  %2492 = vmatpush1.msra.mxu0 0.0
  %2493 = vmatprep.subr.mxu0 0.0
  %2494 = vmatpush1.msra.mxu0 0.0
  %2495 = vmatprep.subr.mxu0 0.0
  %2496 = vmatpush1.msra.mxu0 0.0
  %2497 = vmatprep.subr.mxu0 0.0
  %2498 = vmatpush1.msra.mxu0 0.0
  %2499 = vmatprep.subr.mxu0 0.0
  %2500 = vmatpush1.msra.mxu0 0.0
  %2501 = vmatprep.subr.mxu0 0.0
  %2502 = vmatpush1.msra.mxu0 0.0
  %2503 = vmatprep.subr.mxu0 0.0
  %2504 = vmatpush1.msra.mxu0 0.0
  %2505 = vmatprep.subr.mxu0 0.0
  %2506 = vmatpush1.msra.mxu0 0.0
  %2507 = vmatprep.subr.mxu0 0.0
  %2508 = vmatpush1.msra.mxu0 0.0
  %2509 = vmatprep.subr.mxu0 0.0
  %2510 = vmatpush1.msra.mxu0 0.0
  %2511 = vmatprep.subr.mxu0 0.0
  %2512 = vmatpush1.msra.mxu0 0.0
  %2513 = vmatprep.subr.mxu0 0.0
  %2514 = vmatpush1.msra.mxu0 0.0
  %2515 = vmatprep.subr.mxu0 0.0
  %2516 = vmatpush1.msra.mxu0 0.0
  %2517 = vmatprep.mubr.f32.mxu0 0.0
  %2518 = vmatmul.mubr.f32.gmra.mrb[0].mxu0 %v2447
  %v2519 = vpop.f32.mrb[0].mxu0
  %v2520 = vadd.f32 0.0, %v2519
  %v2521 = vpop.f32.mrb[0].mxu0
  %v2522 = vadd.f32 0.0, %v2521
  %2523 = vdwg.mxu0
  %2524 = vmatprep.subr.mxu0 %v2213
  %2525 = vmatpush1.msra.mxu0 %v2212
  %2526 = vmatprep.subr.mxu0 %v2217
  %2527 = vmatpush1.msra.mxu0 %v2216
  %2528 = vmatprep.subr.mxu0 %v2221
  %2529 = vmatpush1.msra.mxu0 %v2220
  %2530 = vmatprep.subr.mxu0 %v2225
  %2531 = vmatpush1.msra.mxu0 %v2224
  %2532 = vmatprep.subr.mxu0 %v2229
  %2533 = vmatpush1.msra.mxu0 %v2228
  %2534 = vmatprep.subr.mxu0 %v2233
  %2535 = vmatpush1.msra.mxu0 %v2232
  %2536 = vmatprep.subr.mxu0 %v2237
  %2537 = vmatpush1.msra.mxu0 %v2236
  %2538 = vmatprep.subr.mxu0 %v2241
  %2539 = vmatpush1.msra.mxu0 %v2240
  %2540 = vmatprep.subr.mxu0 %v2245
  %2541 = vmatpush1.msra.mxu0 %v2244
  %2542 = vmatprep.subr.mxu0 %v2249
  %2543 = vmatpush1.msra.mxu0 %v2248
  %2544 = vmatprep.subr.mxu0 %v2253
  %2545 = vmatpush1.msra.mxu0 %v2252
  %2546 = vmatprep.subr.mxu0 %v2257
  %2547 = vmatpush1.msra.mxu0 %v2256
  %2548 = vmatprep.subr.mxu0 %v2261
  %2549 = vmatpush1.msra.mxu0 %v2260
  %2550 = vmatprep.subr.mxu0 %v2265
  %2551 = vmatpush1.msra.mxu0 %v2264
  %2552 = vmatprep.subr.mxu0 %v2269
  %2553 = vmatpush1.msra.mxu0 %v2268
  %2554 = vmatprep.subr.mxu0 %v2273
  %2555 = vmatpush1.msra.mxu0 %v2272
  %2556 = vmatprep.subr.mxu0 0.0
  %2557 = vmatpush1.msra.mxu0 0.0
  %2558 = vmatprep.subr.mxu0 0.0
  %2559 = vmatpush1.msra.mxu0 0.0
  %2560 = vmatprep.subr.mxu0 0.0
  %2561 = vmatpush1.msra.mxu0 0.0
  %2562 = vmatprep.subr.mxu0 0.0
  %2563 = vmatpush1.msra.mxu0 0.0
  %2564 = vmatprep.subr.mxu0 0.0
  %2565 = vmatpush1.msra.mxu0 0.0
  %2566 = vmatprep.subr.mxu0 0.0
  %2567 = vmatpush1.msra.mxu0 0.0
  %2568 = vmatprep.subr.mxu0 0.0
  %2569 = vmatpush1.msra.mxu0 0.0
  %2570 = vmatprep.subr.mxu0 0.0
  %2571 = vmatpush1.msra.mxu0 0.0
  %2572 = vmatprep.subr.mxu0 0.0
  %2573 = vmatpush1.msra.mxu0 0.0
  %2574 = vmatprep.subr.mxu0 0.0
  %2575 = vmatpush1.msra.mxu0 0.0
  %2576 = vmatprep.subr.mxu0 0.0
  %2577 = vmatpush1.msra.mxu0 0.0
  %2578 = vmatprep.subr.mxu0 0.0
  %2579 = vmatpush1.msra.mxu0 0.0
  %2580 = vmatprep.subr.mxu0 0.0
  %2581 = vmatpush1.msra.mxu0 0.0
  %2582 = vmatprep.subr.mxu0 0.0
  %2583 = vmatpush1.msra.mxu0 0.0
  %2584 = vmatprep.subr.mxu0 0.0
  %2585 = vmatpush1.msra.mxu0 0.0
  %2586 = vmatprep.subr.mxu0 0.0
  %2587 = vmatpush1.msra.mxu0 0.0
  %2588 = vmatprep.mubr.f32.mxu0 0.0
  %2589 = vmatmul.mubr.f32.gmra.mrb[0].mxu0 %v2447
  %v2590 = vpop.f32.mrb[0].mxu0
  %v2591 = vadd.f32 0.0, %v2590
  %v2592 = vpop.f32.mrb[0].mxu0
  %v2593 = vadd.f32 0.0, %v2592
  %2594 = vdwg.mxu0
  %v2595 = vadd.f32 %v2449, %v2520
  %v2596 = vadd.f32 %v2450, %v2522
  %v2597 = vadd.f32 %v2451, %v2591
  %v2598 = vadd.f32 %v2452, %v2593
  %v2599 = vxor.u32 %v2595, 2147483648
  %v2600 = vmul.f32 %v2599, 1.442695
  %v2601 = vpow.pop %v2600
  %v2602 = vadd.f32 %v2601, 1.0
  %v2603 = vrcp.pop %v2602
  %v2604 = vmul.f32 1.0, %v2603
  %v2605 = vxor.u32 %v2596, 2147483648
  %v2606 = vmul.f32 %v2605, 1.442695
  %v2607 = vpow.pop %v2606
  %v2608 = vadd.f32 %v2607, 1.0
  %v2609 = vrcp.pop %v2608
  %v2610 = vmul.f32 1.0, %v2609
  %v2611 = vtanh.pop %v2597
  %v2612 = vxor.u32 %v2598, 2147483648
  %v2613 = vmul.f32 %v2612, 1.442695
  %v2614 = vpow.pop %v2613
  %v2615 = vadd.f32 %v2614, 1.0
  %v2616 = vrcp.pop %v2615
  %v2617 = vmul.f32 1.0, %v2616
  %v2618 = vmul.f32 %v2610, %v2445
  %v2619 = vmul.f32 %v2604, %v2611
  %v2620 = vadd.f32 %v2618, %v2619
  %v2621 = vtanh.pop %v2620
  %v2622 = vmul.f32 %v2617, %v2621
  %2623 = vst [vmem:[#allocation7 + $0x30] sm:$0xff] %v2622
  %v2624 = vld [vmem:[#allocation3 + $0xa0] sm:$0xff]
  %v2625 = vld [vmem:[#allocation3 + $0xa8] sm:$0xff]
  %v2626 = vld [vmem:[#allocation3 + $0xb0] sm:$0xff]
  %v2627 = vld [vmem:[#allocation3 + $0xb8] sm:$0xff]
  %2628 = vmatprep.subr.mxu0 %v2211
  %2629 = vmatpush1.msra.mxu0 %v2210
  %2630 = vmatprep.subr.mxu0 %v2215
  %2631 = vmatpush1.msra.mxu0 %v2214
  %2632 = vmatprep.subr.mxu0 %v2219
  %2633 = vmatpush1.msra.mxu0 %v2218
  %2634 = vmatprep.subr.mxu0 %v2223
  %2635 = vmatpush1.msra.mxu0 %v2222
  %2636 = vmatprep.subr.mxu0 %v2227
  %2637 = vmatpush1.msra.mxu0 %v2226
  %2638 = vmatprep.subr.mxu0 %v2231
  %2639 = vmatpush1.msra.mxu0 %v2230
  %2640 = vmatprep.subr.mxu0 %v2235
  %2641 = vmatpush1.msra.mxu0 %v2234
  %2642 = vmatprep.subr.mxu0 %v2239
  %2643 = vmatpush1.msra.mxu0 %v2238
  %2644 = vmatprep.subr.mxu0 %v2243
  %2645 = vmatpush1.msra.mxu0 %v2242
  %2646 = vmatprep.subr.mxu0 %v2247
  %2647 = vmatpush1.msra.mxu0 %v2246
  %2648 = vmatprep.subr.mxu0 %v2251
  %2649 = vmatpush1.msra.mxu0 %v2250
  %2650 = vmatprep.subr.mxu0 %v2255
  %2651 = vmatpush1.msra.mxu0 %v2254
  %2652 = vmatprep.subr.mxu0 %v2259
  %2653 = vmatpush1.msra.mxu0 %v2258
  %2654 = vmatprep.subr.mxu0 %v2263
  %2655 = vmatpush1.msra.mxu0 %v2262
  %2656 = vmatprep.subr.mxu0 %v2267
  %2657 = vmatpush1.msra.mxu0 %v2266
  %2658 = vmatprep.subr.mxu0 %v2271
  %2659 = vmatpush1.msra.mxu0 %v2270
  %2660 = vmatprep.subr.mxu0 0.0
  %2661 = vmatpush1.msra.mxu0 0.0
  %2662 = vmatprep.subr.mxu0 0.0
  %2663 = vmatpush1.msra.mxu0 0.0
  %2664 = vmatprep.subr.mxu0 0.0
  %2665 = vmatpush1.msra.mxu0 0.0
  %2666 = vmatprep.subr.mxu0 0.0
  %2667 = vmatpush1.msra.mxu0 0.0
  %2668 = vmatprep.subr.mxu0 0.0
  %2669 = vmatpush1.msra.mxu0 0.0
  %2670 = vmatprep.subr.mxu0 0.0
  %2671 = vmatpush1.msra.mxu0 0.0
  %2672 = vmatprep.subr.mxu0 0.0
  %2673 = vmatpush1.msra.mxu0 0.0
  %2674 = vmatprep.subr.mxu0 0.0
  %2675 = vmatpush1.msra.mxu0 0.0
  %2676 = vmatprep.subr.mxu0 0.0
  %2677 = vmatpush1.msra.mxu0 0.0
  %2678 = vmatprep.subr.mxu0 0.0
  %2679 = vmatpush1.msra.mxu0 0.0
  %2680 = vmatprep.subr.mxu0 0.0
  %2681 = vmatpush1.msra.mxu0 0.0
  %2682 = vmatprep.subr.mxu0 0.0
  %2683 = vmatpush1.msra.mxu0 0.0
  %2684 = vmatprep.subr.mxu0 0.0
  %2685 = vmatpush1.msra.mxu0 0.0
  %2686 = vmatprep.subr.mxu0 0.0
  %2687 = vmatpush1.msra.mxu0 0.0
  %2688 = vmatprep.subr.mxu0 0.0
  %2689 = vmatpush1.msra.mxu0 0.0
  %2690 = vmatprep.subr.mxu0 0.0
  %2691 = vmatpush1.msra.mxu0 0.0
  %2692 = vmatprep.mubr.f32.mxu0 0.0
  %2693 = vmatmul.mubr.f32.gmra.mrb[0].mxu0 %v2622
  %v2694 = vpop.f32.mrb[0].mxu0
  %v2695 = vadd.f32 0.0, %v2694
  %v2696 = vpop.f32.mrb[0].mxu0
  %v2697 = vadd.f32 0.0, %v2696
  %2698 = vdwg.mxu0
  %2699 = vmatprep.subr.mxu0 %v2213
  %2700 = vmatpush1.msra.mxu0 %v2212
  %2701 = vmatprep.subr.mxu0 %v2217
  %2702 = vmatpush1.msra.mxu0 %v2216
  %2703 = vmatprep.subr.mxu0 %v2221
  %2704 = vmatpush1.msra.mxu0 %v2220
  %2705 = vmatprep.subr.mxu0 %v2225
  %2706 = vmatpush1.msra.mxu0 %v2224
  %2707 = vmatprep.subr.mxu0 %v2229
  %2708 = vmatpush1.msra.mxu0 %v2228
  %2709 = vmatprep.subr.mxu0 %v2233
  %2710 = vmatpush1.msra.mxu0 %v2232
  %2711 = vmatprep.subr.mxu0 %v2237
  %2712 = vmatpush1.msra.mxu0 %v2236
  %2713 = vmatprep.subr.mxu0 %v2241
  %2714 = vmatpush1.msra.mxu0 %v2240
  %2715 = vmatprep.subr.mxu0 %v2245
  %2716 = vmatpush1.msra.mxu0 %v2244
  %2717 = vmatprep.subr.mxu0 %v2249
  %2718 = vmatpush1.msra.mxu0 %v2248
  %2719 = vmatprep.subr.mxu0 %v2253
  %2720 = vmatpush1.msra.mxu0 %v2252
  %2721 = vmatprep.subr.mxu0 %v2257
  %2722 = vmatpush1.msra.mxu0 %v2256
  %2723 = vmatprep.subr.mxu0 %v2261
  %2724 = vmatpush1.msra.mxu0 %v2260
  %2725 = vmatprep.subr.mxu0 %v2265
  %2726 = vmatpush1.msra.mxu0 %v2264
  %2727 = vmatprep.subr.mxu0 %v2269
  %2728 = vmatpush1.msra.mxu0 %v2268
  %2729 = vmatprep.subr.mxu0 %v2273
  %2730 = vmatpush1.msra.mxu0 %v2272
  %2731 = vmatprep.subr.mxu0 0.0
  %2732 = vmatpush1.msra.mxu0 0.0
  %2733 = vmatprep.subr.mxu0 0.0
  %2734 = vmatpush1.msra.mxu0 0.0
  %2735 = vmatprep.subr.mxu0 0.0
  %2736 = vmatpush1.msra.mxu0 0.0
  %2737 = vmatprep.subr.mxu0 0.0
  %2738 = vmatpush1.msra.mxu0 0.0
  %2739 = vmatprep.subr.mxu0 0.0
  %2740 = vmatpush1.msra.mxu0 0.0
  %2741 = vmatprep.subr.mxu0 0.0
  %2742 = vmatpush1.msra.mxu0 0.0
  %2743 = vmatprep.subr.mxu0 0.0
  %2744 = vmatpush1.msra.mxu0 0.0
  %2745 = vmatprep.subr.mxu0 0.0
  %2746 = vmatpush1.msra.mxu0 0.0
  %2747 = vmatprep.subr.mxu0 0.0
  %2748 = vmatpush1.msra.mxu0 0.0
  %2749 = vmatprep.subr.mxu0 0.0
  %2750 = vmatpush1.msra.mxu0 0.0
  %2751 = vmatprep.subr.mxu0 0.0
  %2752 = vmatpush1.msra.mxu0 0.0
  %2753 = vmatprep.subr.mxu0 0.0
  %2754 = vmatpush1.msra.mxu0 0.0
  %2755 = vmatprep.subr.mxu0 0.0
  %2756 = vmatpush1.msra.mxu0 0.0
  %2757 = vmatprep.subr.mxu0 0.0
  %2758 = vmatpush1.msra.mxu0 0.0
  %2759 = vmatprep.subr.mxu0 0.0
  %2760 = vmatpush1.msra.mxu0 0.0
  %2761 = vmatprep.subr.mxu0 0.0
  %2762 = vmatpush1.msra.mxu0 0.0
  %2763 = vmatprep.mubr.f32.mxu0 0.0
  %2764 = vmatmul.mubr.f32.gmra.mrb[0].mxu0 %v2622
  %v2765 = vpop.f32.mrb[0].mxu0
  %v2766 = vadd.f32 0.0, %v2765
  %v2767 = vpop.f32.mrb[0].mxu0
  %v2768 = vadd.f32 0.0, %v2767
  %2769 = vdwg.mxu0
  %v2770 = vadd.f32 %v2624, %v2695
  %v2771 = vadd.f32 %v2625, %v2697
  %v2772 = vadd.f32 %v2626, %v2766
  %v2773 = vadd.f32 %v2627, %v2768
  %v2774 = vxor.u32 %v2770, 2147483648
  %v2775 = vmul.f32 %v2774, 1.442695
  %v2776 = vpow.pop %v2775
  %v2777 = vadd.f32 %v2776, 1.0
  %v2778 = vrcp.pop %v2777
  %v2779 = vmul.f32 1.0, %v2778
  %v2780 = vxor.u32 %v2771, 2147483648
  %v2781 = vmul.f32 %v2780, 1.442695
  %v2782 = vpow.pop %v2781
  %v2783 = vadd.f32 %v2782, 1.0
  %v2784 = vrcp.pop %v2783
  %v2785 = vmul.f32 1.0, %v2784
  %v2786 = vtanh.pop %v2772
  %v2787 = vxor.u32 %v2773, 2147483648
  %v2788 = vmul.f32 %v2787, 1.442695
  %v2789 = vpow.pop %v2788
  %v2790 = vadd.f32 %v2789, 1.0
  %v2791 = vrcp.pop %v2790
  %v2792 = vmul.f32 1.0, %v2791
  %v2793 = vmul.f32 %v2785, %v2620
  %v2794 = vmul.f32 %v2779, %v2786
  %v2795 = vadd.f32 %v2793, %v2794
  %v2796 = vtanh.pop %v2795
  %v2797 = vmul.f32 %v2792, %v2796
  %2798 = vst [vmem:[#allocation7 + $0x28] sm:$0xff] %v2797
  %v2799 = vld [vmem:[#allocation3 + $0x80] sm:$0xff]
  %v2800 = vld [vmem:[#allocation3 + $0x88] sm:$0xff]
  %v2801 = vld [vmem:[#allocation3 + $0x90] sm:$0xff]
  %v2802 = vld [vmem:[#allocation3 + $0x98] sm:$0xff]
  %2803 = vmatprep.subr.mxu0 %v2211
  %2804 = vmatpush1.msra.mxu0 %v2210
  %2805 = vmatprep.subr.mxu0 %v2215
  %2806 = vmatpush1.msra.mxu0 %v2214
  %2807 = vmatprep.subr.mxu0 %v2219
  %2808 = vmatpush1.msra.mxu0 %v2218
  %2809 = vmatprep.subr.mxu0 %v2223
  %2810 = vmatpush1.msra.mxu0 %v2222
  %2811 = vmatprep.subr.mxu0 %v2227
  %2812 = vmatpush1.msra.mxu0 %v2226
  %2813 = vmatprep.subr.mxu0 %v2231
  %2814 = vmatpush1.msra.mxu0 %v2230
  %2815 = vmatprep.subr.mxu0 %v2235
  %2816 = vmatpush1.msra.mxu0 %v2234
  %2817 = vmatprep.subr.mxu0 %v2239
  %2818 = vmatpush1.msra.mxu0 %v2238
  %2819 = vmatprep.subr.mxu0 %v2243
  %2820 = vmatpush1.msra.mxu0 %v2242
  %2821 = vmatprep.subr.mxu0 %v2247
  %2822 = vmatpush1.msra.mxu0 %v2246
  %2823 = vmatprep.subr.mxu0 %v2251
  %2824 = vmatpush1.msra.mxu0 %v2250
  %2825 = vmatprep.subr.mxu0 %v2255
  %2826 = vmatpush1.msra.mxu0 %v2254
  %2827 = vmatprep.subr.mxu0 %v2259
  %2828 = vmatpush1.msra.mxu0 %v2258
  %2829 = vmatprep.subr.mxu0 %v2263
  %2830 = vmatpush1.msra.mxu0 %v2262
  %2831 = vmatprep.subr.mxu0 %v2267
  %2832 = vmatpush1.msra.mxu0 %v2266
  %2833 = vmatprep.subr.mxu0 %v2271
  %2834 = vmatpush1.msra.mxu0 %v2270
  %2835 = vmatprep.subr.mxu0 0.0
  %2836 = vmatpush1.msra.mxu0 0.0
  %2837 = vmatprep.subr.mxu0 0.0
  %2838 = vmatpush1.msra.mxu0 0.0
  %2839 = vmatprep.subr.mxu0 0.0
  %2840 = vmatpush1.msra.mxu0 0.0
  %2841 = vmatprep.subr.mxu0 0.0
  %2842 = vmatpush1.msra.mxu0 0.0
  %2843 = vmatprep.subr.mxu0 0.0
  %2844 = vmatpush1.msra.mxu0 0.0
  %2845 = vmatprep.subr.mxu0 0.0
  %2846 = vmatpush1.msra.mxu0 0.0
  %2847 = vmatprep.subr.mxu0 0.0
  %2848 = vmatpush1.msra.mxu0 0.0
  %2849 = vmatprep.subr.mxu0 0.0
  %2850 = vmatpush1.msra.mxu0 0.0
  %2851 = vmatprep.subr.mxu0 0.0
  %2852 = vmatpush1.msra.mxu0 0.0
  %2853 = vmatprep.subr.mxu0 0.0
  %2854 = vmatpush1.msra.mxu0 0.0
  %2855 = vmatprep.subr.mxu0 0.0
  %2856 = vmatpush1.msra.mxu0 0.0
  %2857 = vmatprep.subr.mxu0 0.0
  %2858 = vmatpush1.msra.mxu0 0.0
  %2859 = vmatprep.subr.mxu0 0.0
  %2860 = vmatpush1.msra.mxu0 0.0
  %2861 = vmatprep.subr.mxu0 0.0
  %2862 = vmatpush1.msra.mxu0 0.0
  %2863 = vmatprep.subr.mxu0 0.0
  %2864 = vmatpush1.msra.mxu0 0.0
  %2865 = vmatprep.subr.mxu0 0.0
  %2866 = vmatpush1.msra.mxu0 0.0
  %2867 = vmatprep.mubr.f32.mxu0 0.0
  %2868 = vmatmul.mubr.f32.gmra.mrb[0].mxu0 %v2797
  %v2869 = vpop.f32.mrb[0].mxu0
  %v2870 = vadd.f32 0.0, %v2869
  %v2871 = vpop.f32.mrb[0].mxu0
  %v2872 = vadd.f32 0.0, %v2871
  %2873 = vdwg.mxu0
  %2874 = vmatprep.subr.mxu0 %v2213
  %2875 = vmatpush1.msra.mxu0 %v2212
  %2876 = vmatprep.subr.mxu0 %v2217
  %2877 = vmatpush1.msra.mxu0 %v2216
  %2878 = vmatprep.subr.mxu0 %v2221
  %2879 = vmatpush1.msra.mxu0 %v2220
  %2880 = vmatprep.subr.mxu0 %v2225
  %2881 = vmatpush1.msra.mxu0 %v2224
  %2882 = vmatprep.subr.mxu0 %v2229
  %2883 = vmatpush1.msra.mxu0 %v2228
  %2884 = vmatprep.subr.mxu0 %v2233
  %2885 = vmatpush1.msra.mxu0 %v2232
  %2886 = vmatprep.subr.mxu0 %v2237
  %2887 = vmatpush1.msra.mxu0 %v2236
  %2888 = vmatprep.subr.mxu0 %v2241
  %2889 = vmatpush1.msra.mxu0 %v2240
  %2890 = vmatprep.subr.mxu0 %v2245
  %2891 = vmatpush1.msra.mxu0 %v2244
  %2892 = vmatprep.subr.mxu0 %v2249
  %2893 = vmatpush1.msra.mxu0 %v2248
  %2894 = vmatprep.subr.mxu0 %v2253
  %2895 = vmatpush1.msra.mxu0 %v2252
  %2896 = vmatprep.subr.mxu0 %v2257
  %2897 = vmatpush1.msra.mxu0 %v2256
  %2898 = vmatprep.subr.mxu0 %v2261
  %2899 = vmatpush1.msra.mxu0 %v2260
  %2900 = vmatprep.subr.mxu0 %v2265
  %2901 = vmatpush1.msra.mxu0 %v2264
  %2902 = vmatprep.subr.mxu0 %v2269
  %2903 = vmatpush1.msra.mxu0 %v2268
  %2904 = vmatprep.subr.mxu0 %v2273
  %2905 = vmatpush1.msra.mxu0 %v2272
  %2906 = vmatprep.subr.mxu0 0.0
  %2907 = vmatpush1.msra.mxu0 0.0
  %2908 = vmatprep.subr.mxu0 0.0
  %2909 = vmatpush1.msra.mxu0 0.0
  %2910 = vmatprep.subr.mxu0 0.0
  %2911 = vmatpush1.msra.mxu0 0.0
  %2912 = vmatprep.subr.mxu0 0.0
  %2913 = vmatpush1.msra.mxu0 0.0
  %2914 = vmatprep.subr.mxu0 0.0
  %2915 = vmatpush1.msra.mxu0 0.0
  %2916 = vmatprep.subr.mxu0 0.0
  %2917 = vmatpush1.msra.mxu0 0.0
  %2918 = vmatprep.subr.mxu0 0.0
  %2919 = vmatpush1.msra.mxu0 0.0
  %2920 = vmatprep.subr.mxu0 0.0
  %2921 = vmatpush1.msra.mxu0 0.0
  %2922 = vmatprep.subr.mxu0 0.0
  %2923 = vmatpush1.msra.mxu0 0.0
  %2924 = vmatprep.subr.mxu0 0.0
  %2925 = vmatpush1.msra.mxu0 0.0
  %2926 = vmatprep.subr.mxu0 0.0
  %2927 = vmatpush1.msra.mxu0 0.0
  %2928 = vmatprep.subr.mxu0 0.0
  %2929 = vmatpush1.msra.mxu0 0.0
  %2930 = vmatprep.subr.mxu0 0.0
  %2931 = vmatpush1.msra.mxu0 0.0
  %2932 = vmatprep.subr.mxu0 0.0
  %2933 = vmatpush1.msra.mxu0 0.0
  %2934 = vmatprep.subr.mxu0 0.0
  %2935 = vmatpush1.msra.mxu0 0.0
  %2936 = vmatprep.subr.mxu0 0.0
  %2937 = vmatpush1.msra.mxu0 0.0
  %2938 = vmatprep.mubr.f32.mxu0 0.0
  %2939 = vmatmul.mubr.f32.gmra.mrb[0].mxu0 %v2797
  %v2940 = vpop.f32.mrb[0].mxu0
  %v2941 = vadd.f32 0.0, %v2940
  %v2942 = vpop.f32.mrb[0].mxu0
  %v2943 = vadd.f32 0.0, %v2942
  %2944 = vdwg.mxu0
  %v2945 = vadd.f32 %v2799, %v2870
  %v2946 = vadd.f32 %v2800, %v2872
  %v2947 = vadd.f32 %v2801, %v2941
  %v2948 = vadd.f32 %v2802, %v2943
  %v2949 = vxor.u32 %v2945, 2147483648
  %v2950 = vmul.f32 %v2949, 1.442695
  %v2951 = vpow.pop %v2950
  %v2952 = vadd.f32 %v2951, 1.0
  %v2953 = vrcp.pop %v2952
  %v2954 = vmul.f32 1.0, %v2953
  %v2955 = vxor.u32 %v2946, 2147483648
  %v2956 = vmul.f32 %v2955, 1.442695
  %v2957 = vpow.pop %v2956
  %v2958 = vadd.f32 %v2957, 1.0
  %v2959 = vrcp.pop %v2958
  %v2960 = vmul.f32 1.0, %v2959
  %v2961 = vtanh.pop %v2947
  %v2962 = vxor.u32 %v2948, 2147483648
  %v2963 = vmul.f32 %v2962, 1.442695
  %v2964 = vpow.pop %v2963
  %v2965 = vadd.f32 %v2964, 1.0
  %v2966 = vrcp.pop %v2965
  %v2967 = vmul.f32 1.0, %v2966
  %v2968 = vmul.f32 %v2960, %v2795
  %v2969 = vmul.f32 %v2954, %v2961
  %v2970 = vadd.f32 %v2968, %v2969
  %v2971 = vtanh.pop %v2970
  %v2972 = vmul.f32 %v2967, %v2971
  %2973 = vst [vmem:[#allocation7 + $0x20] sm:$0xff] %v2972
  %v2974 = vld [vmem:[#allocation3 + $0x60] sm:$0xff]
  %v2975 = vld [vmem:[#allocation3 + $0x68] sm:$0xff]
  %v2976 = vld [vmem:[#allocation3 + $0x70] sm:$0xff]
  %v2977 = vld [vmem:[#allocation3 + $0x78] sm:$0xff]
  %2978 = vmatprep.subr.mxu0 %v2211
  %2979 = vmatpush1.msra.mxu0 %v2210
  %2980 = vmatprep.subr.mxu0 %v2215
  %2981 = vmatpush1.msra.mxu0 %v2214
  %2982 = vmatprep.subr.mxu0 %v2219
  %2983 = vmatpush1.msra.mxu0 %v2218
  %2984 = vmatprep.subr.mxu0 %v2223
  %2985 = vmatpush1.msra.mxu0 %v2222
  %2986 = vmatprep.subr.mxu0 %v2227
  %2987 = vmatpush1.msra.mxu0 %v2226
  %2988 = vmatprep.subr.mxu0 %v2231
  %2989 = vmatpush1.msra.mxu0 %v2230
  %2990 = vmatprep.subr.mxu0 %v2235
  %2991 = vmatpush1.msra.mxu0 %v2234
  %2992 = vmatprep.subr.mxu0 %v2239
  %2993 = vmatpush1.msra.mxu0 %v2238
  %2994 = vmatprep.subr.mxu0 %v2243
  %2995 = vmatpush1.msra.mxu0 %v2242
  %2996 = vmatprep.subr.mxu0 %v2247
  %2997 = vmatpush1.msra.mxu0 %v2246
  %2998 = vmatprep.subr.mxu0 %v2251
  %2999 = vmatpush1.msra.mxu0 %v2250
  %3000 = vmatprep.subr.mxu0 %v2255
  %3001 = vmatpush1.msra.mxu0 %v2254
  %3002 = vmatprep.subr.mxu0 %v2259
  %3003 = vmatpush1.msra.mxu0 %v2258
  %3004 = vmatprep.subr.mxu0 %v2263
  %3005 = vmatpush1.msra.mxu0 %v2262
  %3006 = vmatprep.subr.mxu0 %v2267
  %3007 = vmatpush1.msra.mxu0 %v2266
  %3008 = vmatprep.subr.mxu0 %v2271
  %3009 = vmatpush1.msra.mxu0 %v2270
  %3010 = vmatprep.subr.mxu0 0.0
  %3011 = vmatpush1.msra.mxu0 0.0
  %3012 = vmatprep.subr.mxu0 0.0
  %3013 = vmatpush1.msra.mxu0 0.0
  %3014 = vmatprep.subr.mxu0 0.0
  %3015 = vmatpush1.msra.mxu0 0.0
  %3016 = vmatprep.subr.mxu0 0.0
  %3017 = vmatpush1.msra.mxu0 0.0
  %3018 = vmatprep.subr.mxu0 0.0
  %3019 = vmatpush1.msra.mxu0 0.0
  %3020 = vmatprep.subr.mxu0 0.0
  %3021 = vmatpush1.msra.mxu0 0.0
  %3022 = vmatprep.subr.mxu0 0.0
  %3023 = vmatpush1.msra.mxu0 0.0
  %3024 = vmatprep.subr.mxu0 0.0
  %3025 = vmatpush1.msra.mxu0 0.0
  %3026 = vmatprep.subr.mxu0 0.0
  %3027 = vmatpush1.msra.mxu0 0.0
  %3028 = vmatprep.subr.mxu0 0.0
  %3029 = vmatpush1.msra.mxu0 0.0
  %3030 = vmatprep.subr.mxu0 0.0
  %3031 = vmatpush1.msra.mxu0 0.0
  %3032 = vmatprep.subr.mxu0 0.0
  %3033 = vmatpush1.msra.mxu0 0.0
  %3034 = vmatprep.subr.mxu0 0.0
  %3035 = vmatpush1.msra.mxu0 0.0
  %3036 = vmatprep.subr.mxu0 0.0
  %3037 = vmatpush1.msra.mxu0 0.0
  %3038 = vmatprep.subr.mxu0 0.0
  %3039 = vmatpush1.msra.mxu0 0.0
  %3040 = vmatprep.subr.mxu0 0.0
  %3041 = vmatpush1.msra.mxu0 0.0
  %3042 = vmatprep.mubr.f32.mxu0 0.0
  %3043 = vmatmul.mubr.f32.gmra.mrb[0].mxu0 %v2972
  %v3044 = vpop.f32.mrb[0].mxu0
  %v3045 = vadd.f32 0.0, %v3044
  %v3046 = vpop.f32.mrb[0].mxu0
  %v3047 = vadd.f32 0.0, %v3046
  %3048 = vdwg.mxu0
  %3049 = vmatprep.subr.mxu0 %v2213
  %3050 = vmatpush1.msra.mxu0 %v2212
  %3051 = vmatprep.subr.mxu0 %v2217
  %3052 = vmatpush1.msra.mxu0 %v2216
  %3053 = vmatprep.subr.mxu0 %v2221
  %3054 = vmatpush1.msra.mxu0 %v2220
  %3055 = vmatprep.subr.mxu0 %v2225
  %3056 = vmatpush1.msra.mxu0 %v2224
  %3057 = vmatprep.subr.mxu0 %v2229
  %3058 = vmatpush1.msra.mxu0 %v2228
  %3059 = vmatprep.subr.mxu0 %v2233
  %3060 = vmatpush1.msra.mxu0 %v2232
  %3061 = vmatprep.subr.mxu0 %v2237
  %3062 = vmatpush1.msra.mxu0 %v2236
  %3063 = vmatprep.subr.mxu0 %v2241
  %3064 = vmatpush1.msra.mxu0 %v2240
  %3065 = vmatprep.subr.mxu0 %v2245
  %3066 = vmatpush1.msra.mxu0 %v2244
  %3067 = vmatprep.subr.mxu0 %v2249
  %3068 = vmatpush1.msra.mxu0 %v2248
  %3069 = vmatprep.subr.mxu0 %v2253
  %3070 = vmatpush1.msra.mxu0 %v2252
  %3071 = vmatprep.subr.mxu0 %v2257
  %3072 = vmatpush1.msra.mxu0 %v2256
  %3073 = vmatprep.subr.mxu0 %v2261
  %3074 = vmatpush1.msra.mxu0 %v2260
  %3075 = vmatprep.subr.mxu0 %v2265
  %3076 = vmatpush1.msra.mxu0 %v2264
  %3077 = vmatprep.subr.mxu0 %v2269
  %3078 = vmatpush1.msra.mxu0 %v2268
  %3079 = vmatprep.subr.mxu0 %v2273
  %3080 = vmatpush1.msra.mxu0 %v2272
  %3081 = vmatprep.subr.mxu0 0.0
  %3082 = vmatpush1.msra.mxu0 0.0
  %3083 = vmatprep.subr.mxu0 0.0
  %3084 = vmatpush1.msra.mxu0 0.0
  %3085 = vmatprep.subr.mxu0 0.0
  %3086 = vmatpush1.msra.mxu0 0.0
  %3087 = vmatprep.subr.mxu0 0.0
  %3088 = vmatpush1.msra.mxu0 0.0
  %3089 = vmatprep.subr.mxu0 0.0
  %3090 = vmatpush1.msra.mxu0 0.0
  %3091 = vmatprep.subr.mxu0 0.0
  %3092 = vmatpush1.msra.mxu0 0.0
  %3093 = vmatprep.subr.mxu0 0.0
  %3094 = vmatpush1.msra.mxu0 0.0
  %3095 = vmatprep.subr.mxu0 0.0
  %3096 = vmatpush1.msra.mxu0 0.0
  %3097 = vmatprep.subr.mxu0 0.0
  %3098 = vmatpush1.msra.mxu0 0.0
  %3099 = vmatprep.subr.mxu0 0.0
  %3100 = vmatpush1.msra.mxu0 0.0
  %3101 = vmatprep.subr.mxu0 0.0
  %3102 = vmatpush1.msra.mxu0 0.0
  %3103 = vmatprep.subr.mxu0 0.0
  %3104 = vmatpush1.msra.mxu0 0.0
  %3105 = vmatprep.subr.mxu0 0.0
  %3106 = vmatpush1.msra.mxu0 0.0
  %3107 = vmatprep.subr.mxu0 0.0
  %3108 = vmatpush1.msra.mxu0 0.0
  %3109 = vmatprep.subr.mxu0 0.0
  %3110 = vmatpush1.msra.mxu0 0.0
  %3111 = vmatprep.subr.mxu0 0.0
  %3112 = vmatpush1.msra.mxu0 0.0
  %3113 = vmatprep.mubr.f32.mxu0 0.0
  %3114 = vmatmul.mubr.f32.gmra.mrb[0].mxu0 %v2972
  %v3115 = vpop.f32.mrb[0].mxu0
  %v3116 = vadd.f32 0.0, %v3115
  %v3117 = vpop.f32.mrb[0].mxu0
  %v3118 = vadd.f32 0.0, %v3117
  %3119 = vdwg.mxu0
  %v3120 = vadd.f32 %v2974, %v3045
  %v3121 = vadd.f32 %v2975, %v3047
  %v3122 = vadd.f32 %v2976, %v3116
  %v3123 = vadd.f32 %v2977, %v3118
  %v3124 = vxor.u32 %v3120, 2147483648
  %v3125 = vmul.f32 %v3124, 1.442695
  %v3126 = vpow.pop %v3125
  %v3127 = vadd.f32 %v3126, 1.0
  %v3128 = vrcp.pop %v3127
  %v3129 = vmul.f32 1.0, %v3128
  %v3130 = vxor.u32 %v3121, 2147483648
  %v3131 = vmul.f32 %v3130, 1.442695
  %v3132 = vpow.pop %v3131
  %v3133 = vadd.f32 %v3132, 1.0
  %v3134 = vrcp.pop %v3133
  %v3135 = vmul.f32 1.0, %v3134
  %v3136 = vtanh.pop %v3122
  %v3137 = vxor.u32 %v3123, 2147483648
  %v3138 = vmul.f32 %v3137, 1.442695
  %v3139 = vpow.pop %v3138
  %v3140 = vadd.f32 %v3139, 1.0
  %v3141 = vrcp.pop %v3140
  %v3142 = vmul.f32 1.0, %v3141
  %v3143 = vmul.f32 %v3135, %v2970
  %v3144 = vmul.f32 %v3129, %v3136
  %v3145 = vadd.f32 %v3143, %v3144
  %v3146 = vtanh.pop %v3145
  %v3147 = vmul.f32 %v3142, %v3146
  %3148 = vst [vmem:[#allocation7 + $0x18] sm:$0xff] %v3147
  %v3149 = vld [vmem:[#allocation3 + $0x40] sm:$0xff]
  %v3150 = vld [vmem:[#allocation3 + $0x48] sm:$0xff]
  %v3151 = vld [vmem:[#allocation3 + $0x50] sm:$0xff]
  %v3152 = vld [vmem:[#allocation3 + $0x58] sm:$0xff]
  %3153 = vmatprep.subr.mxu0 %v2211
  %3154 = vmatpush1.msra.mxu0 %v2210
  %3155 = vmatprep.subr.mxu0 %v2215
  %3156 = vmatpush1.msra.mxu0 %v2214
  %3157 = vmatprep.subr.mxu0 %v2219
  %3158 = vmatpush1.msra.mxu0 %v2218
  %3159 = vmatprep.subr.mxu0 %v2223
  %3160 = vmatpush1.msra.mxu0 %v2222
  %3161 = vmatprep.subr.mxu0 %v2227
  %3162 = vmatpush1.msra.mxu0 %v2226
  %3163 = vmatprep.subr.mxu0 %v2231
  %3164 = vmatpush1.msra.mxu0 %v2230
  %3165 = vmatprep.subr.mxu0 %v2235
  %3166 = vmatpush1.msra.mxu0 %v2234
  %3167 = vmatprep.subr.mxu0 %v2239
  %3168 = vmatpush1.msra.mxu0 %v2238
  %3169 = vmatprep.subr.mxu0 %v2243
  %3170 = vmatpush1.msra.mxu0 %v2242
  %3171 = vmatprep.subr.mxu0 %v2247
  %3172 = vmatpush1.msra.mxu0 %v2246
  %3173 = vmatprep.subr.mxu0 %v2251
  %3174 = vmatpush1.msra.mxu0 %v2250
  %3175 = vmatprep.subr.mxu0 %v2255
  %3176 = vmatpush1.msra.mxu0 %v2254
  %3177 = vmatprep.subr.mxu0 %v2259
  %3178 = vmatpush1.msra.mxu0 %v2258
  %3179 = vmatprep.subr.mxu0 %v2263
  %3180 = vmatpush1.msra.mxu0 %v2262
  %3181 = vmatprep.subr.mxu0 %v2267
  %3182 = vmatpush1.msra.mxu0 %v2266
  %3183 = vmatprep.subr.mxu0 %v2271
  %3184 = vmatpush1.msra.mxu0 %v2270
  %3185 = vmatprep.subr.mxu0 0.0
  %3186 = vmatpush1.msra.mxu0 0.0
  %3187 = vmatprep.subr.mxu0 0.0
  %3188 = vmatpush1.msra.mxu0 0.0
  %3189 = vmatprep.subr.mxu0 0.0
  %3190 = vmatpush1.msra.mxu0 0.0
  %3191 = vmatprep.subr.mxu0 0.0
  %3192 = vmatpush1.msra.mxu0 0.0
  %3193 = vmatprep.subr.mxu0 0.0
  %3194 = vmatpush1.msra.mxu0 0.0
  %3195 = vmatprep.subr.mxu0 0.0
  %3196 = vmatpush1.msra.mxu0 0.0
  %3197 = vmatprep.subr.mxu0 0.0
  %3198 = vmatpush1.msra.mxu0 0.0
  %3199 = vmatprep.subr.mxu0 0.0
  %3200 = vmatpush1.msra.mxu0 0.0
  %3201 = vmatprep.subr.mxu0 0.0
  %3202 = vmatpush1.msra.mxu0 0.0
  %3203 = vmatprep.subr.mxu0 0.0
  %3204 = vmatpush1.msra.mxu0 0.0
  %3205 = vmatprep.subr.mxu0 0.0
  %3206 = vmatpush1.msra.mxu0 0.0
  %3207 = vmatprep.subr.mxu0 0.0
  %3208 = vmatpush1.msra.mxu0 0.0
  %3209 = vmatprep.subr.mxu0 0.0
  %3210 = vmatpush1.msra.mxu0 0.0
  %3211 = vmatprep.subr.mxu0 0.0
  %3212 = vmatpush1.msra.mxu0 0.0
  %3213 = vmatprep.subr.mxu0 0.0
  %3214 = vmatpush1.msra.mxu0 0.0
  %3215 = vmatprep.subr.mxu0 0.0
  %3216 = vmatpush1.msra.mxu0 0.0
  %3217 = vmatprep.mubr.f32.mxu0 0.0
  %3218 = vmatmul.mubr.f32.gmra.mrb[0].mxu0 %v3147
  %v3219 = vpop.f32.mrb[0].mxu0
  %v3220 = vadd.f32 0.0, %v3219
  %v3221 = vpop.f32.mrb[0].mxu0
  %v3222 = vadd.f32 0.0, %v3221
  %3223 = vdwg.mxu0
  %3224 = vmatprep.subr.mxu0 %v2213
  %3225 = vmatpush1.msra.mxu0 %v2212
  %3226 = vmatprep.subr.mxu0 %v2217
  %3227 = vmatpush1.msra.mxu0 %v2216
  %3228 = vmatprep.subr.mxu0 %v2221
  %3229 = vmatpush1.msra.mxu0 %v2220
  %3230 = vmatprep.subr.mxu0 %v2225
  %3231 = vmatpush1.msra.mxu0 %v2224
  %3232 = vmatprep.subr.mxu0 %v2229
  %3233 = vmatpush1.msra.mxu0 %v2228
  %3234 = vmatprep.subr.mxu0 %v2233
  %3235 = vmatpush1.msra.mxu0 %v2232
  %3236 = vmatprep.subr.mxu0 %v2237
  %3237 = vmatpush1.msra.mxu0 %v2236
  %3238 = vmatprep.subr.mxu0 %v2241
  %3239 = vmatpush1.msra.mxu0 %v2240
  %3240 = vmatprep.subr.mxu0 %v2245
  %3241 = vmatpush1.msra.mxu0 %v2244
  %3242 = vmatprep.subr.mxu0 %v2249
  %3243 = vmatpush1.msra.mxu0 %v2248
  %3244 = vmatprep.subr.mxu0 %v2253
  %3245 = vmatpush1.msra.mxu0 %v2252
  %3246 = vmatprep.subr.mxu0 %v2257
  %3247 = vmatpush1.msra.mxu0 %v2256
  %3248 = vmatprep.subr.mxu0 %v2261
  %3249 = vmatpush1.msra.mxu0 %v2260
  %3250 = vmatprep.subr.mxu0 %v2265
  %3251 = vmatpush1.msra.mxu0 %v2264
  %3252 = vmatprep.subr.mxu0 %v2269
  %3253 = vmatpush1.msra.mxu0 %v2268
  %3254 = vmatprep.subr.mxu0 %v2273
  %3255 = vmatpush1.msra.mxu0 %v2272
  %3256 = vmatprep.subr.mxu0 0.0
  %3257 = vmatpush1.msra.mxu0 0.0
  %3258 = vmatprep.subr.mxu0 0.0
  %3259 = vmatpush1.msra.mxu0 0.0
  %3260 = vmatprep.subr.mxu0 0.0
  %3261 = vmatpush1.msra.mxu0 0.0
  %3262 = vmatprep.subr.mxu0 0.0
  %3263 = vmatpush1.msra.mxu0 0.0
  %3264 = vmatprep.subr.mxu0 0.0
  %3265 = vmatpush1.msra.mxu0 0.0
  %3266 = vmatprep.subr.mxu0 0.0
  %3267 = vmatpush1.msra.mxu0 0.0
  %3268 = vmatprep.subr.mxu0 0.0
  %3269 = vmatpush1.msra.mxu0 0.0
  %3270 = vmatprep.subr.mxu0 0.0
  %3271 = vmatpush1.msra.mxu0 0.0
  %3272 = vmatprep.subr.mxu0 0.0
  %3273 = vmatpush1.msra.mxu0 0.0
  %3274 = vmatprep.subr.mxu0 0.0
  %3275 = vmatpush1.msra.mxu0 0.0
  %3276 = vmatprep.subr.mxu0 0.0
  %3277 = vmatpush1.msra.mxu0 0.0
  %3278 = vmatprep.subr.mxu0 0.0
  %3279 = vmatpush1.msra.mxu0 0.0
  %3280 = vmatprep.subr.mxu0 0.0
  %3281 = vmatpush1.msra.mxu0 0.0
  %3282 = vmatprep.subr.mxu0 0.0
  %3283 = vmatpush1.msra.mxu0 0.0
  %3284 = vmatprep.subr.mxu0 0.0
  %3285 = vmatpush1.msra.mxu0 0.0
  %3286 = vmatprep.subr.mxu0 0.0
  %3287 = vmatpush1.msra.mxu0 0.0
  %3288 = vmatprep.mubr.f32.mxu0 0.0
  %3289 = vmatmul.mubr.f32.gmra.mrb[0].mxu0 %v3147
  %v3290 = vpop.f32.mrb[0].mxu0
  %v3291 = vadd.f32 0.0, %v3290
  %v3292 = vpop.f32.mrb[0].mxu0
  %v3293 = vadd.f32 0.0, %v3292
  %3294 = vdwg.mxu0
  %v3295 = vadd.f32 %v3149, %v3220
  %v3296 = vadd.f32 %v3150, %v3222
  %v3297 = vadd.f32 %v3151, %v3291
  %v3298 = vadd.f32 %v3152, %v3293
  %v3299 = vxor.u32 %v3295, 2147483648
  %v3300 = vmul.f32 %v3299, 1.442695
  %v3301 = vpow.pop %v3300
  %v3302 = vadd.f32 %v3301, 1.0
  %v3303 = vrcp.pop %v3302
  %v3304 = vmul.f32 1.0, %v3303
  %v3305 = vxor.u32 %v3296, 2147483648
  %v3306 = vmul.f32 %v3305, 1.442695
  %v3307 = vpow.pop %v3306
  %v3308 = vadd.f32 %v3307, 1.0
  %v3309 = vrcp.pop %v3308
  %v3310 = vmul.f32 1.0, %v3309
  %v3311 = vtanh.pop %v3297
  %v3312 = vxor.u32 %v3298, 2147483648
  %v3313 = vmul.f32 %v3312, 1.442695
  %v3314 = vpow.pop %v3313
  %v3315 = vadd.f32 %v3314, 1.0
  %v3316 = vrcp.pop %v3315
  %v3317 = vmul.f32 1.0, %v3316
  %v3318 = vmul.f32 %v3310, %v3145
  %v3319 = vmul.f32 %v3304, %v3311
  %v3320 = vadd.f32 %v3318, %v3319
  %v3321 = vtanh.pop %v3320
  %v3322 = vmul.f32 %v3317, %v3321
  %3323 = vst [vmem:[#allocation7 + $0x10] sm:$0xff] %v3322
  %v3324 = vld [vmem:[#allocation3 + $0x20] sm:$0xff]
  %v3325 = vld [vmem:[#allocation3 + $0x28] sm:$0xff]
  %v3326 = vld [vmem:[#allocation3 + $0x30] sm:$0xff]
  %v3327 = vld [vmem:[#allocation3 + $0x38] sm:$0xff]
  %3328 = vmatprep.subr.mxu0 %v2211
  %3329 = vmatpush1.msra.mxu0 %v2210
  %3330 = vmatprep.subr.mxu0 %v2215
  %3331 = vmatpush1.msra.mxu0 %v2214
  %3332 = vmatprep.subr.mxu0 %v2219
  %3333 = vmatpush1.msra.mxu0 %v2218
  %3334 = vmatprep.subr.mxu0 %v2223
  %3335 = vmatpush1.msra.mxu0 %v2222
  %3336 = vmatprep.subr.mxu0 %v2227
  %3337 = vmatpush1.msra.mxu0 %v2226
  %3338 = vmatprep.subr.mxu0 %v2231
  %3339 = vmatpush1.msra.mxu0 %v2230
  %3340 = vmatprep.subr.mxu0 %v2235
  %3341 = vmatpush1.msra.mxu0 %v2234
  %3342 = vmatprep.subr.mxu0 %v2239
  %3343 = vmatpush1.msra.mxu0 %v2238
  %3344 = vmatprep.subr.mxu0 %v2243
  %3345 = vmatpush1.msra.mxu0 %v2242
  %3346 = vmatprep.subr.mxu0 %v2247
  %3347 = vmatpush1.msra.mxu0 %v2246
  %3348 = vmatprep.subr.mxu0 %v2251
  %3349 = vmatpush1.msra.mxu0 %v2250
  %3350 = vmatprep.subr.mxu0 %v2255
  %3351 = vmatpush1.msra.mxu0 %v2254
  %3352 = vmatprep.subr.mxu0 %v2259
  %3353 = vmatpush1.msra.mxu0 %v2258
  %3354 = vmatprep.subr.mxu0 %v2263
  %3355 = vmatpush1.msra.mxu0 %v2262
  %3356 = vmatprep.subr.mxu0 %v2267
  %3357 = vmatpush1.msra.mxu0 %v2266
  %3358 = vmatprep.subr.mxu0 %v2271
  %3359 = vmatpush1.msra.mxu0 %v2270
  %3360 = vmatprep.subr.mxu0 0.0
  %3361 = vmatpush1.msra.mxu0 0.0
  %3362 = vmatprep.subr.mxu0 0.0
  %3363 = vmatpush1.msra.mxu0 0.0
  %3364 = vmatprep.subr.mxu0 0.0
  %3365 = vmatpush1.msra.mxu0 0.0
  %3366 = vmatprep.subr.mxu0 0.0
  %3367 = vmatpush1.msra.mxu0 0.0
  %3368 = vmatprep.subr.mxu0 0.0
  %3369 = vmatpush1.msra.mxu0 0.0
  %3370 = vmatprep.subr.mxu0 0.0
  %3371 = vmatpush1.msra.mxu0 0.0
  %3372 = vmatprep.subr.mxu0 0.0
  %3373 = vmatpush1.msra.mxu0 0.0
  %3374 = vmatprep.subr.mxu0 0.0
  %3375 = vmatpush1.msra.mxu0 0.0
  %3376 = vmatprep.subr.mxu0 0.0
  %3377 = vmatpush1.msra.mxu0 0.0
  %3378 = vmatprep.subr.mxu0 0.0
  %3379 = vmatpush1.msra.mxu0 0.0
  %3380 = vmatprep.subr.mxu0 0.0
  %3381 = vmatpush1.msra.mxu0 0.0
  %3382 = vmatprep.subr.mxu0 0.0
  %3383 = vmatpush1.msra.mxu0 0.0
  %3384 = vmatprep.subr.mxu0 0.0
  %3385 = vmatpush1.msra.mxu0 0.0
  %3386 = vmatprep.subr.mxu0 0.0
  %3387 = vmatpush1.msra.mxu0 0.0
  %3388 = vmatprep.subr.mxu0 0.0
  %3389 = vmatpush1.msra.mxu0 0.0
  %3390 = vmatprep.subr.mxu0 0.0
  %3391 = vmatpush1.msra.mxu0 0.0
  %3392 = vmatprep.mubr.f32.mxu0 0.0
  %3393 = vmatmul.mubr.f32.gmra.mrb[0].mxu0 %v3322
  %v3394 = vpop.f32.mrb[0].mxu0
  %v3395 = vadd.f32 0.0, %v3394
  %v3396 = vpop.f32.mrb[0].mxu0
  %v3397 = vadd.f32 0.0, %v3396
  %3398 = vdwg.mxu0
  %3399 = vmatprep.subr.mxu0 %v2213
  %3400 = vmatpush1.msra.mxu0 %v2212
  %3401 = vmatprep.subr.mxu0 %v2217
  %3402 = vmatpush1.msra.mxu0 %v2216
  %3403 = vmatprep.subr.mxu0 %v2221
  %3404 = vmatpush1.msra.mxu0 %v2220
  %3405 = vmatprep.subr.mxu0 %v2225
  %3406 = vmatpush1.msra.mxu0 %v2224
  %3407 = vmatprep.subr.mxu0 %v2229
  %3408 = vmatpush1.msra.mxu0 %v2228
  %3409 = vmatprep.subr.mxu0 %v2233
  %3410 = vmatpush1.msra.mxu0 %v2232
  %3411 = vmatprep.subr.mxu0 %v2237
  %3412 = vmatpush1.msra.mxu0 %v2236
  %3413 = vmatprep.subr.mxu0 %v2241
  %3414 = vmatpush1.msra.mxu0 %v2240
  %3415 = vmatprep.subr.mxu0 %v2245
  %3416 = vmatpush1.msra.mxu0 %v2244
  %3417 = vmatprep.subr.mxu0 %v2249
  %3418 = vmatpush1.msra.mxu0 %v2248
  %3419 = vmatprep.subr.mxu0 %v2253
  %3420 = vmatpush1.msra.mxu0 %v2252
  %3421 = vmatprep.subr.mxu0 %v2257
  %3422 = vmatpush1.msra.mxu0 %v2256
  %3423 = vmatprep.subr.mxu0 %v2261
  %3424 = vmatpush1.msra.mxu0 %v2260
  %3425 = vmatprep.subr.mxu0 %v2265
  %3426 = vmatpush1.msra.mxu0 %v2264
  %3427 = vmatprep.subr.mxu0 %v2269
  %3428 = vmatpush1.msra.mxu0 %v2268
  %3429 = vmatprep.subr.mxu0 %v2273
  %3430 = vmatpush1.msra.mxu0 %v2272
  %3431 = vmatprep.subr.mxu0 0.0
  %3432 = vmatpush1.msra.mxu0 0.0
  %3433 = vmatprep.subr.mxu0 0.0
  %3434 = vmatpush1.msra.mxu0 0.0
  %3435 = vmatprep.subr.mxu0 0.0
  %3436 = vmatpush1.msra.mxu0 0.0
  %3437 = vmatprep.subr.mxu0 0.0
  %3438 = vmatpush1.msra.mxu0 0.0
  %3439 = vmatprep.subr.mxu0 0.0
  %3440 = vmatpush1.msra.mxu0 0.0
  %3441 = vmatprep.subr.mxu0 0.0
  %3442 = vmatpush1.msra.mxu0 0.0
  %3443 = vmatprep.subr.mxu0 0.0
  %3444 = vmatpush1.msra.mxu0 0.0
  %3445 = vmatprep.subr.mxu0 0.0
  %3446 = vmatpush1.msra.mxu0 0.0
  %3447 = vmatprep.subr.mxu0 0.0
  %3448 = vmatpush1.msra.mxu0 0.0
  %3449 = vmatprep.subr.mxu0 0.0
  %3450 = vmatpush1.msra.mxu0 0.0
  %3451 = vmatprep.subr.mxu0 0.0
  %3452 = vmatpush1.msra.mxu0 0.0
  %3453 = vmatprep.subr.mxu0 0.0
  %3454 = vmatpush1.msra.mxu0 0.0
  %3455 = vmatprep.subr.mxu0 0.0
  %3456 = vmatpush1.msra.mxu0 0.0
  %3457 = vmatprep.subr.mxu0 0.0
  %3458 = vmatpush1.msra.mxu0 0.0
  %3459 = vmatprep.subr.mxu0 0.0
  %3460 = vmatpush1.msra.mxu0 0.0
  %3461 = vmatprep.subr.mxu0 0.0
  %3462 = vmatpush1.msra.mxu0 0.0
  %3463 = vmatprep.mubr.f32.mxu0 0.0
  %3464 = vmatmul.mubr.f32.gmra.mrb[0].mxu0 %v3322
  %v3465 = vpop.f32.mrb[0].mxu0
  %v3466 = vadd.f32 0.0, %v3465
  %v3467 = vpop.f32.mrb[0].mxu0
  %v3468 = vadd.f32 0.0, %v3467
  %3469 = vdwg.mxu0
  %v3470 = vadd.f32 %v3324, %v3395
  %v3471 = vadd.f32 %v3325, %v3397
  %v3472 = vadd.f32 %v3326, %v3466
  %v3473 = vadd.f32 %v3327, %v3468
  %v3474 = vxor.u32 %v3470, 2147483648
  %v3475 = vmul.f32 %v3474, 1.442695
  %v3476 = vpow.pop %v3475
  %v3477 = vadd.f32 %v3476, 1.0
  %v3478 = vrcp.pop %v3477
  %v3479 = vmul.f32 1.0, %v3478
  %v3480 = vxor.u32 %v3471, 2147483648
  %v3481 = vmul.f32 %v3480, 1.442695
  %v3482 = vpow.pop %v3481
  %v3483 = vadd.f32 %v3482, 1.0
  %v3484 = vrcp.pop %v3483
  %v3485 = vmul.f32 1.0, %v3484
  %v3486 = vtanh.pop %v3472
  %v3487 = vxor.u32 %v3473, 2147483648
  %v3488 = vmul.f32 %v3487, 1.442695
  %v3489 = vpow.pop %v3488
  %v3490 = vadd.f32 %v3489, 1.0
  %v3491 = vrcp.pop %v3490
  %v3492 = vmul.f32 1.0, %v3491
  %v3493 = vmul.f32 %v3485, %v3320
  %v3494 = vmul.f32 %v3479, %v3486
  %v3495 = vadd.f32 %v3493, %v3494
  %v3496 = vtanh.pop %v3495
  %v3497 = vmul.f32 %v3492, %v3496
  %3498 = vst [vmem:[#allocation7 + $0x8] sm:$0xff] %v3497
  %v3499 = vld [vmem:[#allocation3] sm:$0xff]
  %v3500 = vld [vmem:[#allocation3 + $0x8] sm:$0xff]
  %v3501 = vld [vmem:[#allocation3 + $0x10] sm:$0xff]
  %v3502 = vld [vmem:[#allocation3 + $0x18] sm:$0xff]
  %3503 = vmatprep.subr.mxu0 %v2211
  %3504 = vmatpush1.msra.mxu0 %v2210
  %3505 = vmatprep.subr.mxu0 %v2215
  %3506 = vmatpush1.msra.mxu0 %v2214
  %3507 = vmatprep.subr.mxu0 %v2219
  %3508 = vmatpush1.msra.mxu0 %v2218
  %3509 = vmatprep.subr.mxu0 %v2223
  %3510 = vmatpush1.msra.mxu0 %v2222
  %3511 = vmatprep.subr.mxu0 %v2227
  %3512 = vmatpush1.msra.mxu0 %v2226
  %3513 = vmatprep.subr.mxu0 %v2231
  %3514 = vmatpush1.msra.mxu0 %v2230
  %3515 = vmatprep.subr.mxu0 %v2235
  %3516 = vmatpush1.msra.mxu0 %v2234
  %3517 = vmatprep.subr.mxu0 %v2239
  %3518 = vmatpush1.msra.mxu0 %v2238
  %3519 = vmatprep.subr.mxu0 %v2243
  %3520 = vmatpush1.msra.mxu0 %v2242
  %3521 = vmatprep.subr.mxu0 %v2247
  %3522 = vmatpush1.msra.mxu0 %v2246
  %3523 = vmatprep.subr.mxu0 %v2251
  %3524 = vmatpush1.msra.mxu0 %v2250
  %3525 = vmatprep.subr.mxu0 %v2255
  %3526 = vmatpush1.msra.mxu0 %v2254
  %3527 = vmatprep.subr.mxu0 %v2259
  %3528 = vmatpush1.msra.mxu0 %v2258
  %3529 = vmatprep.subr.mxu0 %v2263
  %3530 = vmatpush1.msra.mxu0 %v2262
  %3531 = vmatprep.subr.mxu0 %v2267
  %3532 = vmatpush1.msra.mxu0 %v2266
  %3533 = vmatprep.subr.mxu0 %v2271
  %3534 = vmatpush1.msra.mxu0 %v2270
  %3535 = vmatprep.subr.mxu0 0.0
  %3536 = vmatpush1.msra.mxu0 0.0
  %3537 = vmatprep.subr.mxu0 0.0
  %3538 = vmatpush1.msra.mxu0 0.0
  %3539 = vmatprep.subr.mxu0 0.0
  %3540 = vmatpush1.msra.mxu0 0.0
  %3541 = vmatprep.subr.mxu0 0.0
  %3542 = vmatpush1.msra.mxu0 0.0
  %3543 = vmatprep.subr.mxu0 0.0
  %3544 = vmatpush1.msra.mxu0 0.0
  %3545 = vmatprep.subr.mxu0 0.0
  %3546 = vmatpush1.msra.mxu0 0.0
  %3547 = vmatprep.subr.mxu0 0.0
  %3548 = vmatpush1.msra.mxu0 0.0
  %3549 = vmatprep.subr.mxu0 0.0
  %3550 = vmatpush1.msra.mxu0 0.0
  %3551 = vmatprep.subr.mxu0 0.0
  %3552 = vmatpush1.msra.mxu0 0.0
  %3553 = vmatprep.subr.mxu0 0.0
  %3554 = vmatpush1.msra.mxu0 0.0
  %3555 = vmatprep.subr.mxu0 0.0
  %3556 = vmatpush1.msra.mxu0 0.0
  %3557 = vmatprep.subr.mxu0 0.0
  %3558 = vmatpush1.msra.mxu0 0.0
  %3559 = vmatprep.subr.mxu0 0.0
  %3560 = vmatpush1.msra.mxu0 0.0
  %3561 = vmatprep.subr.mxu0 0.0
  %3562 = vmatpush1.msra.mxu0 0.0
  %3563 = vmatprep.subr.mxu0 0.0
  %3564 = vmatpush1.msra.mxu0 0.0
  %3565 = vmatprep.subr.mxu0 0.0
  %3566 = vmatpush1.msra.mxu0 0.0
  %3567 = vmatprep.mubr.f32.mxu0 0.0
  %3568 = vmatmul.mubr.f32.gmra.mrb[0].mxu0 %v3497
  %v3569 = vpop.f32.mrb[0].mxu0
  %v3570 = vadd.f32 0.0, %v3569
  %v3571 = vpop.f32.mrb[0].mxu0
  %v3572 = vadd.f32 0.0, %v3571
  %3573 = vdwg.mxu0
  %3574 = vmatprep.subr.mxu0 %v2213
  %3575 = vmatpush1.msra.mxu0 %v2212
  %3576 = vmatprep.subr.mxu0 %v2217
  %3577 = vmatpush1.msra.mxu0 %v2216
  %3578 = vmatprep.subr.mxu0 %v2221
  %3579 = vmatpush1.msra.mxu0 %v2220
  %3580 = vmatprep.subr.mxu0 %v2225
  %3581 = vmatpush1.msra.mxu0 %v2224
  %3582 = vmatprep.subr.mxu0 %v2229
  %3583 = vmatpush1.msra.mxu0 %v2228
  %3584 = vmatprep.subr.mxu0 %v2233
  %3585 = vmatpush1.msra.mxu0 %v2232
  %3586 = vmatprep.subr.mxu0 %v2237
  %3587 = vmatpush1.msra.mxu0 %v2236
  %3588 = vmatprep.subr.mxu0 %v2241
  %3589 = vmatpush1.msra.mxu0 %v2240
  %3590 = vmatprep.subr.mxu0 %v2245
  %3591 = vmatpush1.msra.mxu0 %v2244
  %3592 = vmatprep.subr.mxu0 %v2249
  %3593 = vmatpush1.msra.mxu0 %v2248
  %3594 = vmatprep.subr.mxu0 %v2253
  %3595 = vmatpush1.msra.mxu0 %v2252
  %3596 = vmatprep.subr.mxu0 %v2257
  %3597 = vmatpush1.msra.mxu0 %v2256
  %3598 = vmatprep.subr.mxu0 %v2261
  %3599 = vmatpush1.msra.mxu0 %v2260
  %3600 = vmatprep.subr.mxu0 %v2265
  %3601 = vmatpush1.msra.mxu0 %v2264
  %3602 = vmatprep.subr.mxu0 %v2269
  %3603 = vmatpush1.msra.mxu0 %v2268
  %3604 = vmatprep.subr.mxu0 %v2273
  %3605 = vmatpush1.msra.mxu0 %v2272
  %3606 = vmatprep.subr.mxu0 0.0
  %3607 = vmatpush1.msra.mxu0 0.0
  %3608 = vmatprep.subr.mxu0 0.0
  %3609 = vmatpush1.msra.mxu0 0.0
  %3610 = vmatprep.subr.mxu0 0.0
  %3611 = vmatpush1.msra.mxu0 0.0
  %3612 = vmatprep.subr.mxu0 0.0
  %3613 = vmatpush1.msra.mxu0 0.0
  %3614 = vmatprep.subr.mxu0 0.0
  %3615 = vmatpush1.msra.mxu0 0.0
  %3616 = vmatprep.subr.mxu0 0.0
  %3617 = vmatpush1.msra.mxu0 0.0
  %3618 = vmatprep.subr.mxu0 0.0
  %3619 = vmatpush1.msra.mxu0 0.0
  %3620 = vmatprep.subr.mxu0 0.0
  %3621 = vmatpush1.msra.mxu0 0.0
  %3622 = vmatprep.subr.mxu0 0.0
  %3623 = vmatpush1.msra.mxu0 0.0
  %3624 = vmatprep.subr.mxu0 0.0
  %3625 = vmatpush1.msra.mxu0 0.0
  %3626 = vmatprep.subr.mxu0 0.0
  %3627 = vmatpush1.msra.mxu0 0.0
  %3628 = vmatprep.subr.mxu0 0.0
  %3629 = vmatpush1.msra.mxu0 0.0
  %3630 = vmatprep.subr.mxu0 0.0
  %3631 = vmatpush1.msra.mxu0 0.0
  %3632 = vmatprep.subr.mxu0 0.0
  %3633 = vmatpush1.msra.mxu0 0.0
  %3634 = vmatprep.subr.mxu0 0.0
  %3635 = vmatpush1.msra.mxu0 0.0
  %3636 = vmatprep.subr.mxu0 0.0
  %3637 = vmatpush1.msra.mxu0 0.0
  %3638 = vmatprep.mubr.f32.mxu0 0.0
  %3639 = vmatmul.mubr.f32.gmra.mrb[0].mxu0 %v3497
  %v3640 = vpop.f32.mrb[0].mxu0
  %v3641 = vadd.f32 0.0, %v3640
  %v3642 = vpop.f32.mrb[0].mxu0
  %v3643 = vadd.f32 0.0, %v3642
  %3644 = vdwg.mxu0
  %v3645 = vadd.f32 %v3499, %v3570
  %v3646 = vadd.f32 %v3500, %v3572
  %v3647 = vadd.f32 %v3501, %v3641
  %v3648 = vadd.f32 %v3502, %v3643
  %v3649 = vxor.u32 %v3645, 2147483648
  %v3650 = vmul.f32 %v3649, 1.442695
  %v3651 = vpow.pop %v3650
  %v3652 = vadd.f32 %v3651, 1.0
  %v3653 = vrcp.pop %v3652
  %v3654 = vmul.f32 1.0, %v3653
  %v3655 = vxor.u32 %v3646, 2147483648
  %v3656 = vmul.f32 %v3655, 1.442695
  %v3657 = vpow.pop %v3656
  %v3658 = vadd.f32 %v3657, 1.0
  %v3659 = vrcp.pop %v3658
  %v3660 = vmul.f32 1.0, %v3659
  %v3661 = vtanh.pop %v3647
  %v3662 = vxor.u32 %v3648, 2147483648
  %v3663 = vmul.f32 %v3662, 1.442695
  %v3664 = vpow.pop %v3663
  %v3665 = vadd.f32 %v3664, 1.0
  %v3666 = vrcp.pop %v3665
  %v3667 = vmul.f32 1.0, %v3666
  %v3668 = vmul.f32 %v3660, %v3495
  %v3669 = vmul.f32 %v3654, %v3661
  %v3670 = vadd.f32 %v3668, %v3669
  %v3671 = vtanh.pop %v3670
  %v3672 = vmul.f32 %v3667, %v3671
  %3673 = vst [vmem:[#allocation7] sm:$0xff] %v3672
  %v3674 = vld [vmem:[#allocation6] sm:$0xff]
  %v3675 = vld [vmem:[#allocation6 + $0x8] sm:$0xff]
  %v3676 = vld [vmem:[#allocation6 + $0x10] sm:$0xff]
  %v3677 = vld [vmem:[#allocation6 + $0x18] sm:$0xff]
  %v3678 = vld [vmem:[#allocation6 + $0x20] sm:$0xff]
  %v3679 = vld [vmem:[#allocation6 + $0x28] sm:$0xff]
  %v3680 = vld [vmem:[#allocation6 + $0x30] sm:$0xff]
  %v3681 = vld [vmem:[#allocation6 + $0x38] sm:$0xff]
  %v3682 = vld [vmem:[#allocation7] sm:$0xff]
  %v3683 = vld [vmem:[#allocation7 + $0x8] sm:$0xff]
  %v3684 = vld [vmem:[#allocation7 + $0x10] sm:$0xff]
  %v3685 = vld [vmem:[#allocation7 + $0x18] sm:$0xff]
  %v3686 = vld [vmem:[#allocation7 + $0x20] sm:$0xff]
  %v3687 = vld [vmem:[#allocation7 + $0x28] sm:$0xff]
  %v3688 = vld [vmem:[#allocation7 + $0x30] sm:$0xff]
  %v3689 = vld [vmem:[#allocation7 + $0x38] sm:$0xff]
  %v3690 = vld [vmem:[%s7] sm:$0xff]
  %v3691 = vld [vmem:[%s7 + $0x8] sm:$0xff]
  %v3692 = vld [vmem:[%s7 + $0x10] sm:$0xff]
  %v3693 = vld [vmem:[%s7 + $0x18] sm:$0xff]
  %v3694 = vld [vmem:[%s7 + $0x20] sm:$0xff]
  %v3695 = vld [vmem:[%s7 + $0x28] sm:$0xff]
  %v3696 = vld [vmem:[%s7 + $0x30] sm:$0xff]
  %v3697 = vld [vmem:[%s7 + $0x38] sm:$0xff]
  %v3698 = vld [vmem:[%s7 + $0x40] sm:$0xff]
  %v3699 = vld [vmem:[%s7 + $0x48] sm:$0xff]
  %v3700 = vld [vmem:[%s7 + $0x50] sm:$0xff]
  %v3701 = vld [vmem:[%s7 + $0x58] sm:$0xff]
  %v3702 = vld [vmem:[%s7 + $0x60] sm:$0xff]
  %v3703 = vld [vmem:[%s7 + $0x68] sm:$0xff]
  %v3704 = vld [vmem:[%s7 + $0x70] sm:$0xff]
  %v3705 = vld [vmem:[%s7 + $0x78] sm:$0xff]
  %v3706 = vld [vmem:[%s7 + $0x80] sm:$0xff]
  %v3707 = vld [vmem:[%s7 + $0x88] sm:$0xff]
  %v3708 = vld [vmem:[%s7 + $0x90] sm:$0xff]
  %v3709 = vld [vmem:[%s7 + $0x98] sm:$0xff]
  %v3710 = vld [vmem:[%s7 + $0xa0] sm:$0xff]
  %v3711 = vld [vmem:[%s7 + $0xa8] sm:$0xff]
  %v3712 = vld [vmem:[%s7 + $0xb0] sm:$0xff]
  %v3713 = vld [vmem:[%s7 + $0xb8] sm:$0xff]
  %v3714 = vld [vmem:[%s7 + $0xc0] sm:$0xff]
  %v3715 = vld [vmem:[%s7 + $0xc8] sm:$0xff]
  %v3716 = vld [vmem:[%s7 + $0xd0] sm:$0xff]
  %v3717 = vld [vmem:[%s7 + $0xd8] sm:$0xff]
  %v3718 = vld [vmem:[%s7 + $0xe0] sm:$0xff]
  %v3719 = vld [vmem:[%s7 + $0xe8] sm:$0xff]
  %v3720 = vld [vmem:[%s7 + $0xf0] sm:$0xff]
  %v3721 = vld [vmem:[%s7 + $0xf8] sm:$0xff]
  %v3722 = vld [vmem:[%s7 + $0x100] sm:$0xff]
  %v3723 = vld [vmem:[%s7 + $0x108] sm:$0xff]
  %v3724 = vld [vmem:[%s7 + $0x110] sm:$0xff]
  %v3725 = vld [vmem:[%s7 + $0x118] sm:$0xff]
  %v3726 = vld [vmem:[%s7 + $0x120] sm:$0xff]
  %v3727 = vld [vmem:[%s7 + $0x128] sm:$0xff]
  %v3728 = vld [vmem:[%s7 + $0x130] sm:$0xff]
  %v3729 = vld [vmem:[%s7 + $0x138] sm:$0xff]
  %v3730 = vld [vmem:[%s7 + $0x140] sm:$0xff]
  %v3731 = vld [vmem:[%s7 + $0x148] sm:$0xff]
  %v3732 = vld [vmem:[%s7 + $0x150] sm:$0xff]
  %v3733 = vld [vmem:[%s7 + $0x158] sm:$0xff]
  %v3734 = vld [vmem:[%s7 + $0x160] sm:$0xff]
  %v3735 = vld [vmem:[%s7 + $0x168] sm:$0xff]
  %v3736 = vld [vmem:[%s7 + $0x170] sm:$0xff]
  %v3737 = vld [vmem:[%s7 + $0x178] sm:$0xff]
  %v3738 = vld [vmem:[%s7 + $0x180] sm:$0xff]
  %v3739 = vld [vmem:[%s7 + $0x188] sm:$0xff]
  %v3740 = vld [vmem:[%s7 + $0x190] sm:$0xff]
  %v3741 = vld [vmem:[%s7 + $0x198] sm:$0xff]
  %v3742 = vld [vmem:[%s7 + $0x1a0] sm:$0xff]
  %v3743 = vld [vmem:[%s7 + $0x1a8] sm:$0xff]
  %v3744 = vld [vmem:[%s7 + $0x1b0] sm:$0xff]
  %v3745 = vld [vmem:[%s7 + $0x1b8] sm:$0xff]
  %v3746 = vld [vmem:[%s7 + $0x1c0] sm:$0xff]
  %v3747 = vld [vmem:[%s7 + $0x1c8] sm:$0xff]
  %v3748 = vld [vmem:[%s7 + $0x1d0] sm:$0xff]
  %v3749 = vld [vmem:[%s7 + $0x1d8] sm:$0xff]
  %v3750 = vld [vmem:[%s7 + $0x1e0] sm:$0xff]
  %v3751 = vld [vmem:[%s7 + $0x1e8] sm:$0xff]
  %v3752 = vld [vmem:[%s7 + $0x1f0] sm:$0xff]
  %v3753 = vld [vmem:[%s7 + $0x1f8] sm:$0xff]
  %v3754 = vld [vmem:[%s7 + $0x200] sm:$0xff]
  %v3755 = vld [vmem:[%s7 + $0x208] sm:$0xff]
  %v3756 = vld [vmem:[%s7 + $0x210] sm:$0xff]
  %v3757 = vld [vmem:[%s7 + $0x218] sm:$0xff]
  %v3758 = vld [vmem:[%s7 + $0x220] sm:$0xff]
  %v3759 = vld [vmem:[%s7 + $0x228] sm:$0xff]
  %v3760 = vld [vmem:[%s7 + $0x230] sm:$0xff]
  %v3761 = vld [vmem:[%s7 + $0x238] sm:$0xff]
  %v3762 = vld [vmem:[%s7 + $0x240] sm:$0xff]
  %v3763 = vld [vmem:[%s7 + $0x248] sm:$0xff]
  %v3764 = vld [vmem:[%s7 + $0x250] sm:$0xff]
  %v3765 = vld [vmem:[%s7 + $0x258] sm:$0xff]
  %v3766 = vld [vmem:[%s7 + $0x260] sm:$0xff]
  %v3767 = vld [vmem:[%s7 + $0x268] sm:$0xff]
  %v3768 = vld [vmem:[%s7 + $0x270] sm:$0xff]
  %v3769 = vld [vmem:[%s7 + $0x278] sm:$0xff]
  %v3770 = vld [vmem:[%s7 + $0x280] sm:$0xff]
  %v3771 = vld [vmem:[%s7 + $0x288] sm:$0xff]
  %v3772 = vld [vmem:[%s7 + $0x290] sm:$0xff]
  %v3773 = vld [vmem:[%s7 + $0x298] sm:$0xff]
  %v3774 = vld [vmem:[%s7 + $0x2a0] sm:$0xff]
  %v3775 = vld [vmem:[%s7 + $0x2a8] sm:$0xff]
  %v3776 = vld [vmem:[%s7 + $0x2b0] sm:$0xff]
  %v3777 = vld [vmem:[%s7 + $0x2b8] sm:$0xff]
  %v3778 = vld [vmem:[%s7 + $0x2c0] sm:$0xff]
  %v3779 = vld [vmem:[%s7 + $0x2c8] sm:$0xff]
  %v3780 = vld [vmem:[%s7 + $0x2d0] sm:$0xff]
  %v3781 = vld [vmem:[%s7 + $0x2d8] sm:$0xff]
  %v3782 = vld [vmem:[%s7 + $0x2e0] sm:$0xff]
  %v3783 = vld [vmem:[%s7 + $0x2e8] sm:$0xff]
  %v3784 = vld [vmem:[%s7 + $0x2f0] sm:$0xff]
  %v3785 = vld [vmem:[%s7 + $0x2f8] sm:$0xff]
  %v3786 = vld [vmem:[%s7 + $0x300] sm:$0xff]
  %v3787 = vld [vmem:[%s7 + $0x308] sm:$0xff]
  %v3788 = vld [vmem:[%s7 + $0x310] sm:$0xff]
  %v3789 = vld [vmem:[%s7 + $0x318] sm:$0xff]
  %v3790 = vld [vmem:[%s7 + $0x320] sm:$0xff]
  %v3791 = vld [vmem:[%s7 + $0x328] sm:$0xff]
  %v3792 = vld [vmem:[%s7 + $0x330] sm:$0xff]
  %v3793 = vld [vmem:[%s7 + $0x338] sm:$0xff]
  %v3794 = vld [vmem:[%s7 + $0x340] sm:$0xff]
  %v3795 = vld [vmem:[%s7 + $0x348] sm:$0xff]
  %v3796 = vld [vmem:[%s7 + $0x350] sm:$0xff]
  %v3797 = vld [vmem:[%s7 + $0x358] sm:$0xff]
  %v3798 = vld [vmem:[%s7 + $0x360] sm:$0xff]
  %v3799 = vld [vmem:[%s7 + $0x368] sm:$0xff]
  %v3800 = vld [vmem:[%s7 + $0x370] sm:$0xff]
  %v3801 = vld [vmem:[%s7 + $0x378] sm:$0xff]
  %v3802 = vld [vmem:[%s7 + $0x380] sm:$0xff]
  %v3803 = vld [vmem:[%s7 + $0x388] sm:$0xff]
  %v3804 = vld [vmem:[%s7 + $0x390] sm:$0xff]
  %v3805 = vld [vmem:[%s7 + $0x398] sm:$0xff]
  %v3806 = vld [vmem:[%s7 + $0x3a0] sm:$0xff]
  %v3807 = vld [vmem:[%s7 + $0x3a8] sm:$0xff]
  %v3808 = vld [vmem:[%s7 + $0x3b0] sm:$0xff]
  %v3809 = vld [vmem:[%s7 + $0x3b8] sm:$0xff]
  %v3810 = vld [vmem:[%s7 + $0x3c0] sm:$0xff]
  %v3811 = vld [vmem:[%s7 + $0x3c8] sm:$0xff]
  %v3812 = vld [vmem:[%s7 + $0x3d0] sm:$0xff]
  %v3813 = vld [vmem:[%s7 + $0x3d8] sm:$0xff]
  %v3814 = vld [vmem:[%s7 + $0x3e0] sm:$0xff]
  %v3815 = vld [vmem:[%s7 + $0x3e8] sm:$0xff]
  %v3816 = vld [vmem:[%s7 + $0x3f0] sm:$0xff]
  %v3817 = vld [vmem:[%s7 + $0x3f8] sm:$0xff]
  %v3818 = vld [vmem:[%s9] sm:$0xf]
  %v3820 = vlaneseq
  %v3821 = vshrl.u32 %v3820, 7
  %v3822 = vsub.s32 0, %v3821
  %v3823 = vrot.slane %v3818, %v3822
  %v3824 = vlaneseq
  %v3825 = vshrl.u32 %v3824, 7
  %v3826 = vsub.s32 1, %v3825
  %v3827 = vrot.slane %v3818, %v3826
  %v3828 = vlaneseq
  %v3829 = vshrl.u32 %v3828, 7
  %v3830 = vsub.s32 2, %v3829
  %v3831 = vrot.slane %v3818, %v3830
  %v3832 = vlaneseq
  %v3833 = vshrl.u32 %v3832, 7
  %v3834 = vsub.s32 3, %v3833
  %v3835 = vrot.slane %v3818, %v3834
  %3840 = vmatprep.subr.mxu0 %v3691
  %3841 = vmatpush1.msra.mxu0 %v3690
  %3842 = vmatprep.subr.mxu0 %v3695
  %3843 = vmatpush1.msra.mxu0 %v3694
  %3844 = vmatprep.subr.mxu0 %v3699
  %3845 = vmatpush1.msra.mxu0 %v3698
  %3846 = vmatprep.subr.mxu0 %v3703
  %3847 = vmatpush1.msra.mxu0 %v3702
  %3848 = vmatprep.subr.mxu0 %v3707
  %3849 = vmatpush1.msra.mxu0 %v3706
  %3850 = vmatprep.subr.mxu0 %v3711
  %3851 = vmatpush1.msra.mxu0 %v3710
  %3852 = vmatprep.subr.mxu0 %v3715
  %3853 = vmatpush1.msra.mxu0 %v3714
  %3854 = vmatprep.subr.mxu0 %v3719
  %3855 = vmatpush1.msra.mxu0 %v3718
  %3856 = vmatprep.subr.mxu0 %v3723
  %3857 = vmatpush1.msra.mxu0 %v3722
  %3858 = vmatprep.subr.mxu0 %v3727
  %3859 = vmatpush1.msra.mxu0 %v3726
  %3860 = vmatprep.subr.mxu0 %v3731
  %3861 = vmatpush1.msra.mxu0 %v3730
  %3862 = vmatprep.subr.mxu0 %v3735
  %3863 = vmatpush1.msra.mxu0 %v3734
  %3864 = vmatprep.subr.mxu0 %v3739
  %3865 = vmatpush1.msra.mxu0 %v3738
  %3866 = vmatprep.subr.mxu0 %v3743
  %3867 = vmatpush1.msra.mxu0 %v3742
  %3868 = vmatprep.subr.mxu0 %v3747
  %3869 = vmatpush1.msra.mxu0 %v3746
  %3870 = vmatprep.subr.mxu0 %v3751
  %3871 = vmatpush1.msra.mxu0 %v3750
  %3872 = vmatprep.subr.mxu0 %v3755
  %3873 = vmatpush1.msra.mxu0 %v3754
  %3874 = vmatprep.subr.mxu0 %v3759
  %3875 = vmatpush1.msra.mxu0 %v3758
  %3876 = vmatprep.subr.mxu0 %v3763
  %3877 = vmatpush1.msra.mxu0 %v3762
  %3878 = vmatprep.subr.mxu0 %v3767
  %3879 = vmatpush1.msra.mxu0 %v3766
  %3880 = vmatprep.subr.mxu0 %v3771
  %3881 = vmatpush1.msra.mxu0 %v3770
  %3882 = vmatprep.subr.mxu0 %v3775
  %3883 = vmatpush1.msra.mxu0 %v3774
  %3884 = vmatprep.subr.mxu0 %v3779
  %3885 = vmatpush1.msra.mxu0 %v3778
  %3886 = vmatprep.subr.mxu0 %v3783
  %3887 = vmatpush1.msra.mxu0 %v3782
  %3888 = vmatprep.subr.mxu0 %v3787
  %3889 = vmatpush1.msra.mxu0 %v3786
  %3890 = vmatprep.subr.mxu0 %v3791
  %3891 = vmatpush1.msra.mxu0 %v3790
  %3892 = vmatprep.subr.mxu0 %v3795
  %3893 = vmatpush1.msra.mxu0 %v3794
  %3894 = vmatprep.subr.mxu0 %v3799
  %3895 = vmatpush1.msra.mxu0 %v3798
  %3896 = vmatprep.subr.mxu0 %v3803
  %3897 = vmatpush1.msra.mxu0 %v3802
  %3898 = vmatprep.subr.mxu0 %v3807
  %3899 = vmatpush1.msra.mxu0 %v3806
  %3900 = vmatprep.subr.mxu0 %v3811
  %3901 = vmatpush1.msra.mxu0 %v3810
  %3902 = vmatprep.subr.mxu0 %v3815
  %3903 = vmatpush1.msra.mxu0 %v3814
  %3904 = vmatprep.mubr.f32.mxu0 %v3682
  %3905 = vmatmul.mubr.f32.gmra.mrb[0].mxu0 %v3674
  %v3906 = vpop.f32.mrb[0].mxu0
  %v3907 = vadd.f32 %v3823, %v3906
  %v3908 = vpop.f32.mrb[0].mxu0
  %v3909 = vadd.f32 %v3827, %v3908
  %3910 = vmatprep.mubr.f32.mxu0 %v3683
  %3911 = vmatmul.mubr.f32.gmra.mrb[0].mxu0 %v3675
  %v3912 = vpop.f32.mrb[0].mxu0
  %v3913 = vadd.f32 %v3823, %v3912
  %v3914 = vpop.f32.mrb[0].mxu0
  %v3915 = vadd.f32 %v3827, %v3914
  %3916 = vmatprep.mubr.f32.mxu0 %v3684
  %3917 = vmatmul.mubr.f32.gmra.mrb[0].mxu0 %v3676
  %v3918 = vpop.f32.mrb[0].mxu0
  %v3919 = vadd.f32 %v3823, %v3918
  %v3920 = vpop.f32.mrb[0].mxu0
  %v3921 = vadd.f32 %v3827, %v3920
  %3922 = vmatprep.mubr.f32.mxu0 %v3685
  %3923 = vmatmul.mubr.f32.gmra.mrb[0].mxu0 %v3677
  %v3924 = vpop.f32.mrb[0].mxu0
  %v3925 = vadd.f32 %v3823, %v3924
  %v3926 = vpop.f32.mrb[0].mxu0
  %v3927 = vadd.f32 %v3827, %v3926
  %3928 = vmatprep.mubr.f32.mxu0 %v3686
  %3929 = vmatmul.mubr.f32.gmra.mrb[0].mxu0 %v3678
  %v3930 = vpop.f32.mrb[0].mxu0
  %v3931 = vadd.f32 %v3823, %v3930
  %v3932 = vpop.f32.mrb[0].mxu0
  %v3933 = vadd.f32 %v3827, %v3932
  %3934 = vmatprep.mubr.f32.mxu0 %v3687
  %3935 = vmatmul.mubr.f32.gmra.mrb[0].mxu0 %v3679
  %v3936 = vpop.f32.mrb[0].mxu0
  %v3937 = vadd.f32 %v3823, %v3936
  %v3938 = vpop.f32.mrb[0].mxu0
  %v3939 = vadd.f32 %v3827, %v3938
  %3940 = vmatprep.mubr.f32.mxu0 %v3688
  %3941 = vmatmul.mubr.f32.gmra.mrb[0].mxu0 %v3680
  %v3942 = vpop.f32.mrb[0].mxu0
  %v3943 = vadd.f32 %v3823, %v3942
  %v3944 = vpop.f32.mrb[0].mxu0
  %v3945 = vadd.f32 %v3827, %v3944
  %3946 = vmatprep.mubr.f32.mxu0 %v3689
  %3947 = vmatmul.mubr.f32.gmra.mrb[0].mxu0 %v3681
  %v3948 = vpop.f32.mrb[0].mxu0
  %v3949 = vadd.f32 %v3823, %v3948
  %v3950 = vpop.f32.mrb[0].mxu0
  %v3951 = vadd.f32 %v3827, %v3950
  %3952 = vdwg.mxu0
  %3953 = vmatprep.subr.mxu0 %v3693
  %3954 = vmatpush1.msra.mxu0 %v3692
  %3955 = vmatprep.subr.mxu0 %v3697
  %3956 = vmatpush1.msra.mxu0 %v3696
  %3957 = vmatprep.subr.mxu0 %v3701
  %3958 = vmatpush1.msra.mxu0 %v3700
  %3959 = vmatprep.subr.mxu0 %v3705
  %3960 = vmatpush1.msra.mxu0 %v3704
  %3961 = vmatprep.subr.mxu0 %v3709
  %3962 = vmatpush1.msra.mxu0 %v3708
  %3963 = vmatprep.subr.mxu0 %v3713
  %3964 = vmatpush1.msra.mxu0 %v3712
  %3965 = vmatprep.subr.mxu0 %v3717
  %3966 = vmatpush1.msra.mxu0 %v3716
  %3967 = vmatprep.subr.mxu0 %v3721
  %3968 = vmatpush1.msra.mxu0 %v3720
  %3969 = vmatprep.subr.mxu0 %v3725
  %3970 = vmatpush1.msra.mxu0 %v3724
  %3971 = vmatprep.subr.mxu0 %v3729
  %3972 = vmatpush1.msra.mxu0 %v3728
  %3973 = vmatprep.subr.mxu0 %v3733
  %3974 = vmatpush1.msra.mxu0 %v3732
  %3975 = vmatprep.subr.mxu0 %v3737
  %3976 = vmatpush1.msra.mxu0 %v3736
  %3977 = vmatprep.subr.mxu0 %v3741
  %3978 = vmatpush1.msra.mxu0 %v3740
  %3979 = vmatprep.subr.mxu0 %v3745
  %3980 = vmatpush1.msra.mxu0 %v3744
  %3981 = vmatprep.subr.mxu0 %v3749
  %3982 = vmatpush1.msra.mxu0 %v3748
  %3983 = vmatprep.subr.mxu0 %v3753
  %3984 = vmatpush1.msra.mxu0 %v3752
  %3985 = vmatprep.subr.mxu0 %v3757
  %3986 = vmatpush1.msra.mxu0 %v3756
  %3987 = vmatprep.subr.mxu0 %v3761
  %3988 = vmatpush1.msra.mxu0 %v3760
  %3989 = vmatprep.subr.mxu0 %v3765
  %3990 = vmatpush1.msra.mxu0 %v3764
  %3991 = vmatprep.subr.mxu0 %v3769
  %3992 = vmatpush1.msra.mxu0 %v3768
  %3993 = vmatprep.subr.mxu0 %v3773
  %3994 = vmatpush1.msra.mxu0 %v3772
  %3995 = vmatprep.subr.mxu0 %v3777
  %3996 = vmatpush1.msra.mxu0 %v3776
  %3997 = vmatprep.subr.mxu0 %v3781
  %3998 = vmatpush1.msra.mxu0 %v3780
  %3999 = vmatprep.subr.mxu0 %v3785
  %4000 = vmatpush1.msra.mxu0 %v3784
  %4001 = vmatprep.subr.mxu0 %v3789
  %4002 = vmatpush1.msra.mxu0 %v3788
  %4003 = vmatprep.subr.mxu0 %v3793
  %4004 = vmatpush1.msra.mxu0 %v3792
  %4005 = vmatprep.subr.mxu0 %v3797
  %4006 = vmatpush1.msra.mxu0 %v3796
  %4007 = vmatprep.subr.mxu0 %v3801
  %4008 = vmatpush1.msra.mxu0 %v3800
  %4009 = vmatprep.subr.mxu0 %v3805
  %4010 = vmatpush1.msra.mxu0 %v3804
  %4011 = vmatprep.subr.mxu0 %v3809
  %4012 = vmatpush1.msra.mxu0 %v3808
  %4013 = vmatprep.subr.mxu0 %v3813
  %4014 = vmatpush1.msra.mxu0 %v3812
  %4015 = vmatprep.subr.mxu0 %v3817
  %4016 = vmatpush1.msra.mxu0 %v3816
  %4017 = vmatprep.mubr.f32.mxu0 %v3682
  %4018 = vmatmul.mubr.f32.gmra.mrb[0].mxu0 %v3674
  %v4019 = vpop.f32.mrb[0].mxu0
  %v4020 = vadd.f32 %v3831, %v4019
  %v4021 = vpop.f32.mrb[0].mxu0
  %v4022 = vadd.f32 %v3835, %v4021
  %4023 = vmatprep.mubr.f32.mxu0 %v3683
  %4024 = vmatmul.mubr.f32.gmra.mrb[0].mxu0 %v3675
  %v4025 = vpop.f32.mrb[0].mxu0
  %v4026 = vadd.f32 %v3831, %v4025
  %v4027 = vpop.f32.mrb[0].mxu0
  %v4028 = vadd.f32 %v3835, %v4027
  %4029 = vmatprep.mubr.f32.mxu0 %v3684
  %4030 = vmatmul.mubr.f32.gmra.mrb[0].mxu0 %v3676
  %v4031 = vpop.f32.mrb[0].mxu0
  %v4032 = vadd.f32 %v3831, %v4031
  %v4033 = vpop.f32.mrb[0].mxu0
  %v4034 = vadd.f32 %v3835, %v4033
  %4035 = vmatprep.mubr.f32.mxu0 %v3685
  %4036 = vmatmul.mubr.f32.gmra.mrb[0].mxu0 %v3677
  %v4037 = vpop.f32.mrb[0].mxu0
  %v4038 = vadd.f32 %v3831, %v4037
  %v4039 = vpop.f32.mrb[0].mxu0
  %v4040 = vadd.f32 %v3835, %v4039
  %4041 = vmatprep.mubr.f32.mxu0 %v3686
  %4042 = vmatmul.mubr.f32.gmra.mrb[0].mxu0 %v3678
  %v4043 = vpop.f32.mrb[0].mxu0
  %v4044 = vadd.f32 %v3831, %v4043
  %v4045 = vpop.f32.mrb[0].mxu0
  %v4046 = vadd.f32 %v3835, %v4045
  %4047 = vmatprep.mubr.f32.mxu0 %v3687
  %4048 = vmatmul.mubr.f32.gmra.mrb[0].mxu0 %v3679
  %v4049 = vpop.f32.mrb[0].mxu0
  %v4050 = vadd.f32 %v3831, %v4049
  %v4051 = vpop.f32.mrb[0].mxu0
  %v4052 = vadd.f32 %v3835, %v4051
  %4053 = vmatprep.mubr.f32.mxu0 %v3688
  %4054 = vmatmul.mubr.f32.gmra.mrb[0].mxu0 %v3680
  %v4055 = vpop.f32.mrb[0].mxu0
  %v4056 = vadd.f32 %v3831, %v4055
  %v4057 = vpop.f32.mrb[0].mxu0
  %v4058 = vadd.f32 %v3835, %v4057
  %4059 = vmatprep.mubr.f32.mxu0 %v3689
  %4060 = vmatmul.mubr.f32.gmra.mrb[0].mxu0 %v3681
  %v4061 = vpop.f32.mrb[0].mxu0
  %v4062 = vadd.f32 %v3831, %v4061
  %v4063 = vpop.f32.mrb[0].mxu0
  %v4064 = vadd.f32 %v3835, %v4063
  %4065 = vdwg.mxu0
  %4066 = vst [vmem:[#allocation4] sm:$0xff] %v3907
  %4067 = vst [vmem:[#allocation4 + $0x8] sm:$0xff] %v3909
  %4068 = vst [vmem:[#allocation4 + $0x10] sm:$0xff] %v4020
  %4069 = vst [vmem:[#allocation4 + $0x18] sm:$0xff] %v4022
  %4070 = vst [vmem:[#allocation4 + $0x20] sm:$0xff] %v3913
  %4071 = vst [vmem:[#allocation4 + $0x28] sm:$0xff] %v3915
  %4072 = vst [vmem:[#allocation4 + $0x30] sm:$0xff] %v4026
  %4073 = vst [vmem:[#allocation4 + $0x38] sm:$0xff] %v4028
  %4074 = vst [vmem:[#allocation4 + $0x40] sm:$0xff] %v3919
  %4075 = vst [vmem:[#allocation4 + $0x48] sm:$0xff] %v3921
  %4076 = vst [vmem:[#allocation4 + $0x50] sm:$0xff] %v4032
  %4077 = vst [vmem:[#allocation4 + $0x58] sm:$0xff] %v4034
  %4078 = vst [vmem:[#allocation4 + $0x60] sm:$0xff] %v3925
  %4079 = vst [vmem:[#allocation4 + $0x68] sm:$0xff] %v3927
  %4080 = vst [vmem:[#allocation4 + $0x70] sm:$0xff] %v4038
  %4081 = vst [vmem:[#allocation4 + $0x78] sm:$0xff] %v4040
  %4082 = vst [vmem:[#allocation4 + $0x80] sm:$0xff] %v3931
  %4083 = vst [vmem:[#allocation4 + $0x88] sm:$0xff] %v3933
  %4084 = vst [vmem:[#allocation4 + $0x90] sm:$0xff] %v4044
  %4085 = vst [vmem:[#allocation4 + $0x98] sm:$0xff] %v4046
  %4086 = vst [vmem:[#allocation4 + $0xa0] sm:$0xff] %v3937
  %4087 = vst [vmem:[#allocation4 + $0xa8] sm:$0xff] %v3939
  %4088 = vst [vmem:[#allocation4 + $0xb0] sm:$0xff] %v4050
  %4089 = vst [vmem:[#allocation4 + $0xb8] sm:$0xff] %v4052
  %4090 = vst [vmem:[#allocation4 + $0xc0] sm:$0xff] %v3943
  %4091 = vst [vmem:[#allocation4 + $0xc8] sm:$0xff] %v3945
  %4092 = vst [vmem:[#allocation4 + $0xd0] sm:$0xff] %v4056
  %4093 = vst [vmem:[#allocation4 + $0xd8] sm:$0xff] %v4058
  %4094 = vst [vmem:[#allocation4 + $0xe0] sm:$0xff] %v3949
  %4095 = vst [vmem:[#allocation4 + $0xe8] sm:$0xff] %v3951
  %4096 = vst [vmem:[#allocation4 + $0xf0] sm:$0xff] %v4062
  %4097 = vst [vmem:[#allocation4 + $0xf8] sm:$0xff] %v4064
  %v4098 = vld [vmem:[%s10] sm:$0xff]
  %v4099 = vld [vmem:[%s10 + $0x8] sm:$0xff]
  %v4100 = vld [vmem:[%s10 + $0x10] sm:$0xff]
  %v4101 = vld [vmem:[%s10 + $0x18] sm:$0xff]
  %v4102 = vld [vmem:[%s10 + $0x20] sm:$0xff]
  %v4103 = vld [vmem:[%s10 + $0x28] sm:$0xff]
  %v4104 = vld [vmem:[%s10 + $0x30] sm:$0xff]
  %v4105 = vld [vmem:[%s10 + $0x38] sm:$0xff]
  %v4106 = vld [vmem:[%s10 + $0x40] sm:$0xff]
  %v4107 = vld [vmem:[%s10 + $0x48] sm:$0xff]
  %v4108 = vld [vmem:[%s10 + $0x50] sm:$0xff]
  %v4109 = vld [vmem:[%s10 + $0x58] sm:$0xff]
  %v4110 = vld [vmem:[%s10 + $0x60] sm:$0xff]
  %v4111 = vld [vmem:[%s10 + $0x68] sm:$0xff]
  %v4112 = vld [vmem:[%s10 + $0x70] sm:$0xff]
  %v4113 = vld [vmem:[%s10 + $0x78] sm:$0xff]
  %v4114 = vld [vmem:[%s10 + $0x80] sm:$0xff]
  %v4115 = vld [vmem:[%s10 + $0x88] sm:$0xff]
  %v4116 = vld [vmem:[%s10 + $0x90] sm:$0xff]
  %v4117 = vld [vmem:[%s10 + $0x98] sm:$0xff]
  %v4118 = vld [vmem:[%s10 + $0xa0] sm:$0xff]
  %v4119 = vld [vmem:[%s10 + $0xa8] sm:$0xff]
  %v4120 = vld [vmem:[%s10 + $0xb0] sm:$0xff]
  %v4121 = vld [vmem:[%s10 + $0xb8] sm:$0xff]
  %v4122 = vld [vmem:[%s10 + $0xc0] sm:$0xff]
  %v4123 = vld [vmem:[%s10 + $0xc8] sm:$0xff]
  %v4124 = vld [vmem:[%s10 + $0xd0] sm:$0xff]
  %v4125 = vld [vmem:[%s10 + $0xd8] sm:$0xff]
  %v4126 = vld [vmem:[%s10 + $0xe0] sm:$0xff]
  %v4127 = vld [vmem:[%s10 + $0xe8] sm:$0xff]
  %v4128 = vld [vmem:[%s10 + $0xf0] sm:$0xff]
  %v4129 = vld [vmem:[%s10 + $0xf8] sm:$0xff]
  %v4130 = vld [vmem:[%s10 + $0x100] sm:$0xff]
  %v4131 = vld [vmem:[%s10 + $0x108] sm:$0xff]
  %v4132 = vld [vmem:[%s10 + $0x110] sm:$0xff]
  %v4133 = vld [vmem:[%s10 + $0x118] sm:$0xff]
  %v4134 = vld [vmem:[%s10 + $0x120] sm:$0xff]
  %v4135 = vld [vmem:[%s10 + $0x128] sm:$0xff]
  %v4136 = vld [vmem:[%s10 + $0x130] sm:$0xff]
  %v4137 = vld [vmem:[%s10 + $0x138] sm:$0xff]
  %v4138 = vld [vmem:[%s10 + $0x140] sm:$0xff]
  %v4139 = vld [vmem:[%s10 + $0x148] sm:$0xff]
  %v4140 = vld [vmem:[%s10 + $0x150] sm:$0xff]
  %v4141 = vld [vmem:[%s10 + $0x158] sm:$0xff]
  %v4142 = vld [vmem:[%s10 + $0x160] sm:$0xff]
  %v4143 = vld [vmem:[%s10 + $0x168] sm:$0xff]
  %v4144 = vld [vmem:[%s10 + $0x170] sm:$0xff]
  %v4145 = vld [vmem:[%s10 + $0x178] sm:$0xff]
  %v4146 = vld [vmem:[%s10 + $0x180] sm:$0xff]
  %v4147 = vld [vmem:[%s10 + $0x188] sm:$0xff]
  %v4148 = vld [vmem:[%s10 + $0x190] sm:$0xff]
  %v4149 = vld [vmem:[%s10 + $0x198] sm:$0xff]
  %v4150 = vld [vmem:[%s10 + $0x1a0] sm:$0xff]
  %v4151 = vld [vmem:[%s10 + $0x1a8] sm:$0xff]
  %v4152 = vld [vmem:[%s10 + $0x1b0] sm:$0xff]
  %v4153 = vld [vmem:[%s10 + $0x1b8] sm:$0xff]
  %v4154 = vld [vmem:[%s10 + $0x1c0] sm:$0xff]
  %v4155 = vld [vmem:[%s10 + $0x1c8] sm:$0xff]
  %v4156 = vld [vmem:[%s10 + $0x1d0] sm:$0xff]
  %v4157 = vld [vmem:[%s10 + $0x1d8] sm:$0xff]
  %v4158 = vld [vmem:[%s10 + $0x1e0] sm:$0xff]
  %v4159 = vld [vmem:[%s10 + $0x1e8] sm:$0xff]
  %v4160 = vld [vmem:[%s10 + $0x1f0] sm:$0xff]
  %v4161 = vld [vmem:[%s10 + $0x1f8] sm:$0xff]
  %v4162 = vld [vmem:[%s10 + $0x200] sm:$0xff]
  %v4163 = vld [vmem:[%s10 + $0x208] sm:$0xff]
  %v4164 = vld [vmem:[%s10 + $0x210] sm:$0xff]
  %v4165 = vld [vmem:[%s10 + $0x218] sm:$0xff]
  %v4166 = vld [vmem:[%s10 + $0x220] sm:$0xff]
  %v4167 = vld [vmem:[%s10 + $0x228] sm:$0xff]
  %v4168 = vld [vmem:[%s10 + $0x230] sm:$0xff]
  %v4169 = vld [vmem:[%s10 + $0x238] sm:$0xff]
  %v4170 = vld [vmem:[%s10 + $0x240] sm:$0xff]
  %v4171 = vld [vmem:[%s10 + $0x248] sm:$0xff]
  %v4172 = vld [vmem:[%s10 + $0x250] sm:$0xff]
  %v4173 = vld [vmem:[%s10 + $0x258] sm:$0xff]
  %v4174 = vld [vmem:[%s10 + $0x260] sm:$0xff]
  %v4175 = vld [vmem:[%s10 + $0x268] sm:$0xff]
  %v4176 = vld [vmem:[%s10 + $0x270] sm:$0xff]
  %v4177 = vld [vmem:[%s10 + $0x278] sm:$0xff]
  %v4178 = vld [vmem:[%s10 + $0x280] sm:$0xff]
  %v4179 = vld [vmem:[%s10 + $0x288] sm:$0xff]
  %v4180 = vld [vmem:[%s10 + $0x290] sm:$0xff]
  %v4181 = vld [vmem:[%s10 + $0x298] sm:$0xff]
  %v4182 = vld [vmem:[%s10 + $0x2a0] sm:$0xff]
  %v4183 = vld [vmem:[%s10 + $0x2a8] sm:$0xff]
  %v4184 = vld [vmem:[%s10 + $0x2b0] sm:$0xff]
  %v4185 = vld [vmem:[%s10 + $0x2b8] sm:$0xff]
  %v4186 = vld [vmem:[%s10 + $0x2c0] sm:$0xff]
  %v4187 = vld [vmem:[%s10 + $0x2c8] sm:$0xff]
  %v4188 = vld [vmem:[%s10 + $0x2d0] sm:$0xff]
  %v4189 = vld [vmem:[%s10 + $0x2d8] sm:$0xff]
  %v4190 = vld [vmem:[%s10 + $0x2e0] sm:$0xff]
  %v4191 = vld [vmem:[%s10 + $0x2e8] sm:$0xff]
  %v4192 = vld [vmem:[%s10 + $0x2f0] sm:$0xff]
  %v4193 = vld [vmem:[%s10 + $0x2f8] sm:$0xff]
  %v4194 = vld [vmem:[%s10 + $0x300] sm:$0xff]
  %v4195 = vld [vmem:[%s10 + $0x308] sm:$0xff]
  %v4196 = vld [vmem:[%s10 + $0x310] sm:$0xff]
  %v4197 = vld [vmem:[%s10 + $0x318] sm:$0xff]
  %v4198 = vld [vmem:[%s10 + $0x320] sm:$0xff]
  %v4199 = vld [vmem:[%s10 + $0x328] sm:$0xff]
  %v4200 = vld [vmem:[%s10 + $0x330] sm:$0xff]
  %v4201 = vld [vmem:[%s10 + $0x338] sm:$0xff]
  %v4202 = vld [vmem:[%s10 + $0x340] sm:$0xff]
  %v4203 = vld [vmem:[%s10 + $0x348] sm:$0xff]
  %v4204 = vld [vmem:[%s10 + $0x350] sm:$0xff]
  %v4205 = vld [vmem:[%s10 + $0x358] sm:$0xff]
  %v4206 = vld [vmem:[%s10 + $0x360] sm:$0xff]
  %v4207 = vld [vmem:[%s10 + $0x368] sm:$0xff]
  %v4208 = vld [vmem:[%s10 + $0x370] sm:$0xff]
  %v4209 = vld [vmem:[%s10 + $0x378] sm:$0xff]
  %v4210 = vld [vmem:[%s10 + $0x380] sm:$0xff]
  %v4211 = vld [vmem:[%s10 + $0x388] sm:$0xff]
  %v4212 = vld [vmem:[%s10 + $0x390] sm:$0xff]
  %v4213 = vld [vmem:[%s10 + $0x398] sm:$0xff]
  %v4214 = vld [vmem:[%s10 + $0x3a0] sm:$0xff]
  %v4215 = vld [vmem:[%s10 + $0x3a8] sm:$0xff]
  %v4216 = vld [vmem:[%s10 + $0x3b0] sm:$0xff]
  %v4217 = vld [vmem:[%s10 + $0x3b8] sm:$0xff]
  %v4218 = vld [vmem:[%s10 + $0x3c0] sm:$0xff]
  %v4219 = vld [vmem:[%s10 + $0x3c8] sm:$0xff]
  %v4220 = vld [vmem:[%s10 + $0x3d0] sm:$0xff]
  %v4221 = vld [vmem:[%s10 + $0x3d8] sm:$0xff]
  %v4222 = vld [vmem:[%s10 + $0x3e0] sm:$0xff]
  %v4223 = vld [vmem:[%s10 + $0x3e8] sm:$0xff]
  %v4224 = vld [vmem:[%s10 + $0x3f0] sm:$0xff]
  %v4225 = vld [vmem:[%s10 + $0x3f8] sm:$0xff]
  %v4226 = vld [vmem:[%s12] sm:$0xf]
  %v4228 = vlaneseq
  %v4229 = vshrl.u32 %v4228, 7
  %v4230 = vsub.s32 0, %v4229
  %v4231 = vrot.slane %v4226, %v4230
  %v4232 = vlaneseq
  %v4233 = vshrl.u32 %v4232, 7
  %v4234 = vsub.s32 1, %v4233
  %v4235 = vrot.slane %v4226, %v4234
  %v4236 = vlaneseq
  %v4237 = vshrl.u32 %v4236, 7
  %v4238 = vsub.s32 2, %v4237
  %v4239 = vrot.slane %v4226, %v4238
  %v4240 = vlaneseq
  %v4241 = vshrl.u32 %v4240, 7
  %v4242 = vsub.s32 3, %v4241
  %v4243 = vrot.slane %v4226, %v4242
  %4248 = vmatprep.subr.mxu0 %v4099
  %4249 = vmatpush1.msra.mxu0 %v4098
  %4250 = vmatprep.subr.mxu0 %v4103
  %4251 = vmatpush1.msra.mxu0 %v4102
  %4252 = vmatprep.subr.mxu0 %v4107
  %4253 = vmatpush1.msra.mxu0 %v4106
  %4254 = vmatprep.subr.mxu0 %v4111
  %4255 = vmatpush1.msra.mxu0 %v4110
  %4256 = vmatprep.subr.mxu0 %v4115
  %4257 = vmatpush1.msra.mxu0 %v4114
  %4258 = vmatprep.subr.mxu0 %v4119
  %4259 = vmatpush1.msra.mxu0 %v4118
  %4260 = vmatprep.subr.mxu0 %v4123
  %4261 = vmatpush1.msra.mxu0 %v4122
  %4262 = vmatprep.subr.mxu0 %v4127
  %4263 = vmatpush1.msra.mxu0 %v4126
  %4264 = vmatprep.subr.mxu0 %v4131
  %4265 = vmatpush1.msra.mxu0 %v4130
  %4266 = vmatprep.subr.mxu0 %v4135
  %4267 = vmatpush1.msra.mxu0 %v4134
  %4268 = vmatprep.subr.mxu0 %v4139
  %4269 = vmatpush1.msra.mxu0 %v4138
  %4270 = vmatprep.subr.mxu0 %v4143
  %4271 = vmatpush1.msra.mxu0 %v4142
  %4272 = vmatprep.subr.mxu0 %v4147
  %4273 = vmatpush1.msra.mxu0 %v4146
  %4274 = vmatprep.subr.mxu0 %v4151
  %4275 = vmatpush1.msra.mxu0 %v4150
  %4276 = vmatprep.subr.mxu0 %v4155
  %4277 = vmatpush1.msra.mxu0 %v4154
  %4278 = vmatprep.subr.mxu0 %v4159
  %4279 = vmatpush1.msra.mxu0 %v4158
  %4280 = vmatprep.subr.mxu0 %v4163
  %4281 = vmatpush1.msra.mxu0 %v4162
  %4282 = vmatprep.subr.mxu0 %v4167
  %4283 = vmatpush1.msra.mxu0 %v4166
  %4284 = vmatprep.subr.mxu0 %v4171
  %4285 = vmatpush1.msra.mxu0 %v4170
  %4286 = vmatprep.subr.mxu0 %v4175
  %4287 = vmatpush1.msra.mxu0 %v4174
  %4288 = vmatprep.subr.mxu0 %v4179
  %4289 = vmatpush1.msra.mxu0 %v4178
  %4290 = vmatprep.subr.mxu0 %v4183
  %4291 = vmatpush1.msra.mxu0 %v4182
  %4292 = vmatprep.subr.mxu0 %v4187
  %4293 = vmatpush1.msra.mxu0 %v4186
  %4294 = vmatprep.subr.mxu0 %v4191
  %4295 = vmatpush1.msra.mxu0 %v4190
  %4296 = vmatprep.subr.mxu0 %v4195
  %4297 = vmatpush1.msra.mxu0 %v4194
  %4298 = vmatprep.subr.mxu0 %v4199
  %4299 = vmatpush1.msra.mxu0 %v4198
  %4300 = vmatprep.subr.mxu0 %v4203
  %4301 = vmatpush1.msra.mxu0 %v4202
  %4302 = vmatprep.subr.mxu0 %v4207
  %4303 = vmatpush1.msra.mxu0 %v4206
  %4304 = vmatprep.subr.mxu0 %v4211
  %4305 = vmatpush1.msra.mxu0 %v4210
  %4306 = vmatprep.subr.mxu0 %v4215
  %4307 = vmatpush1.msra.mxu0 %v4214
  %4308 = vmatprep.subr.mxu0 %v4219
  %4309 = vmatpush1.msra.mxu0 %v4218
  %4310 = vmatprep.subr.mxu0 %v4223
  %4311 = vmatpush1.msra.mxu0 %v4222
  %4312 = vmatprep.mubr.f32.mxu0 %v3682
  %4313 = vmatmul.mubr.f32.gmra.mrb[0].mxu0 %v3674
  %v4314 = vpop.f32.mrb[0].mxu0
  %v4315 = vadd.f32 %v4231, %v4314
  %v4316 = vpop.f32.mrb[0].mxu0
  %v4317 = vadd.f32 %v4235, %v4316
  %4318 = vmatprep.mubr.f32.mxu0 %v3683
  %4319 = vmatmul.mubr.f32.gmra.mrb[0].mxu0 %v3675
  %v4320 = vpop.f32.mrb[0].mxu0
  %v4321 = vadd.f32 %v4231, %v4320
  %v4322 = vpop.f32.mrb[0].mxu0
  %v4323 = vadd.f32 %v4235, %v4322
  %4324 = vmatprep.mubr.f32.mxu0 %v3684
  %4325 = vmatmul.mubr.f32.gmra.mrb[0].mxu0 %v3676
  %v4326 = vpop.f32.mrb[0].mxu0
  %v4327 = vadd.f32 %v4231, %v4326
  %v4328 = vpop.f32.mrb[0].mxu0
  %v4329 = vadd.f32 %v4235, %v4328
  %4330 = vmatprep.mubr.f32.mxu0 %v3685
  %4331 = vmatmul.mubr.f32.gmra.mrb[0].mxu0 %v3677
  %v4332 = vpop.f32.mrb[0].mxu0
  %v4333 = vadd.f32 %v4231, %v4332
  %v4334 = vpop.f32.mrb[0].mxu0
  %v4335 = vadd.f32 %v4235, %v4334
  %4336 = vmatprep.mubr.f32.mxu0 %v3686
  %4337 = vmatmul.mubr.f32.gmra.mrb[0].mxu0 %v3678
  %v4338 = vpop.f32.mrb[0].mxu0
  %v4339 = vadd.f32 %v4231, %v4338
  %v4340 = vpop.f32.mrb[0].mxu0
  %v4341 = vadd.f32 %v4235, %v4340
  %4342 = vmatprep.mubr.f32.mxu0 %v3687
  %4343 = vmatmul.mubr.f32.gmra.mrb[0].mxu0 %v3679
  %v4344 = vpop.f32.mrb[0].mxu0
  %v4345 = vadd.f32 %v4231, %v4344
  %v4346 = vpop.f32.mrb[0].mxu0
  %v4347 = vadd.f32 %v4235, %v4346
  %4348 = vmatprep.mubr.f32.mxu0 %v3688
  %4349 = vmatmul.mubr.f32.gmra.mrb[0].mxu0 %v3680
  %v4350 = vpop.f32.mrb[0].mxu0
  %v4351 = vadd.f32 %v4231, %v4350
  %v4352 = vpop.f32.mrb[0].mxu0
  %v4353 = vadd.f32 %v4235, %v4352
  %4354 = vmatprep.mubr.f32.mxu0 %v3689
  %4355 = vmatmul.mubr.f32.gmra.mrb[0].mxu0 %v3681
  %v4356 = vpop.f32.mrb[0].mxu0
  %v4357 = vadd.f32 %v4231, %v4356
  %v4358 = vpop.f32.mrb[0].mxu0
  %v4359 = vadd.f32 %v4235, %v4358
  %4360 = vdwg.mxu0
  %4361 = vmatprep.subr.mxu0 %v4101
  %4362 = vmatpush1.msra.mxu0 %v4100
  %4363 = vmatprep.subr.mxu0 %v4105
  %4364 = vmatpush1.msra.mxu0 %v4104
  %4365 = vmatprep.subr.mxu0 %v4109
  %4366 = vmatpush1.msra.mxu0 %v4108
  %4367 = vmatprep.subr.mxu0 %v4113
  %4368 = vmatpush1.msra.mxu0 %v4112
  %4369 = vmatprep.subr.mxu0 %v4117
  %4370 = vmatpush1.msra.mxu0 %v4116
  %4371 = vmatprep.subr.mxu0 %v4121
  %4372 = vmatpush1.msra.mxu0 %v4120
  %4373 = vmatprep.subr.mxu0 %v4125
  %4374 = vmatpush1.msra.mxu0 %v4124
  %4375 = vmatprep.subr.mxu0 %v4129
  %4376 = vmatpush1.msra.mxu0 %v4128
  %4377 = vmatprep.subr.mxu0 %v4133
  %4378 = vmatpush1.msra.mxu0 %v4132
  %4379 = vmatprep.subr.mxu0 %v4137
  %4380 = vmatpush1.msra.mxu0 %v4136
  %4381 = vmatprep.subr.mxu0 %v4141
  %4382 = vmatpush1.msra.mxu0 %v4140
  %4383 = vmatprep.subr.mxu0 %v4145
  %4384 = vmatpush1.msra.mxu0 %v4144
  %4385 = vmatprep.subr.mxu0 %v4149
  %4386 = vmatpush1.msra.mxu0 %v4148
  %4387 = vmatprep.subr.mxu0 %v4153
  %4388 = vmatpush1.msra.mxu0 %v4152
  %4389 = vmatprep.subr.mxu0 %v4157
  %4390 = vmatpush1.msra.mxu0 %v4156
  %4391 = vmatprep.subr.mxu0 %v4161
  %4392 = vmatpush1.msra.mxu0 %v4160
  %4393 = vmatprep.subr.mxu0 %v4165
  %4394 = vmatpush1.msra.mxu0 %v4164
  %4395 = vmatprep.subr.mxu0 %v4169
  %4396 = vmatpush1.msra.mxu0 %v4168
  %4397 = vmatprep.subr.mxu0 %v4173
  %4398 = vmatpush1.msra.mxu0 %v4172
  %4399 = vmatprep.subr.mxu0 %v4177
  %4400 = vmatpush1.msra.mxu0 %v4176
  %4401 = vmatprep.subr.mxu0 %v4181
  %4402 = vmatpush1.msra.mxu0 %v4180
  %4403 = vmatprep.subr.mxu0 %v4185
  %4404 = vmatpush1.msra.mxu0 %v4184
  %4405 = vmatprep.subr.mxu0 %v4189
  %4406 = vmatpush1.msra.mxu0 %v4188
  %4407 = vmatprep.subr.mxu0 %v4193
  %4408 = vmatpush1.msra.mxu0 %v4192
  %4409 = vmatprep.subr.mxu0 %v4197
  %4410 = vmatpush1.msra.mxu0 %v4196
  %4411 = vmatprep.subr.mxu0 %v4201
  %4412 = vmatpush1.msra.mxu0 %v4200
  %4413 = vmatprep.subr.mxu0 %v4205
  %4414 = vmatpush1.msra.mxu0 %v4204
  %4415 = vmatprep.subr.mxu0 %v4209
  %4416 = vmatpush1.msra.mxu0 %v4208
  %4417 = vmatprep.subr.mxu0 %v4213
  %4418 = vmatpush1.msra.mxu0 %v4212
  %4419 = vmatprep.subr.mxu0 %v4217
  %4420 = vmatpush1.msra.mxu0 %v4216
  %4421 = vmatprep.subr.mxu0 %v4221
  %4422 = vmatpush1.msra.mxu0 %v4220
  %4423 = vmatprep.subr.mxu0 %v4225
  %4424 = vmatpush1.msra.mxu0 %v4224
  %4425 = vmatprep.mubr.f32.mxu0 %v3682
  %4426 = vmatmul.mubr.f32.gmra.mrb[0].mxu0 %v3674
  %v4427 = vpop.f32.mrb[0].mxu0
  %v4428 = vadd.f32 %v4239, %v4427
  %v4429 = vpop.f32.mrb[0].mxu0
  %v4430 = vadd.f32 %v4243, %v4429
  %4431 = vmatprep.mubr.f32.mxu0 %v3683
  %4432 = vmatmul.mubr.f32.gmra.mrb[0].mxu0 %v3675
  %v4433 = vpop.f32.mrb[0].mxu0
  %v4434 = vadd.f32 %v4239, %v4433
  %v4435 = vpop.f32.mrb[0].mxu0
  %v4436 = vadd.f32 %v4243, %v4435
  %4437 = vmatprep.mubr.f32.mxu0 %v3684
  %4438 = vmatmul.mubr.f32.gmra.mrb[0].mxu0 %v3676
  %v4439 = vpop.f32.mrb[0].mxu0
  %v4440 = vadd.f32 %v4239, %v4439
  %v4441 = vpop.f32.mrb[0].mxu0
  %v4442 = vadd.f32 %v4243, %v4441
  %4443 = vmatprep.mubr.f32.mxu0 %v3685
  %4444 = vmatmul.mubr.f32.gmra.mrb[0].mxu0 %v3677
  %v4445 = vpop.f32.mrb[0].mxu0
  %v4446 = vadd.f32 %v4239, %v4445
  %v4447 = vpop.f32.mrb[0].mxu0
  %v4448 = vadd.f32 %v4243, %v4447
  %4449 = vmatprep.mubr.f32.mxu0 %v3686
  %4450 = vmatmul.mubr.f32.gmra.mrb[0].mxu0 %v3678
  %v4451 = vpop.f32.mrb[0].mxu0
  %v4452 = vadd.f32 %v4239, %v4451
  %v4453 = vpop.f32.mrb[0].mxu0
  %v4454 = vadd.f32 %v4243, %v4453
  %4455 = vmatprep.mubr.f32.mxu0 %v3687
  %4456 = vmatmul.mubr.f32.gmra.mrb[0].mxu0 %v3679
  %v4457 = vpop.f32.mrb[0].mxu0
  %v4458 = vadd.f32 %v4239, %v4457
  %v4459 = vpop.f32.mrb[0].mxu0
  %v4460 = vadd.f32 %v4243, %v4459
  %4461 = vmatprep.mubr.f32.mxu0 %v3688
  %4462 = vmatmul.mubr.f32.gmra.mrb[0].mxu0 %v3680
  %v4463 = vpop.f32.mrb[0].mxu0
  %v4464 = vadd.f32 %v4239, %v4463
  %v4465 = vpop.f32.mrb[0].mxu0
  %v4466 = vadd.f32 %v4243, %v4465
  %4467 = vmatprep.mubr.f32.mxu0 %v3689
  %4468 = vmatmul.mubr.f32.gmra.mrb[0].mxu0 %v3681
  %v4469 = vpop.f32.mrb[0].mxu0
  %v4470 = vadd.f32 %v4239, %v4469
  %v4471 = vpop.f32.mrb[0].mxu0
  %v4472 = vadd.f32 %v4243, %v4471
  %4473 = vdwg.mxu0
  %4474 = vst [vmem:[#allocation5] sm:$0xff] %v4315
  %4475 = vst [vmem:[#allocation5 + $0x8] sm:$0xff] %v4317
  %4476 = vst [vmem:[#allocation5 + $0x10] sm:$0xff] %v4428
  %4477 = vst [vmem:[#allocation5 + $0x18] sm:$0xff] %v4430
  %4478 = vst [vmem:[#allocation5 + $0x20] sm:$0xff] %v4321
  %4479 = vst [vmem:[#allocation5 + $0x28] sm:$0xff] %v4323
  %4480 = vst [vmem:[#allocation5 + $0x30] sm:$0xff] %v4434
  %4481 = vst [vmem:[#allocation5 + $0x38] sm:$0xff] %v4436
  %4482 = vst [vmem:[#allocation5 + $0x40] sm:$0xff] %v4327
  %4483 = vst [vmem:[#allocation5 + $0x48] sm:$0xff] %v4329
  %4484 = vst [vmem:[#allocation5 + $0x50] sm:$0xff] %v4440
  %4485 = vst [vmem:[#allocation5 + $0x58] sm:$0xff] %v4442
  %4486 = vst [vmem:[#allocation5 + $0x60] sm:$0xff] %v4333
  %4487 = vst [vmem:[#allocation5 + $0x68] sm:$0xff] %v4335
  %4488 = vst [vmem:[#allocation5 + $0x70] sm:$0xff] %v4446
  %4489 = vst [vmem:[#allocation5 + $0x78] sm:$0xff] %v4448
  %4490 = vst [vmem:[#allocation5 + $0x80] sm:$0xff] %v4339
  %4491 = vst [vmem:[#allocation5 + $0x88] sm:$0xff] %v4341
  %4492 = vst [vmem:[#allocation5 + $0x90] sm:$0xff] %v4452
  %4493 = vst [vmem:[#allocation5 + $0x98] sm:$0xff] %v4454
  %4494 = vst [vmem:[#allocation5 + $0xa0] sm:$0xff] %v4345
  %4495 = vst [vmem:[#allocation5 + $0xa8] sm:$0xff] %v4347
  %4496 = vst [vmem:[#allocation5 + $0xb0] sm:$0xff] %v4458
  %4497 = vst [vmem:[#allocation5 + $0xb8] sm:$0xff] %v4460
  %4498 = vst [vmem:[#allocation5 + $0xc0] sm:$0xff] %v4351
  %4499 = vst [vmem:[#allocation5 + $0xc8] sm:$0xff] %v4353
  %4500 = vst [vmem:[#allocation5 + $0xd0] sm:$0xff] %v4464
  %4501 = vst [vmem:[#allocation5 + $0xd8] sm:$0xff] %v4466
  %4502 = vst [vmem:[#allocation5 + $0xe0] sm:$0xff] %v4357
  %4503 = vst [vmem:[#allocation5 + $0xe8] sm:$0xff] %v4359
  %4504 = vst [vmem:[#allocation5 + $0xf0] sm:$0xff] %v4470
  %4505 = vst [vmem:[#allocation5 + $0xf8] sm:$0xff] %v4472
  %v4506 = vld [vmem:[%s8] sm:$0xff]
  %v4507 = vld [vmem:[%s8 + $0x8] sm:$0xff]
  %v4508 = vld [vmem:[%s8 + $0x10] sm:$0xff]
  %v4509 = vld [vmem:[%s8 + $0x18] sm:$0xff]
  %v4510 = vld [vmem:[%s8 + $0x20] sm:$0xff]
  %v4511 = vld [vmem:[%s8 + $0x28] sm:$0xff]
  %v4512 = vld [vmem:[%s8 + $0x30] sm:$0xff]
  %v4513 = vld [vmem:[%s8 + $0x38] sm:$0xff]
  %v4514 = vld [vmem:[%s8 + $0x40] sm:$0xff]
  %v4515 = vld [vmem:[%s8 + $0x48] sm:$0xff]
  %v4516 = vld [vmem:[%s8 + $0x50] sm:$0xff]
  %v4517 = vld [vmem:[%s8 + $0x58] sm:$0xff]
  %v4518 = vld [vmem:[%s8 + $0x60] sm:$0xff]
  %v4519 = vld [vmem:[%s8 + $0x68] sm:$0xff]
  %v4520 = vld [vmem:[%s8 + $0x70] sm:$0xff]
  %v4521 = vld [vmem:[%s8 + $0x78] sm:$0xff]
  %v4522 = vld [vmem:[%s8 + $0x80] sm:$0xff]
  %v4523 = vld [vmem:[%s8 + $0x88] sm:$0xff]
  %v4524 = vld [vmem:[%s8 + $0x90] sm:$0xff]
  %v4525 = vld [vmem:[%s8 + $0x98] sm:$0xff]
  %v4526 = vld [vmem:[%s8 + $0xa0] sm:$0xff]
  %v4527 = vld [vmem:[%s8 + $0xa8] sm:$0xff]
  %v4528 = vld [vmem:[%s8 + $0xb0] sm:$0xff]
  %v4529 = vld [vmem:[%s8 + $0xb8] sm:$0xff]
  %v4530 = vld [vmem:[%s8 + $0xc0] sm:$0xff]
  %v4531 = vld [vmem:[%s8 + $0xc8] sm:$0xff]
  %v4532 = vld [vmem:[%s8 + $0xd0] sm:$0xff]
  %v4533 = vld [vmem:[%s8 + $0xd8] sm:$0xff]
  %v4534 = vld [vmem:[%s8 + $0xe0] sm:$0xff]
  %v4535 = vld [vmem:[%s8 + $0xe8] sm:$0xff]
  %v4536 = vld [vmem:[%s8 + $0xf0] sm:$0xff]
  %v4537 = vld [vmem:[%s8 + $0xf8] sm:$0xff]
  %v4538 = vld [vmem:[%s8 + $0x100] sm:$0xff]
  %v4539 = vld [vmem:[%s8 + $0x108] sm:$0xff]
  %v4540 = vld [vmem:[%s8 + $0x110] sm:$0xff]
  %v4541 = vld [vmem:[%s8 + $0x118] sm:$0xff]
  %v4542 = vld [vmem:[%s8 + $0x120] sm:$0xff]
  %v4543 = vld [vmem:[%s8 + $0x128] sm:$0xff]
  %v4544 = vld [vmem:[%s8 + $0x130] sm:$0xff]
  %v4545 = vld [vmem:[%s8 + $0x138] sm:$0xff]
  %v4546 = vld [vmem:[%s8 + $0x140] sm:$0xff]
  %v4547 = vld [vmem:[%s8 + $0x148] sm:$0xff]
  %v4548 = vld [vmem:[%s8 + $0x150] sm:$0xff]
  %v4549 = vld [vmem:[%s8 + $0x158] sm:$0xff]
  %v4550 = vld [vmem:[%s8 + $0x160] sm:$0xff]
  %v4551 = vld [vmem:[%s8 + $0x168] sm:$0xff]
  %v4552 = vld [vmem:[%s8 + $0x170] sm:$0xff]
  %v4553 = vld [vmem:[%s8 + $0x178] sm:$0xff]
  %v4554 = vld [vmem:[%s8 + $0x180] sm:$0xff]
  %v4555 = vld [vmem:[%s8 + $0x188] sm:$0xff]
  %v4556 = vld [vmem:[%s8 + $0x190] sm:$0xff]
  %v4557 = vld [vmem:[%s8 + $0x198] sm:$0xff]
  %v4558 = vld [vmem:[%s8 + $0x1a0] sm:$0xff]
  %v4559 = vld [vmem:[%s8 + $0x1a8] sm:$0xff]
  %v4560 = vld [vmem:[%s8 + $0x1b0] sm:$0xff]
  %v4561 = vld [vmem:[%s8 + $0x1b8] sm:$0xff]
  %v4562 = vld [vmem:[%s8 + $0x1c0] sm:$0xff]
  %v4563 = vld [vmem:[%s8 + $0x1c8] sm:$0xff]
  %v4564 = vld [vmem:[%s8 + $0x1d0] sm:$0xff]
  %v4565 = vld [vmem:[%s8 + $0x1d8] sm:$0xff]
  %v4566 = vld [vmem:[%s8 + $0x1e0] sm:$0xff]
  %v4567 = vld [vmem:[%s8 + $0x1e8] sm:$0xff]
  %v4568 = vld [vmem:[%s8 + $0x1f0] sm:$0xff]
  %v4569 = vld [vmem:[%s8 + $0x1f8] sm:$0xff]
  %v4570 = vld [vmem:[#allocation4] sm:$0xff]
  %v4571 = vld [vmem:[#allocation4 + $0x8] sm:$0xff]
  %v4572 = vld [vmem:[#allocation4 + $0x10] sm:$0xff]
  %v4573 = vld [vmem:[#allocation4 + $0x18] sm:$0xff]
  %4574 = vmatprep.subr.mxu0 %v4507
  %4575 = vmatpush1.msra.mxu0 %v4506
  %4576 = vmatprep.subr.mxu0 %v4511
  %4577 = vmatpush1.msra.mxu0 %v4510
  %4578 = vmatprep.subr.mxu0 %v4515
  %4579 = vmatpush1.msra.mxu0 %v4514
  %4580 = vmatprep.subr.mxu0 %v4519
  %4581 = vmatpush1.msra.mxu0 %v4518
  %4582 = vmatprep.subr.mxu0 %v4523
  %4583 = vmatpush1.msra.mxu0 %v4522
  %4584 = vmatprep.subr.mxu0 %v4527
  %4585 = vmatpush1.msra.mxu0 %v4526
  %4586 = vmatprep.subr.mxu0 %v4531
  %4587 = vmatpush1.msra.mxu0 %v4530
  %4588 = vmatprep.subr.mxu0 %v4535
  %4589 = vmatpush1.msra.mxu0 %v4534
  %4590 = vmatprep.subr.mxu0 %v4539
  %4591 = vmatpush1.msra.mxu0 %v4538
  %4592 = vmatprep.subr.mxu0 %v4543
  %4593 = vmatpush1.msra.mxu0 %v4542
  %4594 = vmatprep.subr.mxu0 %v4547
  %4595 = vmatpush1.msra.mxu0 %v4546
  %4596 = vmatprep.subr.mxu0 %v4551
  %4597 = vmatpush1.msra.mxu0 %v4550
  %4598 = vmatprep.subr.mxu0 %v4555
  %4599 = vmatpush1.msra.mxu0 %v4554
  %4600 = vmatprep.subr.mxu0 %v4559
  %4601 = vmatpush1.msra.mxu0 %v4558
  %4602 = vmatprep.subr.mxu0 %v4563
  %4603 = vmatpush1.msra.mxu0 %v4562
  %4604 = vmatprep.subr.mxu0 %v4567
  %4605 = vmatpush1.msra.mxu0 %v4566
  %4606 = vmatprep.subr.mxu0 0.0
  %4607 = vmatpush1.msra.mxu0 0.0
  %4608 = vmatprep.subr.mxu0 0.0
  %4609 = vmatpush1.msra.mxu0 0.0
  %4610 = vmatprep.subr.mxu0 0.0
  %4611 = vmatpush1.msra.mxu0 0.0
  %4612 = vmatprep.subr.mxu0 0.0
  %4613 = vmatpush1.msra.mxu0 0.0
  %4614 = vmatprep.subr.mxu0 0.0
  %4615 = vmatpush1.msra.mxu0 0.0
  %4616 = vmatprep.subr.mxu0 0.0
  %4617 = vmatpush1.msra.mxu0 0.0
  %4618 = vmatprep.subr.mxu0 0.0
  %4619 = vmatpush1.msra.mxu0 0.0
  %4620 = vmatprep.subr.mxu0 0.0
  %4621 = vmatpush1.msra.mxu0 0.0
  %4622 = vmatprep.subr.mxu0 0.0
  %4623 = vmatpush1.msra.mxu0 0.0
  %4624 = vmatprep.subr.mxu0 0.0
  %4625 = vmatpush1.msra.mxu0 0.0
  %4626 = vmatprep.subr.mxu0 0.0
  %4627 = vmatpush1.msra.mxu0 0.0
  %4628 = vmatprep.subr.mxu0 0.0
  %4629 = vmatpush1.msra.mxu0 0.0
  %4630 = vmatprep.subr.mxu0 0.0
  %4631 = vmatpush1.msra.mxu0 0.0
  %4632 = vmatprep.subr.mxu0 0.0
  %4633 = vmatpush1.msra.mxu0 0.0
  %4634 = vmatprep.subr.mxu0 0.0
  %4635 = vmatpush1.msra.mxu0 0.0
  %4636 = vmatprep.subr.mxu0 0.0
  %4637 = vmatpush1.msra.mxu0 0.0
  %4638 = vmatprep.mubr.f32.mxu0 0.0
  %4639 = vmatmul.mubr.f32.gmra.mrb[0].mxu0 0.0
  %v4640 = vpop.f32.mrb[0].mxu0
  %v4641 = vadd.f32 0.0, %v4640
  %v4642 = vpop.f32.mrb[0].mxu0
  %v4643 = vadd.f32 0.0, %v4642
  %4644 = vdwg.mxu0
  %4645 = vmatprep.subr.mxu0 %v4509
  %4646 = vmatpush1.msra.mxu0 %v4508
  %4647 = vmatprep.subr.mxu0 %v4513
  %4648 = vmatpush1.msra.mxu0 %v4512
  %4649 = vmatprep.subr.mxu0 %v4517
  %4650 = vmatpush1.msra.mxu0 %v4516
  %4651 = vmatprep.subr.mxu0 %v4521
  %4652 = vmatpush1.msra.mxu0 %v4520
  %4653 = vmatprep.subr.mxu0 %v4525
  %4654 = vmatpush1.msra.mxu0 %v4524
  %4655 = vmatprep.subr.mxu0 %v4529
  %4656 = vmatpush1.msra.mxu0 %v4528
  %4657 = vmatprep.subr.mxu0 %v4533
  %4658 = vmatpush1.msra.mxu0 %v4532
  %4659 = vmatprep.subr.mxu0 %v4537
  %4660 = vmatpush1.msra.mxu0 %v4536
  %4661 = vmatprep.subr.mxu0 %v4541
  %4662 = vmatpush1.msra.mxu0 %v4540
  %4663 = vmatprep.subr.mxu0 %v4545
  %4664 = vmatpush1.msra.mxu0 %v4544
  %4665 = vmatprep.subr.mxu0 %v4549
  %4666 = vmatpush1.msra.mxu0 %v4548
  %4667 = vmatprep.subr.mxu0 %v4553
  %4668 = vmatpush1.msra.mxu0 %v4552
  %4669 = vmatprep.subr.mxu0 %v4557
  %4670 = vmatpush1.msra.mxu0 %v4556
  %4671 = vmatprep.subr.mxu0 %v4561
  %4672 = vmatpush1.msra.mxu0 %v4560
  %4673 = vmatprep.subr.mxu0 %v4565
  %4674 = vmatpush1.msra.mxu0 %v4564
  %4675 = vmatprep.subr.mxu0 %v4569
  %4676 = vmatpush1.msra.mxu0 %v4568
  %4677 = vmatprep.subr.mxu0 0.0
  %4678 = vmatpush1.msra.mxu0 0.0
  %4679 = vmatprep.subr.mxu0 0.0
  %4680 = vmatpush1.msra.mxu0 0.0
  %4681 = vmatprep.subr.mxu0 0.0
  %4682 = vmatpush1.msra.mxu0 0.0
  %4683 = vmatprep.subr.mxu0 0.0
  %4684 = vmatpush1.msra.mxu0 0.0
  %4685 = vmatprep.subr.mxu0 0.0
  %4686 = vmatpush1.msra.mxu0 0.0
  %4687 = vmatprep.subr.mxu0 0.0
  %4688 = vmatpush1.msra.mxu0 0.0
  %4689 = vmatprep.subr.mxu0 0.0
  %4690 = vmatpush1.msra.mxu0 0.0
  %4691 = vmatprep.subr.mxu0 0.0
  %4692 = vmatpush1.msra.mxu0 0.0
  %4693 = vmatprep.subr.mxu0 0.0
  %4694 = vmatpush1.msra.mxu0 0.0
  %4695 = vmatprep.subr.mxu0 0.0
  %4696 = vmatpush1.msra.mxu0 0.0
  %4697 = vmatprep.subr.mxu0 0.0
  %4698 = vmatpush1.msra.mxu0 0.0
  %4699 = vmatprep.subr.mxu0 0.0
  %4700 = vmatpush1.msra.mxu0 0.0
  %4701 = vmatprep.subr.mxu0 0.0
  %4702 = vmatpush1.msra.mxu0 0.0
  %4703 = vmatprep.subr.mxu0 0.0
  %4704 = vmatpush1.msra.mxu0 0.0
  %4705 = vmatprep.subr.mxu0 0.0
  %4706 = vmatpush1.msra.mxu0 0.0
  %4707 = vmatprep.subr.mxu0 0.0
  %4708 = vmatpush1.msra.mxu0 0.0
  %4709 = vmatprep.mubr.f32.mxu0 0.0
  %4710 = vmatmul.mubr.f32.gmra.mrb[0].mxu0 0.0
  %v4711 = vpop.f32.mrb[0].mxu0
  %v4712 = vadd.f32 0.0, %v4711
  %v4713 = vpop.f32.mrb[0].mxu0
  %v4714 = vadd.f32 0.0, %v4713
  %4715 = vdwg.mxu0
  %v4716 = vadd.f32 %v4570, %v4641
  %v4717 = vadd.f32 %v4571, %v4643
  %v4718 = vadd.f32 %v4572, %v4712
  %v4719 = vadd.f32 %v4573, %v4714
  %v4720 = vxor.u32 %v4716, 2147483648
  %v4721 = vmul.f32 %v4720, 1.442695
  %v4722 = vpow.pop %v4721
  %v4723 = vadd.f32 %v4722, 1.0
  %v4724 = vrcp.pop %v4723
  %v4725 = vmul.f32 1.0, %v4724
  %v4726 = vxor.u32 %v4717, 2147483648
  %v4727 = vmul.f32 %v4726, 1.442695
  %v4728 = vpow.pop %v4727
  %v4729 = vadd.f32 %v4728, 1.0
  %v4730 = vrcp.pop %v4729
  %v4731 = vmul.f32 1.0, %v4730
  %v4732 = vtanh.pop %v4718
  %v4733 = vxor.u32 %v4719, 2147483648
  %v4734 = vmul.f32 %v4733, 1.442695
  %v4735 = vpow.pop %v4734
  %v4736 = vadd.f32 %v4735, 1.0
  %v4737 = vrcp.pop %v4736
  %v4738 = vmul.f32 1.0, %v4737
  %v4739 = vmul.f32 %v4731, 0.0
  %v4740 = vmul.f32 %v4725, %v4732
  %v4741 = vadd.f32 %v4739, %v4740
  %v4742 = vtanh.pop %v4741
  %v4743 = vmul.f32 %v4738, %v4742
  %4744 = vst [vmem:[#allocation8] sm:$0xff] %v4743
  %v4745 = vld [vmem:[#allocation4 + $0x20] sm:$0xff]
  %v4746 = vld [vmem:[#allocation4 + $0x28] sm:$0xff]
  %v4747 = vld [vmem:[#allocation4 + $0x30] sm:$0xff]
  %v4748 = vld [vmem:[#allocation4 + $0x38] sm:$0xff]
  %4749 = vmatprep.subr.mxu0 %v4507
  %4750 = vmatpush1.msra.mxu0 %v4506
  %4751 = vmatprep.subr.mxu0 %v4511
  %4752 = vmatpush1.msra.mxu0 %v4510
  %4753 = vmatprep.subr.mxu0 %v4515
  %4754 = vmatpush1.msra.mxu0 %v4514
  %4755 = vmatprep.subr.mxu0 %v4519
  %4756 = vmatpush1.msra.mxu0 %v4518
  %4757 = vmatprep.subr.mxu0 %v4523
  %4758 = vmatpush1.msra.mxu0 %v4522
  %4759 = vmatprep.subr.mxu0 %v4527
  %4760 = vmatpush1.msra.mxu0 %v4526
  %4761 = vmatprep.subr.mxu0 %v4531
  %4762 = vmatpush1.msra.mxu0 %v4530
  %4763 = vmatprep.subr.mxu0 %v4535
  %4764 = vmatpush1.msra.mxu0 %v4534
  %4765 = vmatprep.subr.mxu0 %v4539
  %4766 = vmatpush1.msra.mxu0 %v4538
  %4767 = vmatprep.subr.mxu0 %v4543
  %4768 = vmatpush1.msra.mxu0 %v4542
  %4769 = vmatprep.subr.mxu0 %v4547
  %4770 = vmatpush1.msra.mxu0 %v4546
  %4771 = vmatprep.subr.mxu0 %v4551
  %4772 = vmatpush1.msra.mxu0 %v4550
  %4773 = vmatprep.subr.mxu0 %v4555
  %4774 = vmatpush1.msra.mxu0 %v4554
  %4775 = vmatprep.subr.mxu0 %v4559
  %4776 = vmatpush1.msra.mxu0 %v4558
  %4777 = vmatprep.subr.mxu0 %v4563
  %4778 = vmatpush1.msra.mxu0 %v4562
  %4779 = vmatprep.subr.mxu0 %v4567
  %4780 = vmatpush1.msra.mxu0 %v4566
  %4781 = vmatprep.subr.mxu0 0.0
  %4782 = vmatpush1.msra.mxu0 0.0
  %4783 = vmatprep.subr.mxu0 0.0
  %4784 = vmatpush1.msra.mxu0 0.0
  %4785 = vmatprep.subr.mxu0 0.0
  %4786 = vmatpush1.msra.mxu0 0.0
  %4787 = vmatprep.subr.mxu0 0.0
  %4788 = vmatpush1.msra.mxu0 0.0
  %4789 = vmatprep.subr.mxu0 0.0
  %4790 = vmatpush1.msra.mxu0 0.0
  %4791 = vmatprep.subr.mxu0 0.0
  %4792 = vmatpush1.msra.mxu0 0.0
  %4793 = vmatprep.subr.mxu0 0.0
  %4794 = vmatpush1.msra.mxu0 0.0
  %4795 = vmatprep.subr.mxu0 0.0
  %4796 = vmatpush1.msra.mxu0 0.0
  %4797 = vmatprep.subr.mxu0 0.0
  %4798 = vmatpush1.msra.mxu0 0.0
  %4799 = vmatprep.subr.mxu0 0.0
  %4800 = vmatpush1.msra.mxu0 0.0
  %4801 = vmatprep.subr.mxu0 0.0
  %4802 = vmatpush1.msra.mxu0 0.0
  %4803 = vmatprep.subr.mxu0 0.0
  %4804 = vmatpush1.msra.mxu0 0.0
  %4805 = vmatprep.subr.mxu0 0.0
  %4806 = vmatpush1.msra.mxu0 0.0
  %4807 = vmatprep.subr.mxu0 0.0
  %4808 = vmatpush1.msra.mxu0 0.0
  %4809 = vmatprep.subr.mxu0 0.0
  %4810 = vmatpush1.msra.mxu0 0.0
  %4811 = vmatprep.subr.mxu0 0.0
  %4812 = vmatpush1.msra.mxu0 0.0
  %4813 = vmatprep.mubr.f32.mxu0 0.0
  %4814 = vmatmul.mubr.f32.gmra.mrb[0].mxu0 %v4743
  %v4815 = vpop.f32.mrb[0].mxu0
  %v4816 = vadd.f32 0.0, %v4815
  %v4817 = vpop.f32.mrb[0].mxu0
  %v4818 = vadd.f32 0.0, %v4817
  %4819 = vdwg.mxu0
  %4820 = vmatprep.subr.mxu0 %v4509
  %4821 = vmatpush1.msra.mxu0 %v4508
  %4822 = vmatprep.subr.mxu0 %v4513
  %4823 = vmatpush1.msra.mxu0 %v4512
  %4824 = vmatprep.subr.mxu0 %v4517
  %4825 = vmatpush1.msra.mxu0 %v4516
  %4826 = vmatprep.subr.mxu0 %v4521
  %4827 = vmatpush1.msra.mxu0 %v4520
  %4828 = vmatprep.subr.mxu0 %v4525
  %4829 = vmatpush1.msra.mxu0 %v4524
  %4830 = vmatprep.subr.mxu0 %v4529
  %4831 = vmatpush1.msra.mxu0 %v4528
  %4832 = vmatprep.subr.mxu0 %v4533
  %4833 = vmatpush1.msra.mxu0 %v4532
  %4834 = vmatprep.subr.mxu0 %v4537
  %4835 = vmatpush1.msra.mxu0 %v4536
  %4836 = vmatprep.subr.mxu0 %v4541
  %4837 = vmatpush1.msra.mxu0 %v4540
  %4838 = vmatprep.subr.mxu0 %v4545
  %4839 = vmatpush1.msra.mxu0 %v4544
  %4840 = vmatprep.subr.mxu0 %v4549
  %4841 = vmatpush1.msra.mxu0 %v4548
  %4842 = vmatprep.subr.mxu0 %v4553
  %4843 = vmatpush1.msra.mxu0 %v4552
  %4844 = vmatprep.subr.mxu0 %v4557
  %4845 = vmatpush1.msra.mxu0 %v4556
  %4846 = vmatprep.subr.mxu0 %v4561
  %4847 = vmatpush1.msra.mxu0 %v4560
  %4848 = vmatprep.subr.mxu0 %v4565
  %4849 = vmatpush1.msra.mxu0 %v4564
  %4850 = vmatprep.subr.mxu0 %v4569
  %4851 = vmatpush1.msra.mxu0 %v4568
  %4852 = vmatprep.subr.mxu0 0.0
  %4853 = vmatpush1.msra.mxu0 0.0
  %4854 = vmatprep.subr.mxu0 0.0
  %4855 = vmatpush1.msra.mxu0 0.0
  %4856 = vmatprep.subr.mxu0 0.0
  %4857 = vmatpush1.msra.mxu0 0.0
  %4858 = vmatprep.subr.mxu0 0.0
  %4859 = vmatpush1.msra.mxu0 0.0
  %4860 = vmatprep.subr.mxu0 0.0
  %4861 = vmatpush1.msra.mxu0 0.0
  %4862 = vmatprep.subr.mxu0 0.0
  %4863 = vmatpush1.msra.mxu0 0.0
  %4864 = vmatprep.subr.mxu0 0.0
  %4865 = vmatpush1.msra.mxu0 0.0
  %4866 = vmatprep.subr.mxu0 0.0
  %4867 = vmatpush1.msra.mxu0 0.0
  %4868 = vmatprep.subr.mxu0 0.0
  %4869 = vmatpush1.msra.mxu0 0.0
  %4870 = vmatprep.subr.mxu0 0.0
  %4871 = vmatpush1.msra.mxu0 0.0
  %4872 = vmatprep.subr.mxu0 0.0
  %4873 = vmatpush1.msra.mxu0 0.0
  %4874 = vmatprep.subr.mxu0 0.0
  %4875 = vmatpush1.msra.mxu0 0.0
  %4876 = vmatprep.subr.mxu0 0.0
  %4877 = vmatpush1.msra.mxu0 0.0
  %4878 = vmatprep.subr.mxu0 0.0
  %4879 = vmatpush1.msra.mxu0 0.0
  %4880 = vmatprep.subr.mxu0 0.0
  %4881 = vmatpush1.msra.mxu0 0.0
  %4882 = vmatprep.subr.mxu0 0.0
  %4883 = vmatpush1.msra.mxu0 0.0
  %4884 = vmatprep.mubr.f32.mxu0 0.0
  %4885 = vmatmul.mubr.f32.gmra.mrb[0].mxu0 %v4743
  %v4886 = vpop.f32.mrb[0].mxu0
  %v4887 = vadd.f32 0.0, %v4886
  %v4888 = vpop.f32.mrb[0].mxu0
  %v4889 = vadd.f32 0.0, %v4888
  %4890 = vdwg.mxu0
  %v4891 = vadd.f32 %v4745, %v4816
  %v4892 = vadd.f32 %v4746, %v4818
  %v4893 = vadd.f32 %v4747, %v4887
  %v4894 = vadd.f32 %v4748, %v4889
  %v4895 = vxor.u32 %v4891, 2147483648
  %v4896 = vmul.f32 %v4895, 1.442695
  %v4897 = vpow.pop %v4896
  %v4898 = vadd.f32 %v4897, 1.0
  %v4899 = vrcp.pop %v4898
  %v4900 = vmul.f32 1.0, %v4899
  %v4901 = vxor.u32 %v4892, 2147483648
  %v4902 = vmul.f32 %v4901, 1.442695
  %v4903 = vpow.pop %v4902
  %v4904 = vadd.f32 %v4903, 1.0
  %v4905 = vrcp.pop %v4904
  %v4906 = vmul.f32 1.0, %v4905
  %v4907 = vtanh.pop %v4893
  %v4908 = vxor.u32 %v4894, 2147483648
  %v4909 = vmul.f32 %v4908, 1.442695
  %v4910 = vpow.pop %v4909
  %v4911 = vadd.f32 %v4910, 1.0
  %v4912 = vrcp.pop %v4911
  %v4913 = vmul.f32 1.0, %v4912
  %v4914 = vmul.f32 %v4906, %v4741
  %v4915 = vmul.f32 %v4900, %v4907
  %v4916 = vadd.f32 %v4914, %v4915
  %v4917 = vtanh.pop %v4916
  %v4918 = vmul.f32 %v4913, %v4917
  %4919 = vst [vmem:[#allocation8 + $0x8] sm:$0xff] %v4918
  %v4920 = vld [vmem:[#allocation4 + $0x40] sm:$0xff]
  %v4921 = vld [vmem:[#allocation4 + $0x48] sm:$0xff]
  %v4922 = vld [vmem:[#allocation4 + $0x50] sm:$0xff]
  %v4923 = vld [vmem:[#allocation4 + $0x58] sm:$0xff]
  %4924 = vmatprep.subr.mxu0 %v4507
  %4925 = vmatpush1.msra.mxu0 %v4506
  %4926 = vmatprep.subr.mxu0 %v4511
  %4927 = vmatpush1.msra.mxu0 %v4510
  %4928 = vmatprep.subr.mxu0 %v4515
  %4929 = vmatpush1.msra.mxu0 %v4514
  %4930 = vmatprep.subr.mxu0 %v4519
  %4931 = vmatpush1.msra.mxu0 %v4518
  %4932 = vmatprep.subr.mxu0 %v4523
  %4933 = vmatpush1.msra.mxu0 %v4522
  %4934 = vmatprep.subr.mxu0 %v4527
  %4935 = vmatpush1.msra.mxu0 %v4526
  %4936 = vmatprep.subr.mxu0 %v4531
  %4937 = vmatpush1.msra.mxu0 %v4530
  %4938 = vmatprep.subr.mxu0 %v4535
  %4939 = vmatpush1.msra.mxu0 %v4534
  %4940 = vmatprep.subr.mxu0 %v4539
  %4941 = vmatpush1.msra.mxu0 %v4538
  %4942 = vmatprep.subr.mxu0 %v4543
  %4943 = vmatpush1.msra.mxu0 %v4542
  %4944 = vmatprep.subr.mxu0 %v4547
  %4945 = vmatpush1.msra.mxu0 %v4546
  %4946 = vmatprep.subr.mxu0 %v4551
  %4947 = vmatpush1.msra.mxu0 %v4550
  %4948 = vmatprep.subr.mxu0 %v4555
  %4949 = vmatpush1.msra.mxu0 %v4554
  %4950 = vmatprep.subr.mxu0 %v4559
  %4951 = vmatpush1.msra.mxu0 %v4558
  %4952 = vmatprep.subr.mxu0 %v4563
  %4953 = vmatpush1.msra.mxu0 %v4562
  %4954 = vmatprep.subr.mxu0 %v4567
  %4955 = vmatpush1.msra.mxu0 %v4566
  %4956 = vmatprep.subr.mxu0 0.0
  %4957 = vmatpush1.msra.mxu0 0.0
  %4958 = vmatprep.subr.mxu0 0.0
  %4959 = vmatpush1.msra.mxu0 0.0
  %4960 = vmatprep.subr.mxu0 0.0
  %4961 = vmatpush1.msra.mxu0 0.0
  %4962 = vmatprep.subr.mxu0 0.0
  %4963 = vmatpush1.msra.mxu0 0.0
  %4964 = vmatprep.subr.mxu0 0.0
  %4965 = vmatpush1.msra.mxu0 0.0
  %4966 = vmatprep.subr.mxu0 0.0
  %4967 = vmatpush1.msra.mxu0 0.0
  %4968 = vmatprep.subr.mxu0 0.0
  %4969 = vmatpush1.msra.mxu0 0.0
  %4970 = vmatprep.subr.mxu0 0.0
  %4971 = vmatpush1.msra.mxu0 0.0
  %4972 = vmatprep.subr.mxu0 0.0
  %4973 = vmatpush1.msra.mxu0 0.0
  %4974 = vmatprep.subr.mxu0 0.0
  %4975 = vmatpush1.msra.mxu0 0.0
  %4976 = vmatprep.subr.mxu0 0.0
  %4977 = vmatpush1.msra.mxu0 0.0
  %4978 = vmatprep.subr.mxu0 0.0
  %4979 = vmatpush1.msra.mxu0 0.0
  %4980 = vmatprep.subr.mxu0 0.0
  %4981 = vmatpush1.msra.mxu0 0.0
  %4982 = vmatprep.subr.mxu0 0.0
  %4983 = vmatpush1.msra.mxu0 0.0
  %4984 = vmatprep.subr.mxu0 0.0
  %4985 = vmatpush1.msra.mxu0 0.0
  %4986 = vmatprep.subr.mxu0 0.0
  %4987 = vmatpush1.msra.mxu0 0.0
  %4988 = vmatprep.mubr.f32.mxu0 0.0
  %4989 = vmatmul.mubr.f32.gmra.mrb[0].mxu0 %v4918
  %v4990 = vpop.f32.mrb[0].mxu0
  %v4991 = vadd.f32 0.0, %v4990
  %v4992 = vpop.f32.mrb[0].mxu0
  %v4993 = vadd.f32 0.0, %v4992
  %4994 = vdwg.mxu0
  %4995 = vmatprep.subr.mxu0 %v4509
  %4996 = vmatpush1.msra.mxu0 %v4508
  %4997 = vmatprep.subr.mxu0 %v4513
  %4998 = vmatpush1.msra.mxu0 %v4512
  %4999 = vmatprep.subr.mxu0 %v4517
  %5000 = vmatpush1.msra.mxu0 %v4516
  %5001 = vmatprep.subr.mxu0 %v4521
  %5002 = vmatpush1.msra.mxu0 %v4520
  %5003 = vmatprep.subr.mxu0 %v4525
  %5004 = vmatpush1.msra.mxu0 %v4524
  %5005 = vmatprep.subr.mxu0 %v4529
  %5006 = vmatpush1.msra.mxu0 %v4528
  %5007 = vmatprep.subr.mxu0 %v4533
  %5008 = vmatpush1.msra.mxu0 %v4532
  %5009 = vmatprep.subr.mxu0 %v4537
  %5010 = vmatpush1.msra.mxu0 %v4536
  %5011 = vmatprep.subr.mxu0 %v4541
  %5012 = vmatpush1.msra.mxu0 %v4540
  %5013 = vmatprep.subr.mxu0 %v4545
  %5014 = vmatpush1.msra.mxu0 %v4544
  %5015 = vmatprep.subr.mxu0 %v4549
  %5016 = vmatpush1.msra.mxu0 %v4548
  %5017 = vmatprep.subr.mxu0 %v4553
  %5018 = vmatpush1.msra.mxu0 %v4552
  %5019 = vmatprep.subr.mxu0 %v4557
  %5020 = vmatpush1.msra.mxu0 %v4556
  %5021 = vmatprep.subr.mxu0 %v4561
  %5022 = vmatpush1.msra.mxu0 %v4560
  %5023 = vmatprep.subr.mxu0 %v4565
  %5024 = vmatpush1.msra.mxu0 %v4564
  %5025 = vmatprep.subr.mxu0 %v4569
  %5026 = vmatpush1.msra.mxu0 %v4568
  %5027 = vmatprep.subr.mxu0 0.0
  %5028 = vmatpush1.msra.mxu0 0.0
  %5029 = vmatprep.subr.mxu0 0.0
  %5030 = vmatpush1.msra.mxu0 0.0
  %5031 = vmatprep.subr.mxu0 0.0
  %5032 = vmatpush1.msra.mxu0 0.0
  %5033 = vmatprep.subr.mxu0 0.0
  %5034 = vmatpush1.msra.mxu0 0.0
  %5035 = vmatprep.subr.mxu0 0.0
  %5036 = vmatpush1.msra.mxu0 0.0
  %5037 = vmatprep.subr.mxu0 0.0
  %5038 = vmatpush1.msra.mxu0 0.0
  %5039 = vmatprep.subr.mxu0 0.0
  %5040 = vmatpush1.msra.mxu0 0.0
  %5041 = vmatprep.subr.mxu0 0.0
  %5042 = vmatpush1.msra.mxu0 0.0
  %5043 = vmatprep.subr.mxu0 0.0
  %5044 = vmatpush1.msra.mxu0 0.0
  %5045 = vmatprep.subr.mxu0 0.0
  %5046 = vmatpush1.msra.mxu0 0.0
  %5047 = vmatprep.subr.mxu0 0.0
  %5048 = vmatpush1.msra.mxu0 0.0
  %5049 = vmatprep.subr.mxu0 0.0
  %5050 = vmatpush1.msra.mxu0 0.0
  %5051 = vmatprep.subr.mxu0 0.0
  %5052 = vmatpush1.msra.mxu0 0.0
  %5053 = vmatprep.subr.mxu0 0.0
  %5054 = vmatpush1.msra.mxu0 0.0
  %5055 = vmatprep.subr.mxu0 0.0
  %5056 = vmatpush1.msra.mxu0 0.0
  %5057 = vmatprep.subr.mxu0 0.0
  %5058 = vmatpush1.msra.mxu0 0.0
  %5059 = vmatprep.mubr.f32.mxu0 0.0
  %5060 = vmatmul.mubr.f32.gmra.mrb[0].mxu0 %v4918
  %v5061 = vpop.f32.mrb[0].mxu0
  %v5062 = vadd.f32 0.0, %v5061
  %v5063 = vpop.f32.mrb[0].mxu0
  %v5064 = vadd.f32 0.0, %v5063
  %5065 = vdwg.mxu0
  %v5066 = vadd.f32 %v4920, %v4991
  %v5067 = vadd.f32 %v4921, %v4993
  %v5068 = vadd.f32 %v4922, %v5062
  %v5069 = vadd.f32 %v4923, %v5064
  %v5070 = vxor.u32 %v5066, 2147483648
  %v5071 = vmul.f32 %v5070, 1.442695
  %v5072 = vpow.pop %v5071
  %v5073 = vadd.f32 %v5072, 1.0
  %v5074 = vrcp.pop %v5073
  %v5075 = vmul.f32 1.0, %v5074
  %v5076 = vxor.u32 %v5067, 2147483648
  %v5077 = vmul.f32 %v5076, 1.442695
  %v5078 = vpow.pop %v5077
  %v5079 = vadd.f32 %v5078, 1.0
  %v5080 = vrcp.pop %v5079
  %v5081 = vmul.f32 1.0, %v5080
  %v5082 = vtanh.pop %v5068
  %v5083 = vxor.u32 %v5069, 2147483648
  %v5084 = vmul.f32 %v5083, 1.442695
  %v5085 = vpow.pop %v5084
  %v5086 = vadd.f32 %v5085, 1.0
  %v5087 = vrcp.pop %v5086
  %v5088 = vmul.f32 1.0, %v5087
  %v5089 = vmul.f32 %v5081, %v4916
  %v5090 = vmul.f32 %v5075, %v5082
  %v5091 = vadd.f32 %v5089, %v5090
  %v5092 = vtanh.pop %v5091
  %v5093 = vmul.f32 %v5088, %v5092
  %5094 = vst [vmem:[#allocation8 + $0x10] sm:$0xff] %v5093
  %v5095 = vld [vmem:[#allocation4 + $0x60] sm:$0xff]
  %v5096 = vld [vmem:[#allocation4 + $0x68] sm:$0xff]
  %v5097 = vld [vmem:[#allocation4 + $0x70] sm:$0xff]
  %v5098 = vld [vmem:[#allocation4 + $0x78] sm:$0xff]
  %5099 = vmatprep.subr.mxu0 %v4507
  %5100 = vmatpush1.msra.mxu0 %v4506
  %5101 = vmatprep.subr.mxu0 %v4511
  %5102 = vmatpush1.msra.mxu0 %v4510
  %5103 = vmatprep.subr.mxu0 %v4515
  %5104 = vmatpush1.msra.mxu0 %v4514
  %5105 = vmatprep.subr.mxu0 %v4519
  %5106 = vmatpush1.msra.mxu0 %v4518
  %5107 = vmatprep.subr.mxu0 %v4523
  %5108 = vmatpush1.msra.mxu0 %v4522
  %5109 = vmatprep.subr.mxu0 %v4527
  %5110 = vmatpush1.msra.mxu0 %v4526
  %5111 = vmatprep.subr.mxu0 %v4531
  %5112 = vmatpush1.msra.mxu0 %v4530
  %5113 = vmatprep.subr.mxu0 %v4535
  %5114 = vmatpush1.msra.mxu0 %v4534
  %5115 = vmatprep.subr.mxu0 %v4539
  %5116 = vmatpush1.msra.mxu0 %v4538
  %5117 = vmatprep.subr.mxu0 %v4543
  %5118 = vmatpush1.msra.mxu0 %v4542
  %5119 = vmatprep.subr.mxu0 %v4547
  %5120 = vmatpush1.msra.mxu0 %v4546
  %5121 = vmatprep.subr.mxu0 %v4551
  %5122 = vmatpush1.msra.mxu0 %v4550
  %5123 = vmatprep.subr.mxu0 %v4555
  %5124 = vmatpush1.msra.mxu0 %v4554
  %5125 = vmatprep.subr.mxu0 %v4559
  %5126 = vmatpush1.msra.mxu0 %v4558
  %5127 = vmatprep.subr.mxu0 %v4563
  %5128 = vmatpush1.msra.mxu0 %v4562
  %5129 = vmatprep.subr.mxu0 %v4567
  %5130 = vmatpush1.msra.mxu0 %v4566
  %5131 = vmatprep.subr.mxu0 0.0
  %5132 = vmatpush1.msra.mxu0 0.0
  %5133 = vmatprep.subr.mxu0 0.0
  %5134 = vmatpush1.msra.mxu0 0.0
  %5135 = vmatprep.subr.mxu0 0.0
  %5136 = vmatpush1.msra.mxu0 0.0
  %5137 = vmatprep.subr.mxu0 0.0
  %5138 = vmatpush1.msra.mxu0 0.0
  %5139 = vmatprep.subr.mxu0 0.0
  %5140 = vmatpush1.msra.mxu0 0.0
  %5141 = vmatprep.subr.mxu0 0.0
  %5142 = vmatpush1.msra.mxu0 0.0
  %5143 = vmatprep.subr.mxu0 0.0
  %5144 = vmatpush1.msra.mxu0 0.0
  %5145 = vmatprep.subr.mxu0 0.0
  %5146 = vmatpush1.msra.mxu0 0.0
  %5147 = vmatprep.subr.mxu0 0.0
  %5148 = vmatpush1.msra.mxu0 0.0
  %5149 = vmatprep.subr.mxu0 0.0
  %5150 = vmatpush1.msra.mxu0 0.0
  %5151 = vmatprep.subr.mxu0 0.0
  %5152 = vmatpush1.msra.mxu0 0.0
  %5153 = vmatprep.subr.mxu0 0.0
  %5154 = vmatpush1.msra.mxu0 0.0
  %5155 = vmatprep.subr.mxu0 0.0
  %5156 = vmatpush1.msra.mxu0 0.0
  %5157 = vmatprep.subr.mxu0 0.0
  %5158 = vmatpush1.msra.mxu0 0.0
  %5159 = vmatprep.subr.mxu0 0.0
  %5160 = vmatpush1.msra.mxu0 0.0
  %5161 = vmatprep.subr.mxu0 0.0
  %5162 = vmatpush1.msra.mxu0 0.0
  %5163 = vmatprep.mubr.f32.mxu0 0.0
  %5164 = vmatmul.mubr.f32.gmra.mrb[0].mxu0 %v5093
  %v5165 = vpop.f32.mrb[0].mxu0
  %v5166 = vadd.f32 0.0, %v5165
  %v5167 = vpop.f32.mrb[0].mxu0
  %v5168 = vadd.f32 0.0, %v5167
  %5169 = vdwg.mxu0
  %5170 = vmatprep.subr.mxu0 %v4509
  %5171 = vmatpush1.msra.mxu0 %v4508
  %5172 = vmatprep.subr.mxu0 %v4513
  %5173 = vmatpush1.msra.mxu0 %v4512
  %5174 = vmatprep.subr.mxu0 %v4517
  %5175 = vmatpush1.msra.mxu0 %v4516
  %5176 = vmatprep.subr.mxu0 %v4521
  %5177 = vmatpush1.msra.mxu0 %v4520
  %5178 = vmatprep.subr.mxu0 %v4525
  %5179 = vmatpush1.msra.mxu0 %v4524
  %5180 = vmatprep.subr.mxu0 %v4529
  %5181 = vmatpush1.msra.mxu0 %v4528
  %5182 = vmatprep.subr.mxu0 %v4533
  %5183 = vmatpush1.msra.mxu0 %v4532
  %5184 = vmatprep.subr.mxu0 %v4537
  %5185 = vmatpush1.msra.mxu0 %v4536
  %5186 = vmatprep.subr.mxu0 %v4541
  %5187 = vmatpush1.msra.mxu0 %v4540
  %5188 = vmatprep.subr.mxu0 %v4545
  %5189 = vmatpush1.msra.mxu0 %v4544
  %5190 = vmatprep.subr.mxu0 %v4549
  %5191 = vmatpush1.msra.mxu0 %v4548
  %5192 = vmatprep.subr.mxu0 %v4553
  %5193 = vmatpush1.msra.mxu0 %v4552
  %5194 = vmatprep.subr.mxu0 %v4557
  %5195 = vmatpush1.msra.mxu0 %v4556
  %5196 = vmatprep.subr.mxu0 %v4561
  %5197 = vmatpush1.msra.mxu0 %v4560
  %5198 = vmatprep.subr.mxu0 %v4565
  %5199 = vmatpush1.msra.mxu0 %v4564
  %5200 = vmatprep.subr.mxu0 %v4569
  %5201 = vmatpush1.msra.mxu0 %v4568
  %5202 = vmatprep.subr.mxu0 0.0
  %5203 = vmatpush1.msra.mxu0 0.0
  %5204 = vmatprep.subr.mxu0 0.0
  %5205 = vmatpush1.msra.mxu0 0.0
  %5206 = vmatprep.subr.mxu0 0.0
  %5207 = vmatpush1.msra.mxu0 0.0
  %5208 = vmatprep.subr.mxu0 0.0
  %5209 = vmatpush1.msra.mxu0 0.0
  %5210 = vmatprep.subr.mxu0 0.0
  %5211 = vmatpush1.msra.mxu0 0.0
  %5212 = vmatprep.subr.mxu0 0.0
  %5213 = vmatpush1.msra.mxu0 0.0
  %5214 = vmatprep.subr.mxu0 0.0
  %5215 = vmatpush1.msra.mxu0 0.0
  %5216 = vmatprep.subr.mxu0 0.0
  %5217 = vmatpush1.msra.mxu0 0.0
  %5218 = vmatprep.subr.mxu0 0.0
  %5219 = vmatpush1.msra.mxu0 0.0
  %5220 = vmatprep.subr.mxu0 0.0
  %5221 = vmatpush1.msra.mxu0 0.0
  %5222 = vmatprep.subr.mxu0 0.0
  %5223 = vmatpush1.msra.mxu0 0.0
  %5224 = vmatprep.subr.mxu0 0.0
  %5225 = vmatpush1.msra.mxu0 0.0
  %5226 = vmatprep.subr.mxu0 0.0
  %5227 = vmatpush1.msra.mxu0 0.0
  %5228 = vmatprep.subr.mxu0 0.0
  %5229 = vmatpush1.msra.mxu0 0.0
  %5230 = vmatprep.subr.mxu0 0.0
  %5231 = vmatpush1.msra.mxu0 0.0
  %5232 = vmatprep.subr.mxu0 0.0
  %5233 = vmatpush1.msra.mxu0 0.0
  %5234 = vmatprep.mubr.f32.mxu0 0.0
  %5235 = vmatmul.mubr.f32.gmra.mrb[0].mxu0 %v5093
  %v5236 = vpop.f32.mrb[0].mxu0
  %v5237 = vadd.f32 0.0, %v5236
  %v5238 = vpop.f32.mrb[0].mxu0
  %v5239 = vadd.f32 0.0, %v5238
  %5240 = vdwg.mxu0
  %v5241 = vadd.f32 %v5095, %v5166
  %v5242 = vadd.f32 %v5096, %v5168
  %v5243 = vadd.f32 %v5097, %v5237
  %v5244 = vadd.f32 %v5098, %v5239
  %v5245 = vxor.u32 %v5241, 2147483648
  %v5246 = vmul.f32 %v5245, 1.442695
  %v5247 = vpow.pop %v5246
  %v5248 = vadd.f32 %v5247, 1.0
  %v5249 = vrcp.pop %v5248
  %v5250 = vmul.f32 1.0, %v5249
  %v5251 = vxor.u32 %v5242, 2147483648
  %v5252 = vmul.f32 %v5251, 1.442695
  %v5253 = vpow.pop %v5252
  %v5254 = vadd.f32 %v5253, 1.0
  %v5255 = vrcp.pop %v5254
  %v5256 = vmul.f32 1.0, %v5255
  %v5257 = vtanh.pop %v5243
  %v5258 = vxor.u32 %v5244, 2147483648
  %v5259 = vmul.f32 %v5258, 1.442695
  %v5260 = vpow.pop %v5259
  %v5261 = vadd.f32 %v5260, 1.0
  %v5262 = vrcp.pop %v5261
  %v5263 = vmul.f32 1.0, %v5262
  %v5264 = vmul.f32 %v5256, %v5091
  %v5265 = vmul.f32 %v5250, %v5257
  %v5266 = vadd.f32 %v5264, %v5265
  %v5267 = vtanh.pop %v5266
  %v5268 = vmul.f32 %v5263, %v5267
  %5269 = vst [vmem:[#allocation8 + $0x18] sm:$0xff] %v5268
  %v5270 = vld [vmem:[#allocation4 + $0x80] sm:$0xff]
  %v5271 = vld [vmem:[#allocation4 + $0x88] sm:$0xff]
  %v5272 = vld [vmem:[#allocation4 + $0x90] sm:$0xff]
  %v5273 = vld [vmem:[#allocation4 + $0x98] sm:$0xff]
  %5274 = vmatprep.subr.mxu0 %v4507
  %5275 = vmatpush1.msra.mxu0 %v4506
  %5276 = vmatprep.subr.mxu0 %v4511
  %5277 = vmatpush1.msra.mxu0 %v4510
  %5278 = vmatprep.subr.mxu0 %v4515
  %5279 = vmatpush1.msra.mxu0 %v4514
  %5280 = vmatprep.subr.mxu0 %v4519
  %5281 = vmatpush1.msra.mxu0 %v4518
  %5282 = vmatprep.subr.mxu0 %v4523
  %5283 = vmatpush1.msra.mxu0 %v4522
  %5284 = vmatprep.subr.mxu0 %v4527
  %5285 = vmatpush1.msra.mxu0 %v4526
  %5286 = vmatprep.subr.mxu0 %v4531
  %5287 = vmatpush1.msra.mxu0 %v4530
  %5288 = vmatprep.subr.mxu0 %v4535
  %5289 = vmatpush1.msra.mxu0 %v4534
  %5290 = vmatprep.subr.mxu0 %v4539
  %5291 = vmatpush1.msra.mxu0 %v4538
  %5292 = vmatprep.subr.mxu0 %v4543
  %5293 = vmatpush1.msra.mxu0 %v4542
  %5294 = vmatprep.subr.mxu0 %v4547
  %5295 = vmatpush1.msra.mxu0 %v4546
  %5296 = vmatprep.subr.mxu0 %v4551
  %5297 = vmatpush1.msra.mxu0 %v4550
  %5298 = vmatprep.subr.mxu0 %v4555
  %5299 = vmatpush1.msra.mxu0 %v4554
  %5300 = vmatprep.subr.mxu0 %v4559
  %5301 = vmatpush1.msra.mxu0 %v4558
  %5302 = vmatprep.subr.mxu0 %v4563
  %5303 = vmatpush1.msra.mxu0 %v4562
  %5304 = vmatprep.subr.mxu0 %v4567
  %5305 = vmatpush1.msra.mxu0 %v4566
  %5306 = vmatprep.subr.mxu0 0.0
  %5307 = vmatpush1.msra.mxu0 0.0
  %5308 = vmatprep.subr.mxu0 0.0
  %5309 = vmatpush1.msra.mxu0 0.0
  %5310 = vmatprep.subr.mxu0 0.0
  %5311 = vmatpush1.msra.mxu0 0.0
  %5312 = vmatprep.subr.mxu0 0.0
  %5313 = vmatpush1.msra.mxu0 0.0
  %5314 = vmatprep.subr.mxu0 0.0
  %5315 = vmatpush1.msra.mxu0 0.0
  %5316 = vmatprep.subr.mxu0 0.0
  %5317 = vmatpush1.msra.mxu0 0.0
  %5318 = vmatprep.subr.mxu0 0.0
  %5319 = vmatpush1.msra.mxu0 0.0
  %5320 = vmatprep.subr.mxu0 0.0
  %5321 = vmatpush1.msra.mxu0 0.0
  %5322 = vmatprep.subr.mxu0 0.0
  %5323 = vmatpush1.msra.mxu0 0.0
  %5324 = vmatprep.subr.mxu0 0.0
  %5325 = vmatpush1.msra.mxu0 0.0
  %5326 = vmatprep.subr.mxu0 0.0
  %5327 = vmatpush1.msra.mxu0 0.0
  %5328 = vmatprep.subr.mxu0 0.0
  %5329 = vmatpush1.msra.mxu0 0.0
  %5330 = vmatprep.subr.mxu0 0.0
  %5331 = vmatpush1.msra.mxu0 0.0
  %5332 = vmatprep.subr.mxu0 0.0
  %5333 = vmatpush1.msra.mxu0 0.0
  %5334 = vmatprep.subr.mxu0 0.0
  %5335 = vmatpush1.msra.mxu0 0.0
  %5336 = vmatprep.subr.mxu0 0.0
  %5337 = vmatpush1.msra.mxu0 0.0
  %5338 = vmatprep.mubr.f32.mxu0 0.0
  %5339 = vmatmul.mubr.f32.gmra.mrb[0].mxu0 %v5268
  %v5340 = vpop.f32.mrb[0].mxu0
  %v5341 = vadd.f32 0.0, %v5340
  %v5342 = vpop.f32.mrb[0].mxu0
  %v5343 = vadd.f32 0.0, %v5342
  %5344 = vdwg.mxu0
  %5345 = vmatprep.subr.mxu0 %v4509
  %5346 = vmatpush1.msra.mxu0 %v4508
  %5347 = vmatprep.subr.mxu0 %v4513
  %5348 = vmatpush1.msra.mxu0 %v4512
  %5349 = vmatprep.subr.mxu0 %v4517
  %5350 = vmatpush1.msra.mxu0 %v4516
  %5351 = vmatprep.subr.mxu0 %v4521
  %5352 = vmatpush1.msra.mxu0 %v4520
  %5353 = vmatprep.subr.mxu0 %v4525
  %5354 = vmatpush1.msra.mxu0 %v4524
  %5355 = vmatprep.subr.mxu0 %v4529
  %5356 = vmatpush1.msra.mxu0 %v4528
  %5357 = vmatprep.subr.mxu0 %v4533
  %5358 = vmatpush1.msra.mxu0 %v4532
  %5359 = vmatprep.subr.mxu0 %v4537
  %5360 = vmatpush1.msra.mxu0 %v4536
  %5361 = vmatprep.subr.mxu0 %v4541
  %5362 = vmatpush1.msra.mxu0 %v4540
  %5363 = vmatprep.subr.mxu0 %v4545
  %5364 = vmatpush1.msra.mxu0 %v4544
  %5365 = vmatprep.subr.mxu0 %v4549
  %5366 = vmatpush1.msra.mxu0 %v4548
  %5367 = vmatprep.subr.mxu0 %v4553
  %5368 = vmatpush1.msra.mxu0 %v4552
  %5369 = vmatprep.subr.mxu0 %v4557
  %5370 = vmatpush1.msra.mxu0 %v4556
  %5371 = vmatprep.subr.mxu0 %v4561
  %5372 = vmatpush1.msra.mxu0 %v4560
  %5373 = vmatprep.subr.mxu0 %v4565
  %5374 = vmatpush1.msra.mxu0 %v4564
  %5375 = vmatprep.subr.mxu0 %v4569
  %5376 = vmatpush1.msra.mxu0 %v4568
  %5377 = vmatprep.subr.mxu0 0.0
  %5378 = vmatpush1.msra.mxu0 0.0
  %5379 = vmatprep.subr.mxu0 0.0
  %5380 = vmatpush1.msra.mxu0 0.0
  %5381 = vmatprep.subr.mxu0 0.0
  %5382 = vmatpush1.msra.mxu0 0.0
  %5383 = vmatprep.subr.mxu0 0.0
  %5384 = vmatpush1.msra.mxu0 0.0
  %5385 = vmatprep.subr.mxu0 0.0
  %5386 = vmatpush1.msra.mxu0 0.0
  %5387 = vmatprep.subr.mxu0 0.0
  %5388 = vmatpush1.msra.mxu0 0.0
  %5389 = vmatprep.subr.mxu0 0.0
  %5390 = vmatpush1.msra.mxu0 0.0
  %5391 = vmatprep.subr.mxu0 0.0
  %5392 = vmatpush1.msra.mxu0 0.0
  %5393 = vmatprep.subr.mxu0 0.0
  %5394 = vmatpush1.msra.mxu0 0.0
  %5395 = vmatprep.subr.mxu0 0.0
  %5396 = vmatpush1.msra.mxu0 0.0
  %5397 = vmatprep.subr.mxu0 0.0
  %5398 = vmatpush1.msra.mxu0 0.0
  %5399 = vmatprep.subr.mxu0 0.0
  %5400 = vmatpush1.msra.mxu0 0.0
  %5401 = vmatprep.subr.mxu0 0.0
  %5402 = vmatpush1.msra.mxu0 0.0
  %5403 = vmatprep.subr.mxu0 0.0
  %5404 = vmatpush1.msra.mxu0 0.0
  %5405 = vmatprep.subr.mxu0 0.0
  %5406 = vmatpush1.msra.mxu0 0.0
  %5407 = vmatprep.subr.mxu0 0.0
  %5408 = vmatpush1.msra.mxu0 0.0
  %5409 = vmatprep.mubr.f32.mxu0 0.0
  %5410 = vmatmul.mubr.f32.gmra.mrb[0].mxu0 %v5268
  %v5411 = vpop.f32.mrb[0].mxu0
  %v5412 = vadd.f32 0.0, %v5411
  %v5413 = vpop.f32.mrb[0].mxu0
  %v5414 = vadd.f32 0.0, %v5413
  %5415 = vdwg.mxu0
  %v5416 = vadd.f32 %v5270, %v5341
  %v5417 = vadd.f32 %v5271, %v5343
  %v5418 = vadd.f32 %v5272, %v5412
  %v5419 = vadd.f32 %v5273, %v5414
  %v5420 = vxor.u32 %v5416, 2147483648
  %v5421 = vmul.f32 %v5420, 1.442695
  %v5422 = vpow.pop %v5421
  %v5423 = vadd.f32 %v5422, 1.0
  %v5424 = vrcp.pop %v5423
  %v5425 = vmul.f32 1.0, %v5424
  %v5426 = vxor.u32 %v5417, 2147483648
  %v5427 = vmul.f32 %v5426, 1.442695
  %v5428 = vpow.pop %v5427
  %v5429 = vadd.f32 %v5428, 1.0
  %v5430 = vrcp.pop %v5429
  %v5431 = vmul.f32 1.0, %v5430
  %v5432 = vtanh.pop %v5418
  %v5433 = vxor.u32 %v5419, 2147483648
  %v5434 = vmul.f32 %v5433, 1.442695
  %v5435 = vpow.pop %v5434
  %v5436 = vadd.f32 %v5435, 1.0
  %v5437 = vrcp.pop %v5436
  %v5438 = vmul.f32 1.0, %v5437
  %v5439 = vmul.f32 %v5431, %v5266
  %v5440 = vmul.f32 %v5425, %v5432
  %v5441 = vadd.f32 %v5439, %v5440
  %v5442 = vtanh.pop %v5441
  %v5443 = vmul.f32 %v5438, %v5442
  %5444 = vst [vmem:[#allocation8 + $0x20] sm:$0xff] %v5443
  %v5445 = vld [vmem:[#allocation4 + $0xa0] sm:$0xff]
  %v5446 = vld [vmem:[#allocation4 + $0xa8] sm:$0xff]
  %v5447 = vld [vmem:[#allocation4 + $0xb0] sm:$0xff]
  %v5448 = vld [vmem:[#allocation4 + $0xb8] sm:$0xff]
  %5449 = vmatprep.subr.mxu0 %v4507
  %5450 = vmatpush1.msra.mxu0 %v4506
  %5451 = vmatprep.subr.mxu0 %v4511
  %5452 = vmatpush1.msra.mxu0 %v4510
  %5453 = vmatprep.subr.mxu0 %v4515
  %5454 = vmatpush1.msra.mxu0 %v4514
  %5455 = vmatprep.subr.mxu0 %v4519
  %5456 = vmatpush1.msra.mxu0 %v4518
  %5457 = vmatprep.subr.mxu0 %v4523
  %5458 = vmatpush1.msra.mxu0 %v4522
  %5459 = vmatprep.subr.mxu0 %v4527
  %5460 = vmatpush1.msra.mxu0 %v4526
  %5461 = vmatprep.subr.mxu0 %v4531
  %5462 = vmatpush1.msra.mxu0 %v4530
  %5463 = vmatprep.subr.mxu0 %v4535
  %5464 = vmatpush1.msra.mxu0 %v4534
  %5465 = vmatprep.subr.mxu0 %v4539
  %5466 = vmatpush1.msra.mxu0 %v4538
  %5467 = vmatprep.subr.mxu0 %v4543
  %5468 = vmatpush1.msra.mxu0 %v4542
  %5469 = vmatprep.subr.mxu0 %v4547
  %5470 = vmatpush1.msra.mxu0 %v4546
  %5471 = vmatprep.subr.mxu0 %v4551
  %5472 = vmatpush1.msra.mxu0 %v4550
  %5473 = vmatprep.subr.mxu0 %v4555
  %5474 = vmatpush1.msra.mxu0 %v4554
  %5475 = vmatprep.subr.mxu0 %v4559
  %5476 = vmatpush1.msra.mxu0 %v4558
  %5477 = vmatprep.subr.mxu0 %v4563
  %5478 = vmatpush1.msra.mxu0 %v4562
  %5479 = vmatprep.subr.mxu0 %v4567
  %5480 = vmatpush1.msra.mxu0 %v4566
  %5481 = vmatprep.subr.mxu0 0.0
  %5482 = vmatpush1.msra.mxu0 0.0
  %5483 = vmatprep.subr.mxu0 0.0
  %5484 = vmatpush1.msra.mxu0 0.0
  %5485 = vmatprep.subr.mxu0 0.0
  %5486 = vmatpush1.msra.mxu0 0.0
  %5487 = vmatprep.subr.mxu0 0.0
  %5488 = vmatpush1.msra.mxu0 0.0
  %5489 = vmatprep.subr.mxu0 0.0
  %5490 = vmatpush1.msra.mxu0 0.0
  %5491 = vmatprep.subr.mxu0 0.0
  %5492 = vmatpush1.msra.mxu0 0.0
  %5493 = vmatprep.subr.mxu0 0.0
  %5494 = vmatpush1.msra.mxu0 0.0
  %5495 = vmatprep.subr.mxu0 0.0
  %5496 = vmatpush1.msra.mxu0 0.0
  %5497 = vmatprep.subr.mxu0 0.0
  %5498 = vmatpush1.msra.mxu0 0.0
  %5499 = vmatprep.subr.mxu0 0.0
  %5500 = vmatpush1.msra.mxu0 0.0
  %5501 = vmatprep.subr.mxu0 0.0
  %5502 = vmatpush1.msra.mxu0 0.0
  %5503 = vmatprep.subr.mxu0 0.0
  %5504 = vmatpush1.msra.mxu0 0.0
  %5505 = vmatprep.subr.mxu0 0.0
  %5506 = vmatpush1.msra.mxu0 0.0
  %5507 = vmatprep.subr.mxu0 0.0
  %5508 = vmatpush1.msra.mxu0 0.0
  %5509 = vmatprep.subr.mxu0 0.0
  %5510 = vmatpush1.msra.mxu0 0.0
  %5511 = vmatprep.subr.mxu0 0.0
  %5512 = vmatpush1.msra.mxu0 0.0
  %5513 = vmatprep.mubr.f32.mxu0 0.0
  %5514 = vmatmul.mubr.f32.gmra.mrb[0].mxu0 %v5443
  %v5515 = vpop.f32.mrb[0].mxu0
  %v5516 = vadd.f32 0.0, %v5515
  %v5517 = vpop.f32.mrb[0].mxu0
  %v5518 = vadd.f32 0.0, %v5517
  %5519 = vdwg.mxu0
  %5520 = vmatprep.subr.mxu0 %v4509
  %5521 = vmatpush1.msra.mxu0 %v4508
  %5522 = vmatprep.subr.mxu0 %v4513
  %5523 = vmatpush1.msra.mxu0 %v4512
  %5524 = vmatprep.subr.mxu0 %v4517
  %5525 = vmatpush1.msra.mxu0 %v4516
  %5526 = vmatprep.subr.mxu0 %v4521
  %5527 = vmatpush1.msra.mxu0 %v4520
  %5528 = vmatprep.subr.mxu0 %v4525
  %5529 = vmatpush1.msra.mxu0 %v4524
  %5530 = vmatprep.subr.mxu0 %v4529
  %5531 = vmatpush1.msra.mxu0 %v4528
  %5532 = vmatprep.subr.mxu0 %v4533
  %5533 = vmatpush1.msra.mxu0 %v4532
  %5534 = vmatprep.subr.mxu0 %v4537
  %5535 = vmatpush1.msra.mxu0 %v4536
  %5536 = vmatprep.subr.mxu0 %v4541
  %5537 = vmatpush1.msra.mxu0 %v4540
  %5538 = vmatprep.subr.mxu0 %v4545
  %5539 = vmatpush1.msra.mxu0 %v4544
  %5540 = vmatprep.subr.mxu0 %v4549
  %5541 = vmatpush1.msra.mxu0 %v4548
  %5542 = vmatprep.subr.mxu0 %v4553
  %5543 = vmatpush1.msra.mxu0 %v4552
  %5544 = vmatprep.subr.mxu0 %v4557
  %5545 = vmatpush1.msra.mxu0 %v4556
  %5546 = vmatprep.subr.mxu0 %v4561
  %5547 = vmatpush1.msra.mxu0 %v4560
  %5548 = vmatprep.subr.mxu0 %v4565
  %5549 = vmatpush1.msra.mxu0 %v4564
  %5550 = vmatprep.subr.mxu0 %v4569
  %5551 = vmatpush1.msra.mxu0 %v4568
  %5552 = vmatprep.subr.mxu0 0.0
  %5553 = vmatpush1.msra.mxu0 0.0
  %5554 = vmatprep.subr.mxu0 0.0
  %5555 = vmatpush1.msra.mxu0 0.0
  %5556 = vmatprep.subr.mxu0 0.0
  %5557 = vmatpush1.msra.mxu0 0.0
  %5558 = vmatprep.subr.mxu0 0.0
  %5559 = vmatpush1.msra.mxu0 0.0
  %5560 = vmatprep.subr.mxu0 0.0
  %5561 = vmatpush1.msra.mxu0 0.0
  %5562 = vmatprep.subr.mxu0 0.0
  %5563 = vmatpush1.msra.mxu0 0.0
  %5564 = vmatprep.subr.mxu0 0.0
  %5565 = vmatpush1.msra.mxu0 0.0
  %5566 = vmatprep.subr.mxu0 0.0
  %5567 = vmatpush1.msra.mxu0 0.0
  %5568 = vmatprep.subr.mxu0 0.0
  %5569 = vmatpush1.msra.mxu0 0.0
  %5570 = vmatprep.subr.mxu0 0.0
  %5571 = vmatpush1.msra.mxu0 0.0
  %5572 = vmatprep.subr.mxu0 0.0
  %5573 = vmatpush1.msra.mxu0 0.0
  %5574 = vmatprep.subr.mxu0 0.0
  %5575 = vmatpush1.msra.mxu0 0.0
  %5576 = vmatprep.subr.mxu0 0.0
  %5577 = vmatpush1.msra.mxu0 0.0
  %5578 = vmatprep.subr.mxu0 0.0
  %5579 = vmatpush1.msra.mxu0 0.0
  %5580 = vmatprep.subr.mxu0 0.0
  %5581 = vmatpush1.msra.mxu0 0.0
  %5582 = vmatprep.subr.mxu0 0.0
  %5583 = vmatpush1.msra.mxu0 0.0
  %5584 = vmatprep.mubr.f32.mxu0 0.0
  %5585 = vmatmul.mubr.f32.gmra.mrb[0].mxu0 %v5443
  %v5586 = vpop.f32.mrb[0].mxu0
  %v5587 = vadd.f32 0.0, %v5586
  %v5588 = vpop.f32.mrb[0].mxu0
  %v5589 = vadd.f32 0.0, %v5588
  %5590 = vdwg.mxu0
  %v5591 = vadd.f32 %v5445, %v5516
  %v5592 = vadd.f32 %v5446, %v5518
  %v5593 = vadd.f32 %v5447, %v5587
  %v5594 = vadd.f32 %v5448, %v5589
  %v5595 = vxor.u32 %v5591, 2147483648
  %v5596 = vmul.f32 %v5595, 1.442695
  %v5597 = vpow.pop %v5596
  %v5598 = vadd.f32 %v5597, 1.0
  %v5599 = vrcp.pop %v5598
  %v5600 = vmul.f32 1.0, %v5599
  %v5601 = vxor.u32 %v5592, 2147483648
  %v5602 = vmul.f32 %v5601, 1.442695
  %v5603 = vpow.pop %v5602
  %v5604 = vadd.f32 %v5603, 1.0
  %v5605 = vrcp.pop %v5604
  %v5606 = vmul.f32 1.0, %v5605
  %v5607 = vtanh.pop %v5593
  %v5608 = vxor.u32 %v5594, 2147483648
  %v5609 = vmul.f32 %v5608, 1.442695
  %v5610 = vpow.pop %v5609
  %v5611 = vadd.f32 %v5610, 1.0
  %v5612 = vrcp.pop %v5611
  %v5613 = vmul.f32 1.0, %v5612
  %v5614 = vmul.f32 %v5606, %v5441
  %v5615 = vmul.f32 %v5600, %v5607
  %v5616 = vadd.f32 %v5614, %v5615
  %v5617 = vtanh.pop %v5616
  %v5618 = vmul.f32 %v5613, %v5617
  %5619 = vst [vmem:[#allocation8 + $0x28] sm:$0xff] %v5618
  %v5620 = vld [vmem:[#allocation4 + $0xc0] sm:$0xff]
  %v5621 = vld [vmem:[#allocation4 + $0xc8] sm:$0xff]
  %v5622 = vld [vmem:[#allocation4 + $0xd0] sm:$0xff]
  %v5623 = vld [vmem:[#allocation4 + $0xd8] sm:$0xff]
  %5624 = vmatprep.subr.mxu0 %v4507
  %5625 = vmatpush1.msra.mxu0 %v4506
  %5626 = vmatprep.subr.mxu0 %v4511
  %5627 = vmatpush1.msra.mxu0 %v4510
  %5628 = vmatprep.subr.mxu0 %v4515
  %5629 = vmatpush1.msra.mxu0 %v4514
  %5630 = vmatprep.subr.mxu0 %v4519
  %5631 = vmatpush1.msra.mxu0 %v4518
  %5632 = vmatprep.subr.mxu0 %v4523
  %5633 = vmatpush1.msra.mxu0 %v4522
  %5634 = vmatprep.subr.mxu0 %v4527
  %5635 = vmatpush1.msra.mxu0 %v4526
  %5636 = vmatprep.subr.mxu0 %v4531
  %5637 = vmatpush1.msra.mxu0 %v4530
  %5638 = vmatprep.subr.mxu0 %v4535
  %5639 = vmatpush1.msra.mxu0 %v4534
  %5640 = vmatprep.subr.mxu0 %v4539
  %5641 = vmatpush1.msra.mxu0 %v4538
  %5642 = vmatprep.subr.mxu0 %v4543
  %5643 = vmatpush1.msra.mxu0 %v4542
  %5644 = vmatprep.subr.mxu0 %v4547
  %5645 = vmatpush1.msra.mxu0 %v4546
  %5646 = vmatprep.subr.mxu0 %v4551
  %5647 = vmatpush1.msra.mxu0 %v4550
  %5648 = vmatprep.subr.mxu0 %v4555
  %5649 = vmatpush1.msra.mxu0 %v4554
  %5650 = vmatprep.subr.mxu0 %v4559
  %5651 = vmatpush1.msra.mxu0 %v4558
  %5652 = vmatprep.subr.mxu0 %v4563
  %5653 = vmatpush1.msra.mxu0 %v4562
  %5654 = vmatprep.subr.mxu0 %v4567
  %5655 = vmatpush1.msra.mxu0 %v4566
  %5656 = vmatprep.subr.mxu0 0.0
  %5657 = vmatpush1.msra.mxu0 0.0
  %5658 = vmatprep.subr.mxu0 0.0
  %5659 = vmatpush1.msra.mxu0 0.0
  %5660 = vmatprep.subr.mxu0 0.0
  %5661 = vmatpush1.msra.mxu0 0.0
  %5662 = vmatprep.subr.mxu0 0.0
  %5663 = vmatpush1.msra.mxu0 0.0
  %5664 = vmatprep.subr.mxu0 0.0
  %5665 = vmatpush1.msra.mxu0 0.0
  %5666 = vmatprep.subr.mxu0 0.0
  %5667 = vmatpush1.msra.mxu0 0.0
  %5668 = vmatprep.subr.mxu0 0.0
  %5669 = vmatpush1.msra.mxu0 0.0
  %5670 = vmatprep.subr.mxu0 0.0
  %5671 = vmatpush1.msra.mxu0 0.0
  %5672 = vmatprep.subr.mxu0 0.0
  %5673 = vmatpush1.msra.mxu0 0.0
  %5674 = vmatprep.subr.mxu0 0.0
  %5675 = vmatpush1.msra.mxu0 0.0
  %5676 = vmatprep.subr.mxu0 0.0
  %5677 = vmatpush1.msra.mxu0 0.0
  %5678 = vmatprep.subr.mxu0 0.0
  %5679 = vmatpush1.msra.mxu0 0.0
  %5680 = vmatprep.subr.mxu0 0.0
  %5681 = vmatpush1.msra.mxu0 0.0
  %5682 = vmatprep.subr.mxu0 0.0
  %5683 = vmatpush1.msra.mxu0 0.0
  %5684 = vmatprep.subr.mxu0 0.0
  %5685 = vmatpush1.msra.mxu0 0.0
  %5686 = vmatprep.subr.mxu0 0.0
  %5687 = vmatpush1.msra.mxu0 0.0
  %5688 = vmatprep.mubr.f32.mxu0 0.0
  %5689 = vmatmul.mubr.f32.gmra.mrb[0].mxu0 %v5618
  %v5690 = vpop.f32.mrb[0].mxu0
  %v5691 = vadd.f32 0.0, %v5690
  %v5692 = vpop.f32.mrb[0].mxu0
  %v5693 = vadd.f32 0.0, %v5692
  %5694 = vdwg.mxu0
  %5695 = vmatprep.subr.mxu0 %v4509
  %5696 = vmatpush1.msra.mxu0 %v4508
  %5697 = vmatprep.subr.mxu0 %v4513
  %5698 = vmatpush1.msra.mxu0 %v4512
  %5699 = vmatprep.subr.mxu0 %v4517
  %5700 = vmatpush1.msra.mxu0 %v4516
  %5701 = vmatprep.subr.mxu0 %v4521
  %5702 = vmatpush1.msra.mxu0 %v4520
  %5703 = vmatprep.subr.mxu0 %v4525
  %5704 = vmatpush1.msra.mxu0 %v4524
  %5705 = vmatprep.subr.mxu0 %v4529
  %5706 = vmatpush1.msra.mxu0 %v4528
  %5707 = vmatprep.subr.mxu0 %v4533
  %5708 = vmatpush1.msra.mxu0 %v4532
  %5709 = vmatprep.subr.mxu0 %v4537
  %5710 = vmatpush1.msra.mxu0 %v4536
  %5711 = vmatprep.subr.mxu0 %v4541
  %5712 = vmatpush1.msra.mxu0 %v4540
  %5713 = vmatprep.subr.mxu0 %v4545
  %5714 = vmatpush1.msra.mxu0 %v4544
  %5715 = vmatprep.subr.mxu0 %v4549
  %5716 = vmatpush1.msra.mxu0 %v4548
  %5717 = vmatprep.subr.mxu0 %v4553
  %5718 = vmatpush1.msra.mxu0 %v4552
  %5719 = vmatprep.subr.mxu0 %v4557
  %5720 = vmatpush1.msra.mxu0 %v4556
  %5721 = vmatprep.subr.mxu0 %v4561
  %5722 = vmatpush1.msra.mxu0 %v4560
  %5723 = vmatprep.subr.mxu0 %v4565
  %5724 = vmatpush1.msra.mxu0 %v4564
  %5725 = vmatprep.subr.mxu0 %v4569
  %5726 = vmatpush1.msra.mxu0 %v4568
  %5727 = vmatprep.subr.mxu0 0.0
  %5728 = vmatpush1.msra.mxu0 0.0
  %5729 = vmatprep.subr.mxu0 0.0
  %5730 = vmatpush1.msra.mxu0 0.0
  %5731 = vmatprep.subr.mxu0 0.0
  %5732 = vmatpush1.msra.mxu0 0.0
  %5733 = vmatprep.subr.mxu0 0.0
  %5734 = vmatpush1.msra.mxu0 0.0
  %5735 = vmatprep.subr.mxu0 0.0
  %5736 = vmatpush1.msra.mxu0 0.0
  %5737 = vmatprep.subr.mxu0 0.0
  %5738 = vmatpush1.msra.mxu0 0.0
  %5739 = vmatprep.subr.mxu0 0.0
  %5740 = vmatpush1.msra.mxu0 0.0
  %5741 = vmatprep.subr.mxu0 0.0
  %5742 = vmatpush1.msra.mxu0 0.0
  %5743 = vmatprep.subr.mxu0 0.0
  %5744 = vmatpush1.msra.mxu0 0.0
  %5745 = vmatprep.subr.mxu0 0.0
  %5746 = vmatpush1.msra.mxu0 0.0
  %5747 = vmatprep.subr.mxu0 0.0
  %5748 = vmatpush1.msra.mxu0 0.0
  %5749 = vmatprep.subr.mxu0 0.0
  %5750 = vmatpush1.msra.mxu0 0.0
  %5751 = vmatprep.subr.mxu0 0.0
  %5752 = vmatpush1.msra.mxu0 0.0
  %5753 = vmatprep.subr.mxu0 0.0
  %5754 = vmatpush1.msra.mxu0 0.0
  %5755 = vmatprep.subr.mxu0 0.0
  %5756 = vmatpush1.msra.mxu0 0.0
  %5757 = vmatprep.subr.mxu0 0.0
  %5758 = vmatpush1.msra.mxu0 0.0
  %5759 = vmatprep.mubr.f32.mxu0 0.0
  %5760 = vmatmul.mubr.f32.gmra.mrb[0].mxu0 %v5618
  %v5761 = vpop.f32.mrb[0].mxu0
  %v5762 = vadd.f32 0.0, %v5761
  %v5763 = vpop.f32.mrb[0].mxu0
  %v5764 = vadd.f32 0.0, %v5763
  %5765 = vdwg.mxu0
  %v5766 = vadd.f32 %v5620, %v5691
  %v5767 = vadd.f32 %v5621, %v5693
  %v5768 = vadd.f32 %v5622, %v5762
  %v5769 = vadd.f32 %v5623, %v5764
  %v5770 = vxor.u32 %v5766, 2147483648
  %v5771 = vmul.f32 %v5770, 1.442695
  %v5772 = vpow.pop %v5771
  %v5773 = vadd.f32 %v5772, 1.0
  %v5774 = vrcp.pop %v5773
  %v5775 = vmul.f32 1.0, %v5774
  %v5776 = vxor.u32 %v5767, 2147483648
  %v5777 = vmul.f32 %v5776, 1.442695
  %v5778 = vpow.pop %v5777
  %v5779 = vadd.f32 %v5778, 1.0
  %v5780 = vrcp.pop %v5779
  %v5781 = vmul.f32 1.0, %v5780
  %v5782 = vtanh.pop %v5768
  %v5783 = vxor.u32 %v5769, 2147483648
  %v5784 = vmul.f32 %v5783, 1.442695
  %v5785 = vpow.pop %v5784
  %v5786 = vadd.f32 %v5785, 1.0
  %v5787 = vrcp.pop %v5786
  %v5788 = vmul.f32 1.0, %v5787
  %v5789 = vmul.f32 %v5781, %v5616
  %v5790 = vmul.f32 %v5775, %v5782
  %v5791 = vadd.f32 %v5789, %v5790
  %v5792 = vtanh.pop %v5791
  %v5793 = vmul.f32 %v5788, %v5792
  %5794 = vst [vmem:[#allocation8 + $0x30] sm:$0xff] %v5793
  %v5795 = vld [vmem:[#allocation4 + $0xe0] sm:$0xff]
  %v5796 = vld [vmem:[#allocation4 + $0xe8] sm:$0xff]
  %v5797 = vld [vmem:[#allocation4 + $0xf0] sm:$0xff]
  %v5798 = vld [vmem:[#allocation4 + $0xf8] sm:$0xff]
  %5799 = vmatprep.subr.mxu0 %v4507
  %5800 = vmatpush1.msra.mxu0 %v4506
  %5801 = vmatprep.subr.mxu0 %v4511
  %5802 = vmatpush1.msra.mxu0 %v4510
  %5803 = vmatprep.subr.mxu0 %v4515
  %5804 = vmatpush1.msra.mxu0 %v4514
  %5805 = vmatprep.subr.mxu0 %v4519
  %5806 = vmatpush1.msra.mxu0 %v4518
  %5807 = vmatprep.subr.mxu0 %v4523
  %5808 = vmatpush1.msra.mxu0 %v4522
  %5809 = vmatprep.subr.mxu0 %v4527
  %5810 = vmatpush1.msra.mxu0 %v4526
  %5811 = vmatprep.subr.mxu0 %v4531
  %5812 = vmatpush1.msra.mxu0 %v4530
  %5813 = vmatprep.subr.mxu0 %v4535
  %5814 = vmatpush1.msra.mxu0 %v4534
  %5815 = vmatprep.subr.mxu0 %v4539
  %5816 = vmatpush1.msra.mxu0 %v4538
  %5817 = vmatprep.subr.mxu0 %v4543
  %5818 = vmatpush1.msra.mxu0 %v4542
  %5819 = vmatprep.subr.mxu0 %v4547
  %5820 = vmatpush1.msra.mxu0 %v4546
  %5821 = vmatprep.subr.mxu0 %v4551
  %5822 = vmatpush1.msra.mxu0 %v4550
  %5823 = vmatprep.subr.mxu0 %v4555
  %5824 = vmatpush1.msra.mxu0 %v4554
  %5825 = vmatprep.subr.mxu0 %v4559
  %5826 = vmatpush1.msra.mxu0 %v4558
  %5827 = vmatprep.subr.mxu0 %v4563
  %5828 = vmatpush1.msra.mxu0 %v4562
  %5829 = vmatprep.subr.mxu0 %v4567
  %5830 = vmatpush1.msra.mxu0 %v4566
  %5831 = vmatprep.subr.mxu0 0.0
  %5832 = vmatpush1.msra.mxu0 0.0
  %5833 = vmatprep.subr.mxu0 0.0
  %5834 = vmatpush1.msra.mxu0 0.0
  %5835 = vmatprep.subr.mxu0 0.0
  %5836 = vmatpush1.msra.mxu0 0.0
  %5837 = vmatprep.subr.mxu0 0.0
  %5838 = vmatpush1.msra.mxu0 0.0
  %5839 = vmatprep.subr.mxu0 0.0
  %5840 = vmatpush1.msra.mxu0 0.0
  %5841 = vmatprep.subr.mxu0 0.0
  %5842 = vmatpush1.msra.mxu0 0.0
  %5843 = vmatprep.subr.mxu0 0.0
  %5844 = vmatpush1.msra.mxu0 0.0
  %5845 = vmatprep.subr.mxu0 0.0
  %5846 = vmatpush1.msra.mxu0 0.0
  %5847 = vmatprep.subr.mxu0 0.0
  %5848 = vmatpush1.msra.mxu0 0.0
  %5849 = vmatprep.subr.mxu0 0.0
  %5850 = vmatpush1.msra.mxu0 0.0
  %5851 = vmatprep.subr.mxu0 0.0
  %5852 = vmatpush1.msra.mxu0 0.0
  %5853 = vmatprep.subr.mxu0 0.0
  %5854 = vmatpush1.msra.mxu0 0.0
  %5855 = vmatprep.subr.mxu0 0.0
  %5856 = vmatpush1.msra.mxu0 0.0
  %5857 = vmatprep.subr.mxu0 0.0
  %5858 = vmatpush1.msra.mxu0 0.0
  %5859 = vmatprep.subr.mxu0 0.0
  %5860 = vmatpush1.msra.mxu0 0.0
  %5861 = vmatprep.subr.mxu0 0.0
  %5862 = vmatpush1.msra.mxu0 0.0
  %5863 = vmatprep.mubr.f32.mxu0 0.0
  %5864 = vmatmul.mubr.f32.gmra.mrb[0].mxu0 %v5793
  %v5865 = vpop.f32.mrb[0].mxu0
  %v5866 = vadd.f32 0.0, %v5865
  %v5867 = vpop.f32.mrb[0].mxu0
  %v5868 = vadd.f32 0.0, %v5867
  %5869 = vdwg.mxu0
  %5870 = vmatprep.subr.mxu0 %v4509
  %5871 = vmatpush1.msra.mxu0 %v4508
  %5872 = vmatprep.subr.mxu0 %v4513
  %5873 = vmatpush1.msra.mxu0 %v4512
  %5874 = vmatprep.subr.mxu0 %v4517
  %5875 = vmatpush1.msra.mxu0 %v4516
  %5876 = vmatprep.subr.mxu0 %v4521
  %5877 = vmatpush1.msra.mxu0 %v4520
  %5878 = vmatprep.subr.mxu0 %v4525
  %5879 = vmatpush1.msra.mxu0 %v4524
  %5880 = vmatprep.subr.mxu0 %v4529
  %5881 = vmatpush1.msra.mxu0 %v4528
  %5882 = vmatprep.subr.mxu0 %v4533
  %5883 = vmatpush1.msra.mxu0 %v4532
  %5884 = vmatprep.subr.mxu0 %v4537
  %5885 = vmatpush1.msra.mxu0 %v4536
  %5886 = vmatprep.subr.mxu0 %v4541
  %5887 = vmatpush1.msra.mxu0 %v4540
  %5888 = vmatprep.subr.mxu0 %v4545
  %5889 = vmatpush1.msra.mxu0 %v4544
  %5890 = vmatprep.subr.mxu0 %v4549
  %5891 = vmatpush1.msra.mxu0 %v4548
  %5892 = vmatprep.subr.mxu0 %v4553
  %5893 = vmatpush1.msra.mxu0 %v4552
  %5894 = vmatprep.subr.mxu0 %v4557
  %5895 = vmatpush1.msra.mxu0 %v4556
  %5896 = vmatprep.subr.mxu0 %v4561
  %5897 = vmatpush1.msra.mxu0 %v4560
  %5898 = vmatprep.subr.mxu0 %v4565
  %5899 = vmatpush1.msra.mxu0 %v4564
  %5900 = vmatprep.subr.mxu0 %v4569
  %5901 = vmatpush1.msra.mxu0 %v4568
  %5902 = vmatprep.subr.mxu0 0.0
  %5903 = vmatpush1.msra.mxu0 0.0
  %5904 = vmatprep.subr.mxu0 0.0
  %5905 = vmatpush1.msra.mxu0 0.0
  %5906 = vmatprep.subr.mxu0 0.0
  %5907 = vmatpush1.msra.mxu0 0.0
  %5908 = vmatprep.subr.mxu0 0.0
  %5909 = vmatpush1.msra.mxu0 0.0
  %5910 = vmatprep.subr.mxu0 0.0
  %5911 = vmatpush1.msra.mxu0 0.0
  %5912 = vmatprep.subr.mxu0 0.0
  %5913 = vmatpush1.msra.mxu0 0.0
  %5914 = vmatprep.subr.mxu0 0.0
  %5915 = vmatpush1.msra.mxu0 0.0
  %5916 = vmatprep.subr.mxu0 0.0
  %5917 = vmatpush1.msra.mxu0 0.0
  %5918 = vmatprep.subr.mxu0 0.0
  %5919 = vmatpush1.msra.mxu0 0.0
  %5920 = vmatprep.subr.mxu0 0.0
  %5921 = vmatpush1.msra.mxu0 0.0
  %5922 = vmatprep.subr.mxu0 0.0
  %5923 = vmatpush1.msra.mxu0 0.0
  %5924 = vmatprep.subr.mxu0 0.0
  %5925 = vmatpush1.msra.mxu0 0.0
  %5926 = vmatprep.subr.mxu0 0.0
  %5927 = vmatpush1.msra.mxu0 0.0
  %5928 = vmatprep.subr.mxu0 0.0
  %5929 = vmatpush1.msra.mxu0 0.0
  %5930 = vmatprep.subr.mxu0 0.0
  %5931 = vmatpush1.msra.mxu0 0.0
  %5932 = vmatprep.subr.mxu0 0.0
  %5933 = vmatpush1.msra.mxu0 0.0
  %5934 = vmatprep.mubr.f32.mxu0 0.0
  %5935 = vmatmul.mubr.f32.gmra.mrb[0].mxu0 %v5793
  %v5936 = vpop.f32.mrb[0].mxu0
  %v5937 = vadd.f32 0.0, %v5936
  %v5938 = vpop.f32.mrb[0].mxu0
  %v5939 = vadd.f32 0.0, %v5938
  %5940 = vdwg.mxu0
  %v5941 = vadd.f32 %v5795, %v5866
  %v5942 = vadd.f32 %v5796, %v5868
  %v5943 = vadd.f32 %v5797, %v5937
  %v5944 = vadd.f32 %v5798, %v5939
  %v5945 = vxor.u32 %v5941, 2147483648
  %v5946 = vmul.f32 %v5945, 1.442695
  %v5947 = vpow.pop %v5946
  %v5948 = vadd.f32 %v5947, 1.0
  %v5949 = vrcp.pop %v5948
  %v5950 = vmul.f32 1.0, %v5949
  %v5951 = vxor.u32 %v5942, 2147483648
  %v5952 = vmul.f32 %v5951, 1.442695
  %v5953 = vpow.pop %v5952
  %v5954 = vadd.f32 %v5953, 1.0
  %v5955 = vrcp.pop %v5954
  %v5956 = vmul.f32 1.0, %v5955
  %v5957 = vtanh.pop %v5943
  %v5958 = vxor.u32 %v5944, 2147483648
  %v5959 = vmul.f32 %v5958, 1.442695
  %v5960 = vpow.pop %v5959
  %v5961 = vadd.f32 %v5960, 1.0
  %v5962 = vrcp.pop %v5961
  %v5963 = vmul.f32 1.0, %v5962
  %v5964 = vmul.f32 %v5956, %v5791
  %v5965 = vmul.f32 %v5950, %v5957
  %v5966 = vadd.f32 %v5964, %v5965
  %v5967 = vtanh.pop %v5966
  %v5968 = vmul.f32 %v5963, %v5967
  %5969 = vst [vmem:[#allocation8 + $0x38] sm:$0xff] %v5968
  %v5970 = vld [vmem:[%s11] sm:$0xff]
  %v5971 = vld [vmem:[%s11 + $0x8] sm:$0xff]
  %v5972 = vld [vmem:[%s11 + $0x10] sm:$0xff]
  %v5973 = vld [vmem:[%s11 + $0x18] sm:$0xff]
  %v5974 = vld [vmem:[%s11 + $0x20] sm:$0xff]
  %v5975 = vld [vmem:[%s11 + $0x28] sm:$0xff]
  %v5976 = vld [vmem:[%s11 + $0x30] sm:$0xff]
  %v5977 = vld [vmem:[%s11 + $0x38] sm:$0xff]
  %v5978 = vld [vmem:[%s11 + $0x40] sm:$0xff]
  %v5979 = vld [vmem:[%s11 + $0x48] sm:$0xff]
  %v5980 = vld [vmem:[%s11 + $0x50] sm:$0xff]
  %v5981 = vld [vmem:[%s11 + $0x58] sm:$0xff]
  %v5982 = vld [vmem:[%s11 + $0x60] sm:$0xff]
  %v5983 = vld [vmem:[%s11 + $0x68] sm:$0xff]
  %v5984 = vld [vmem:[%s11 + $0x70] sm:$0xff]
  %v5985 = vld [vmem:[%s11 + $0x78] sm:$0xff]
  %v5986 = vld [vmem:[%s11 + $0x80] sm:$0xff]
  %v5987 = vld [vmem:[%s11 + $0x88] sm:$0xff]
  %v5988 = vld [vmem:[%s11 + $0x90] sm:$0xff]
  %v5989 = vld [vmem:[%s11 + $0x98] sm:$0xff]
  %v5990 = vld [vmem:[%s11 + $0xa0] sm:$0xff]
  %v5991 = vld [vmem:[%s11 + $0xa8] sm:$0xff]
  %v5992 = vld [vmem:[%s11 + $0xb0] sm:$0xff]
  %v5993 = vld [vmem:[%s11 + $0xb8] sm:$0xff]
  %v5994 = vld [vmem:[%s11 + $0xc0] sm:$0xff]
  %v5995 = vld [vmem:[%s11 + $0xc8] sm:$0xff]
  %v5996 = vld [vmem:[%s11 + $0xd0] sm:$0xff]
  %v5997 = vld [vmem:[%s11 + $0xd8] sm:$0xff]
  %v5998 = vld [vmem:[%s11 + $0xe0] sm:$0xff]
  %v5999 = vld [vmem:[%s11 + $0xe8] sm:$0xff]
  %v6000 = vld [vmem:[%s11 + $0xf0] sm:$0xff]
  %v6001 = vld [vmem:[%s11 + $0xf8] sm:$0xff]
  %v6002 = vld [vmem:[%s11 + $0x100] sm:$0xff]
  %v6003 = vld [vmem:[%s11 + $0x108] sm:$0xff]
  %v6004 = vld [vmem:[%s11 + $0x110] sm:$0xff]
  %v6005 = vld [vmem:[%s11 + $0x118] sm:$0xff]
  %v6006 = vld [vmem:[%s11 + $0x120] sm:$0xff]
  %v6007 = vld [vmem:[%s11 + $0x128] sm:$0xff]
  %v6008 = vld [vmem:[%s11 + $0x130] sm:$0xff]
  %v6009 = vld [vmem:[%s11 + $0x138] sm:$0xff]
  %v6010 = vld [vmem:[%s11 + $0x140] sm:$0xff]
  %v6011 = vld [vmem:[%s11 + $0x148] sm:$0xff]
  %v6012 = vld [vmem:[%s11 + $0x150] sm:$0xff]
  %v6013 = vld [vmem:[%s11 + $0x158] sm:$0xff]
  %v6014 = vld [vmem:[%s11 + $0x160] sm:$0xff]
  %v6015 = vld [vmem:[%s11 + $0x168] sm:$0xff]
  %v6016 = vld [vmem:[%s11 + $0x170] sm:$0xff]
  %v6017 = vld [vmem:[%s11 + $0x178] sm:$0xff]
  %v6018 = vld [vmem:[%s11 + $0x180] sm:$0xff]
  %v6019 = vld [vmem:[%s11 + $0x188] sm:$0xff]
  %v6020 = vld [vmem:[%s11 + $0x190] sm:$0xff]
  %v6021 = vld [vmem:[%s11 + $0x198] sm:$0xff]
  %v6022 = vld [vmem:[%s11 + $0x1a0] sm:$0xff]
  %v6023 = vld [vmem:[%s11 + $0x1a8] sm:$0xff]
  %v6024 = vld [vmem:[%s11 + $0x1b0] sm:$0xff]
  %v6025 = vld [vmem:[%s11 + $0x1b8] sm:$0xff]
  %v6026 = vld [vmem:[%s11 + $0x1c0] sm:$0xff]
  %v6027 = vld [vmem:[%s11 + $0x1c8] sm:$0xff]
  %v6028 = vld [vmem:[%s11 + $0x1d0] sm:$0xff]
  %v6029 = vld [vmem:[%s11 + $0x1d8] sm:$0xff]
  %v6030 = vld [vmem:[%s11 + $0x1e0] sm:$0xff]
  %v6031 = vld [vmem:[%s11 + $0x1e8] sm:$0xff]
  %v6032 = vld [vmem:[%s11 + $0x1f0] sm:$0xff]
  %v6033 = vld [vmem:[%s11 + $0x1f8] sm:$0xff]
  %v6034 = vld [vmem:[#allocation5 + $0xe0] sm:$0xff]
  %v6035 = vld [vmem:[#allocation5 + $0xe8] sm:$0xff]
  %v6036 = vld [vmem:[#allocation5 + $0xf0] sm:$0xff]
  %v6037 = vld [vmem:[#allocation5 + $0xf8] sm:$0xff]
  %6038 = vmatprep.subr.mxu0 %v5971
  %6039 = vmatpush1.msra.mxu0 %v5970
  %6040 = vmatprep.subr.mxu0 %v5975
  %6041 = vmatpush1.msra.mxu0 %v5974
  %6042 = vmatprep.subr.mxu0 %v5979
  %6043 = vmatpush1.msra.mxu0 %v5978
  %6044 = vmatprep.subr.mxu0 %v5983
  %6045 = vmatpush1.msra.mxu0 %v5982
  %6046 = vmatprep.subr.mxu0 %v5987
  %6047 = vmatpush1.msra.mxu0 %v5986
  %6048 = vmatprep.subr.mxu0 %v5991
  %6049 = vmatpush1.msra.mxu0 %v5990
  %6050 = vmatprep.subr.mxu0 %v5995
  %6051 = vmatpush1.msra.mxu0 %v5994
  %6052 = vmatprep.subr.mxu0 %v5999
  %6053 = vmatpush1.msra.mxu0 %v5998
  %6054 = vmatprep.subr.mxu0 %v6003
  %6055 = vmatpush1.msra.mxu0 %v6002
  %6056 = vmatprep.subr.mxu0 %v6007
  %6057 = vmatpush1.msra.mxu0 %v6006
  %6058 = vmatprep.subr.mxu0 %v6011
  %6059 = vmatpush1.msra.mxu0 %v6010
  %6060 = vmatprep.subr.mxu0 %v6015
  %6061 = vmatpush1.msra.mxu0 %v6014
  %6062 = vmatprep.subr.mxu0 %v6019
  %6063 = vmatpush1.msra.mxu0 %v6018
  %6064 = vmatprep.subr.mxu0 %v6023
  %6065 = vmatpush1.msra.mxu0 %v6022
  %6066 = vmatprep.subr.mxu0 %v6027
  %6067 = vmatpush1.msra.mxu0 %v6026
  %6068 = vmatprep.subr.mxu0 %v6031
  %6069 = vmatpush1.msra.mxu0 %v6030
  %6070 = vmatprep.subr.mxu0 0.0
  %6071 = vmatpush1.msra.mxu0 0.0
  %6072 = vmatprep.subr.mxu0 0.0
  %6073 = vmatpush1.msra.mxu0 0.0
  %6074 = vmatprep.subr.mxu0 0.0
  %6075 = vmatpush1.msra.mxu0 0.0
  %6076 = vmatprep.subr.mxu0 0.0
  %6077 = vmatpush1.msra.mxu0 0.0
  %6078 = vmatprep.subr.mxu0 0.0
  %6079 = vmatpush1.msra.mxu0 0.0
  %6080 = vmatprep.subr.mxu0 0.0
  %6081 = vmatpush1.msra.mxu0 0.0
  %6082 = vmatprep.subr.mxu0 0.0
  %6083 = vmatpush1.msra.mxu0 0.0
  %6084 = vmatprep.subr.mxu0 0.0
  %6085 = vmatpush1.msra.mxu0 0.0
  %6086 = vmatprep.subr.mxu0 0.0
  %6087 = vmatpush1.msra.mxu0 0.0
  %6088 = vmatprep.subr.mxu0 0.0
  %6089 = vmatpush1.msra.mxu0 0.0
  %6090 = vmatprep.subr.mxu0 0.0
  %6091 = vmatpush1.msra.mxu0 0.0
  %6092 = vmatprep.subr.mxu0 0.0
  %6093 = vmatpush1.msra.mxu0 0.0
  %6094 = vmatprep.subr.mxu0 0.0
  %6095 = vmatpush1.msra.mxu0 0.0
  %6096 = vmatprep.subr.mxu0 0.0
  %6097 = vmatpush1.msra.mxu0 0.0
  %6098 = vmatprep.subr.mxu0 0.0
  %6099 = vmatpush1.msra.mxu0 0.0
  %6100 = vmatprep.subr.mxu0 0.0
  %6101 = vmatpush1.msra.mxu0 0.0
  %6102 = vmatprep.mubr.f32.mxu0 0.0
  %6103 = vmatmul.mubr.f32.gmra.mrb[0].mxu0 0.0
  %v6104 = vpop.f32.mrb[0].mxu0
  %v6105 = vadd.f32 0.0, %v6104
  %v6106 = vpop.f32.mrb[0].mxu0
  %v6107 = vadd.f32 0.0, %v6106
  %6108 = vdwg.mxu0
  %6109 = vmatprep.subr.mxu0 %v5973
  %6110 = vmatpush1.msra.mxu0 %v5972
  %6111 = vmatprep.subr.mxu0 %v5977
  %6112 = vmatpush1.msra.mxu0 %v5976
  %6113 = vmatprep.subr.mxu0 %v5981
  %6114 = vmatpush1.msra.mxu0 %v5980
  %6115 = vmatprep.subr.mxu0 %v5985
  %6116 = vmatpush1.msra.mxu0 %v5984
  %6117 = vmatprep.subr.mxu0 %v5989
  %6118 = vmatpush1.msra.mxu0 %v5988
  %6119 = vmatprep.subr.mxu0 %v5993
  %6120 = vmatpush1.msra.mxu0 %v5992
  %6121 = vmatprep.subr.mxu0 %v5997
  %6122 = vmatpush1.msra.mxu0 %v5996
  %6123 = vmatprep.subr.mxu0 %v6001
  %6124 = vmatpush1.msra.mxu0 %v6000
  %6125 = vmatprep.subr.mxu0 %v6005
  %6126 = vmatpush1.msra.mxu0 %v6004
  %6127 = vmatprep.subr.mxu0 %v6009
  %6128 = vmatpush1.msra.mxu0 %v6008
  %6129 = vmatprep.subr.mxu0 %v6013
  %6130 = vmatpush1.msra.mxu0 %v6012
  %6131 = vmatprep.subr.mxu0 %v6017
  %6132 = vmatpush1.msra.mxu0 %v6016
  %6133 = vmatprep.subr.mxu0 %v6021
  %6134 = vmatpush1.msra.mxu0 %v6020
  %6135 = vmatprep.subr.mxu0 %v6025
  %6136 = vmatpush1.msra.mxu0 %v6024
  %6137 = vmatprep.subr.mxu0 %v6029
  %6138 = vmatpush1.msra.mxu0 %v6028
  %6139 = vmatprep.subr.mxu0 %v6033
  %6140 = vmatpush1.msra.mxu0 %v6032
  %6141 = vmatprep.subr.mxu0 0.0
  %6142 = vmatpush1.msra.mxu0 0.0
  %6143 = vmatprep.subr.mxu0 0.0
  %6144 = vmatpush1.msra.mxu0 0.0
  %6145 = vmatprep.subr.mxu0 0.0
  %6146 = vmatpush1.msra.mxu0 0.0
  %6147 = vmatprep.subr.mxu0 0.0
  %6148 = vmatpush1.msra.mxu0 0.0
  %6149 = vmatprep.subr.mxu0 0.0
  %6150 = vmatpush1.msra.mxu0 0.0
  %6151 = vmatprep.subr.mxu0 0.0
  %6152 = vmatpush1.msra.mxu0 0.0
  %6153 = vmatprep.subr.mxu0 0.0
  %6154 = vmatpush1.msra.mxu0 0.0
  %6155 = vmatprep.subr.mxu0 0.0
  %6156 = vmatpush1.msra.mxu0 0.0
  %6157 = vmatprep.subr.mxu0 0.0
  %6158 = vmatpush1.msra.mxu0 0.0
  %6159 = vmatprep.subr.mxu0 0.0
  %6160 = vmatpush1.msra.mxu0 0.0
  %6161 = vmatprep.subr.mxu0 0.0
  %6162 = vmatpush1.msra.mxu0 0.0
  %6163 = vmatprep.subr.mxu0 0.0
  %6164 = vmatpush1.msra.mxu0 0.0
  %6165 = vmatprep.subr.mxu0 0.0
  %6166 = vmatpush1.msra.mxu0 0.0
  %6167 = vmatprep.subr.mxu0 0.0
  %6168 = vmatpush1.msra.mxu0 0.0
  %6169 = vmatprep.subr.mxu0 0.0
  %6170 = vmatpush1.msra.mxu0 0.0
  %6171 = vmatprep.subr.mxu0 0.0
  %6172 = vmatpush1.msra.mxu0 0.0
  %6173 = vmatprep.mubr.f32.mxu0 0.0
  %6174 = vmatmul.mubr.f32.gmra.mrb[0].mxu0 0.0
  %v6175 = vpop.f32.mrb[0].mxu0
  %v6176 = vadd.f32 0.0, %v6175
  %v6177 = vpop.f32.mrb[0].mxu0
  %v6178 = vadd.f32 0.0, %v6177
  %6179 = vdwg.mxu0
  %v6180 = vadd.f32 %v6034, %v6105
  %v6181 = vadd.f32 %v6035, %v6107
  %v6182 = vadd.f32 %v6036, %v6176
  %v6183 = vadd.f32 %v6037, %v6178
  %v6184 = vxor.u32 %v6180, 2147483648
  %v6185 = vmul.f32 %v6184, 1.442695
  %v6186 = vpow.pop %v6185
  %v6187 = vadd.f32 %v6186, 1.0
  %v6188 = vrcp.pop %v6187
  %v6189 = vmul.f32 1.0, %v6188
  %v6190 = vxor.u32 %v6181, 2147483648
  %v6191 = vmul.f32 %v6190, 1.442695
  %v6192 = vpow.pop %v6191
  %v6193 = vadd.f32 %v6192, 1.0
  %v6194 = vrcp.pop %v6193
  %v6195 = vmul.f32 1.0, %v6194
  %v6196 = vtanh.pop %v6182
  %v6197 = vxor.u32 %v6183, 2147483648
  %v6198 = vmul.f32 %v6197, 1.442695
  %v6199 = vpow.pop %v6198
  %v6200 = vadd.f32 %v6199, 1.0
  %v6201 = vrcp.pop %v6200
  %v6202 = vmul.f32 1.0, %v6201
  %v6203 = vmul.f32 %v6195, 0.0
  %v6204 = vmul.f32 %v6189, %v6196
  %v6205 = vadd.f32 %v6203, %v6204
  %v6206 = vtanh.pop %v6205
  %v6207 = vmul.f32 %v6202, %v6206
  %6208 = vst [vmem:[#allocation9 + $0x38] sm:$0xff] %v6207
  %v6209 = vld [vmem:[#allocation5 + $0xc0] sm:$0xff]
  %v6210 = vld [vmem:[#allocation5 + $0xc8] sm:$0xff]
  %v6211 = vld [vmem:[#allocation5 + $0xd0] sm:$0xff]
  %v6212 = vld [vmem:[#allocation5 + $0xd8] sm:$0xff]
  %6213 = vmatprep.subr.mxu0 %v5971
  %6214 = vmatpush1.msra.mxu0 %v5970
  %6215 = vmatprep.subr.mxu0 %v5975
  %6216 = vmatpush1.msra.mxu0 %v5974
  %6217 = vmatprep.subr.mxu0 %v5979
  %6218 = vmatpush1.msra.mxu0 %v5978
  %6219 = vmatprep.subr.mxu0 %v5983
  %6220 = vmatpush1.msra.mxu0 %v5982
  %6221 = vmatprep.subr.mxu0 %v5987
  %6222 = vmatpush1.msra.mxu0 %v5986
  %6223 = vmatprep.subr.mxu0 %v5991
  %6224 = vmatpush1.msra.mxu0 %v5990
  %6225 = vmatprep.subr.mxu0 %v5995
  %6226 = vmatpush1.msra.mxu0 %v5994
  %6227 = vmatprep.subr.mxu0 %v5999
  %6228 = vmatpush1.msra.mxu0 %v5998
  %6229 = vmatprep.subr.mxu0 %v6003
  %6230 = vmatpush1.msra.mxu0 %v6002
  %6231 = vmatprep.subr.mxu0 %v6007
  %6232 = vmatpush1.msra.mxu0 %v6006
  %6233 = vmatprep.subr.mxu0 %v6011
  %6234 = vmatpush1.msra.mxu0 %v6010
  %6235 = vmatprep.subr.mxu0 %v6015
  %6236 = vmatpush1.msra.mxu0 %v6014
  %6237 = vmatprep.subr.mxu0 %v6019
  %6238 = vmatpush1.msra.mxu0 %v6018
  %6239 = vmatprep.subr.mxu0 %v6023
  %6240 = vmatpush1.msra.mxu0 %v6022
  %6241 = vmatprep.subr.mxu0 %v6027
  %6242 = vmatpush1.msra.mxu0 %v6026
  %6243 = vmatprep.subr.mxu0 %v6031
  %6244 = vmatpush1.msra.mxu0 %v6030
  %6245 = vmatprep.subr.mxu0 0.0
  %6246 = vmatpush1.msra.mxu0 0.0
  %6247 = vmatprep.subr.mxu0 0.0
  %6248 = vmatpush1.msra.mxu0 0.0
  %6249 = vmatprep.subr.mxu0 0.0
  %6250 = vmatpush1.msra.mxu0 0.0
  %6251 = vmatprep.subr.mxu0 0.0
  %6252 = vmatpush1.msra.mxu0 0.0
  %6253 = vmatprep.subr.mxu0 0.0
  %6254 = vmatpush1.msra.mxu0 0.0
  %6255 = vmatprep.subr.mxu0 0.0
  %6256 = vmatpush1.msra.mxu0 0.0
  %6257 = vmatprep.subr.mxu0 0.0
  %6258 = vmatpush1.msra.mxu0 0.0
  %6259 = vmatprep.subr.mxu0 0.0
  %6260 = vmatpush1.msra.mxu0 0.0
  %6261 = vmatprep.subr.mxu0 0.0
  %6262 = vmatpush1.msra.mxu0 0.0
  %6263 = vmatprep.subr.mxu0 0.0
  %6264 = vmatpush1.msra.mxu0 0.0
  %6265 = vmatprep.subr.mxu0 0.0
  %6266 = vmatpush1.msra.mxu0 0.0
  %6267 = vmatprep.subr.mxu0 0.0
  %6268 = vmatpush1.msra.mxu0 0.0
  %6269 = vmatprep.subr.mxu0 0.0
  %6270 = vmatpush1.msra.mxu0 0.0
  %6271 = vmatprep.subr.mxu0 0.0
  %6272 = vmatpush1.msra.mxu0 0.0
  %6273 = vmatprep.subr.mxu0 0.0
  %6274 = vmatpush1.msra.mxu0 0.0
  %6275 = vmatprep.subr.mxu0 0.0
  %6276 = vmatpush1.msra.mxu0 0.0
  %6277 = vmatprep.mubr.f32.mxu0 0.0
  %6278 = vmatmul.mubr.f32.gmra.mrb[0].mxu0 %v6207
  %v6279 = vpop.f32.mrb[0].mxu0
  %v6280 = vadd.f32 0.0, %v6279
  %v6281 = vpop.f32.mrb[0].mxu0
  %v6282 = vadd.f32 0.0, %v6281
  %6283 = vdwg.mxu0
  %6284 = vmatprep.subr.mxu0 %v5973
  %6285 = vmatpush1.msra.mxu0 %v5972
  %6286 = vmatprep.subr.mxu0 %v5977
  %6287 = vmatpush1.msra.mxu0 %v5976
  %6288 = vmatprep.subr.mxu0 %v5981
  %6289 = vmatpush1.msra.mxu0 %v5980
  %6290 = vmatprep.subr.mxu0 %v5985
  %6291 = vmatpush1.msra.mxu0 %v5984
  %6292 = vmatprep.subr.mxu0 %v5989
  %6293 = vmatpush1.msra.mxu0 %v5988
  %6294 = vmatprep.subr.mxu0 %v5993
  %6295 = vmatpush1.msra.mxu0 %v5992
  %6296 = vmatprep.subr.mxu0 %v5997
  %6297 = vmatpush1.msra.mxu0 %v5996
  %6298 = vmatprep.subr.mxu0 %v6001
  %6299 = vmatpush1.msra.mxu0 %v6000
  %6300 = vmatprep.subr.mxu0 %v6005
  %6301 = vmatpush1.msra.mxu0 %v6004
  %6302 = vmatprep.subr.mxu0 %v6009
  %6303 = vmatpush1.msra.mxu0 %v6008
  %6304 = vmatprep.subr.mxu0 %v6013
  %6305 = vmatpush1.msra.mxu0 %v6012
  %6306 = vmatprep.subr.mxu0 %v6017
  %6307 = vmatpush1.msra.mxu0 %v6016
  %6308 = vmatprep.subr.mxu0 %v6021
  %6309 = vmatpush1.msra.mxu0 %v6020
  %6310 = vmatprep.subr.mxu0 %v6025
  %6311 = vmatpush1.msra.mxu0 %v6024
  %6312 = vmatprep.subr.mxu0 %v6029
  %6313 = vmatpush1.msra.mxu0 %v6028
  %6314 = vmatprep.subr.mxu0 %v6033
  %6315 = vmatpush1.msra.mxu0 %v6032
  %6316 = vmatprep.subr.mxu0 0.0
  %6317 = vmatpush1.msra.mxu0 0.0
  %6318 = vmatprep.subr.mxu0 0.0
  %6319 = vmatpush1.msra.mxu0 0.0
  %6320 = vmatprep.subr.mxu0 0.0
  %6321 = vmatpush1.msra.mxu0 0.0
  %6322 = vmatprep.subr.mxu0 0.0
  %6323 = vmatpush1.msra.mxu0 0.0
  %6324 = vmatprep.subr.mxu0 0.0
  %6325 = vmatpush1.msra.mxu0 0.0
  %6326 = vmatprep.subr.mxu0 0.0
  %6327 = vmatpush1.msra.mxu0 0.0
  %6328 = vmatprep.subr.mxu0 0.0
  %6329 = vmatpush1.msra.mxu0 0.0
  %6330 = vmatprep.subr.mxu0 0.0
  %6331 = vmatpush1.msra.mxu0 0.0
  %6332 = vmatprep.subr.mxu0 0.0
  %6333 = vmatpush1.msra.mxu0 0.0
  %6334 = vmatprep.subr.mxu0 0.0
  %6335 = vmatpush1.msra.mxu0 0.0
  %6336 = vmatprep.subr.mxu0 0.0
  %6337 = vmatpush1.msra.mxu0 0.0
  %6338 = vmatprep.subr.mxu0 0.0
  %6339 = vmatpush1.msra.mxu0 0.0
  %6340 = vmatprep.subr.mxu0 0.0
  %6341 = vmatpush1.msra.mxu0 0.0
  %6342 = vmatprep.subr.mxu0 0.0
  %6343 = vmatpush1.msra.mxu0 0.0
  %6344 = vmatprep.subr.mxu0 0.0
  %6345 = vmatpush1.msra.mxu0 0.0
  %6346 = vmatprep.subr.mxu0 0.0
  %6347 = vmatpush1.msra.mxu0 0.0
  %6348 = vmatprep.mubr.f32.mxu0 0.0
  %6349 = vmatmul.mubr.f32.gmra.mrb[0].mxu0 %v6207
  %v6350 = vpop.f32.mrb[0].mxu0
  %v6351 = vadd.f32 0.0, %v6350
  %v6352 = vpop.f32.mrb[0].mxu0
  %v6353 = vadd.f32 0.0, %v6352
  %6354 = vdwg.mxu0
  %v6355 = vadd.f32 %v6209, %v6280
  %v6356 = vadd.f32 %v6210, %v6282
  %v6357 = vadd.f32 %v6211, %v6351
  %v6358 = vadd.f32 %v6212, %v6353
  %v6359 = vxor.u32 %v6355, 2147483648
  %v6360 = vmul.f32 %v6359, 1.442695
  %v6361 = vpow.pop %v6360
  %v6362 = vadd.f32 %v6361, 1.0
  %v6363 = vrcp.pop %v6362
  %v6364 = vmul.f32 1.0, %v6363
  %v6365 = vxor.u32 %v6356, 2147483648
  %v6366 = vmul.f32 %v6365, 1.442695
  %v6367 = vpow.pop %v6366
  %v6368 = vadd.f32 %v6367, 1.0
  %v6369 = vrcp.pop %v6368
  %v6370 = vmul.f32 1.0, %v6369
  %v6371 = vtanh.pop %v6357
  %v6372 = vxor.u32 %v6358, 2147483648
  %v6373 = vmul.f32 %v6372, 1.442695
  %v6374 = vpow.pop %v6373
  %v6375 = vadd.f32 %v6374, 1.0
  %v6376 = vrcp.pop %v6375
  %v6377 = vmul.f32 1.0, %v6376
  %v6378 = vmul.f32 %v6370, %v6205
  %v6379 = vmul.f32 %v6364, %v6371
  %v6380 = vadd.f32 %v6378, %v6379
  %v6381 = vtanh.pop %v6380
  %v6382 = vmul.f32 %v6377, %v6381
  %6383 = vst [vmem:[#allocation9 + $0x30] sm:$0xff] %v6382
  %v6384 = vld [vmem:[#allocation5 + $0xa0] sm:$0xff]
  %v6385 = vld [vmem:[#allocation5 + $0xa8] sm:$0xff]
  %v6386 = vld [vmem:[#allocation5 + $0xb0] sm:$0xff]
  %v6387 = vld [vmem:[#allocation5 + $0xb8] sm:$0xff]
  %6388 = vmatprep.subr.mxu0 %v5971
  %6389 = vmatpush1.msra.mxu0 %v5970
  %6390 = vmatprep.subr.mxu0 %v5975
  %6391 = vmatpush1.msra.mxu0 %v5974
  %6392 = vmatprep.subr.mxu0 %v5979
  %6393 = vmatpush1.msra.mxu0 %v5978
  %6394 = vmatprep.subr.mxu0 %v5983
  %6395 = vmatpush1.msra.mxu0 %v5982
  %6396 = vmatprep.subr.mxu0 %v5987
  %6397 = vmatpush1.msra.mxu0 %v5986
  %6398 = vmatprep.subr.mxu0 %v5991
  %6399 = vmatpush1.msra.mxu0 %v5990
  %6400 = vmatprep.subr.mxu0 %v5995
  %6401 = vmatpush1.msra.mxu0 %v5994
  %6402 = vmatprep.subr.mxu0 %v5999
  %6403 = vmatpush1.msra.mxu0 %v5998
  %6404 = vmatprep.subr.mxu0 %v6003
  %6405 = vmatpush1.msra.mxu0 %v6002
  %6406 = vmatprep.subr.mxu0 %v6007
  %6407 = vmatpush1.msra.mxu0 %v6006
  %6408 = vmatprep.subr.mxu0 %v6011
  %6409 = vmatpush1.msra.mxu0 %v6010
  %6410 = vmatprep.subr.mxu0 %v6015
  %6411 = vmatpush1.msra.mxu0 %v6014
  %6412 = vmatprep.subr.mxu0 %v6019
  %6413 = vmatpush1.msra.mxu0 %v6018
  %6414 = vmatprep.subr.mxu0 %v6023
  %6415 = vmatpush1.msra.mxu0 %v6022
  %6416 = vmatprep.subr.mxu0 %v6027
  %6417 = vmatpush1.msra.mxu0 %v6026
  %6418 = vmatprep.subr.mxu0 %v6031
  %6419 = vmatpush1.msra.mxu0 %v6030
  %6420 = vmatprep.subr.mxu0 0.0
  %6421 = vmatpush1.msra.mxu0 0.0
  %6422 = vmatprep.subr.mxu0 0.0
  %6423 = vmatpush1.msra.mxu0 0.0
  %6424 = vmatprep.subr.mxu0 0.0
  %6425 = vmatpush1.msra.mxu0 0.0
  %6426 = vmatprep.subr.mxu0 0.0
  %6427 = vmatpush1.msra.mxu0 0.0
  %6428 = vmatprep.subr.mxu0 0.0
  %6429 = vmatpush1.msra.mxu0 0.0
  %6430 = vmatprep.subr.mxu0 0.0
  %6431 = vmatpush1.msra.mxu0 0.0
  %6432 = vmatprep.subr.mxu0 0.0
  %6433 = vmatpush1.msra.mxu0 0.0
  %6434 = vmatprep.subr.mxu0 0.0
  %6435 = vmatpush1.msra.mxu0 0.0
  %6436 = vmatprep.subr.mxu0 0.0
  %6437 = vmatpush1.msra.mxu0 0.0
  %6438 = vmatprep.subr.mxu0 0.0
  %6439 = vmatpush1.msra.mxu0 0.0
  %6440 = vmatprep.subr.mxu0 0.0
  %6441 = vmatpush1.msra.mxu0 0.0
  %6442 = vmatprep.subr.mxu0 0.0
  %6443 = vmatpush1.msra.mxu0 0.0
  %6444 = vmatprep.subr.mxu0 0.0
  %6445 = vmatpush1.msra.mxu0 0.0
  %6446 = vmatprep.subr.mxu0 0.0
  %6447 = vmatpush1.msra.mxu0 0.0
  %6448 = vmatprep.subr.mxu0 0.0
  %6449 = vmatpush1.msra.mxu0 0.0
  %6450 = vmatprep.subr.mxu0 0.0
  %6451 = vmatpush1.msra.mxu0 0.0
  %6452 = vmatprep.mubr.f32.mxu0 0.0
  %6453 = vmatmul.mubr.f32.gmra.mrb[0].mxu0 %v6382
  %v6454 = vpop.f32.mrb[0].mxu0
  %v6455 = vadd.f32 0.0, %v6454
  %v6456 = vpop.f32.mrb[0].mxu0
  %v6457 = vadd.f32 0.0, %v6456
  %6458 = vdwg.mxu0
  %6459 = vmatprep.subr.mxu0 %v5973
  %6460 = vmatpush1.msra.mxu0 %v5972
  %6461 = vmatprep.subr.mxu0 %v5977
  %6462 = vmatpush1.msra.mxu0 %v5976
  %6463 = vmatprep.subr.mxu0 %v5981
  %6464 = vmatpush1.msra.mxu0 %v5980
  %6465 = vmatprep.subr.mxu0 %v5985
  %6466 = vmatpush1.msra.mxu0 %v5984
  %6467 = vmatprep.subr.mxu0 %v5989
  %6468 = vmatpush1.msra.mxu0 %v5988
  %6469 = vmatprep.subr.mxu0 %v5993
  %6470 = vmatpush1.msra.mxu0 %v5992
  %6471 = vmatprep.subr.mxu0 %v5997
  %6472 = vmatpush1.msra.mxu0 %v5996
  %6473 = vmatprep.subr.mxu0 %v6001
  %6474 = vmatpush1.msra.mxu0 %v6000
  %6475 = vmatprep.subr.mxu0 %v6005
  %6476 = vmatpush1.msra.mxu0 %v6004
  %6477 = vmatprep.subr.mxu0 %v6009
  %6478 = vmatpush1.msra.mxu0 %v6008
  %6479 = vmatprep.subr.mxu0 %v6013
  %6480 = vmatpush1.msra.mxu0 %v6012
  %6481 = vmatprep.subr.mxu0 %v6017
  %6482 = vmatpush1.msra.mxu0 %v6016
  %6483 = vmatprep.subr.mxu0 %v6021
  %6484 = vmatpush1.msra.mxu0 %v6020
  %6485 = vmatprep.subr.mxu0 %v6025
  %6486 = vmatpush1.msra.mxu0 %v6024
  %6487 = vmatprep.subr.mxu0 %v6029
  %6488 = vmatpush1.msra.mxu0 %v6028
  %6489 = vmatprep.subr.mxu0 %v6033
  %6490 = vmatpush1.msra.mxu0 %v6032
  %6491 = vmatprep.subr.mxu0 0.0
  %6492 = vmatpush1.msra.mxu0 0.0
  %6493 = vmatprep.subr.mxu0 0.0
  %6494 = vmatpush1.msra.mxu0 0.0
  %6495 = vmatprep.subr.mxu0 0.0
  %6496 = vmatpush1.msra.mxu0 0.0
  %6497 = vmatprep.subr.mxu0 0.0
  %6498 = vmatpush1.msra.mxu0 0.0
  %6499 = vmatprep.subr.mxu0 0.0
  %6500 = vmatpush1.msra.mxu0 0.0
  %6501 = vmatprep.subr.mxu0 0.0
  %6502 = vmatpush1.msra.mxu0 0.0
  %6503 = vmatprep.subr.mxu0 0.0
  %6504 = vmatpush1.msra.mxu0 0.0
  %6505 = vmatprep.subr.mxu0 0.0
  %6506 = vmatpush1.msra.mxu0 0.0
  %6507 = vmatprep.subr.mxu0 0.0
  %6508 = vmatpush1.msra.mxu0 0.0
  %6509 = vmatprep.subr.mxu0 0.0
  %6510 = vmatpush1.msra.mxu0 0.0
  %6511 = vmatprep.subr.mxu0 0.0
  %6512 = vmatpush1.msra.mxu0 0.0
  %6513 = vmatprep.subr.mxu0 0.0
  %6514 = vmatpush1.msra.mxu0 0.0
  %6515 = vmatprep.subr.mxu0 0.0
  %6516 = vmatpush1.msra.mxu0 0.0
  %6517 = vmatprep.subr.mxu0 0.0
  %6518 = vmatpush1.msra.mxu0 0.0
  %6519 = vmatprep.subr.mxu0 0.0
  %6520 = vmatpush1.msra.mxu0 0.0
  %6521 = vmatprep.subr.mxu0 0.0
  %6522 = vmatpush1.msra.mxu0 0.0
  %6523 = vmatprep.mubr.f32.mxu0 0.0
  %6524 = vmatmul.mubr.f32.gmra.mrb[0].mxu0 %v6382
  %v6525 = vpop.f32.mrb[0].mxu0
  %v6526 = vadd.f32 0.0, %v6525
  %v6527 = vpop.f32.mrb[0].mxu0
  %v6528 = vadd.f32 0.0, %v6527
  %6529 = vdwg.mxu0
  %v6530 = vadd.f32 %v6384, %v6455
  %v6531 = vadd.f32 %v6385, %v6457
  %v6532 = vadd.f32 %v6386, %v6526
  %v6533 = vadd.f32 %v6387, %v6528
  %v6534 = vxor.u32 %v6530, 2147483648
  %v6535 = vmul.f32 %v6534, 1.442695
  %v6536 = vpow.pop %v6535
  %v6537 = vadd.f32 %v6536, 1.0
  %v6538 = vrcp.pop %v6537
  %v6539 = vmul.f32 1.0, %v6538
  %v6540 = vxor.u32 %v6531, 2147483648
  %v6541 = vmul.f32 %v6540, 1.442695
  %v6542 = vpow.pop %v6541
  %v6543 = vadd.f32 %v6542, 1.0
  %v6544 = vrcp.pop %v6543
  %v6545 = vmul.f32 1.0, %v6544
  %v6546 = vtanh.pop %v6532
  %v6547 = vxor.u32 %v6533, 2147483648
  %v6548 = vmul.f32 %v6547, 1.442695
  %v6549 = vpow.pop %v6548
  %v6550 = vadd.f32 %v6549, 1.0
  %v6551 = vrcp.pop %v6550
  %v6552 = vmul.f32 1.0, %v6551
  %v6553 = vmul.f32 %v6545, %v6380
  %v6554 = vmul.f32 %v6539, %v6546
  %v6555 = vadd.f32 %v6553, %v6554
  %v6556 = vtanh.pop %v6555
  %v6557 = vmul.f32 %v6552, %v6556
  %6558 = vst [vmem:[#allocation9 + $0x28] sm:$0xff] %v6557
  %v6559 = vld [vmem:[#allocation5 + $0x80] sm:$0xff]
  %v6560 = vld [vmem:[#allocation5 + $0x88] sm:$0xff]
  %v6561 = vld [vmem:[#allocation5 + $0x90] sm:$0xff]
  %v6562 = vld [vmem:[#allocation5 + $0x98] sm:$0xff]
  %6563 = vmatprep.subr.mxu0 %v5971
  %6564 = vmatpush1.msra.mxu0 %v5970
  %6565 = vmatprep.subr.mxu0 %v5975
  %6566 = vmatpush1.msra.mxu0 %v5974
  %6567 = vmatprep.subr.mxu0 %v5979
  %6568 = vmatpush1.msra.mxu0 %v5978
  %6569 = vmatprep.subr.mxu0 %v5983
  %6570 = vmatpush1.msra.mxu0 %v5982
  %6571 = vmatprep.subr.mxu0 %v5987
  %6572 = vmatpush1.msra.mxu0 %v5986
  %6573 = vmatprep.subr.mxu0 %v5991
  %6574 = vmatpush1.msra.mxu0 %v5990
  %6575 = vmatprep.subr.mxu0 %v5995
  %6576 = vmatpush1.msra.mxu0 %v5994
  %6577 = vmatprep.subr.mxu0 %v5999
  %6578 = vmatpush1.msra.mxu0 %v5998
  %6579 = vmatprep.subr.mxu0 %v6003
  %6580 = vmatpush1.msra.mxu0 %v6002
  %6581 = vmatprep.subr.mxu0 %v6007
  %6582 = vmatpush1.msra.mxu0 %v6006
  %6583 = vmatprep.subr.mxu0 %v6011
  %6584 = vmatpush1.msra.mxu0 %v6010
  %6585 = vmatprep.subr.mxu0 %v6015
  %6586 = vmatpush1.msra.mxu0 %v6014
  %6587 = vmatprep.subr.mxu0 %v6019
  %6588 = vmatpush1.msra.mxu0 %v6018
  %6589 = vmatprep.subr.mxu0 %v6023
  %6590 = vmatpush1.msra.mxu0 %v6022
  %6591 = vmatprep.subr.mxu0 %v6027
  %6592 = vmatpush1.msra.mxu0 %v6026
  %6593 = vmatprep.subr.mxu0 %v6031
  %6594 = vmatpush1.msra.mxu0 %v6030
  %6595 = vmatprep.subr.mxu0 0.0
  %6596 = vmatpush1.msra.mxu0 0.0
  %6597 = vmatprep.subr.mxu0 0.0
  %6598 = vmatpush1.msra.mxu0 0.0
  %6599 = vmatprep.subr.mxu0 0.0
  %6600 = vmatpush1.msra.mxu0 0.0
  %6601 = vmatprep.subr.mxu0 0.0
  %6602 = vmatpush1.msra.mxu0 0.0
  %6603 = vmatprep.subr.mxu0 0.0
  %6604 = vmatpush1.msra.mxu0 0.0
  %6605 = vmatprep.subr.mxu0 0.0
  %6606 = vmatpush1.msra.mxu0 0.0
  %6607 = vmatprep.subr.mxu0 0.0
  %6608 = vmatpush1.msra.mxu0 0.0
  %6609 = vmatprep.subr.mxu0 0.0
  %6610 = vmatpush1.msra.mxu0 0.0
  %6611 = vmatprep.subr.mxu0 0.0
  %6612 = vmatpush1.msra.mxu0 0.0
  %6613 = vmatprep.subr.mxu0 0.0
  %6614 = vmatpush1.msra.mxu0 0.0
  %6615 = vmatprep.subr.mxu0 0.0
  %6616 = vmatpush1.msra.mxu0 0.0
  %6617 = vmatprep.subr.mxu0 0.0
  %6618 = vmatpush1.msra.mxu0 0.0
  %6619 = vmatprep.subr.mxu0 0.0
  %6620 = vmatpush1.msra.mxu0 0.0
  %6621 = vmatprep.subr.mxu0 0.0
  %6622 = vmatpush1.msra.mxu0 0.0
  %6623 = vmatprep.subr.mxu0 0.0
  %6624 = vmatpush1.msra.mxu0 0.0
  %6625 = vmatprep.subr.mxu0 0.0
  %6626 = vmatpush1.msra.mxu0 0.0
  %6627 = vmatprep.mubr.f32.mxu0 0.0
  %6628 = vmatmul.mubr.f32.gmra.mrb[0].mxu0 %v6557
  %v6629 = vpop.f32.mrb[0].mxu0
  %v6630 = vadd.f32 0.0, %v6629
  %v6631 = vpop.f32.mrb[0].mxu0
  %v6632 = vadd.f32 0.0, %v6631
  %6633 = vdwg.mxu0
  %6634 = vmatprep.subr.mxu0 %v5973
  %6635 = vmatpush1.msra.mxu0 %v5972
  %6636 = vmatprep.subr.mxu0 %v5977
  %6637 = vmatpush1.msra.mxu0 %v5976
  %6638 = vmatprep.subr.mxu0 %v5981
  %6639 = vmatpush1.msra.mxu0 %v5980
  %6640 = vmatprep.subr.mxu0 %v5985
  %6641 = vmatpush1.msra.mxu0 %v5984
  %6642 = vmatprep.subr.mxu0 %v5989
  %6643 = vmatpush1.msra.mxu0 %v5988
  %6644 = vmatprep.subr.mxu0 %v5993
  %6645 = vmatpush1.msra.mxu0 %v5992
  %6646 = vmatprep.subr.mxu0 %v5997
  %6647 = vmatpush1.msra.mxu0 %v5996
  %6648 = vmatprep.subr.mxu0 %v6001
  %6649 = vmatpush1.msra.mxu0 %v6000
  %6650 = vmatprep.subr.mxu0 %v6005
  %6651 = vmatpush1.msra.mxu0 %v6004
  %6652 = vmatprep.subr.mxu0 %v6009
  %6653 = vmatpush1.msra.mxu0 %v6008
  %6654 = vmatprep.subr.mxu0 %v6013
  %6655 = vmatpush1.msra.mxu0 %v6012
  %6656 = vmatprep.subr.mxu0 %v6017
  %6657 = vmatpush1.msra.mxu0 %v6016
  %6658 = vmatprep.subr.mxu0 %v6021
  %6659 = vmatpush1.msra.mxu0 %v6020
  %6660 = vmatprep.subr.mxu0 %v6025
  %6661 = vmatpush1.msra.mxu0 %v6024
  %6662 = vmatprep.subr.mxu0 %v6029
  %6663 = vmatpush1.msra.mxu0 %v6028
  %6664 = vmatprep.subr.mxu0 %v6033
  %6665 = vmatpush1.msra.mxu0 %v6032
  %6666 = vmatprep.subr.mxu0 0.0
  %6667 = vmatpush1.msra.mxu0 0.0
  %6668 = vmatprep.subr.mxu0 0.0
  %6669 = vmatpush1.msra.mxu0 0.0
  %6670 = vmatprep.subr.mxu0 0.0
  %6671 = vmatpush1.msra.mxu0 0.0
  %6672 = vmatprep.subr.mxu0 0.0
  %6673 = vmatpush1.msra.mxu0 0.0
  %6674 = vmatprep.subr.mxu0 0.0
  %6675 = vmatpush1.msra.mxu0 0.0
  %6676 = vmatprep.subr.mxu0 0.0
  %6677 = vmatpush1.msra.mxu0 0.0
  %6678 = vmatprep.subr.mxu0 0.0
  %6679 = vmatpush1.msra.mxu0 0.0
  %6680 = vmatprep.subr.mxu0 0.0
  %6681 = vmatpush1.msra.mxu0 0.0
  %6682 = vmatprep.subr.mxu0 0.0
  %6683 = vmatpush1.msra.mxu0 0.0
  %6684 = vmatprep.subr.mxu0 0.0
  %6685 = vmatpush1.msra.mxu0 0.0
  %6686 = vmatprep.subr.mxu0 0.0
  %6687 = vmatpush1.msra.mxu0 0.0
  %6688 = vmatprep.subr.mxu0 0.0
  %6689 = vmatpush1.msra.mxu0 0.0
  %6690 = vmatprep.subr.mxu0 0.0
  %6691 = vmatpush1.msra.mxu0 0.0
  %6692 = vmatprep.subr.mxu0 0.0
  %6693 = vmatpush1.msra.mxu0 0.0
  %6694 = vmatprep.subr.mxu0 0.0
  %6695 = vmatpush1.msra.mxu0 0.0
  %6696 = vmatprep.subr.mxu0 0.0
  %6697 = vmatpush1.msra.mxu0 0.0
  %6698 = vmatprep.mubr.f32.mxu0 0.0
  %6699 = vmatmul.mubr.f32.gmra.mrb[0].mxu0 %v6557
  %v6700 = vpop.f32.mrb[0].mxu0
  %v6701 = vadd.f32 0.0, %v6700
  %v6702 = vpop.f32.mrb[0].mxu0
  %v6703 = vadd.f32 0.0, %v6702
  %6704 = vdwg.mxu0
  %v6705 = vadd.f32 %v6559, %v6630
  %v6706 = vadd.f32 %v6560, %v6632
  %v6707 = vadd.f32 %v6561, %v6701
  %v6708 = vadd.f32 %v6562, %v6703
  %v6709 = vxor.u32 %v6705, 2147483648
  %v6710 = vmul.f32 %v6709, 1.442695
  %v6711 = vpow.pop %v6710
  %v6712 = vadd.f32 %v6711, 1.0
  %v6713 = vrcp.pop %v6712
  %v6714 = vmul.f32 1.0, %v6713
  %v6715 = vxor.u32 %v6706, 2147483648
  %v6716 = vmul.f32 %v6715, 1.442695
  %v6717 = vpow.pop %v6716
  %v6718 = vadd.f32 %v6717, 1.0
  %v6719 = vrcp.pop %v6718
  %v6720 = vmul.f32 1.0, %v6719
  %v6721 = vtanh.pop %v6707
  %v6722 = vxor.u32 %v6708, 2147483648
  %v6723 = vmul.f32 %v6722, 1.442695
  %v6724 = vpow.pop %v6723
  %v6725 = vadd.f32 %v6724, 1.0
  %v6726 = vrcp.pop %v6725
  %v6727 = vmul.f32 1.0, %v6726
  %v6728 = vmul.f32 %v6720, %v6555
  %v6729 = vmul.f32 %v6714, %v6721
  %v6730 = vadd.f32 %v6728, %v6729
  %v6731 = vtanh.pop %v6730
  %v6732 = vmul.f32 %v6727, %v6731
  %6733 = vst [vmem:[#allocation9 + $0x20] sm:$0xff] %v6732
  %v6734 = vld [vmem:[#allocation5 + $0x60] sm:$0xff]
  %v6735 = vld [vmem:[#allocation5 + $0x68] sm:$0xff]
  %v6736 = vld [vmem:[#allocation5 + $0x70] sm:$0xff]
  %v6737 = vld [vmem:[#allocation5 + $0x78] sm:$0xff]
  %6738 = vmatprep.subr.mxu0 %v5971
  %6739 = vmatpush1.msra.mxu0 %v5970
  %6740 = vmatprep.subr.mxu0 %v5975
  %6741 = vmatpush1.msra.mxu0 %v5974
  %6742 = vmatprep.subr.mxu0 %v5979
  %6743 = vmatpush1.msra.mxu0 %v5978
  %6744 = vmatprep.subr.mxu0 %v5983
  %6745 = vmatpush1.msra.mxu0 %v5982
  %6746 = vmatprep.subr.mxu0 %v5987
  %6747 = vmatpush1.msra.mxu0 %v5986
  %6748 = vmatprep.subr.mxu0 %v5991
  %6749 = vmatpush1.msra.mxu0 %v5990
  %6750 = vmatprep.subr.mxu0 %v5995
  %6751 = vmatpush1.msra.mxu0 %v5994
  %6752 = vmatprep.subr.mxu0 %v5999
  %6753 = vmatpush1.msra.mxu0 %v5998
  %6754 = vmatprep.subr.mxu0 %v6003
  %6755 = vmatpush1.msra.mxu0 %v6002
  %6756 = vmatprep.subr.mxu0 %v6007
  %6757 = vmatpush1.msra.mxu0 %v6006
  %6758 = vmatprep.subr.mxu0 %v6011
  %6759 = vmatpush1.msra.mxu0 %v6010
  %6760 = vmatprep.subr.mxu0 %v6015
  %6761 = vmatpush1.msra.mxu0 %v6014
  %6762 = vmatprep.subr.mxu0 %v6019
  %6763 = vmatpush1.msra.mxu0 %v6018
  %6764 = vmatprep.subr.mxu0 %v6023
  %6765 = vmatpush1.msra.mxu0 %v6022
  %6766 = vmatprep.subr.mxu0 %v6027
  %6767 = vmatpush1.msra.mxu0 %v6026
  %6768 = vmatprep.subr.mxu0 %v6031
  %6769 = vmatpush1.msra.mxu0 %v6030
  %6770 = vmatprep.subr.mxu0 0.0
  %6771 = vmatpush1.msra.mxu0 0.0
  %6772 = vmatprep.subr.mxu0 0.0
  %6773 = vmatpush1.msra.mxu0 0.0
  %6774 = vmatprep.subr.mxu0 0.0
  %6775 = vmatpush1.msra.mxu0 0.0
  %6776 = vmatprep.subr.mxu0 0.0
  %6777 = vmatpush1.msra.mxu0 0.0
  %6778 = vmatprep.subr.mxu0 0.0
  %6779 = vmatpush1.msra.mxu0 0.0
  %6780 = vmatprep.subr.mxu0 0.0
  %6781 = vmatpush1.msra.mxu0 0.0
  %6782 = vmatprep.subr.mxu0 0.0
  %6783 = vmatpush1.msra.mxu0 0.0
  %6784 = vmatprep.subr.mxu0 0.0
  %6785 = vmatpush1.msra.mxu0 0.0
  %6786 = vmatprep.subr.mxu0 0.0
  %6787 = vmatpush1.msra.mxu0 0.0
  %6788 = vmatprep.subr.mxu0 0.0
  %6789 = vmatpush1.msra.mxu0 0.0
  %6790 = vmatprep.subr.mxu0 0.0
  %6791 = vmatpush1.msra.mxu0 0.0
  %6792 = vmatprep.subr.mxu0 0.0
  %6793 = vmatpush1.msra.mxu0 0.0
  %6794 = vmatprep.subr.mxu0 0.0
  %6795 = vmatpush1.msra.mxu0 0.0
  %6796 = vmatprep.subr.mxu0 0.0
  %6797 = vmatpush1.msra.mxu0 0.0
  %6798 = vmatprep.subr.mxu0 0.0
  %6799 = vmatpush1.msra.mxu0 0.0
  %6800 = vmatprep.subr.mxu0 0.0
  %6801 = vmatpush1.msra.mxu0 0.0
  %6802 = vmatprep.mubr.f32.mxu0 0.0
  %6803 = vmatmul.mubr.f32.gmra.mrb[0].mxu0 %v6732
  %v6804 = vpop.f32.mrb[0].mxu0
  %v6805 = vadd.f32 0.0, %v6804
  %v6806 = vpop.f32.mrb[0].mxu0
  %v6807 = vadd.f32 0.0, %v6806
  %6808 = vdwg.mxu0
  %6809 = vmatprep.subr.mxu0 %v5973
  %6810 = vmatpush1.msra.mxu0 %v5972
  %6811 = vmatprep.subr.mxu0 %v5977
  %6812 = vmatpush1.msra.mxu0 %v5976
  %6813 = vmatprep.subr.mxu0 %v5981
  %6814 = vmatpush1.msra.mxu0 %v5980
  %6815 = vmatprep.subr.mxu0 %v5985
  %6816 = vmatpush1.msra.mxu0 %v5984
  %6817 = vmatprep.subr.mxu0 %v5989
  %6818 = vmatpush1.msra.mxu0 %v5988
  %6819 = vmatprep.subr.mxu0 %v5993
  %6820 = vmatpush1.msra.mxu0 %v5992
  %6821 = vmatprep.subr.mxu0 %v5997
  %6822 = vmatpush1.msra.mxu0 %v5996
  %6823 = vmatprep.subr.mxu0 %v6001
  %6824 = vmatpush1.msra.mxu0 %v6000
  %6825 = vmatprep.subr.mxu0 %v6005
  %6826 = vmatpush1.msra.mxu0 %v6004
  %6827 = vmatprep.subr.mxu0 %v6009
  %6828 = vmatpush1.msra.mxu0 %v6008
  %6829 = vmatprep.subr.mxu0 %v6013
  %6830 = vmatpush1.msra.mxu0 %v6012
  %6831 = vmatprep.subr.mxu0 %v6017
  %6832 = vmatpush1.msra.mxu0 %v6016
  %6833 = vmatprep.subr.mxu0 %v6021
  %6834 = vmatpush1.msra.mxu0 %v6020
  %6835 = vmatprep.subr.mxu0 %v6025
  %6836 = vmatpush1.msra.mxu0 %v6024
  %6837 = vmatprep.subr.mxu0 %v6029
  %6838 = vmatpush1.msra.mxu0 %v6028
  %6839 = vmatprep.subr.mxu0 %v6033
  %6840 = vmatpush1.msra.mxu0 %v6032
  %6841 = vmatprep.subr.mxu0 0.0
  %6842 = vmatpush1.msra.mxu0 0.0
  %6843 = vmatprep.subr.mxu0 0.0
  %6844 = vmatpush1.msra.mxu0 0.0
  %6845 = vmatprep.subr.mxu0 0.0
  %6846 = vmatpush1.msra.mxu0 0.0
  %6847 = vmatprep.subr.mxu0 0.0
  %6848 = vmatpush1.msra.mxu0 0.0
  %6849 = vmatprep.subr.mxu0 0.0
  %6850 = vmatpush1.msra.mxu0 0.0
  %6851 = vmatprep.subr.mxu0 0.0
  %6852 = vmatpush1.msra.mxu0 0.0
  %6853 = vmatprep.subr.mxu0 0.0
  %6854 = vmatpush1.msra.mxu0 0.0
  %6855 = vmatprep.subr.mxu0 0.0
  %6856 = vmatpush1.msra.mxu0 0.0
  %6857 = vmatprep.subr.mxu0 0.0
  %6858 = vmatpush1.msra.mxu0 0.0
  %6859 = vmatprep.subr.mxu0 0.0
  %6860 = vmatpush1.msra.mxu0 0.0
  %6861 = vmatprep.subr.mxu0 0.0
  %6862 = vmatpush1.msra.mxu0 0.0
  %6863 = vmatprep.subr.mxu0 0.0
  %6864 = vmatpush1.msra.mxu0 0.0
  %6865 = vmatprep.subr.mxu0 0.0
  %6866 = vmatpush1.msra.mxu0 0.0
  %6867 = vmatprep.subr.mxu0 0.0
  %6868 = vmatpush1.msra.mxu0 0.0
  %6869 = vmatprep.subr.mxu0 0.0
  %6870 = vmatpush1.msra.mxu0 0.0
  %6871 = vmatprep.subr.mxu0 0.0
  %6872 = vmatpush1.msra.mxu0 0.0
  %6873 = vmatprep.mubr.f32.mxu0 0.0
  %6874 = vmatmul.mubr.f32.gmra.mrb[0].mxu0 %v6732
  %v6875 = vpop.f32.mrb[0].mxu0
  %v6876 = vadd.f32 0.0, %v6875
  %v6877 = vpop.f32.mrb[0].mxu0
  %v6878 = vadd.f32 0.0, %v6877
  %6879 = vdwg.mxu0
  %v6880 = vadd.f32 %v6734, %v6805
  %v6881 = vadd.f32 %v6735, %v6807
  %v6882 = vadd.f32 %v6736, %v6876
  %v6883 = vadd.f32 %v6737, %v6878
  %v6884 = vxor.u32 %v6880, 2147483648
  %v6885 = vmul.f32 %v6884, 1.442695
  %v6886 = vpow.pop %v6885
  %v6887 = vadd.f32 %v6886, 1.0
  %v6888 = vrcp.pop %v6887
  %v6889 = vmul.f32 1.0, %v6888
  %v6890 = vxor.u32 %v6881, 2147483648
  %v6891 = vmul.f32 %v6890, 1.442695
  %v6892 = vpow.pop %v6891
  %v6893 = vadd.f32 %v6892, 1.0
  %v6894 = vrcp.pop %v6893
  %v6895 = vmul.f32 1.0, %v6894
  %v6896 = vtanh.pop %v6882
  %v6897 = vxor.u32 %v6883, 2147483648
  %v6898 = vmul.f32 %v6897, 1.442695
  %v6899 = vpow.pop %v6898
  %v6900 = vadd.f32 %v6899, 1.0
  %v6901 = vrcp.pop %v6900
  %v6902 = vmul.f32 1.0, %v6901
  %v6903 = vmul.f32 %v6895, %v6730
  %v6904 = vmul.f32 %v6889, %v6896
  %v6905 = vadd.f32 %v6903, %v6904
  %v6906 = vtanh.pop %v6905
  %v6907 = vmul.f32 %v6902, %v6906
  %6908 = vst [vmem:[#allocation9 + $0x18] sm:$0xff] %v6907
  %v6909 = vld [vmem:[#allocation5 + $0x40] sm:$0xff]
  %v6910 = vld [vmem:[#allocation5 + $0x48] sm:$0xff]
  %v6911 = vld [vmem:[#allocation5 + $0x50] sm:$0xff]
  %v6912 = vld [vmem:[#allocation5 + $0x58] sm:$0xff]
  %6913 = vmatprep.subr.mxu0 %v5971
  %6914 = vmatpush1.msra.mxu0 %v5970
  %6915 = vmatprep.subr.mxu0 %v5975
  %6916 = vmatpush1.msra.mxu0 %v5974
  %6917 = vmatprep.subr.mxu0 %v5979
  %6918 = vmatpush1.msra.mxu0 %v5978
  %6919 = vmatprep.subr.mxu0 %v5983
  %6920 = vmatpush1.msra.mxu0 %v5982
  %6921 = vmatprep.subr.mxu0 %v5987
  %6922 = vmatpush1.msra.mxu0 %v5986
  %6923 = vmatprep.subr.mxu0 %v5991
  %6924 = vmatpush1.msra.mxu0 %v5990
  %6925 = vmatprep.subr.mxu0 %v5995
  %6926 = vmatpush1.msra.mxu0 %v5994
  %6927 = vmatprep.subr.mxu0 %v5999
  %6928 = vmatpush1.msra.mxu0 %v5998
  %6929 = vmatprep.subr.mxu0 %v6003
  %6930 = vmatpush1.msra.mxu0 %v6002
  %6931 = vmatprep.subr.mxu0 %v6007
  %6932 = vmatpush1.msra.mxu0 %v6006
  %6933 = vmatprep.subr.mxu0 %v6011
  %6934 = vmatpush1.msra.mxu0 %v6010
  %6935 = vmatprep.subr.mxu0 %v6015
  %6936 = vmatpush1.msra.mxu0 %v6014
  %6937 = vmatprep.subr.mxu0 %v6019
  %6938 = vmatpush1.msra.mxu0 %v6018
  %6939 = vmatprep.subr.mxu0 %v6023
  %6940 = vmatpush1.msra.mxu0 %v6022
  %6941 = vmatprep.subr.mxu0 %v6027
  %6942 = vmatpush1.msra.mxu0 %v6026
  %6943 = vmatprep.subr.mxu0 %v6031
  %6944 = vmatpush1.msra.mxu0 %v6030
  %6945 = vmatprep.subr.mxu0 0.0
  %6946 = vmatpush1.msra.mxu0 0.0
  %6947 = vmatprep.subr.mxu0 0.0
  %6948 = vmatpush1.msra.mxu0 0.0
  %6949 = vmatprep.subr.mxu0 0.0
  %6950 = vmatpush1.msra.mxu0 0.0
  %6951 = vmatprep.subr.mxu0 0.0
  %6952 = vmatpush1.msra.mxu0 0.0
  %6953 = vmatprep.subr.mxu0 0.0
  %6954 = vmatpush1.msra.mxu0 0.0
  %6955 = vmatprep.subr.mxu0 0.0
  %6956 = vmatpush1.msra.mxu0 0.0
  %6957 = vmatprep.subr.mxu0 0.0
  %6958 = vmatpush1.msra.mxu0 0.0
  %6959 = vmatprep.subr.mxu0 0.0
  %6960 = vmatpush1.msra.mxu0 0.0
  %6961 = vmatprep.subr.mxu0 0.0
  %6962 = vmatpush1.msra.mxu0 0.0
  %6963 = vmatprep.subr.mxu0 0.0
  %6964 = vmatpush1.msra.mxu0 0.0
  %6965 = vmatprep.subr.mxu0 0.0
  %6966 = vmatpush1.msra.mxu0 0.0
  %6967 = vmatprep.subr.mxu0 0.0
  %6968 = vmatpush1.msra.mxu0 0.0
  %6969 = vmatprep.subr.mxu0 0.0
  %6970 = vmatpush1.msra.mxu0 0.0
  %6971 = vmatprep.subr.mxu0 0.0
  %6972 = vmatpush1.msra.mxu0 0.0
  %6973 = vmatprep.subr.mxu0 0.0
  %6974 = vmatpush1.msra.mxu0 0.0
  %6975 = vmatprep.subr.mxu0 0.0
  %6976 = vmatpush1.msra.mxu0 0.0
  %6977 = vmatprep.mubr.f32.mxu0 0.0
  %6978 = vmatmul.mubr.f32.gmra.mrb[0].mxu0 %v6907
  %v6979 = vpop.f32.mrb[0].mxu0
  %v6980 = vadd.f32 0.0, %v6979
  %v6981 = vpop.f32.mrb[0].mxu0
  %v6982 = vadd.f32 0.0, %v6981
  %6983 = vdwg.mxu0
  %6984 = vmatprep.subr.mxu0 %v5973
  %6985 = vmatpush1.msra.mxu0 %v5972
  %6986 = vmatprep.subr.mxu0 %v5977
  %6987 = vmatpush1.msra.mxu0 %v5976
  %6988 = vmatprep.subr.mxu0 %v5981
  %6989 = vmatpush1.msra.mxu0 %v5980
  %6990 = vmatprep.subr.mxu0 %v5985
  %6991 = vmatpush1.msra.mxu0 %v5984
  %6992 = vmatprep.subr.mxu0 %v5989
  %6993 = vmatpush1.msra.mxu0 %v5988
  %6994 = vmatprep.subr.mxu0 %v5993
  %6995 = vmatpush1.msra.mxu0 %v5992
  %6996 = vmatprep.subr.mxu0 %v5997
  %6997 = vmatpush1.msra.mxu0 %v5996
  %6998 = vmatprep.subr.mxu0 %v6001
  %6999 = vmatpush1.msra.mxu0 %v6000
  %7000 = vmatprep.subr.mxu0 %v6005
  %7001 = vmatpush1.msra.mxu0 %v6004
  %7002 = vmatprep.subr.mxu0 %v6009
  %7003 = vmatpush1.msra.mxu0 %v6008
  %7004 = vmatprep.subr.mxu0 %v6013
  %7005 = vmatpush1.msra.mxu0 %v6012
  %7006 = vmatprep.subr.mxu0 %v6017
  %7007 = vmatpush1.msra.mxu0 %v6016
  %7008 = vmatprep.subr.mxu0 %v6021
  %7009 = vmatpush1.msra.mxu0 %v6020
  %7010 = vmatprep.subr.mxu0 %v6025
  %7011 = vmatpush1.msra.mxu0 %v6024
  %7012 = vmatprep.subr.mxu0 %v6029
  %7013 = vmatpush1.msra.mxu0 %v6028
  %7014 = vmatprep.subr.mxu0 %v6033
  %7015 = vmatpush1.msra.mxu0 %v6032
  %7016 = vmatprep.subr.mxu0 0.0
  %7017 = vmatpush1.msra.mxu0 0.0
  %7018 = vmatprep.subr.mxu0 0.0
  %7019 = vmatpush1.msra.mxu0 0.0
  %7020 = vmatprep.subr.mxu0 0.0
  %7021 = vmatpush1.msra.mxu0 0.0
  %7022 = vmatprep.subr.mxu0 0.0
  %7023 = vmatpush1.msra.mxu0 0.0
  %7024 = vmatprep.subr.mxu0 0.0
  %7025 = vmatpush1.msra.mxu0 0.0
  %7026 = vmatprep.subr.mxu0 0.0
  %7027 = vmatpush1.msra.mxu0 0.0
  %7028 = vmatprep.subr.mxu0 0.0
  %7029 = vmatpush1.msra.mxu0 0.0
  %7030 = vmatprep.subr.mxu0 0.0
  %7031 = vmatpush1.msra.mxu0 0.0
  %7032 = vmatprep.subr.mxu0 0.0
  %7033 = vmatpush1.msra.mxu0 0.0
  %7034 = vmatprep.subr.mxu0 0.0
  %7035 = vmatpush1.msra.mxu0 0.0
  %7036 = vmatprep.subr.mxu0 0.0
  %7037 = vmatpush1.msra.mxu0 0.0
  %7038 = vmatprep.subr.mxu0 0.0
  %7039 = vmatpush1.msra.mxu0 0.0
  %7040 = vmatprep.subr.mxu0 0.0
  %7041 = vmatpush1.msra.mxu0 0.0
  %7042 = vmatprep.subr.mxu0 0.0
  %7043 = vmatpush1.msra.mxu0 0.0
  %7044 = vmatprep.subr.mxu0 0.0
  %7045 = vmatpush1.msra.mxu0 0.0
  %7046 = vmatprep.subr.mxu0 0.0
  %7047 = vmatpush1.msra.mxu0 0.0
  %7048 = vmatprep.mubr.f32.mxu0 0.0
  %7049 = vmatmul.mubr.f32.gmra.mrb[0].mxu0 %v6907
  %v7050 = vpop.f32.mrb[0].mxu0
  %v7051 = vadd.f32 0.0, %v7050
  %v7052 = vpop.f32.mrb[0].mxu0
  %v7053 = vadd.f32 0.0, %v7052
  %7054 = vdwg.mxu0
  %v7055 = vadd.f32 %v6909, %v6980
  %v7056 = vadd.f32 %v6910, %v6982
  %v7057 = vadd.f32 %v6911, %v7051
  %v7058 = vadd.f32 %v6912, %v7053
  %v7059 = vxor.u32 %v7055, 2147483648
  %v7060 = vmul.f32 %v7059, 1.442695
  %v7061 = vpow.pop %v7060
  %v7062 = vadd.f32 %v7061, 1.0
  %v7063 = vrcp.pop %v7062
  %v7064 = vmul.f32 1.0, %v7063
  %v7065 = vxor.u32 %v7056, 2147483648
  %v7066 = vmul.f32 %v7065, 1.442695
  %v7067 = vpow.pop %v7066
  %v7068 = vadd.f32 %v7067, 1.0
  %v7069 = vrcp.pop %v7068
  %v7070 = vmul.f32 1.0, %v7069
  %v7071 = vtanh.pop %v7057
  %v7072 = vxor.u32 %v7058, 2147483648
  %v7073 = vmul.f32 %v7072, 1.442695
  %v7074 = vpow.pop %v7073
  %v7075 = vadd.f32 %v7074, 1.0
  %v7076 = vrcp.pop %v7075
  %v7077 = vmul.f32 1.0, %v7076
  %v7078 = vmul.f32 %v7070, %v6905
  %v7079 = vmul.f32 %v7064, %v7071
  %v7080 = vadd.f32 %v7078, %v7079
  %v7081 = vtanh.pop %v7080
  %v7082 = vmul.f32 %v7077, %v7081
  %7083 = vst [vmem:[#allocation9 + $0x10] sm:$0xff] %v7082
  %v7084 = vld [vmem:[#allocation5 + $0x20] sm:$0xff]
  %v7085 = vld [vmem:[#allocation5 + $0x28] sm:$0xff]
  %v7086 = vld [vmem:[#allocation5 + $0x30] sm:$0xff]
  %v7087 = vld [vmem:[#allocation5 + $0x38] sm:$0xff]
  %7088 = vmatprep.subr.mxu0 %v5971
  %7089 = vmatpush1.msra.mxu0 %v5970
  %7090 = vmatprep.subr.mxu0 %v5975
  %7091 = vmatpush1.msra.mxu0 %v5974
  %7092 = vmatprep.subr.mxu0 %v5979
  %7093 = vmatpush1.msra.mxu0 %v5978
  %7094 = vmatprep.subr.mxu0 %v5983
  %7095 = vmatpush1.msra.mxu0 %v5982
  %7096 = vmatprep.subr.mxu0 %v5987
  %7097 = vmatpush1.msra.mxu0 %v5986
  %7098 = vmatprep.subr.mxu0 %v5991
  %7099 = vmatpush1.msra.mxu0 %v5990
  %7100 = vmatprep.subr.mxu0 %v5995
  %7101 = vmatpush1.msra.mxu0 %v5994
  %7102 = vmatprep.subr.mxu0 %v5999
  %7103 = vmatpush1.msra.mxu0 %v5998
  %7104 = vmatprep.subr.mxu0 %v6003
  %7105 = vmatpush1.msra.mxu0 %v6002
  %7106 = vmatprep.subr.mxu0 %v6007
  %7107 = vmatpush1.msra.mxu0 %v6006
  %7108 = vmatprep.subr.mxu0 %v6011
  %7109 = vmatpush1.msra.mxu0 %v6010
  %7110 = vmatprep.subr.mxu0 %v6015
  %7111 = vmatpush1.msra.mxu0 %v6014
  %7112 = vmatprep.subr.mxu0 %v6019
  %7113 = vmatpush1.msra.mxu0 %v6018
  %7114 = vmatprep.subr.mxu0 %v6023
  %7115 = vmatpush1.msra.mxu0 %v6022
  %7116 = vmatprep.subr.mxu0 %v6027
  %7117 = vmatpush1.msra.mxu0 %v6026
  %7118 = vmatprep.subr.mxu0 %v6031
  %7119 = vmatpush1.msra.mxu0 %v6030
  %7120 = vmatprep.subr.mxu0 0.0
  %7121 = vmatpush1.msra.mxu0 0.0
  %7122 = vmatprep.subr.mxu0 0.0
  %7123 = vmatpush1.msra.mxu0 0.0
  %7124 = vmatprep.subr.mxu0 0.0
  %7125 = vmatpush1.msra.mxu0 0.0
  %7126 = vmatprep.subr.mxu0 0.0
  %7127 = vmatpush1.msra.mxu0 0.0
  %7128 = vmatprep.subr.mxu0 0.0
  %7129 = vmatpush1.msra.mxu0 0.0
  %7130 = vmatprep.subr.mxu0 0.0
  %7131 = vmatpush1.msra.mxu0 0.0
  %7132 = vmatprep.subr.mxu0 0.0
  %7133 = vmatpush1.msra.mxu0 0.0
  %7134 = vmatprep.subr.mxu0 0.0
  %7135 = vmatpush1.msra.mxu0 0.0
  %7136 = vmatprep.subr.mxu0 0.0
  %7137 = vmatpush1.msra.mxu0 0.0
  %7138 = vmatprep.subr.mxu0 0.0
  %7139 = vmatpush1.msra.mxu0 0.0
  %7140 = vmatprep.subr.mxu0 0.0
  %7141 = vmatpush1.msra.mxu0 0.0
  %7142 = vmatprep.subr.mxu0 0.0
  %7143 = vmatpush1.msra.mxu0 0.0
  %7144 = vmatprep.subr.mxu0 0.0
  %7145 = vmatpush1.msra.mxu0 0.0
  %7146 = vmatprep.subr.mxu0 0.0
  %7147 = vmatpush1.msra.mxu0 0.0
  %7148 = vmatprep.subr.mxu0 0.0
  %7149 = vmatpush1.msra.mxu0 0.0
  %7150 = vmatprep.subr.mxu0 0.0
  %7151 = vmatpush1.msra.mxu0 0.0
  %7152 = vmatprep.mubr.f32.mxu0 0.0
  %7153 = vmatmul.mubr.f32.gmra.mrb[0].mxu0 %v7082
  %v7154 = vpop.f32.mrb[0].mxu0
  %v7155 = vadd.f32 0.0, %v7154
  %v7156 = vpop.f32.mrb[0].mxu0
  %v7157 = vadd.f32 0.0, %v7156
  %7158 = vdwg.mxu0
  %7159 = vmatprep.subr.mxu0 %v5973
  %7160 = vmatpush1.msra.mxu0 %v5972
  %7161 = vmatprep.subr.mxu0 %v5977
  %7162 = vmatpush1.msra.mxu0 %v5976
  %7163 = vmatprep.subr.mxu0 %v5981
  %7164 = vmatpush1.msra.mxu0 %v5980
  %7165 = vmatprep.subr.mxu0 %v5985
  %7166 = vmatpush1.msra.mxu0 %v5984
  %7167 = vmatprep.subr.mxu0 %v5989
  %7168 = vmatpush1.msra.mxu0 %v5988
  %7169 = vmatprep.subr.mxu0 %v5993
  %7170 = vmatpush1.msra.mxu0 %v5992
  %7171 = vmatprep.subr.mxu0 %v5997
  %7172 = vmatpush1.msra.mxu0 %v5996
  %7173 = vmatprep.subr.mxu0 %v6001
  %7174 = vmatpush1.msra.mxu0 %v6000
  %7175 = vmatprep.subr.mxu0 %v6005
  %7176 = vmatpush1.msra.mxu0 %v6004
  %7177 = vmatprep.subr.mxu0 %v6009
  %7178 = vmatpush1.msra.mxu0 %v6008
  %7179 = vmatprep.subr.mxu0 %v6013
  %7180 = vmatpush1.msra.mxu0 %v6012
  %7181 = vmatprep.subr.mxu0 %v6017
  %7182 = vmatpush1.msra.mxu0 %v6016
  %7183 = vmatprep.subr.mxu0 %v6021
  %7184 = vmatpush1.msra.mxu0 %v6020
  %7185 = vmatprep.subr.mxu0 %v6025
  %7186 = vmatpush1.msra.mxu0 %v6024
  %7187 = vmatprep.subr.mxu0 %v6029
  %7188 = vmatpush1.msra.mxu0 %v6028
  %7189 = vmatprep.subr.mxu0 %v6033
  %7190 = vmatpush1.msra.mxu0 %v6032
  %7191 = vmatprep.subr.mxu0 0.0
  %7192 = vmatpush1.msra.mxu0 0.0
  %7193 = vmatprep.subr.mxu0 0.0
  %7194 = vmatpush1.msra.mxu0 0.0
  %7195 = vmatprep.subr.mxu0 0.0
  %7196 = vmatpush1.msra.mxu0 0.0
  %7197 = vmatprep.subr.mxu0 0.0
  %7198 = vmatpush1.msra.mxu0 0.0
  %7199 = vmatprep.subr.mxu0 0.0
  %7200 = vmatpush1.msra.mxu0 0.0
  %7201 = vmatprep.subr.mxu0 0.0
  %7202 = vmatpush1.msra.mxu0 0.0
  %7203 = vmatprep.subr.mxu0 0.0
  %7204 = vmatpush1.msra.mxu0 0.0
  %7205 = vmatprep.subr.mxu0 0.0
  %7206 = vmatpush1.msra.mxu0 0.0
  %7207 = vmatprep.subr.mxu0 0.0
  %7208 = vmatpush1.msra.mxu0 0.0
  %7209 = vmatprep.subr.mxu0 0.0
  %7210 = vmatpush1.msra.mxu0 0.0
  %7211 = vmatprep.subr.mxu0 0.0
  %7212 = vmatpush1.msra.mxu0 0.0
  %7213 = vmatprep.subr.mxu0 0.0
  %7214 = vmatpush1.msra.mxu0 0.0
  %7215 = vmatprep.subr.mxu0 0.0
  %7216 = vmatpush1.msra.mxu0 0.0
  %7217 = vmatprep.subr.mxu0 0.0
  %7218 = vmatpush1.msra.mxu0 0.0
  %7219 = vmatprep.subr.mxu0 0.0
  %7220 = vmatpush1.msra.mxu0 0.0
  %7221 = vmatprep.subr.mxu0 0.0
  %7222 = vmatpush1.msra.mxu0 0.0
  %7223 = vmatprep.mubr.f32.mxu0 0.0
  %7224 = vmatmul.mubr.f32.gmra.mrb[0].mxu0 %v7082
  %v7225 = vpop.f32.mrb[0].mxu0
  %v7226 = vadd.f32 0.0, %v7225
  %v7227 = vpop.f32.mrb[0].mxu0
  %v7228 = vadd.f32 0.0, %v7227
  %7229 = vdwg.mxu0
  %v7230 = vadd.f32 %v7084, %v7155
  %v7231 = vadd.f32 %v7085, %v7157
  %v7232 = vadd.f32 %v7086, %v7226
  %v7233 = vadd.f32 %v7087, %v7228
  %v7234 = vxor.u32 %v7230, 2147483648
  %v7235 = vmul.f32 %v7234, 1.442695
  %v7236 = vpow.pop %v7235
  %v7237 = vadd.f32 %v7236, 1.0
  %v7238 = vrcp.pop %v7237
  %v7239 = vmul.f32 1.0, %v7238
  %v7240 = vxor.u32 %v7231, 2147483648
  %v7241 = vmul.f32 %v7240, 1.442695
  %v7242 = vpow.pop %v7241
  %v7243 = vadd.f32 %v7242, 1.0
  %v7244 = vrcp.pop %v7243
  %v7245 = vmul.f32 1.0, %v7244
  %v7246 = vtanh.pop %v7232
  %v7247 = vxor.u32 %v7233, 2147483648
  %v7248 = vmul.f32 %v7247, 1.442695
  %v7249 = vpow.pop %v7248
  %v7250 = vadd.f32 %v7249, 1.0
  %v7251 = vrcp.pop %v7250
  %v7252 = vmul.f32 1.0, %v7251
  %v7253 = vmul.f32 %v7245, %v7080
  %v7254 = vmul.f32 %v7239, %v7246
  %v7255 = vadd.f32 %v7253, %v7254
  %v7256 = vtanh.pop %v7255
  %v7257 = vmul.f32 %v7252, %v7256
  %7258 = vst [vmem:[#allocation9 + $0x8] sm:$0xff] %v7257
  %v7259 = vld [vmem:[#allocation5] sm:$0xff]
  %v7260 = vld [vmem:[#allocation5 + $0x8] sm:$0xff]
  %v7261 = vld [vmem:[#allocation5 + $0x10] sm:$0xff]
  %v7262 = vld [vmem:[#allocation5 + $0x18] sm:$0xff]
  %7263 = vmatprep.subr.mxu0 %v5971
  %7264 = vmatpush1.msra.mxu0 %v5970
  %7265 = vmatprep.subr.mxu0 %v5975
  %7266 = vmatpush1.msra.mxu0 %v5974
  %7267 = vmatprep.subr.mxu0 %v5979
  %7268 = vmatpush1.msra.mxu0 %v5978
  %7269 = vmatprep.subr.mxu0 %v5983
  %7270 = vmatpush1.msra.mxu0 %v5982
  %7271 = vmatprep.subr.mxu0 %v5987
  %7272 = vmatpush1.msra.mxu0 %v5986
  %7273 = vmatprep.subr.mxu0 %v5991
  %7274 = vmatpush1.msra.mxu0 %v5990
  %7275 = vmatprep.subr.mxu0 %v5995
  %7276 = vmatpush1.msra.mxu0 %v5994
  %7277 = vmatprep.subr.mxu0 %v5999
  %7278 = vmatpush1.msra.mxu0 %v5998
  %7279 = vmatprep.subr.mxu0 %v6003
  %7280 = vmatpush1.msra.mxu0 %v6002
  %7281 = vmatprep.subr.mxu0 %v6007
  %7282 = vmatpush1.msra.mxu0 %v6006
  %7283 = vmatprep.subr.mxu0 %v6011
  %7284 = vmatpush1.msra.mxu0 %v6010
  %7285 = vmatprep.subr.mxu0 %v6015
  %7286 = vmatpush1.msra.mxu0 %v6014
  %7287 = vmatprep.subr.mxu0 %v6019
  %7288 = vmatpush1.msra.mxu0 %v6018
  %7289 = vmatprep.subr.mxu0 %v6023
  %7290 = vmatpush1.msra.mxu0 %v6022
  %7291 = vmatprep.subr.mxu0 %v6027
  %7292 = vmatpush1.msra.mxu0 %v6026
  %7293 = vmatprep.subr.mxu0 %v6031
  %7294 = vmatpush1.msra.mxu0 %v6030
  %7295 = vmatprep.subr.mxu0 0.0
  %7296 = vmatpush1.msra.mxu0 0.0
  %7297 = vmatprep.subr.mxu0 0.0
  %7298 = vmatpush1.msra.mxu0 0.0
  %7299 = vmatprep.subr.mxu0 0.0
  %7300 = vmatpush1.msra.mxu0 0.0
  %7301 = vmatprep.subr.mxu0 0.0
  %7302 = vmatpush1.msra.mxu0 0.0
  %7303 = vmatprep.subr.mxu0 0.0
  %7304 = vmatpush1.msra.mxu0 0.0
  %7305 = vmatprep.subr.mxu0 0.0
  %7306 = vmatpush1.msra.mxu0 0.0
  %7307 = vmatprep.subr.mxu0 0.0
  %7308 = vmatpush1.msra.mxu0 0.0
  %7309 = vmatprep.subr.mxu0 0.0
  %7310 = vmatpush1.msra.mxu0 0.0
  %7311 = vmatprep.subr.mxu0 0.0
  %7312 = vmatpush1.msra.mxu0 0.0
  %7313 = vmatprep.subr.mxu0 0.0
  %7314 = vmatpush1.msra.mxu0 0.0
  %7315 = vmatprep.subr.mxu0 0.0
  %7316 = vmatpush1.msra.mxu0 0.0
  %7317 = vmatprep.subr.mxu0 0.0
  %7318 = vmatpush1.msra.mxu0 0.0
  %7319 = vmatprep.subr.mxu0 0.0
  %7320 = vmatpush1.msra.mxu0 0.0
  %7321 = vmatprep.subr.mxu0 0.0
  %7322 = vmatpush1.msra.mxu0 0.0
  %7323 = vmatprep.subr.mxu0 0.0
  %7324 = vmatpush1.msra.mxu0 0.0
  %7325 = vmatprep.subr.mxu0 0.0
  %7326 = vmatpush1.msra.mxu0 0.0
  %7327 = vmatprep.mubr.f32.mxu0 0.0
  %7328 = vmatmul.mubr.f32.gmra.mrb[0].mxu0 %v7257
  %v7329 = vpop.f32.mrb[0].mxu0
  %v7330 = vadd.f32 0.0, %v7329
  %v7331 = vpop.f32.mrb[0].mxu0
  %v7332 = vadd.f32 0.0, %v7331
  %7333 = vdwg.mxu0
  %7334 = vmatprep.subr.mxu0 %v5973
  %7335 = vmatpush1.msra.mxu0 %v5972
  %7336 = vmatprep.subr.mxu0 %v5977
  %7337 = vmatpush1.msra.mxu0 %v5976
  %7338 = vmatprep.subr.mxu0 %v5981
  %7339 = vmatpush1.msra.mxu0 %v5980
  %7340 = vmatprep.subr.mxu0 %v5985
  %7341 = vmatpush1.msra.mxu0 %v5984
  %7342 = vmatprep.subr.mxu0 %v5989
  %7343 = vmatpush1.msra.mxu0 %v5988
  %7344 = vmatprep.subr.mxu0 %v5993
  %7345 = vmatpush1.msra.mxu0 %v5992
  %7346 = vmatprep.subr.mxu0 %v5997
  %7347 = vmatpush1.msra.mxu0 %v5996
  %7348 = vmatprep.subr.mxu0 %v6001
  %7349 = vmatpush1.msra.mxu0 %v6000
  %7350 = vmatprep.subr.mxu0 %v6005
  %7351 = vmatpush1.msra.mxu0 %v6004
  %7352 = vmatprep.subr.mxu0 %v6009
  %7353 = vmatpush1.msra.mxu0 %v6008
  %7354 = vmatprep.subr.mxu0 %v6013
  %7355 = vmatpush1.msra.mxu0 %v6012
  %7356 = vmatprep.subr.mxu0 %v6017
  %7357 = vmatpush1.msra.mxu0 %v6016
  %7358 = vmatprep.subr.mxu0 %v6021
  %7359 = vmatpush1.msra.mxu0 %v6020
  %7360 = vmatprep.subr.mxu0 %v6025
  %7361 = vmatpush1.msra.mxu0 %v6024
  %7362 = vmatprep.subr.mxu0 %v6029
  %7363 = vmatpush1.msra.mxu0 %v6028
  %7364 = vmatprep.subr.mxu0 %v6033
  %7365 = vmatpush1.msra.mxu0 %v6032
  %7366 = vmatprep.subr.mxu0 0.0
  %7367 = vmatpush1.msra.mxu0 0.0
  %7368 = vmatprep.subr.mxu0 0.0
  %7369 = vmatpush1.msra.mxu0 0.0
  %7370 = vmatprep.subr.mxu0 0.0
  %7371 = vmatpush1.msra.mxu0 0.0
  %7372 = vmatprep.subr.mxu0 0.0
  %7373 = vmatpush1.msra.mxu0 0.0
  %7374 = vmatprep.subr.mxu0 0.0
  %7375 = vmatpush1.msra.mxu0 0.0
  %7376 = vmatprep.subr.mxu0 0.0
  %7377 = vmatpush1.msra.mxu0 0.0
  %7378 = vmatprep.subr.mxu0 0.0
  %7379 = vmatpush1.msra.mxu0 0.0
  %7380 = vmatprep.subr.mxu0 0.0
  %7381 = vmatpush1.msra.mxu0 0.0
  %7382 = vmatprep.subr.mxu0 0.0
  %7383 = vmatpush1.msra.mxu0 0.0
  %7384 = vmatprep.subr.mxu0 0.0
  %7385 = vmatpush1.msra.mxu0 0.0
  %7386 = vmatprep.subr.mxu0 0.0
  %7387 = vmatpush1.msra.mxu0 0.0
  %7388 = vmatprep.subr.mxu0 0.0
  %7389 = vmatpush1.msra.mxu0 0.0
  %7390 = vmatprep.subr.mxu0 0.0
  %7391 = vmatpush1.msra.mxu0 0.0
  %7392 = vmatprep.subr.mxu0 0.0
  %7393 = vmatpush1.msra.mxu0 0.0
  %7394 = vmatprep.subr.mxu0 0.0
  %7395 = vmatpush1.msra.mxu0 0.0
  %7396 = vmatprep.subr.mxu0 0.0
  %7397 = vmatpush1.msra.mxu0 0.0
  %7398 = vmatprep.mubr.f32.mxu0 0.0
  %7399 = vmatmul.mubr.f32.gmra.mrb[0].mxu0 %v7257
  %v7400 = vpop.f32.mrb[0].mxu0
  %v7401 = vadd.f32 0.0, %v7400
  %v7402 = vpop.f32.mrb[0].mxu0
  %v7403 = vadd.f32 0.0, %v7402
  %7404 = vdwg.mxu0
  %v7405 = vadd.f32 %v7259, %v7330
  %v7406 = vadd.f32 %v7260, %v7332
  %v7407 = vadd.f32 %v7261, %v7401
  %v7408 = vadd.f32 %v7262, %v7403
  %v7409 = vxor.u32 %v7405, 2147483648
  %v7410 = vmul.f32 %v7409, 1.442695
  %v7411 = vpow.pop %v7410
  %v7412 = vadd.f32 %v7411, 1.0
  %v7413 = vrcp.pop %v7412
  %v7414 = vmul.f32 1.0, %v7413
  %v7415 = vxor.u32 %v7406, 2147483648
  %v7416 = vmul.f32 %v7415, 1.442695
  %v7417 = vpow.pop %v7416
  %v7418 = vadd.f32 %v7417, 1.0
  %v7419 = vrcp.pop %v7418
  %v7420 = vmul.f32 1.0, %v7419
  %v7421 = vtanh.pop %v7407
  %v7422 = vxor.u32 %v7408, 2147483648
  %v7423 = vmul.f32 %v7422, 1.442695
  %v7424 = vpow.pop %v7423
  %v7425 = vadd.f32 %v7424, 1.0
  %v7426 = vrcp.pop %v7425
  %v7427 = vmul.f32 1.0, %v7426
  %v7428 = vmul.f32 %v7420, %v7255
  %v7429 = vmul.f32 %v7414, %v7421
  %v7430 = vadd.f32 %v7428, %v7429
  %v7431 = vtanh.pop %v7430
  %v7432 = vmul.f32 %v7427, %v7431
  %7433 = vst [vmem:[#allocation9] sm:$0xff] %v7432
  %v7434 = vld [vmem:[#allocation8 + $0x38] sm:$0xff]
  %v7435 = vld [vmem:[#allocation9 + $0x38] sm:$0xff]
  %v7436 = vld [vmem:[%s13] sm:$0xff]
  %v7437 = vld [vmem:[%s13 + $0x8] sm:$0xff]
  %v7438 = vld [vmem:[%s13 + $0x10] sm:$0xff]
  %v7439 = vld [vmem:[%s13 + $0x18] sm:$0xff]
  %v7440 = vld [vmem:[%s13 + $0x20] sm:$0xff]
  %v7441 = vld [vmem:[%s13 + $0x28] sm:$0xff]
  %v7442 = vld [vmem:[%s13 + $0x30] sm:$0xff]
  %v7443 = vld [vmem:[%s13 + $0x38] sm:$0xff]
  %v7444 = vld [vmem:[%s13 + $0x40] sm:$0xff]
  %v7445 = vld [vmem:[%s13 + $0x48] sm:$0xff]
  %v7446 = vld [vmem:[%s13 + $0x50] sm:$0xff]
  %v7447 = vld [vmem:[%s13 + $0x58] sm:$0xff]
  %v7448 = vld [vmem:[%s13 + $0x60] sm:$0xff]
  %v7449 = vld [vmem:[%s13 + $0x68] sm:$0xff]
  %v7450 = vld [vmem:[%s13 + $0x70] sm:$0xff]
  %v7451 = vld [vmem:[%s13 + $0x78] sm:$0xff]
  %v7452 = vld [vmem:[%s13 + $0x80] sm:$0xff]
  %v7453 = vld [vmem:[%s13 + $0x88] sm:$0xff]
  %v7454 = vld [vmem:[%s13 + $0x90] sm:$0xff]
  %v7455 = vld [vmem:[%s13 + $0x98] sm:$0xff]
  %v7456 = vld [vmem:[%s13 + $0xa0] sm:$0xff]
  %v7457 = vld [vmem:[%s13 + $0xa8] sm:$0xff]
  %v7458 = vld [vmem:[%s13 + $0xb0] sm:$0xff]
  %v7459 = vld [vmem:[%s13 + $0xb8] sm:$0xff]
  %v7460 = vld [vmem:[%s13 + $0xc0] sm:$0xff]
  %v7461 = vld [vmem:[%s13 + $0xc8] sm:$0xff]
  %v7462 = vld [vmem:[%s13 + $0xd0] sm:$0xff]
  %v7463 = vld [vmem:[%s13 + $0xd8] sm:$0xff]
  %v7464 = vld [vmem:[%s13 + $0xe0] sm:$0xff]
  %v7465 = vld [vmem:[%s13 + $0xe8] sm:$0xff]
  %v7466 = vld [vmem:[%s13 + $0xf0] sm:$0xff]
  %v7467 = vld [vmem:[%s13 + $0xf8] sm:$0xff]
  %v7468 = vld [vmem:[%s14] sm:$0x1]
  %v7470 = vlaneseq
  %v7471 = vshrl.u32 %v7470, 7
  %v7472 = vsub.s32 0, %v7471
  %v7473 = vrot.slane %v7468, %v7472
  %7475 = vmatprep.subr.mxu0 0.0
  %7476 = vmatpush1.msra.mxu0 %v7436
  %7477 = vmatprep.subr.mxu0 0.0
  %7478 = vmatpush1.msra.mxu0 %v7437
  %7479 = vmatprep.subr.mxu0 0.0
  %7480 = vmatpush1.msra.mxu0 %v7438
  %7481 = vmatprep.subr.mxu0 0.0
  %7482 = vmatpush1.msra.mxu0 %v7439
  %7483 = vmatprep.subr.mxu0 0.0
  %7484 = vmatpush1.msra.mxu0 %v7440
  %7485 = vmatprep.subr.mxu0 0.0
  %7486 = vmatpush1.msra.mxu0 %v7441
  %7487 = vmatprep.subr.mxu0 0.0
  %7488 = vmatpush1.msra.mxu0 %v7442
  %7489 = vmatprep.subr.mxu0 0.0
  %7490 = vmatpush1.msra.mxu0 %v7443
  %7491 = vmatprep.subr.mxu0 0.0
  %7492 = vmatpush1.msra.mxu0 %v7444
  %7493 = vmatprep.subr.mxu0 0.0
  %7494 = vmatpush1.msra.mxu0 %v7445
  %7495 = vmatprep.subr.mxu0 0.0
  %7496 = vmatpush1.msra.mxu0 %v7446
  %7497 = vmatprep.subr.mxu0 0.0
  %7498 = vmatpush1.msra.mxu0 %v7447
  %7499 = vmatprep.subr.mxu0 0.0
  %7500 = vmatpush1.msra.mxu0 %v7448
  %7501 = vmatprep.subr.mxu0 0.0
  %7502 = vmatpush1.msra.mxu0 %v7449
  %7503 = vmatprep.subr.mxu0 0.0
  %7504 = vmatpush1.msra.mxu0 %v7450
  %7505 = vmatprep.subr.mxu0 0.0
  %7506 = vmatpush1.msra.mxu0 %v7451
  %7507 = vmatprep.subr.mxu0 0.0
  %7508 = vmatpush1.msra.mxu0 %v7452
  %7509 = vmatprep.subr.mxu0 0.0
  %7510 = vmatpush1.msra.mxu0 %v7453
  %7511 = vmatprep.subr.mxu0 0.0
  %7512 = vmatpush1.msra.mxu0 %v7454
  %7513 = vmatprep.subr.mxu0 0.0
  %7514 = vmatpush1.msra.mxu0 %v7455
  %7515 = vmatprep.subr.mxu0 0.0
  %7516 = vmatpush1.msra.mxu0 %v7456
  %7517 = vmatprep.subr.mxu0 0.0
  %7518 = vmatpush1.msra.mxu0 %v7457
  %7519 = vmatprep.subr.mxu0 0.0
  %7520 = vmatpush1.msra.mxu0 %v7458
  %7521 = vmatprep.subr.mxu0 0.0
  %7522 = vmatpush1.msra.mxu0 %v7459
  %7523 = vmatprep.subr.mxu0 0.0
  %7524 = vmatpush1.msra.mxu0 %v7460
  %7525 = vmatprep.subr.mxu0 0.0
  %7526 = vmatpush1.msra.mxu0 %v7461
  %7527 = vmatprep.subr.mxu0 0.0
  %7528 = vmatpush1.msra.mxu0 %v7462
  %7529 = vmatprep.subr.mxu0 0.0
  %7530 = vmatpush1.msra.mxu0 %v7463
  %7531 = vmatprep.subr.mxu0 0.0
  %7532 = vmatpush1.msra.mxu0 %v7464
  %7533 = vmatprep.subr.mxu0 0.0
  %7534 = vmatpush1.msra.mxu0 %v7465
  %7535 = vmatprep.subr.mxu0 0.0
  %7536 = vmatpush1.msra.mxu0 %v7466
  %7537 = vmatprep.subr.mxu0 0.0
  %7538 = vmatpush1.msra.mxu0 %v7467
  %7539 = vmatprep.mubr.f32.mxu0 %v7435
  %7540 = vmatmul.mubr.f32.gmra.mrb[0].mxu0 %v7434
  %v7541 = vpop.f32.mrb[0].mxu0
  %v7542 = vadd.f32 %v7473, %v7541
  %v7543 = vpop.f32.mrb[0].mxu0
  %7544 = vdwg.mxu0
  %7545 = vst [vmem:[%s15] sm:$0xff] %v7542
  // Predicated region
  $region62: #{bilstm_forward.1} parent=0 // pred_check
    _
  $region63: #{bilstm_forward.1} parent=0 // pred_check_branch
    %7547 = sbr.rel (0) target = $region65
  $region64: #{bilstm_forward.1} parent=0 // pred_region
    _
  $region65: #{bilstm_forward.1} parent=0 // pred_fallthru
    _
  // Predicated region
  $region66: #{bilstm_forward.1} parent=0 // pred_check
    _
  $region67: #{bilstm_forward.1} parent=0 // pred_check_branch
    %7549 = sbr.rel (0) target = $region69
  $region68: #{bilstm_forward.1} parent=0 // pred_region
    _
  $region69: #{bilstm_forward.1} parent=0 // pred_fallthru
    _

</llo_original>
